<compile_context>
chip_gen: v7x
topology: tpu7x:2x2x1
jax: 0.10.0
libtpu: 0.0.40
codegen_flags: <defaults>
</compile_context>

<pallas_src>
import functools

import jax
import jax.numpy as jnp
from jax import lax
from jax.experimental import pallas as pl
from jax.experimental.pallas import tpu as pltpu


# ----------------------------------------------------------------------------
# In-kernel helpers
# ----------------------------------------------------------------------------
def _group_norm_silu(x, p_ref, gamma_ref, beta_ref, eps):
    """GroupNorm (affine, eps) + SiLU on a (C, H*W) slab of one image.

    p_ref is a (C, C) "same group" averaging matrix pre-scaled by
    1/(group_size*H*W): P @ x followed by a lane-sum gives the per-channel
    group mean directly.  Everything stays as well-shaped MXU matmuls + lane
    reductions (no reshapes); the extra MXU work is negligible because these
    kernels are HBM-bandwidth bound.
    """
    p = p_ref[...]
    gmean = jnp.sum(jnp.dot(p, x, preferred_element_type=jnp.float32),
                    axis=1, keepdims=True)                       # (C, 1)
    gmsq = jnp.sum(jnp.dot(p, x * x, preferred_element_type=jnp.float32),
                   axis=1, keepdims=True)                        # (C, 1)
    var = jnp.maximum(gmsq - gmean * gmean, 0.0)
    rstd = lax.rsqrt(var + eps)
    xhat = (x - gmean) * (rstd * gamma_ref[...]) + beta_ref[...]
    return xhat * (1.0 / (1.0 + jnp.exp(-xhat)))                 # SiLU (f32)


def _neighbor(a, pos, k, col_ok):
    """Return b with b[:, m] = a[:, m + k] where (m + k) is a valid in-image
    neighbor, else 0.  The validity mask is derived from a rolled index vector,
    which (a) handles the image borders and (b) makes the helper independent of
    the rotation-direction convention of the hardware rotate (with a pinned
    convention one roll per tap would suffice; the extra rolls ride the
    otherwise idle XLU slot)."""
    hw = a.shape[-1]
    want = pos + k
    s_a = (-k) % hw
    s_b = k % hw
    shifts = (s_a,) if s_a == s_b else (s_a, s_b)
    out = jnp.zeros_like(a)
    for s in shifts:
        r = a if s == 0 else pltpu.roll(a, s, axis=1)
        p = pos if s == 0 else pltpu.roll(pos, s, axis=1)
        m = p == want
        if col_ok is not None:
            m = jnp.logical_and(m, col_ok)
        out = out + jnp.where(m, r, 0.0)
    return out


def _conv3x3_flat(a, w_ref, H, W):
    """3x3 'same' convolution on a channels-major flattened image.

    a:     (Cin, H*W) activation of one image (f32).
    w_ref: (9, Cout, Cin) tap weights; tap t=(dy+1)*3+(dx+1) holds
           torch_weight[:, :, dy+1, dx+1].
    Returns (Cout, H*W) f32.  Each tap is one lane-dense MXU matmul.
    """
    hw = H * W
    cout = w_ref.shape[1]
    pos = lax.broadcasted_iota(jnp.int32, (1, hw), 1)
    col = pos % W
    acc = jnp.zeros((cout, hw), jnp.float32)
    t = 0
    for dy in (-1, 0, 1):
        for dx in (-1, 0, 1):
            if dy == 0 and dx == 0:
                shifted = a
            else:
                if dx == -1:
                    col_ok = col >= 1
                elif dx == 1:
                    col_ok = col <= W - 2
                else:
                    col_ok = None
                shifted = _neighbor(a, pos, dy * W + dx, col_ok)
            acc = acc + jnp.dot(w_ref[t], shifted,
                                preferred_element_type=jnp.float32)
            t += 1
    return acc


# ----------------------------------------------------------------------------
# Kernels
# ----------------------------------------------------------------------------
def _temb_proj_kernel(t_ref, w_ref, b_ref, o_ref):
    """o = silu(temb) @ W^T + (temb_bias + conv1_bias)   -- tiny, one shot."""
    t = t_ref[...].astype(jnp.float32)
    ts = t * (1.0 / (1.0 + jnp.exp(-t)))
    o_ref[...] = (jnp.dot(ts, w_ref[...], preferred_element_type=jnp.float32)
                  + b_ref[...]).astype(o_ref.dtype)


def _gn_silu_conv_temb_kernel(x_ref, g_ref, b_ref, p_ref, w_ref, add_ref,
                              o_ref, *, H, W):
    """h = conv3x3(silu(GN1(x))) + (conv1_bias + temb_proj)   (one image)."""
    x = x_ref[...].astype(jnp.float32)
    a = _group_norm_silu(x, p_ref, g_ref, b_ref, 1e-6)
    y = _conv3x3_flat(a, w_ref, H, W)
    o_ref[...] = (y + add_ref[...]).astype(o_ref.dtype)


def _gn_silu_conv_residual_kernel(h_ref, x_ref, g_ref, b_ref, p_ref, w_ref,
                                  bias_ref, wsc_ref, bsc_ref, o_ref, *, H, W):
    """out = shortcut(x) + conv3x3(silu(GN2(h))) + conv2_bias   (one image).
    Dropout(p=0.0) in eval mode is the identity."""
    h = h_ref[...].astype(jnp.float32)
    a = _group_norm_silu(h, p_ref, g_ref, b_ref, 1e-6)
    y = _conv3x3_flat(a, w_ref, H, W) + bias_ref[...]
    sc = jnp.dot(wsc_ref[...], x_ref[...].astype(jnp.float32),
                 preferred_element_type=jnp.float32) + bsc_ref[...]
    o_ref[...] = (y + sc).astype(o_ref.dtype)


# ----------------------------------------------------------------------------
# pallas_call wrappers
# ----------------------------------------------------------------------------
def _temb_projection(temb, w_t, bias_row):
    n, t = temb.shape
    cout = w_t.shape[1]
    return pl.pallas_call(
        _temb_proj_kernel,
        out_shape=jax.ShapeDtypeStruct((n, cout), jnp.float32),
        grid=(1,),
        in_specs=[
            pl.BlockSpec((n, t), lambda i: (0, 0)),
            pl.BlockSpec((t, cout), lambda i: (0, 0)),
            pl.BlockSpec((1, cout), lambda i: (0, 0)),
        ],
        out_specs=pl.BlockSpec((n, cout), lambda i: (0, 0)),
    )(temb, w_t, bias_row)


def _part1(x2, gamma, beta, pmat, w_taps, add_col, hgt, wdt):
    n, cin, hw = x2.shape
    cout = w_taps.shape[1]
    kernel = functools.partial(_gn_silu_conv_temb_kernel, H=hgt, W=wdt)
    return pl.pallas_call(
        kernel,
        out_shape=jax.ShapeDtypeStruct((n, cout, hw), jnp.float32),
        grid=(n,),
        in_specs=[
            pl.BlockSpec((None, cin, hw), lambda i: (i, 0, 0)),   # x
            pl.BlockSpec((cin, 1), lambda i: (0, 0)),             # GN1 gamma
            pl.BlockSpec((cin, 1), lambda i: (0, 0)),             # GN1 beta
            pl.BlockSpec((cin, cin), lambda i: (0, 0)),           # group matrix
            pl.BlockSpec((9, cout, cin), lambda i: (0, 0, 0)),    # conv1 taps
            pl.BlockSpec((None, cout, 1), lambda i: (i, 0, 0)),   # bias+temb add
        ],
        out_specs=pl.BlockSpec((None, cout, hw), lambda i: (i, 0, 0)),
        compiler_params=pltpu.CompilerParams(dimension_semantics=("parallel",)),
    )(x2, gamma, beta, pmat, w_taps, add_col)


def _part2(h2, x2, gamma, beta, pmat, w_taps, conv_bias, w_sc, b_sc, hgt, wdt):
    n, cout, hw = h2.shape
    cin = x2.shape[1]
    kernel = functools.partial(_gn_silu_conv_residual_kernel, H=hgt, W=wdt)
    return pl.pallas_call(
        kernel,
        out_shape=jax.ShapeDtypeStruct((n, cout, hw), jnp.float32),
        grid=(n,),
        in_specs=[
            pl.BlockSpec((None, cout, hw), lambda i: (i, 0, 0)),  # h
            pl.BlockSpec((None, cin, hw), lambda i: (i, 0, 0)),   # x (shortcut)
            pl.BlockSpec((cout, 1), lambda i: (0, 0)),            # GN2 gamma
            pl.BlockSpec((cout, 1), lambda i: (0, 0)),            # GN2 beta
            pl.BlockSpec((cout, cout), lambda i: (0, 0)),         # group matrix
            pl.BlockSpec((9, cout, cout), lambda i: (0, 0, 0)),   # conv2 taps
            pl.BlockSpec((cout, 1), lambda i: (0, 0)),            # conv2 bias
            pl.BlockSpec((cout, cin), lambda i: (0, 0)),          # shortcut W
            pl.BlockSpec((cout, 1), lambda i: (0, 0)),            # shortcut b
        ],
        out_specs=pl.BlockSpec((None, cout, hw), lambda i: (i, 0, 0)),
        compiler_params=pltpu.CompilerParams(dimension_semantics=("parallel",)),
    )(h2, x2, gamma, beta, pmat, w_taps, conv_bias, w_sc, b_sc)


# ----------------------------------------------------------------------------
# Forward pass (glue: only reshapes / tiny weight re-layouts)
# ----------------------------------------------------------------------------
def _group_matrix(c, groups, hw):
    gs = c // groups
    gidx = jnp.arange(c) // gs
    same = (gidx[:, None] == gidx[None, :]).astype(jnp.float32)
    return same / float(gs * hw)


def resnet_block_forward(x, temb, params, *, num_groups=32):
    n, cin, hgt, wdt = x.shape
    hw = hgt * wdt
    cout = params["conv1_w"].shape[0]

    # Tiny weight re-layouts (torch OIHW -> 9 taps of (Cout, Cin)).
    w1_taps = jnp.transpose(params["conv1_w"], (2, 3, 0, 1)).reshape(9, cout, cin)
    w2_taps = jnp.transpose(params["conv2_w"], (2, 3, 0, 1)).reshape(9, cout, cout)
    g1 = params["norm1_g"].reshape(cin, 1)
    b1 = params["norm1_b"].reshape(cin, 1)
    g2 = params["norm2_g"].reshape(cout, 1)
    b2 = params["norm2_b"].reshape(cout, 1)
    p1 = _group_matrix(cin, num_groups, hw)
    p2 = _group_matrix(cout, num_groups, hw)
    conv2_b = params["conv2_b"].reshape(cout, 1)

    if cin != cout:
        wsc = params["nin_w"].reshape(cout, cin)
        bsc = params["nin_b"].reshape(cout, 1)
    else:
        wsc = jnp.eye(cout, dtype=jnp.float32)          # identity shortcut
        bsc = jnp.zeros((cout, 1), jnp.float32)

    x2 = x.reshape(n, cin, hw)

    # conv1 bias + temb projection folded into one per-(n, channel) add vector.
    if temb is not None:
        add = _temb_projection(
            temb, jnp.transpose(params["temb_w"]),
            (params["temb_b"] + params["conv1_b"]).reshape(1, cout))
    else:
        add = jnp.broadcast_to(params["conv1_b"].reshape(1, cout), (n, cout))
    add_col = add.reshape(n, cout, 1)

    h = _part1(x2, g1, b1, p1, w1_taps, add_col, hgt, wdt)
    out = _part2(h, x2, g2, b2, p2, w2_taps, conv2_b, wsc, bsc, hgt, wdt)
    return out.reshape(n, cout, hgt, wdt)


# ----------------------------------------------------------------------------
# Pure-JAX reference (for validation only)
# ----------------------------------------------------------------------------
def resnet_block_reference(x, temb, params, *, num_groups=32):
    hp = lax.Precision.HIGHEST

    def group_norm(v, gamma, beta):
        n, c, hh, ww = v.shape
        vg = v.reshape(n, num_groups, (c // num_groups) * hh * ww)
        mean = vg.mean(axis=2, keepdims=True)
        var = vg.var(axis=2, keepdims=True)
        vn = ((vg - mean) / jnp.sqrt(var + 1e-6)).reshape(n, c, hh, ww)
        return vn * gamma.reshape(1, c, 1, 1) + beta.reshape(1, c, 1, 1)

    def silu(v):
        return v * jax.nn.sigmoid(v)

    def conv(v, w, b, padding):
        out = lax.conv_general_dilated(
            v, w, window_strides=(1, 1), padding=padding,
            dimension_numbers=("NCHW", "OIHW", "NCHW"), precision=hp)
        return out + b.reshape(1, -1, 1, 1)

    cin = x.shape[1]
    cout = params["conv1_w"].shape[0]
    h = conv(silu(group_norm(x, params["norm1_g"], params["norm1_b"])),
             params["conv1_w"], params["conv1_b"], "SAME")
    if temb is not None:
        t = jnp.dot(silu(temb), params["temb_w"].T, precision=hp) + params["temb_b"]
        h = h + t[:, :, None, None]
    h = conv(silu(group_norm(h, params["norm2_g"], params["norm2_b"])),
             params["conv2_w"], params["conv2_b"], "SAME")
    if cin != cout:
        x = conv(x, params["nin_w"], params["nin_b"], "VALID")
    return x + h


# ----------------------------------------------------------------------------
# Deterministic parameters
# ----------------------------------------------------------------------------
def make_params(key, in_channels, out_channels, temb_channels):
    ks = jax.random.split(key, 12)

    def w(k, shape, scale):
        return scale * jax.random.normal(k, shape, jnp.float32)

    p = {
        "norm1_g": 1.0 + 0.05 * jax.random.normal(ks[0], (in_channels,), jnp.float32),
        "norm1_b": 0.05 * jax.random.normal(ks[1], (in_channels,), jnp.float32),
        "conv1_w": w(ks[2], (out_channels, in_channels, 3, 3), 0.08),
        "conv1_b": w(ks[3], (out_channels,), 0.05),
        "temb_w": w(ks[4], (out_channels, temb_channels), 0.05),
        "temb_b": w(ks[5], (out_channels,), 0.05),
        "norm2_g": 1.0 + 0.05 * jax.random.normal(ks[6], (out_channels,), jnp.float32),
        "norm2_b": 0.05 * jax.random.normal(ks[7], (out_channels,), jnp.float32),
        "conv2_w": w(ks[8], (out_channels, out_channels, 3, 3), 0.06),
        "conv2_b": w(ks[9], (out_channels,), 0.05),
    }
    if in_channels != out_channels:
        p["nin_w"] = w(ks[10], (out_channels, in_channels, 1, 1), 0.1)
        p["nin_b"] = w(ks[11], (out_channels,), 0.05)
    return p


if __name__ == "__main__":
    key = jax.random.PRNGKey(0)
    kx, kt, kp = jax.random.split(key, 3)

    # Small shapes consistent with the module (GroupNorm requires C % 32 == 0).
    batch, in_channels, out_channels, spatial, temb_channels = 2, 32, 64, 16, 128
    x = jax.random.normal(kx, (batch, in_channels, spatial, spatial), jnp.float32)
    temb = jax.random.normal(kt, (batch, temb_channels), jnp.float32)
    params = make_params(kp, in_channels, out_channels, temb_channels)

    fwd = jax.jit(resnet_block_forward)
    out = fwd(x, temb, params)
    jax.block_until_ready(out)

    assert out.shape == (batch, out_channels, spatial, spatial), out.shape
    assert out.dtype == jnp.float32

    ref = resnet_block_reference(x, temb, params, num_groups=32)
    assert jnp.allclose(out, ref, rtol=3e-2, atol=3e-2), \
        float(jnp.max(jnp.abs(out - ref)))

    print("KERNEL_OK")
</pallas_src>

<mosaic_0001>
module attributes {stable_mosaic.version = 11 : i64} {
  func.func @_temb_proj_kernel(%arg0: i32, %arg1: memref<2x128xf32, #tpu.memory_space<vmem>>, %arg2: memref<128x64xf32, #tpu.memory_space<vmem>>, %arg3: memref<1x64xf32, #tpu.memory_space<vmem>>, %arg4: memref<2x64xf32, #tpu.memory_space<vmem>>) attributes {dimension_semantics = [#tpu.dimension_semantics<arbitrary>], iteration_bounds = array<i64: 1>, scalar_prefetch = 0 : i64, scratch_operands = 0 : i64, tpu.core_type = #tpu.core_type<tc>, window_params = [{pipeline_mode = #tpu.pipeline_mode<synchronous>, transform_indices = @transform_0, window_bounds = array<i64: 2, 128>}, {pipeline_mode = #tpu.pipeline_mode<synchronous>, transform_indices = @transform_1, window_bounds = array<i64: 128, 64>}, {pipeline_mode = #tpu.pipeline_mode<synchronous>, transform_indices = @transform_2, window_bounds = array<i64: 1, 64>}, {pipeline_mode = #tpu.pipeline_mode<synchronous>, transform_indices = @transform_3, window_bounds = array<i64: 2, 64>}]} {
    %c0 = arith.constant 0 : index
    %c0_0 = arith.constant 0 : index
    %0 = vector.load %arg1[%c0, %c0_0] : memref<2x128xf32, #tpu.memory_space<vmem>>, vector<2x128xf32>
    %cst = arith.constant 0.000000e+00 : f32
    %1 = vector.broadcast %cst : f32 to vector<2x128xf32>
    %2 = arith.subf %1, %0 : vector<2x128xf32>
    %3 = math.exp %2 : vector<2x128xf32>
    %cst_1 = arith.constant 1.000000e+00 : f32
    %4 = vector.broadcast %cst_1 : f32 to vector<2x128xf32>
    %5 = arith.addf %4, %3 : vector<2x128xf32>
    %cst_2 = arith.constant 1.000000e+00 : f32
    %6 = vector.broadcast %cst_2 : f32 to vector<2x128xf32>
    %7 = arith.divf %6, %5 : vector<2x128xf32>
    %8 = arith.mulf %0, %7 : vector<2x128xf32>
    %c0_3 = arith.constant 0 : index
    %c0_4 = arith.constant 0 : index
    %9 = vector.load %arg2[%c0_3, %c0_4] : memref<128x64xf32, #tpu.memory_space<vmem>>, vector<128x64xf32>
    %cst_5 = arith.constant dense<0.000000e+00> : vector<2x64xf32>
    %10 = tpu.matmul %8, %9, %cst_5 {dimension_numbers = #tpu.dot_dimension_numbers<[1], [0], [0], [1], [0, 0, 1, 1], [], []>} : vector<2x128xf32>, vector<128x64xf32>, vector<2x64xf32> -> vector<2x64xf32>
    %c0_6 = arith.constant 0 : index
    %c0_7 = arith.constant 0 : index
    %11 = vector.load %arg3[%c0_6, %c0_7] : memref<1x64xf32, #tpu.memory_space<vmem>>, vector<1x64xf32>
    %12 = vector.broadcast %11 : vector<1x64xf32> to vector<2x64xf32>
    %13 = arith.addf %10, %12 : vector<2x64xf32>
    %c0_8 = arith.constant 0 : index
    %c0_9 = arith.constant 0 : index
    %14 = vector.load %arg4[%c0_8, %c0_9] : memref<2x64xf32, #tpu.memory_space<vmem>>, vector<2x64xf32>
    tpu.vector_store %arg4[%c0_8, %c0_9], %13 {strides = array<i32>} : memref<2x64xf32, #tpu.memory_space<vmem>>, vector<2x64xf32>,
    return
  }
  func.func @transform_0(%arg0: i32) -> (i32, i32) {
    %c0_i32 = arith.constant 0 : i32
    %c0_i32_0 = arith.constant 0 : i32
    %c0_i32_1 = arith.constant 0 : i32
    return %c0_i32, %c0_i32_0 : i32, i32
  }
  func.func @transform_1(%arg0: i32) -> (i32, i32) {
    %c0_i32 = arith.constant 0 : i32
    %c0_i32_0 = arith.constant 0 : i32
    %c0_i32_1 = arith.constant 0 : i32
    return %c0_i32, %c0_i32_0 : i32, i32
  }
  func.func @transform_2(%arg0: i32) -> (i32, i32) {
    %c0_i32 = arith.constant 0 : i32
    %c0_i32_0 = arith.constant 0 : i32
    %c0_i32_1 = arith.constant 0 : i32
    return %c0_i32, %c0_i32_0 : i32, i32
  }
  func.func @transform_3(%arg0: i32) -> (i32, i32) {
    %c0_i32 = arith.constant 0 : i32
    %c0_i32_0 = arith.constant 0 : i32
    %c0_i32_1 = arith.constant 0 : i32
    return %c0_i32, %c0_i32_0 : i32, i32
  }
}

module attributes {stable_mosaic.version = 11 : i64} {
  func.func @_gn_silu_conv_temb_kernel(%arg0: i32, %arg1: memref<1x32x256xf32, #tpu.memory_space<vmem>>, %arg2: memref<32x1xf32, #tpu.memory_space<vmem>>, %arg3: memref<32x1xf32, #tpu.memory_space<vmem>>, %arg4: memref<32x32xf32, #tpu.memory_space<vmem>>, %arg5: memref<9x64x32xf32, #tpu.memory_space<vmem>>, %arg6: memref<1x64x1xf32, #tpu.memory_space<vmem>>, %arg7: memref<1x64x256xf32, #tpu.memory_space<vmem>>) attributes {dimension_semantics = [#tpu.dimension_semantics<parallel>], iteration_bounds = array<i64: 2>, scalar_prefetch = 0 : i64, scratch_operands = 0 : i64, tpu.core_type = #tpu.core_type<tc>, window_params = [{transform_indices = @transform_0, window_bounds = array<i64: 1, 32, 256>}, {pipeline_mode = #tpu.pipeline_mode<synchronous>, transform_indices = @transform_1, window_bounds = array<i64: 32, 1>}, {pipeline_mode = #tpu.pipeline_mode<synchronous>, transform_indices = @transform_2, window_bounds = array<i64: 32, 1>}, {pipeline_mode = #tpu.pipeline_mode<synchronous>, transform_indices = @transform_3, window_bounds = array<i64: 32, 32>}, {pipeline_mode = #tpu.pipeline_mode<synchronous>, transform_indices = @transform_4, window_bounds = array<i64: 9, 64, 32>}, {transform_indices = @transform_5, window_bounds = array<i64: 1, 64, 1>}, {transform_indices = @transform_6, window_bounds = array<i64: 1, 64, 256>}]} {
    %c0 = arith.constant 0 : index
    %c0_0 = arith.constant 0 : index
    %c0_1 = arith.constant 0 : index
    %0 = vector.load %arg1[%c0, %c0_0, %c0_1] : memref<1x32x256xf32, #tpu.memory_space<vmem>>, vector<1x32x256xf32>
    %1 = vector.shape_cast %0 : vector<1x32x256xf32> to vector<32x256xf32>
    %c0_2 = arith.constant 0 : index
    %c0_3 = arith.constant 0 : index
    %2 = vector.load %arg4[%c0_2, %c0_3] : memref<32x32xf32, #tpu.memory_space<vmem>>, vector<32x32xf32>
    %cst = arith.constant dense<0.000000e+00> : vector<32x256xf32>
    %3 = tpu.matmul %2, %1, %cst {dimension_numbers = #tpu.dot_dimension_numbers<[1], [0], [0], [1], [0, 0, 1, 1], [], []>} : vector<32x32xf32>, vector<32x256xf32>, vector<32x256xf32> -> vector<32x256xf32>
    %cst_4 = arith.constant dense<0.000000e+00> : vector<32xf32>
    %4 = vector.multi_reduction <add>, %3, %cst_4 [1] : vector<32x256xf32> to vector<32xf32>
    %5 = vector.shape_cast %4 : vector<32xf32> to vector<32x1xf32>
    %6 = arith.mulf %1, %1 : vector<32x256xf32>
    %cst_5 = arith.constant dense<0.000000e+00> : vector<32x256xf32>
    %7 = tpu.matmul %2, %6, %cst_5 {dimension_numbers = #tpu.dot_dimension_numbers<[1], [0], [0], [1], [0, 0, 1, 1], [], []>} : vector<32x32xf32>, vector<32x256xf32>, vector<32x256xf32> -> vector<32x256xf32>
    %cst_6 = arith.constant dense<0.000000e+00> : vector<32xf32>
    %8 = vector.multi_reduction <add>, %7, %cst_6 [1] : vector<32x256xf32> to vector<32xf32>
    %9 = vector.shape_cast %8 : vector<32xf32> to vector<32x1xf32>
    %10 = arith.mulf %5, %5 : vector<32x1xf32>
    %11 = arith.subf %9, %10 : vector<32x1xf32>
    %cst_7 = arith.constant 0.000000e+00 : f32
    %12 = vector.broadcast %cst_7 : f32 to vector<32x1xf32>
    %13 = arith.maximumf %11, %12 : vector<32x1xf32>
    %cst_8 = arith.constant 9.99999997E-7 : f32
    %14 = vector.broadcast %cst_8 : f32 to vector<32x1xf32>
    %15 = arith.addf %13, %14 : vector<32x1xf32>
    %16 = math.rsqrt %15 : vector<32x1xf32>
    %17 = vector.broadcast %5 : vector<32x1xf32> to vector<32x256xf32>
    %18 = arith.subf %1, %17 : vector<32x256xf32>
    %c0_9 = arith.constant 0 : index
    %c0_10 = arith.constant 0 : index
    %19 = vector.load %arg2[%c0_9, %c0_10] : memref<32x1xf32, #tpu.memory_space<vmem>>, vector<32x1xf32>
    %20 = arith.mulf %16, %19 : vector<32x1xf32>
    %21 = vector.broadcast %20 : vector<32x1xf32> to vector<32x256xf32>
    %22 = arith.mulf %18, %21 : vector<32x256xf32>
    %c0_11 = arith.constant 0 : index
    %c0_12 = arith.constant 0 : index
    %23 = vector.load %arg3[%c0_11, %c0_12] : memref<32x1xf32, #tpu.memory_space<vmem>>, vector<32x1xf32>
    %24 = vector.broadcast %23 : vector<32x1xf32> to vector<32x256xf32>
    %25 = arith.addf %22, %24 : vector<32x256xf32>
    %cst_13 = arith.constant 0.000000e+00 : f32
    %26 = vector.broadcast %cst_13 : f32 to vector<32x256xf32>
    %27 = arith.subf %26, %25 : vector<32x256xf32>
    %28 = math.exp %27 : vector<32x256xf32>
    %cst_14 = arith.constant 1.000000e+00 : f32
    %29 = vector.broadcast %cst_14 : f32 to vector<32x256xf32>
    %30 = arith.addf %29, %28 : vector<32x256xf32>
    %cst_15 = arith.constant 1.000000e+00 : f32
    %31 = vector.broadcast %cst_15 : f32 to vector<32x256xf32>
    %32 = arith.divf %31, %30 : vector<32x256xf32>
    %33 = arith.mulf %25, %32 : vector<32x256xf32>
    %34 = tpu.iota {dimensions = array<i32: 1>} : vector<1x256xi32>
    %c16_i32 = arith.constant 16 : i32
    %c0_i32 = arith.constant 0 : i32
    %35 = arith.cmpi eq, %c16_i32, %c0_i32 : i32
    %c1_i32 = arith.constant 1 : i32
    %36 = arith.select %35, %c1_i32, %c16_i32 : i32
    %37 = vector.broadcast %36 : i32 to vector<1x256xi32>
    %38 = arith.remsi %34, %37 : vector<1x256xi32>
    %c0_i32_16 = arith.constant 0 : i32
    %39 = vector.broadcast %c0_i32_16 : i32 to vector<1x256xi32>
    %40 = arith.cmpi ne, %38, %39 : vector<1x256xi32>
    %c0_i32_17 = arith.constant 0 : i32
    %41 = vector.broadcast %c0_i32_17 : i32 to vector<1x256xi32>
    %42 = arith.cmpi slt, %38, %41 : vector<1x256xi32>
    %c0_i32_18 = arith.constant 0 : i32
    %43 = arith.cmpi slt, %36, %c0_i32_18 : i32
    %44 = vector.broadcast %43 : i1 to vector<1x256xi1>
    %45 = vector.broadcast %44 : vector<1x256xi1> to vector<1x256xi1>
    %46 = arith.xori %42, %45 : vector<1x256xi1>
    %47 = arith.andi %46, %40 : vector<1x256xi1>
    %48 = vector.broadcast %36 : i32 to vector<1x256xi32>
    %49 = arith.addi %38, %48 : vector<1x256xi32>
    %50 = arith.select %47, %49, %38 : vector<1x256xi1>, vector<1x256xi32>
    %cst_19 = arith.constant 0.000000e+00 : f32
    %51 = vector.broadcast %cst_19 : f32 to vector<64x256xf32>
    %c1_i32_20 = arith.constant 1 : i32
    %52 = vector.broadcast %c1_i32_20 : i32 to vector<1x256xi32>
    %53 = arith.cmpi sge, %50, %52 : vector<1x256xi32>
    %c-17_i32 = arith.constant -17 : i32
    %54 = vector.broadcast %c-17_i32 : i32 to vector<1x256xi32>
    %55 = arith.addi %34, %54 : vector<1x256xi32>
    %cst_21 = arith.constant 0.000000e+00 : f32
    %56 = vector.broadcast %cst_21 : f32 to vector<32x256xf32>
    %c17_i32 = arith.constant 17 : i32
    %57 = tpu.dynamic_rotate %33 by %c17_i32 dim 1 : vector<32x256xf32>, i32 -> vector<32x256xf32>
    %c17_i32_22 = arith.constant 17 : i32
    %58 = tpu.dynamic_rotate %34 by %c17_i32_22 dim 1 : vector<1x256xi32>, i32 -> vector<1x256xi32>
    %59 = arith.cmpi eq, %58, %55 : vector<1x256xi32>
    %60 = arith.andi %59, %53 : vector<1x256xi1>
    %cst_23 = arith.constant 0.000000e+00 : f32
    %61 = vector.shape_cast %60 : vector<1x256xi1> to vector<1x256xi1>
    %62 = vector.broadcast %61 : vector<1x256xi1> to vector<32x256xi1>
    %63 = vector.broadcast %cst_23 : f32 to vector<32x256xf32>
    %64 = arith.select %62, %57, %63 : vector<32x256xi1>, vector<32x256xf32>
    %65 = arith.addf %56, %64 : vector<32x256xf32>
    %c239_i32 = arith.constant 239 : i32
    %66 = tpu.dynamic_rotate %33 by %c239_i32 dim 1 : vector<32x256xf32>, i32 -> vector<32x256xf32>
    %c239_i32_24 = arith.constant 239 : i32
    %67 = tpu.dynamic_rotate %34 by %c239_i32_24 dim 1 : vector<1x256xi32>, i32 -> vector<1x256xi32>
    %68 = arith.cmpi eq, %67, %55 : vector<1x256xi32>
    %69 = arith.andi %68, %53 : vector<1x256xi1>
    %cst_25 = arith.constant 0.000000e+00 : f32
    %70 = vector.shape_cast %69 : vector<1x256xi1> to vector<1x256xi1>
    %71 = vector.broadcast %70 : vector<1x256xi1> to vector<32x256xi1>
    %72 = vector.broadcast %cst_25 : f32 to vector<32x256xf32>
    %73 = arith.select %71, %66, %72 : vector<32x256xi1>, vector<32x256xf32>
    %74 = arith.addf %65, %73 : vector<32x256xf32>
    %c0_26 = arith.constant 0 : index
    %c0_27 = arith.constant 0 : index
    %c0_28 = arith.constant 0 : index
    %75 = vector.load %arg5[%c0_26, %c0_27, %c0_28] : memref<9x64x32xf32, #tpu.memory_space<vmem>>, vector<1x64x32xf32>
    %76 = vector.shape_cast %75 : vector<1x64x32xf32> to vector<64x32xf32>
    %cst_29 = arith.constant dense<0.000000e+00> : vector<64x256xf32>
    %77 = tpu.matmul %76, %74, %cst_29 {dimension_numbers = #tpu.dot_dimension_numbers<[1], [0], [0], [1], [0, 0, 1, 1], [], []>} : vector<64x32xf32>, vector<32x256xf32>, vector<64x256xf32> -> vector<64x256xf32>
    %78 = arith.addf %51, %77 : vector<64x256xf32>
    %c-16_i32 = arith.constant -16 : i32
    %79 = vector.broadcast %c-16_i32 : i32 to vector<1x256xi32>
    %80 = arith.addi %34, %79 : vector<1x256xi32>
    %cst_30 = arith.constant 0.000000e+00 : f32
    %81 = vector.broadcast %cst_30 : f32 to vector<32x256xf32>
    %c16_i32_31 = arith.constant 16 : i32
    %82 = tpu.dynamic_rotate %33 by %c16_i32_31 dim 1 : vector<32x256xf32>, i32 -> vector<32x256xf32>
    %c16_i32_32 = arith.constant 16 : i32
    %83 = tpu.dynamic_rotate %34 by %c16_i32_32 dim 1 : vector<1x256xi32>, i32 -> vector<1x256xi32>
    %84 = arith.cmpi eq, %83, %80 : vector<1x256xi32>
    %cst_33 = arith.constant 0.000000e+00 : f32
    %85 = vector.shape_cast %84 : vector<1x256xi1> to vector<1x256xi1>
    %86 = vector.broadcast %85 : vector<1x256xi1> to vector<32x256xi1>
    %87 = vector.broadcast %cst_33 : f32 to vector<32x256xf32>
    %88 = arith.select %86, %82, %87 : vector<32x256xi1>, vector<32x256xf32>
    %89 = arith.addf %81, %88 : vector<32x256xf32>
    %c240_i32 = arith.constant 240 : i32
    %90 = tpu.dynamic_rotate %33 by %c240_i32 dim 1 : vector<32x256xf32>, i32 -> vector<32x256xf32>
    %c240_i32_34 = arith.constant 240 : i32
    %91 = tpu.dynamic_rotate %34 by %c240_i32_34 dim 1 : vector<1x256xi32>, i32 -> vector<1x256xi32>
    %92 = arith.cmpi eq, %91, %80 : vector<1x256xi32>
    %cst_35 = arith.constant 0.000000e+00 : f32
    %93 = vector.shape_cast %92 : vector<1x256xi1> to vector<1x256xi1>
    %94 = vector.broadcast %93 : vector<1x256xi1> to vector<32x256xi1>
    %95 = vector.broadcast %cst_35 : f32 to vector<32x256xf32>
    %96 = arith.select %94, %90, %95 : vector<32x256xi1>, vector<32x256xf32>
    %97 = arith.addf %89, %96 : vector<32x256xf32>
    %c1 = arith.constant 1 : index
    %c0_36 = arith.constant 0 : index
    %c0_37 = arith.constant 0 : index
    %98 = vector.load %arg5[%c1, %c0_36, %c0_37] : memref<9x64x32xf32, #tpu.memory_space<vmem>>, vector<1x64x32xf32>
    %99 = vector.shape_cast %98 : vector<1x64x32xf32> to vector<64x32xf32>
    %cst_38 = arith.constant dense<0.000000e+00> : vector<64x256xf32>
    %100 = tpu.matmul %99, %97, %cst_38 {dimension_numbers = #tpu.dot_dimension_numbers<[1], [0], [0], [1], [0, 0, 1, 1], [], []>} : vector<64x32xf32>, vector<32x256xf32>, vector<64x256xf32> -> vector<64x256xf32>
    %101 = arith.addf %78, %100 : vector<64x256xf32>
    %c14_i32 = arith.constant 14 : i32
    %102 = vector.broadcast %c14_i32 : i32 to vector<1x256xi32>
    %103 = arith.cmpi sle, %50, %102 : vector<1x256xi32>
    %c-15_i32 = arith.constant -15 : i32
    %104 = vector.broadcast %c-15_i32 : i32 to vector<1x256xi32>
    %105 = arith.addi %34, %104 : vector<1x256xi32>
    %cst_39 = arith.constant 0.000000e+00 : f32
    %106 = vector.broadcast %cst_39 : f32 to vector<32x256xf32>
    %c15_i32 = arith.constant 15 : i32
    %107 = tpu.dynamic_rotate %33 by %c15_i32 dim 1 : vector<32x256xf32>, i32 -> vector<32x256xf32>
    %c15_i32_40 = arith.constant 15 : i32
    %108 = tpu.dynamic_rotate %34 by %c15_i32_40 dim 1 : vector<1x256xi32>, i32 -> vector<1x256xi32>
    %109 = arith.cmpi eq, %108, %105 : vector<1x256xi32>
    %110 = arith.andi %109, %103 : vector<1x256xi1>
    %cst_41 = arith.constant 0.000000e+00 : f32
    %111 = vector.shape_cast %110 : vector<1x256xi1> to vector<1x256xi1>
    %112 = vector.broadcast %111 : vector<1x256xi1> to vector<32x256xi1>
    %113 = vector.broadcast %cst_41 : f32 to vector<32x256xf32>
    %114 = arith.select %112, %107, %113 : vector<32x256xi1>, vector<32x256xf32>
    %115 = arith.addf %106, %114 : vector<32x256xf32>
    %c241_i32 = arith.constant 241 : i32
    %116 = tpu.dynamic_rotate %33 by %c241_i32 dim 1 : vector<32x256xf32>, i32 -> vector<32x256xf32>
    %c241_i32_42 = arith.constant 241 : i32
    %117 = tpu.dynamic_rotate %34 by %c241_i32_42 dim 1 : vector<1x256xi32>, i32 -> vector<1x256xi32>
    %118 = arith.cmpi eq, %117, %105 : vector<1x256xi32>
    %119 = arith.andi %118, %103 : vector<1x256xi1>
    %cst_43 = arith.constant 0.000000e+00 : f32
    %120 = vector.shape_cast %119 : vector<1x256xi1> to vector<1x256xi1>
    %121 = vector.broadcast %120 : vector<1x256xi1> to vector<32x256xi1>
    %122 = vector.broadcast %cst_43 : f32 to vector<32x256xf32>
    %123 = arith.select %121, %116, %122 : vector<32x256xi1>, vector<32x256xf32>
    %124 = arith.addf %115, %123 : vector<32x256xf32>
    %c2 = arith.constant 2 : index
    %c0_44 = arith.constant 0 : index
    %c0_45 = arith.constant 0 : index
    %125 = vector.load %arg5[%c2, %c0_44, %c0_45] : memref<9x64x32xf32, #tpu.memory_space<vmem>>, vector<1x64x32xf32>
    %126 = vector.shape_cast %125 : vector<1x64x32xf32> to vector<64x32xf32>
    %cst_46 = arith.constant dense<0.000000e+00> : vector<64x256xf32>
    %127 = tpu.matmul %126, %124, %cst_46 {dimension_numbers = #tpu.dot_dimension_numbers<[1], [0], [0], [1], [0, 0, 1, 1], [], []>} : vector<64x32xf32>, vector<32x256xf32>, vector<64x256xf32> -> vector<64x256xf32>
    %128 = arith.addf %101, %127 : vector<64x256xf32>
    %c1_i32_47 = arith.constant 1 : i32
    %129 = vector.broadcast %c1_i32_47 : i32 to vector<1x256xi32>
    %130 = arith.cmpi sge, %50, %129 : vector<1x256xi32>
    %c-1_i32 = arith.constant -1 : i32
    %131 = vector.broadcast %c-1_i32 : i32 to vector<1x256xi32>
    %132 = arith.addi %34, %131 : vector<1x256xi32>
    %cst_48 = arith.constant 0.000000e+00 : f32
    %133 = vector.broadcast %cst_48 : f32 to vector<32x256xf32>
    %c1_i32_49 = arith.constant 1 : i32
    %134 = tpu.dynamic_rotate %33 by %c1_i32_49 dim 1 : vector<32x256xf32>, i32 -> vector<32x256xf32>
    %c1_i32_50 = arith.constant 1 : i32
    %135 = tpu.dynamic_rotate %34 by %c1_i32_50 dim 1 : vector<1x256xi32>, i32 -> vector<1x256xi32>
    %136 = arith.cmpi eq, %135, %132 : vector<1x256xi32>
    %137 = arith.andi %136, %130 : vector<1x256xi1>
    %cst_51 = arith.constant 0.000000e+00 : f32
    %138 = vector.shape_cast %137 : vector<1x256xi1> to vector<1x256xi1>
    %139 = vector.broadcast %138 : vector<1x256xi1> to vector<32x256xi1>
    %140 = vector.broadcast %cst_51 : f32 to vector<32x256xf32>
    %141 = arith.select %139, %134, %140 : vector<32x256xi1>, vector<32x256xf32>
    %142 = arith.addf %133, %141 : vector<32x256xf32>
    %c255_i32 = arith.constant 255 : i32
    %143 = tpu.dynamic_rotate %33 by %c255_i32 dim 1 : vector<32x256xf32>, i32 -> vector<32x256xf32>
    %c255_i32_52 = arith.constant 255 : i32
    %144 = tpu.dynamic_rotate %34 by %c255_i32_52 dim 1 : vector<1x256xi32>, i32 -> vector<1x256xi32>
    %145 = arith.cmpi eq, %144, %132 : vector<1x256xi32>
    %146 = arith.andi %145, %130 : vector<1x256xi1>
    %cst_53 = arith.constant 0.000000e+00 : f32
    %147 = vector.shape_cast %146 : vector<1x256xi1> to vector<1x256xi1>
    %148 = vector.broadcast %147 : vector<1x256xi1> to vector<32x256xi1>
    %149 = vector.broadcast %cst_53 : f32 to vector<32x256xf32>
    %150 = arith.select %148, %143, %149 : vector<32x256xi1>, vector<32x256xf32>
    %151 = arith.addf %142, %150 : vector<32x256xf32>
    %c3 = arith.constant 3 : index
    %c0_54 = arith.constant 0 : index
    %c0_55 = arith.constant 0 : index
    %152 = vector.load %arg5[%c3, %c0_54, %c0_55] : memref<9x64x32xf32, #tpu.memory_space<vmem>>, vector<1x64x32xf32>
    %153 = vector.shape_cast %152 : vector<1x64x32xf32> to vector<64x32xf32>
    %cst_56 = arith.constant dense<0.000000e+00> : vector<64x256xf32>
    %154 = tpu.matmul %153, %151, %cst_56 {dimension_numbers = #tpu.dot_dimension_numbers<[1], [0], [0], [1], [0, 0, 1, 1], [], []>} : vector<64x32xf32>, vector<32x256xf32>, vector<64x256xf32> -> vector<64x256xf32>
    %155 = arith.addf %128, %154 : vector<64x256xf32>
    %c4 = arith.constant 4 : index
    %c0_57 = arith.constant 0 : index
    %c0_58 = arith.constant 0 : index
    %156 = vector.load %arg5[%c4, %c0_57, %c0_58] : memref<9x64x32xf32, #tpu.memory_space<vmem>>, vector<1x64x32xf32>
    %157 = vector.shape_cast %156 : vector<1x64x32xf32> to vector<64x32xf32>
    %cst_59 = arith.constant dense<0.000000e+00> : vector<64x256xf32>
    %158 = tpu.matmul %157, %33, %cst_59 {dimension_numbers = #tpu.dot_dimension_numbers<[1], [0], [0], [1], [0, 0, 1, 1], [], []>} : vector<64x32xf32>, vector<32x256xf32>, vector<64x256xf32> -> vector<64x256xf32>
    %159 = arith.addf %155, %158 : vector<64x256xf32>
    %c14_i32_60 = arith.constant 14 : i32
    %160 = vector.broadcast %c14_i32_60 : i32 to vector<1x256xi32>
    %161 = arith.cmpi sle, %50, %160 : vector<1x256xi32>
    %c1_i32_61 = arith.constant 1 : i32
    %162 = vector.broadcast %c1_i32_61 : i32 to vector<1x256xi32>
    %163 = arith.addi %34, %162 : vector<1x256xi32>
    %cst_62 = arith.constant 0.000000e+00 : f32
    %164 = vector.broadcast %cst_62 : f32 to vector<32x256xf32>
    %c255_i32_63 = arith.constant 255 : i32
    %165 = tpu.dynamic_rotate %33 by %c255_i32_63 dim 1 : vector<32x256xf32>, i32 -> vector<32x256xf32>
    %c255_i32_64 = arith.constant 255 : i32
    %166 = tpu.dynamic_rotate %34 by %c255_i32_64 dim 1 : vector<1x256xi32>, i32 -> vector<1x256xi32>
    %167 = arith.cmpi eq, %166, %163 : vector<1x256xi32>
    %168 = arith.andi %167, %161 : vector<1x256xi1>
    %cst_65 = arith.constant 0.000000e+00 : f32
    %169 = vector.shape_cast %168 : vector<1x256xi1> to vector<1x256xi1>
    %170 = vector.broadcast %169 : vector<1x256xi1> to vector<32x256xi1>
    %171 = vector.broadcast %cst_65 : f32 to vector<32x256xf32>
    %172 = arith.select %170, %165, %171 : vector<32x256xi1>, vector<32x256xf32>
    %173 = arith.addf %164, %172 : vector<32x256xf32>
    %c1_i32_66 = arith.constant 1 : i32
    %174 = tpu.dynamic_rotate %33 by %c1_i32_66 dim 1 : vector<32x256xf32>, i32 -> vector<32x256xf32>
    %c1_i32_67 = arith.constant 1 : i32
    %175 = tpu.dynamic_rotate %34 by %c1_i32_67 dim 1 : vector<1x256xi32>, i32 -> vector<1x256xi32>
    %176 = arith.cmpi eq, %175, %163 : vector<1x256xi32>
    %177 = arith.andi %176, %161 : vector<1x256xi1>
    %cst_68 = arith.constant 0.000000e+00 : f32
    %178 = vector.shape_cast %177 : vector<1x256xi1> to vector<1x256xi1>
    %179 = vector.broadcast %178 : vector<1x256xi1> to vector<32x256xi1>
    %180 = vector.broadcast %cst_68 : f32 to vector<32x256xf32>
    %181 = arith.select %179, %174, %180 : vector<32x256xi1>, vector<32x256xf32>
    %182 = arith.addf %173, %181 : vector<32x256xf32>
    %c5 = arith.constant 5 : index
    %c0_69 = arith.constant 0 : index
    %c0_70 = arith.constant 0 : index
    %183 = vector.load %arg5[%c5, %c0_69, %c0_70] : memref<9x64x32xf32, #tpu.memory_space<vmem>>, vector<1x64x32xf32>
    %184 = vector.shape_cast %183 : vector<1x64x32xf32> to vector<64x32xf32>
    %cst_71 = arith.constant dense<0.000000e+00> : vector<64x256xf32>
    %185 = tpu.matmul %184, %182, %cst_71 {dimension_numbers = #tpu.dot_dimension_numbers<[1], [0], [0], [1], [0, 0, 1, 1], [], []>} : vector<64x32xf32>, vector<32x256xf32>, vector<64x256xf32> -> vector<64x256xf32>
    %186 = arith.addf %159, %185 : vector<64x256xf32>
    %c1_i32_72 = arith.constant 1 : i32
    %187 = vector.broadcast %c1_i32_72 : i32 to vector<1x256xi32>
    %188 = arith.cmpi sge, %50, %187 : vector<1x256xi32>
    %c15_i32_73 = arith.constant 15 : i32
    %189 = vector.broadcast %c15_i32_73 : i32 to vector<1x256xi32>
    %190 = arith.addi %34, %189 : vector<1x256xi32>
    %cst_74 = arith.constant 0.000000e+00 : f32
    %191 = vector.broadcast %cst_74 : f32 to vector<32x256xf32>
    %c241_i32_75 = arith.constant 241 : i32
    %192 = tpu.dynamic_rotate %33 by %c241_i32_75 dim 1 : vector<32x256xf32>, i32 -> vector<32x256xf32>
    %c241_i32_76 = arith.constant 241 : i32
    %193 = tpu.dynamic_rotate %34 by %c241_i32_76 dim 1 : vector<1x256xi32>, i32 -> vector<1x256xi32>
    %194 = arith.cmpi eq, %193, %190 : vector<1x256xi32>
    %195 = arith.andi %194, %188 : vector<1x256xi1>
    %cst_77 = arith.constant 0.000000e+00 : f32
    %196 = vector.shape_cast %195 : vector<1x256xi1> to vector<1x256xi1>
    %197 = vector.broadcast %196 : vector<1x256xi1> to vector<32x256xi1>
    %198 = vector.broadcast %cst_77 : f32 to vector<32x256xf32>
    %199 = arith.select %197, %192, %198 : vector<32x256xi1>, vector<32x256xf32>
    %200 = arith.addf %191, %199 : vector<32x256xf32>
    %c15_i32_78 = arith.constant 15 : i32
    %201 = tpu.dynamic_rotate %33 by %c15_i32_78 dim 1 : vector<32x256xf32>, i32 -> vector<32x256xf32>
    %c15_i32_79 = arith.constant 15 : i32
    %202 = tpu.dynamic_rotate %34 by %c15_i32_79 dim 1 : vector<1x256xi32>, i32 -> vector<1x256xi32>
    %203 = arith.cmpi eq, %202, %190 : vector<1x256xi32>
    %204 = arith.andi %203, %188 : vector<1x256xi1>
    %cst_80 = arith.constant 0.000000e+00 : f32
    %205 = vector.shape_cast %204 : vector<1x256xi1> to vector<1x256xi1>
    %206 = vector.broadcast %205 : vector<1x256xi1> to vector<32x256xi1>
    %207 = vector.broadcast %cst_80 : f32 to vector<32x256xf32>
    %208 = arith.select %206, %201, %207 : vector<32x256xi1>, vector<32x256xf32>
    %209 = arith.addf %200, %208 : vector<32x256xf32>
    %c6 = arith.constant 6 : index
    %c0_81 = arith.constant 0 : index
    %c0_82 = arith.constant 0 : index
    %210 = vector.load %arg5[%c6, %c0_81, %c0_82] : memref<9x64x32xf32, #tpu.memory_space<vmem>>, vector<1x64x32xf32>
    %211 = vector.shape_cast %210 : vector<1x64x32xf32> to vector<64x32xf32>
    %cst_83 = arith.constant dense<0.000000e+00> : vector<64x256xf32>
    %212 = tpu.matmul %211, %209, %cst_83 {dimension_numbers = #tpu.dot_dimension_numbers<[1], [0], [0], [1], [0, 0, 1, 1], [], []>} : vector<64x32xf32>, vector<32x256xf32>, vector<64x256xf32> -> vector<64x256xf32>
    %213 = arith.addf %186, %212 : vector<64x256xf32>
    %c16_i32_84 = arith.constant 16 : i32
    %214 = vector.broadcast %c16_i32_84 : i32 to vector<1x256xi32>
    %215 = arith.addi %34, %214 : vector<1x256xi32>
    %cst_85 = arith.constant 0.000000e+00 : f32
    %216 = vector.broadcast %cst_85 : f32 to vector<32x256xf32>
    %c240_i32_86 = arith.constant 240 : i32
    %217 = tpu.dynamic_rotate %33 by %c240_i32_86 dim 1 : vector<32x256xf32>, i32 -> vector<32x256xf32>
    %c240_i32_87 = arith.constant 240 : i32
    %218 = tpu.dynamic_rotate %34 by %c240_i32_87 dim 1 : vector<1x256xi32>, i32 -> vector<1x256xi32>
    %219 = arith.cmpi eq, %218, %215 : vector<1x256xi32>
    %cst_88 = arith.constant 0.000000e+00 : f32
    %220 = vector.shape_cast %219 : vector<1x256xi1> to vector<1x256xi1>
    %221 = vector.broadcast %220 : vector<1x256xi1> to vector<32x256xi1>
    %222 = vector.broadcast %cst_88 : f32 to vector<32x256xf32>
    %223 = arith.select %221, %217, %222 : vector<32x256xi1>, vector<32x256xf32>
    %224 = arith.addf %216, %223 : vector<32x256xf32>
    %c16_i32_89 = arith.constant 16 : i32
    %225 = tpu.dynamic_rotate %33 by %c16_i32_89 dim 1 : vector<32x256xf32>, i32 -> vector<32x256xf32>
    %c16_i32_90 = arith.constant 16 : i32
    %226 = tpu.dynamic_rotate %34 by %c16_i32_90 dim 1 : vector<1x256xi32>, i32 -> vector<1x256xi32>
    %227 = arith.cmpi eq, %226, %215 : vector<1x256xi32>
    %cst_91 = arith.constant 0.000000e+00 : f32
    %228 = vector.shape_cast %227 : vector<1x256xi1> to vector<1x256xi1>
    %229 = vector.broadcast %228 : vector<1x256xi1> to vector<32x256xi1>
    %230 = vector.broadcast %cst_91 : f32 to vector<32x256xf32>
    %231 = arith.select %229, %225, %230 : vector<32x256xi1>, vector<32x256xf32>
    %232 = arith.addf %224, %231 : vector<32x256xf32>
    %c7 = arith.constant 7 : index
    %c0_92 = arith.constant 0 : index
    %c0_93 = arith.constant 0 : index
    %233 = vector.load %arg5[%c7, %c0_92, %c0_93] : memref<9x64x32xf32, #tpu.memory_space<vmem>>, vector<1x64x32xf32>
    %234 = vector.shape_cast %233 : vector<1x64x32xf32> to vector<64x32xf32>
    %cst_94 = arith.constant dense<0.000000e+00> : vector<64x256xf32>
    %235 = tpu.matmul %234, %232, %cst_94 {dimension_numbers = #tpu.dot_dimension_numbers<[1], [0], [0], [1], [0, 0, 1, 1], [], []>} : vector<64x32xf32>, vector<32x256xf32>, vector<64x256xf32> -> vector<64x256xf32>
    %236 = arith.addf %213, %235 : vector<64x256xf32>
    %c14_i32_95 = arith.constant 14 : i32
    %237 = vector.broadcast %c14_i32_95 : i32 to vector<1x256xi32>
    %238 = arith.cmpi sle, %50, %237 : vector<1x256xi32>
    %c17_i32_96 = arith.constant 17 : i32
    %239 = vector.broadcast %c17_i32_96 : i32 to vector<1x256xi32>
    %240 = arith.addi %34, %239 : vector<1x256xi32>
    %cst_97 = arith.constant 0.000000e+00 : f32
    %241 = vector.broadcast %cst_97 : f32 to vector<32x256xf32>
    %c239_i32_98 = arith.constant 239 : i32
    %242 = tpu.dynamic_rotate %33 by %c239_i32_98 dim 1 : vector<32x256xf32>, i32 -> vector<32x256xf32>
    %c239_i32_99 = arith.constant 239 : i32
    %243 = tpu.dynamic_rotate %34 by %c239_i32_99 dim 1 : vector<1x256xi32>, i32 -> vector<1x256xi32>
    %244 = arith.cmpi eq, %243, %240 : vector<1x256xi32>
    %245 = arith.andi %244, %238 : vector<1x256xi1>
    %cst_100 = arith.constant 0.000000e+00 : f32
    %246 = vector.shape_cast %245 : vector<1x256xi1> to vector<1x256xi1>
    %247 = vector.broadcast %246 : vector<1x256xi1> to vector<32x256xi1>
    %248 = vector.broadcast %cst_100 : f32 to vector<32x256xf32>
    %249 = arith.select %247, %242, %248 : vector<32x256xi1>, vector<32x256xf32>
    %250 = arith.addf %241, %249 : vector<32x256xf32>
    %c17_i32_101 = arith.constant 17 : i32
    %251 = tpu.dynamic_rotate %33 by %c17_i32_101 dim 1 : vector<32x256xf32>, i32 -> vector<32x256xf32>
    %c17_i32_102 = arith.constant 17 : i32
    %252 = tpu.dynamic_rotate %34 by %c17_i32_102 dim 1 : vector<1x256xi32>, i32 -> vector<1x256xi32>
    %253 = arith.cmpi eq, %252, %240 : vector<1x256xi32>
    %254 = arith.andi %253, %238 : vector<1x256xi1>
    %cst_103 = arith.constant 0.000000e+00 : f32
    %255 = vector.shape_cast %254 : vector<1x256xi1> to vector<1x256xi1>
    %256 = vector.broadcast %255 : vector<1x256xi1> to vector<32x256xi1>
    %257 = vector.broadcast %cst_103 : f32 to vector<32x256xf32>
    %258 = arith.select %256, %251, %257 : vector<32x256xi1>, vector<32x256xf32>
    %259 = arith.addf %250, %258 : vector<32x256xf32>
    %c8 = arith.constant 8 : index
    %c0_104 = arith.constant 0 : index
    %c0_105 = arith.constant 0 : index
    %260 = vector.load %arg5[%c8, %c0_104, %c0_105] : memref<9x64x32xf32, #tpu.memory_space<vmem>>, vector<1x64x32xf32>
    %261 = vector.shape_cast %260 : vector<1x64x32xf32> to vector<64x32xf32>
    %cst_106 = arith.constant dense<0.000000e+00> : vector<64x256xf32>
    %262 = tpu.matmul %261, %259, %cst_106 {dimension_numbers = #tpu.dot_dimension_numbers<[1], [0], [0], [1], [0, 0, 1, 1], [], []>} : vector<64x32xf32>, vector<32x256xf32>, vector<64x256xf32> -> vector<64x256xf32>
    %263 = arith.addf %236, %262 : vector<64x256xf32>
    %c0_107 = arith.constant 0 : index
    %c0_108 = arith.constant 0 : index
    %c0_109 = arith.constant 0 : index
    %264 = vector.load %arg6[%c0_107, %c0_108, %c0_109] : memref<1x64x1xf32, #tpu.memory_space<vmem>>, vector<1x64x1xf32>
    %265 = vector.shape_cast %264 : vector<1x64x1xf32> to vector<64x1xf32>
    %266 = vector.broadcast %265 : vector<64x1xf32> to vector<64x256xf32>
    %267 = arith.addf %263, %266 : vector<64x256xf32>
    %c0_110 = arith.constant 0 : index
    %c0_111 = arith.constant 0 : index
    %c0_112 = arith.constant 0 : index
    %268 = vector.load %arg7[%c0_110, %c0_111, %c0_112] : memref<1x64x256xf32, #tpu.memory_space<vmem>>, vector<1x64x256xf32>
    %269 = vector.shape_cast %268 : vector<1x64x256xf32> to vector<64x256xf32>
    %270 = vector.shape_cast %267 : vector<64x256xf32> to vector<1x64x256xf32>
    tpu.vector_store %arg7[%c0_110, %c0_111, %c0_112], %270 {strides = array<i32>} : memref<1x64x256xf32, #tpu.memory_space<vmem>>, vector<1x64x256xf32>,
    return
  }
  func.func @transform_0(%arg0: i32) -> (i32, i32, i32) {
    %c0_i32 = arith.constant 0 : i32
    %c0_i32_0 = arith.constant 0 : i32
    %c0_i32_1 = arith.constant 0 : i32
    return %arg0, %c0_i32, %c0_i32_0 : i32, i32, i32
  }
  func.func @transform_1(%arg0: i32) -> (i32, i32) {
    %c0_i32 = arith.constant 0 : i32
    %c0_i32_0 = arith.constant 0 : i32
    %c0_i32_1 = arith.constant 0 : i32
    return %c0_i32, %c0_i32_0 : i32, i32
  }
  func.func @transform_2(%arg0: i32) -> (i32, i32) {
    %c0_i32 = arith.constant 0 : i32
    %c0_i32_0 = arith.constant 0 : i32
    %c0_i32_1 = arith.constant 0 : i32
    return %c0_i32, %c0_i32_0 : i32, i32
  }
  func.func @transform_3(%arg0: i32) -> (i32, i32) {
    %c0_i32 = arith.constant 0 : i32
    %c0_i32_0 = arith.constant 0 : i32
    %c0_i32_1 = arith.constant 0 : i32
    return %c0_i32, %c0_i32_0 : i32, i32
  }
  func.func @transform_4(%arg0: i32) -> (i32, i32, i32) {
    %c0_i32 = arith.constant 0 : i32
    %c0_i32_0 = arith.constant 0 : i32
    %c0_i32_1 = arith.constant 0 : i32
    %c0_i32_2 = arith.constant 0 : i32
    return %c0_i32, %c0_i32_0, %c0_i32_1 : i32, i32, i32
  }
  func.func @transform_5(%arg0: i32) -> (i32, i32, i32) {
    %c0_i32 = arith.constant 0 : i32
    %c0_i32_0 = arith.constant 0 : i32
    %c0_i32_1 = arith.constant 0 : i32
    return %arg0, %c0_i32, %c0_i32_0 : i32, i32, i32
  }
  func.func @transform_6(%arg0: i32) -> (i32, i32, i32) {
    %c0_i32 = arith.constant 0 : i32
    %c0_i32_0 = arith.constant 0 : i32
    %c0_i32_1 = arith.constant 0 : i32
    return %arg0, %c0_i32, %c0_i32_0 : i32, i32, i32
  }
}

module attributes {stable_mosaic.version = 11 : i64} {
  func.func @_gn_silu_conv_residual_kernel(%arg0: i32, %arg1: memref<1x64x256xf32, #tpu.memory_space<vmem>>, %arg2: memref<1x32x256xf32, #tpu.memory_space<vmem>>, %arg3: memref<64x1xf32, #tpu.memory_space<vmem>>, %arg4: memref<64x1xf32, #tpu.memory_space<vmem>>, %arg5: memref<64x64xf32, #tpu.memory_space<vmem>>, %arg6: memref<9x64x64xf32, #tpu.memory_space<vmem>>, %arg7: memref<64x1xf32, #tpu.memory_space<vmem>>, %arg8: memref<64x32xf32, #tpu.memory_space<vmem>>, %arg9: memref<64x1xf32, #tpu.memory_space<vmem>>, %arg10: memref<1x64x256xf32, #tpu.memory_space<vmem>>) attributes {dimension_semantics = [#tpu.dimension_semantics<parallel>], iteration_bounds = array<i64: 2>, scalar_prefetch = 0 : i64, scratch_operands = 0 : i64, tpu.core_type = #tpu.core_type<tc>, window_params = [{transform_indices = @transform_0, window_bounds = array<i64: 1, 64, 256>}, {transform_indices = @transform_1, window_bounds = array<i64: 1, 32, 256>}, {pipeline_mode = #tpu.pipeline_mode<synchronous>, transform_indices = @transform_2, window_bounds = array<i64: 64, 1>}, {pipeline_mode = #tpu.pipeline_mode<synchronous>, transform_indices = @transform_3, window_bounds = array<i64: 64, 1>}, {pipeline_mode = #tpu.pipeline_mode<synchronous>, transform_indices = @transform_4, window_bounds = array<i64: 64, 64>}, {pipeline_mode = #tpu.pipeline_mode<synchronous>, transform_indices = @transform_5, window_bounds = array<i64: 9, 64, 64>}, {pipeline_mode = #tpu.pipeline_mode<synchronous>, transform_indices = @transform_6, window_bounds = array<i64: 64, 1>}, {pipeline_mode = #tpu.pipeline_mode<synchronous>, transform_indices = @transform_7, window_bounds = array<i64: 64, 32>}, {pipeline_mode = #tpu.pipeline_mode<synchronous>, transform_indices = @transform_8, window_bounds = array<i64: 64, 1>}, {transform_indices = @transform_9, window_bounds = array<i64: 1, 64, 256>}]} {
    %c0 = arith.constant 0 : index
    %c0_0 = arith.constant 0 : index
    %c0_1 = arith.constant 0 : index
    %0 = vector.load %arg1[%c0, %c0_0, %c0_1] : memref<1x64x256xf32, #tpu.memory_space<vmem>>, vector<1x64x256xf32>
    %1 = vector.shape_cast %0 : vector<1x64x256xf32> to vector<64x256xf32>
    %c0_2 = arith.constant 0 : index
    %c0_3 = arith.constant 0 : index
    %2 = vector.load %arg5[%c0_2, %c0_3] : memref<64x64xf32, #tpu.memory_space<vmem>>, vector<64x64xf32>
    %cst = arith.constant dense<0.000000e+00> : vector<64x256xf32>
    %3 = tpu.matmul %2, %1, %cst {dimension_numbers = #tpu.dot_dimension_numbers<[1], [0], [0], [1], [0, 0, 1, 1], [], []>} : vector<64x64xf32>, vector<64x256xf32>, vector<64x256xf32> -> vector<64x256xf32>
    %cst_4 = arith.constant dense<0.000000e+00> : vector<64xf32>
    %4 = vector.multi_reduction <add>, %3, %cst_4 [1] : vector<64x256xf32> to vector<64xf32>
    %5 = vector.shape_cast %4 : vector<64xf32> to vector<64x1xf32>
    %6 = arith.mulf %1, %1 : vector<64x256xf32>
    %cst_5 = arith.constant dense<0.000000e+00> : vector<64x256xf32>
    %7 = tpu.matmul %2, %6, %cst_5 {dimension_numbers = #tpu.dot_dimension_numbers<[1], [0], [0], [1], [0, 0, 1, 1], [], []>} : vector<64x64xf32>, vector<64x256xf32>, vector<64x256xf32> -> vector<64x256xf32>
    %cst_6 = arith.constant dense<0.000000e+00> : vector<64xf32>
    %8 = vector.multi_reduction <add>, %7, %cst_6 [1] : vector<64x256xf32> to vector<64xf32>
    %9 = vector.shape_cast %8 : vector<64xf32> to vector<64x1xf32>
    %10 = arith.mulf %5, %5 : vector<64x1xf32>
    %11 = arith.subf %9, %10 : vector<64x1xf32>
    %cst_7 = arith.constant 0.000000e+00 : f32
    %12 = vector.broadcast %cst_7 : f32 to vector<64x1xf32>
    %13 = arith.maximumf %11, %12 : vector<64x1xf32>
    %cst_8 = arith.constant 9.99999997E-7 : f32
    %14 = vector.broadcast %cst_8 : f32 to vector<64x1xf32>
    %15 = arith.addf %13, %14 : vector<64x1xf32>
    %16 = math.rsqrt %15 : vector<64x1xf32>
    %17 = vector.broadcast %5 : vector<64x1xf32> to vector<64x256xf32>
    %18 = arith.subf %1, %17 : vector<64x256xf32>
    %c0_9 = arith.constant 0 : index
    %c0_10 = arith.constant 0 : index
    %19 = vector.load %arg3[%c0_9, %c0_10] : memref<64x1xf32, #tpu.memory_space<vmem>>, vector<64x1xf32>
    %20 = arith.mulf %16, %19 : vector<64x1xf32>
    %21 = vector.broadcast %20 : vector<64x1xf32> to vector<64x256xf32>
    %22 = arith.mulf %18, %21 : vector<64x256xf32>
    %c0_11 = arith.constant 0 : index
    %c0_12 = arith.constant 0 : index
    %23 = vector.load %arg4[%c0_11, %c0_12] : memref<64x1xf32, #tpu.memory_space<vmem>>, vector<64x1xf32>
    %24 = vector.broadcast %23 : vector<64x1xf32> to vector<64x256xf32>
    %25 = arith.addf %22, %24 : vector<64x256xf32>
    %cst_13 = arith.constant 0.000000e+00 : f32
    %26 = vector.broadcast %cst_13 : f32 to vector<64x256xf32>
    %27 = arith.subf %26, %25 : vector<64x256xf32>
    %28 = math.exp %27 : vector<64x256xf32>
    %cst_14 = arith.constant 1.000000e+00 : f32
    %29 = vector.broadcast %cst_14 : f32 to vector<64x256xf32>
    %30 = arith.addf %29, %28 : vector<64x256xf32>
    %cst_15 = arith.constant 1.000000e+00 : f32
    %31 = vector.broadcast %cst_15 : f32 to vector<64x256xf32>
    %32 = arith.divf %31, %30 : vector<64x256xf32>
    %33 = arith.mulf %25, %32 : vector<64x256xf32>
    %34 = tpu.iota {dimensions = array<i32: 1>} : vector<1x256xi32>
    %c16_i32 = arith.constant 16 : i32
    %c0_i32 = arith.constant 0 : i32
    %35 = arith.cmpi eq, %c16_i32, %c0_i32 : i32
    %c1_i32 = arith.constant 1 : i32
    %36 = arith.select %35, %c1_i32, %c16_i32 : i32
    %37 = vector.broadcast %36 : i32 to vector<1x256xi32>
    %38 = arith.remsi %34, %37 : vector<1x256xi32>
    %c0_i32_16 = arith.constant 0 : i32
    %39 = vector.broadcast %c0_i32_16 : i32 to vector<1x256xi32>
    %40 = arith.cmpi ne, %38, %39 : vector<1x256xi32>
    %c0_i32_17 = arith.constant 0 : i32
    %41 = vector.broadcast %c0_i32_17 : i32 to vector<1x256xi32>
    %42 = arith.cmpi slt, %38, %41 : vector<1x256xi32>
    %c0_i32_18 = arith.constant 0 : i32
    %43 = arith.cmpi slt, %36, %c0_i32_18 : i32
    %44 = vector.broadcast %43 : i1 to vector<1x256xi1>
    %45 = vector.broadcast %44 : vector<1x256xi1> to vector<1x256xi1>
    %46 = arith.xori %42, %45 : vector<1x256xi1>
    %47 = arith.andi %46, %40 : vector<1x256xi1>
    %48 = vector.broadcast %36 : i32 to vector<1x256xi32>
    %49 = arith.addi %38, %48 : vector<1x256xi32>
    %50 = arith.select %47, %49, %38 : vector<1x256xi1>, vector<1x256xi32>
    %cst_19 = arith.constant 0.000000e+00 : f32
    %51 = vector.broadcast %cst_19 : f32 to vector<64x256xf32>
    %c1_i32_20 = arith.constant 1 : i32
    %52 = vector.broadcast %c1_i32_20 : i32 to vector<1x256xi32>
    %53 = arith.cmpi sge, %50, %52 : vector<1x256xi32>
    %c-17_i32 = arith.constant -17 : i32
    %54 = vector.broadcast %c-17_i32 : i32 to vector<1x256xi32>
    %55 = arith.addi %34, %54 : vector<1x256xi32>
    %cst_21 = arith.constant 0.000000e+00 : f32
    %56 = vector.broadcast %cst_21 : f32 to vector<64x256xf32>
    %c17_i32 = arith.constant 17 : i32
    %57 = tpu.dynamic_rotate %33 by %c17_i32 dim 1 : vector<64x256xf32>, i32 -> vector<64x256xf32>
    %c17_i32_22 = arith.constant 17 : i32
    %58 = tpu.dynamic_rotate %34 by %c17_i32_22 dim 1 : vector<1x256xi32>, i32 -> vector<1x256xi32>
    %59 = arith.cmpi eq, %58, %55 : vector<1x256xi32>
    %60 = arith.andi %59, %53 : vector<1x256xi1>
    %cst_23 = arith.constant 0.000000e+00 : f32
    %61 = vector.shape_cast %60 : vector<1x256xi1> to vector<1x256xi1>
    %62 = vector.broadcast %61 : vector<1x256xi1> to vector<64x256xi1>
    %63 = vector.broadcast %cst_23 : f32 to vector<64x256xf32>
    %64 = arith.select %62, %57, %63 : vector<64x256xi1>, vector<64x256xf32>
    %65 = arith.addf %56, %64 : vector<64x256xf32>
    %c239_i32 = arith.constant 239 : i32
    %66 = tpu.dynamic_rotate %33 by %c239_i32 dim 1 : vector<64x256xf32>, i32 -> vector<64x256xf32>
    %c239_i32_24 = arith.constant 239 : i32
    %67 = tpu.dynamic_rotate %34 by %c239_i32_24 dim 1 : vector<1x256xi32>, i32 -> vector<1x256xi32>
    %68 = arith.cmpi eq, %67, %55 : vector<1x256xi32>
    %69 = arith.andi %68, %53 : vector<1x256xi1>
    %cst_25 = arith.constant 0.000000e+00 : f32
    %70 = vector.shape_cast %69 : vector<1x256xi1> to vector<1x256xi1>
    %71 = vector.broadcast %70 : vector<1x256xi1> to vector<64x256xi1>
    %72 = vector.broadcast %cst_25 : f32 to vector<64x256xf32>
    %73 = arith.select %71, %66, %72 : vector<64x256xi1>, vector<64x256xf32>
    %74 = arith.addf %65, %73 : vector<64x256xf32>
    %c0_26 = arith.constant 0 : index
    %c0_27 = arith.constant 0 : index
    %c0_28 = arith.constant 0 : index
    %75 = vector.load %arg6[%c0_26, %c0_27, %c0_28] : memref<9x64x64xf32, #tpu.memory_space<vmem>>, vector<1x64x64xf32>
    %76 = vector.shape_cast %75 : vector<1x64x64xf32> to vector<64x64xf32>
    %cst_29 = arith.constant dense<0.000000e+00> : vector<64x256xf32>
    %77 = tpu.matmul %76, %74, %cst_29 {dimension_numbers = #tpu.dot_dimension_numbers<[1], [0], [0], [1], [0, 0, 1, 1], [], []>} : vector<64x64xf32>, vector<64x256xf32>, vector<64x256xf32> -> vector<64x256xf32>
    %78 = arith.addf %51, %77 : vector<64x256xf32>
    %c-16_i32 = arith.constant -16 : i32
    %79 = vector.broadcast %c-16_i32 : i32 to vector<1x256xi32>
    %80 = arith.addi %34, %79 : vector<1x256xi32>
    %cst_30 = arith.constant 0.000000e+00 : f32
    %81 = vector.broadcast %cst_30 : f32 to vector<64x256xf32>
    %c16_i32_31 = arith.constant 16 : i32
    %82 = tpu.dynamic_rotate %33 by %c16_i32_31 dim 1 : vector<64x256xf32>, i32 -> vector<64x256xf32>
    %c16_i32_32 = arith.constant 16 : i32
    %83 = tpu.dynamic_rotate %34 by %c16_i32_32 dim 1 : vector<1x256xi32>, i32 -> vector<1x256xi32>
    %84 = arith.cmpi eq, %83, %80 : vector<1x256xi32>
    %cst_33 = arith.constant 0.000000e+00 : f32
    %85 = vector.shape_cast %84 : vector<1x256xi1> to vector<1x256xi1>
    %86 = vector.broadcast %85 : vector<1x256xi1> to vector<64x256xi1>
    %87 = vector.broadcast %cst_33 : f32 to vector<64x256xf32>
    %88 = arith.select %86, %82, %87 : vector<64x256xi1>, vector<64x256xf32>
    %89 = arith.addf %81, %88 : vector<64x256xf32>
    %c240_i32 = arith.constant 240 : i32
    %90 = tpu.dynamic_rotate %33 by %c240_i32 dim 1 : vector<64x256xf32>, i32 -> vector<64x256xf32>
    %c240_i32_34 = arith.constant 240 : i32
    %91 = tpu.dynamic_rotate %34 by %c240_i32_34 dim 1 : vector<1x256xi32>, i32 -> vector<1x256xi32>
    %92 = arith.cmpi eq, %91, %80 : vector<1x256xi32>
    %cst_35 = arith.constant 0.000000e+00 : f32
    %93 = vector.shape_cast %92 : vector<1x256xi1> to vector<1x256xi1>
    %94 = vector.broadcast %93 : vector<1x256xi1> to vector<64x256xi1>
    %95 = vector.broadcast %cst_35 : f32 to vector<64x256xf32>
    %96 = arith.select %94, %90, %95 : vector<64x256xi1>, vector<64x256xf32>
    %97 = arith.addf %89, %96 : vector<64x256xf32>
    %c1 = arith.constant 1 : index
    %c0_36 = arith.constant 0 : index
    %c0_37 = arith.constant 0 : index
    %98 = vector.load %arg6[%c1, %c0_36, %c0_37] : memref<9x64x64xf32, #tpu.memory_space<vmem>>, vector<1x64x64xf32>
    %99 = vector.shape_cast %98 : vector<1x64x64xf32> to vector<64x64xf32>
    %cst_38 = arith.constant dense<0.000000e+00> : vector<64x256xf32>
    %100 = tpu.matmul %99, %97, %cst_38 {dimension_numbers = #tpu.dot_dimension_numbers<[1], [0], [0], [1], [0, 0, 1, 1], [], []>} : vector<64x64xf32>, vector<64x256xf32>, vector<64x256xf32> -> vector<64x256xf32>
    %101 = arith.addf %78, %100 : vector<64x256xf32>
    %c14_i32 = arith.constant 14 : i32
    %102 = vector.broadcast %c14_i32 : i32 to vector<1x256xi32>
    %103 = arith.cmpi sle, %50, %102 : vector<1x256xi32>
    %c-15_i32 = arith.constant -15 : i32
    %104 = vector.broadcast %c-15_i32 : i32 to vector<1x256xi32>
    %105 = arith.addi %34, %104 : vector<1x256xi32>
    %cst_39 = arith.constant 0.000000e+00 : f32
    %106 = vector.broadcast %cst_39 : f32 to vector<64x256xf32>
    %c15_i32 = arith.constant 15 : i32
    %107 = tpu.dynamic_rotate %33 by %c15_i32 dim 1 : vector<64x256xf32>, i32 -> vector<64x256xf32>
    %c15_i32_40 = arith.constant 15 : i32
    %108 = tpu.dynamic_rotate %34 by %c15_i32_40 dim 1 : vector<1x256xi32>, i32 -> vector<1x256xi32>
    %109 = arith.cmpi eq, %108, %105 : vector<1x256xi32>
    %110 = arith.andi %109, %103 : vector<1x256xi1>
    %cst_41 = arith.constant 0.000000e+00 : f32
    %111 = vector.shape_cast %110 : vector<1x256xi1> to vector<1x256xi1>
    %112 = vector.broadcast %111 : vector<1x256xi1> to vector<64x256xi1>
    %113 = vector.broadcast %cst_41 : f32 to vector<64x256xf32>
    %114 = arith.select %112, %107, %113 : vector<64x256xi1>, vector<64x256xf32>
    %115 = arith.addf %106, %114 : vector<64x256xf32>
    %c241_i32 = arith.constant 241 : i32
    %116 = tpu.dynamic_rotate %33 by %c241_i32 dim 1 : vector<64x256xf32>, i32 -> vector<64x256xf32>
    %c241_i32_42 = arith.constant 241 : i32
    %117 = tpu.dynamic_rotate %34 by %c241_i32_42 dim 1 : vector<1x256xi32>, i32 -> vector<1x256xi32>
    %118 = arith.cmpi eq, %117, %105 : vector<1x256xi32>
    %119 = arith.andi %118, %103 : vector<1x256xi1>
    %cst_43 = arith.constant 0.000000e+00 : f32
    %120 = vector.shape_cast %119 : vector<1x256xi1> to vector<1x256xi1>
    %121 = vector.broadcast %120 : vector<1x256xi1> to vector<64x256xi1>
    %122 = vector.broadcast %cst_43 : f32 to vector<64x256xf32>
    %123 = arith.select %121, %116, %122 : vector<64x256xi1>, vector<64x256xf32>
    %124 = arith.addf %115, %123 : vector<64x256xf32>
    %c2 = arith.constant 2 : index
    %c0_44 = arith.constant 0 : index
    %c0_45 = arith.constant 0 : index
    %125 = vector.load %arg6[%c2, %c0_44, %c0_45] : memref<9x64x64xf32, #tpu.memory_space<vmem>>, vector<1x64x64xf32>
    %126 = vector.shape_cast %125 : vector<1x64x64xf32> to vector<64x64xf32>
    %cst_46 = arith.constant dense<0.000000e+00> : vector<64x256xf32>
    %127 = tpu.matmul %126, %124, %cst_46 {dimension_numbers = #tpu.dot_dimension_numbers<[1], [0], [0], [1], [0, 0, 1, 1], [], []>} : vector<64x64xf32>, vector<64x256xf32>, vector<64x256xf32> -> vector<64x256xf32>
    %128 = arith.addf %101, %127 : vector<64x256xf32>
    %c1_i32_47 = arith.constant 1 : i32
    %129 = vector.broadcast %c1_i32_47 : i32 to vector<1x256xi32>
    %130 = arith.cmpi sge, %50, %129 : vector<1x256xi32>
    %c-1_i32 = arith.constant -1 : i32
    %131 = vector.broadcast %c-1_i32 : i32 to vector<1x256xi32>
    %132 = arith.addi %34, %131 : vector<1x256xi32>
    %cst_48 = arith.constant 0.000000e+00 : f32
    %133 = vector.broadcast %cst_48 : f32 to vector<64x256xf32>
    %c1_i32_49 = arith.constant 1 : i32
    %134 = tpu.dynamic_rotate %33 by %c1_i32_49 dim 1 : vector<64x256xf32>, i32 -> vector<64x256xf32>
    %c1_i32_50 = arith.constant 1 : i32
    %135 = tpu.dynamic_rotate %34 by %c1_i32_50 dim 1 : vector<1x256xi32>, i32 -> vector<1x256xi32>
    %136 = arith.cmpi eq, %135, %132 : vector<1x256xi32>
    %137 = arith.andi %136, %130 : vector<1x256xi1>
    %cst_51 = arith.constant 0.000000e+00 : f32
    %138 = vector.shape_cast %137 : vector<1x256xi1> to vector<1x256xi1>
    %139 = vector.broadcast %138 : vector<1x256xi1> to vector<64x256xi1>
    %140 = vector.broadcast %cst_51 : f32 to vector<64x256xf32>
    %141 = arith.select %139, %134, %140 : vector<64x256xi1>, vector<64x256xf32>
    %142 = arith.addf %133, %141 : vector<64x256xf32>
    %c255_i32 = arith.constant 255 : i32
    %143 = tpu.dynamic_rotate %33 by %c255_i32 dim 1 : vector<64x256xf32>, i32 -> vector<64x256xf32>
    %c255_i32_52 = arith.constant 255 : i32
    %144 = tpu.dynamic_rotate %34 by %c255_i32_52 dim 1 : vector<1x256xi32>, i32 -> vector<1x256xi32>
    %145 = arith.cmpi eq, %144, %132 : vector<1x256xi32>
    %146 = arith.andi %145, %130 : vector<1x256xi1>
    %cst_53 = arith.constant 0.000000e+00 : f32
    %147 = vector.shape_cast %146 : vector<1x256xi1> to vector<1x256xi1>
    %148 = vector.broadcast %147 : vector<1x256xi1> to vector<64x256xi1>
    %149 = vector.broadcast %cst_53 : f32 to vector<64x256xf32>
    %150 = arith.select %148, %143, %149 : vector<64x256xi1>, vector<64x256xf32>
    %151 = arith.addf %142, %150 : vector<64x256xf32>
    %c3 = arith.constant 3 : index
    %c0_54 = arith.constant 0 : index
    %c0_55 = arith.constant 0 : index
    %152 = vector.load %arg6[%c3, %c0_54, %c0_55] : memref<9x64x64xf32, #tpu.memory_space<vmem>>, vector<1x64x64xf32>
    %153 = vector.shape_cast %152 : vector<1x64x64xf32> to vector<64x64xf32>
    %cst_56 = arith.constant dense<0.000000e+00> : vector<64x256xf32>
    %154 = tpu.matmul %153, %151, %cst_56 {dimension_numbers = #tpu.dot_dimension_numbers<[1], [0], [0], [1], [0, 0, 1, 1], [], []>} : vector<64x64xf32>, vector<64x256xf32>, vector<64x256xf32> -> vector<64x256xf32>
    %155 = arith.addf %128, %154 : vector<64x256xf32>
    %c4 = arith.constant 4 : index
    %c0_57 = arith.constant 0 : index
    %c0_58 = arith.constant 0 : index
    %156 = vector.load %arg6[%c4, %c0_57, %c0_58] : memref<9x64x64xf32, #tpu.memory_space<vmem>>, vector<1x64x64xf32>
    %157 = vector.shape_cast %156 : vector<1x64x64xf32> to vector<64x64xf32>
    %cst_59 = arith.constant dense<0.000000e+00> : vector<64x256xf32>
    %158 = tpu.matmul %157, %33, %cst_59 {dimension_numbers = #tpu.dot_dimension_numbers<[1], [0], [0], [1], [0, 0, 1, 1], [], []>} : vector<64x64xf32>, vector<64x256xf32>, vector<64x256xf32> -> vector<64x256xf32>
    %159 = arith.addf %155, %158 : vector<64x256xf32>
    %c14_i32_60 = arith.constant 14 : i32
    %160 = vector.broadcast %c14_i32_60 : i32 to vector<1x256xi32>
    %161 = arith.cmpi sle, %50, %160 : vector<1x256xi32>
    %c1_i32_61 = arith.constant 1 : i32
    %162 = vector.broadcast %c1_i32_61 : i32 to vector<1x256xi32>
    %163 = arith.addi %34, %162 : vector<1x256xi32>
    %cst_62 = arith.constant 0.000000e+00 : f32
    %164 = vector.broadcast %cst_62 : f32 to vector<64x256xf32>
    %c255_i32_63 = arith.constant 255 : i32
    %165 = tpu.dynamic_rotate %33 by %c255_i32_63 dim 1 : vector<64x256xf32>, i32 -> vector<64x256xf32>
    %c255_i32_64 = arith.constant 255 : i32
    %166 = tpu.dynamic_rotate %34 by %c255_i32_64 dim 1 : vector<1x256xi32>, i32 -> vector<1x256xi32>
    %167 = arith.cmpi eq, %166, %163 : vector<1x256xi32>
    %168 = arith.andi %167, %161 : vector<1x256xi1>
    %cst_65 = arith.constant 0.000000e+00 : f32
    %169 = vector.shape_cast %168 : vector<1x256xi1> to vector<1x256xi1>
    %170 = vector.broadcast %169 : vector<1x256xi1> to vector<64x256xi1>
    %171 = vector.broadcast %cst_65 : f32 to vector<64x256xf32>
    %172 = arith.select %170, %165, %171 : vector<64x256xi1>, vector<64x256xf32>
    %173 = arith.addf %164, %172 : vector<64x256xf32>
    %c1_i32_66 = arith.constant 1 : i32
    %174 = tpu.dynamic_rotate %33 by %c1_i32_66 dim 1 : vector<64x256xf32>, i32 -> vector<64x256xf32>
    %c1_i32_67 = arith.constant 1 : i32
    %175 = tpu.dynamic_rotate %34 by %c1_i32_67 dim 1 : vector<1x256xi32>, i32 -> vector<1x256xi32>
    %176 = arith.cmpi eq, %175, %163 : vector<1x256xi32>
    %177 = arith.andi %176, %161 : vector<1x256xi1>
    %cst_68 = arith.constant 0.000000e+00 : f32
    %178 = vector.shape_cast %177 : vector<1x256xi1> to vector<1x256xi1>
    %179 = vector.broadcast %178 : vector<1x256xi1> to vector<64x256xi1>
    %180 = vector.broadcast %cst_68 : f32 to vector<64x256xf32>
    %181 = arith.select %179, %174, %180 : vector<64x256xi1>, vector<64x256xf32>
    %182 = arith.addf %173, %181 : vector<64x256xf32>
    %c5 = arith.constant 5 : index
    %c0_69 = arith.constant 0 : index
    %c0_70 = arith.constant 0 : index
    %183 = vector.load %arg6[%c5, %c0_69, %c0_70] : memref<9x64x64xf32, #tpu.memory_space<vmem>>, vector<1x64x64xf32>
    %184 = vector.shape_cast %183 : vector<1x64x64xf32> to vector<64x64xf32>
    %cst_71 = arith.constant dense<0.000000e+00> : vector<64x256xf32>
    %185 = tpu.matmul %184, %182, %cst_71 {dimension_numbers = #tpu.dot_dimension_numbers<[1], [0], [0], [1], [0, 0, 1, 1], [], []>} : vector<64x64xf32>, vector<64x256xf32>, vector<64x256xf32> -> vector<64x256xf32>
    %186 = arith.addf %159, %185 : vector<64x256xf32>
    %c1_i32_72 = arith.constant 1 : i32
    %187 = vector.broadcast %c1_i32_72 : i32 to vector<1x256xi32>
    %188 = arith.cmpi sge, %50, %187 : vector<1x256xi32>
    %c15_i32_73 = arith.constant 15 : i32
    %189 = vector.broadcast %c15_i32_73 : i32 to vector<1x256xi32>
    %190 = arith.addi %34, %189 : vector<1x256xi32>
    %cst_74 = arith.constant 0.000000e+00 : f32
    %191 = vector.broadcast %cst_74 : f32 to vector<64x256xf32>
    %c241_i32_75 = arith.constant 241 : i32
    %192 = tpu.dynamic_rotate %33 by %c241_i32_75 dim 1 : vector<64x256xf32>, i32 -> vector<64x256xf32>
    %c241_i32_76 = arith.constant 241 : i32
    %193 = tpu.dynamic_rotate %34 by %c241_i32_76 dim 1 : vector<1x256xi32>, i32 -> vector<1x256xi32>
    %194 = arith.cmpi eq, %193, %190 : vector<1x256xi32>
    %195 = arith.andi %194, %188 : vector<1x256xi1>
    %cst_77 = arith.constant 0.000000e+00 : f32
    %196 = vector.shape_cast %195 : vector<1x256xi1> to vector<1x256xi1>
    %197 = vector.broadcast %196 : vector<1x256xi1> to vector<64x256xi1>
    %198 = vector.broadcast %cst_77 : f32 to vector<64x256xf32>
    %199 = arith.select %197, %192, %198 : vector<64x256xi1>, vector<64x256xf32>
    %200 = arith.addf %191, %199 : vector<64x256xf32>
    %c15_i32_78 = arith.constant 15 : i32
    %201 = tpu.dynamic_rotate %33 by %c15_i32_78 dim 1 : vector<64x256xf32>, i32 -> vector<64x256xf32>
    %c15_i32_79 = arith.constant 15 : i32
    %202 = tpu.dynamic_rotate %34 by %c15_i32_79 dim 1 : vector<1x256xi32>, i32 -> vector<1x256xi32>
    %203 = arith.cmpi eq, %202, %190 : vector<1x256xi32>
    %204 = arith.andi %203, %188 : vector<1x256xi1>
    %cst_80 = arith.constant 0.000000e+00 : f32
    %205 = vector.shape_cast %204 : vector<1x256xi1> to vector<1x256xi1>
    %206 = vector.broadcast %205 : vector<1x256xi1> to vector<64x256xi1>
    %207 = vector.broadcast %cst_80 : f32 to vector<64x256xf32>
    %208 = arith.select %206, %201, %207 : vector<64x256xi1>, vector<64x256xf32>
    %209 = arith.addf %200, %208 : vector<64x256xf32>
    %c6 = arith.constant 6 : index
    %c0_81 = arith.constant 0 : index
    %c0_82 = arith.constant 0 : index
    %210 = vector.load %arg6[%c6, %c0_81, %c0_82] : memref<9x64x64xf32, #tpu.memory_space<vmem>>, vector<1x64x64xf32>
    %211 = vector.shape_cast %210 : vector<1x64x64xf32> to vector<64x64xf32>
    %cst_83 = arith.constant dense<0.000000e+00> : vector<64x256xf32>
    %212 = tpu.matmul %211, %209, %cst_83 {dimension_numbers = #tpu.dot_dimension_numbers<[1], [0], [0], [1], [0, 0, 1, 1], [], []>} : vector<64x64xf32>, vector<64x256xf32>, vector<64x256xf32> -> vector<64x256xf32>
    %213 = arith.addf %186, %212 : vector<64x256xf32>
    %c16_i32_84 = arith.constant 16 : i32
    %214 = vector.broadcast %c16_i32_84 : i32 to vector<1x256xi32>
    %215 = arith.addi %34, %214 : vector<1x256xi32>
    %cst_85 = arith.constant 0.000000e+00 : f32
    %216 = vector.broadcast %cst_85 : f32 to vector<64x256xf32>
    %c240_i32_86 = arith.constant 240 : i32
    %217 = tpu.dynamic_rotate %33 by %c240_i32_86 dim 1 : vector<64x256xf32>, i32 -> vector<64x256xf32>
    %c240_i32_87 = arith.constant 240 : i32
    %218 = tpu.dynamic_rotate %34 by %c240_i32_87 dim 1 : vector<1x256xi32>, i32 -> vector<1x256xi32>
    %219 = arith.cmpi eq, %218, %215 : vector<1x256xi32>
    %cst_88 = arith.constant 0.000000e+00 : f32
    %220 = vector.shape_cast %219 : vector<1x256xi1> to vector<1x256xi1>
    %221 = vector.broadcast %220 : vector<1x256xi1> to vector<64x256xi1>
    %222 = vector.broadcast %cst_88 : f32 to vector<64x256xf32>
    %223 = arith.select %221, %217, %222 : vector<64x256xi1>, vector<64x256xf32>
    %224 = arith.addf %216, %223 : vector<64x256xf32>
    %c16_i32_89 = arith.constant 16 : i32
    %225 = tpu.dynamic_rotate %33 by %c16_i32_89 dim 1 : vector<64x256xf32>, i32 -> vector<64x256xf32>
    %c16_i32_90 = arith.constant 16 : i32
    %226 = tpu.dynamic_rotate %34 by %c16_i32_90 dim 1 : vector<1x256xi32>, i32 -> vector<1x256xi32>
    %227 = arith.cmpi eq, %226, %215 : vector<1x256xi32>
    %cst_91 = arith.constant 0.000000e+00 : f32
    %228 = vector.shape_cast %227 : vector<1x256xi1> to vector<1x256xi1>
    %229 = vector.broadcast %228 : vector<1x256xi1> to vector<64x256xi1>
    %230 = vector.broadcast %cst_91 : f32 to vector<64x256xf32>
    %231 = arith.select %229, %225, %230 : vector<64x256xi1>, vector<64x256xf32>
    %232 = arith.addf %224, %231 : vector<64x256xf32>
    %c7 = arith.constant 7 : index
    %c0_92 = arith.constant 0 : index
    %c0_93 = arith.constant 0 : index
    %233 = vector.load %arg6[%c7, %c0_92, %c0_93] : memref<9x64x64xf32, #tpu.memory_space<vmem>>, vector<1x64x64xf32>
    %234 = vector.shape_cast %233 : vector<1x64x64xf32> to vector<64x64xf32>
    %cst_94 = arith.constant dense<0.000000e+00> : vector<64x256xf32>
    %235 = tpu.matmul %234, %232, %cst_94 {dimension_numbers = #tpu.dot_dimension_numbers<[1], [0], [0], [1], [0, 0, 1, 1], [], []>} : vector<64x64xf32>, vector<64x256xf32>, vector<64x256xf32> -> vector<64x256xf32>
    %236 = arith.addf %213, %235 : vector<64x256xf32>
    %c14_i32_95 = arith.constant 14 : i32
    %237 = vector.broadcast %c14_i32_95 : i32 to vector<1x256xi32>
    %238 = arith.cmpi sle, %50, %237 : vector<1x256xi32>
    %c17_i32_96 = arith.constant 17 : i32
    %239 = vector.broadcast %c17_i32_96 : i32 to vector<1x256xi32>
    %240 = arith.addi %34, %239 : vector<1x256xi32>
    %cst_97 = arith.constant 0.000000e+00 : f32
    %241 = vector.broadcast %cst_97 : f32 to vector<64x256xf32>
    %c239_i32_98 = arith.constant 239 : i32
    %242 = tpu.dynamic_rotate %33 by %c239_i32_98 dim 1 : vector<64x256xf32>, i32 -> vector<64x256xf32>
    %c239_i32_99 = arith.constant 239 : i32
    %243 = tpu.dynamic_rotate %34 by %c239_i32_99 dim 1 : vector<1x256xi32>, i32 -> vector<1x256xi32>
    %244 = arith.cmpi eq, %243, %240 : vector<1x256xi32>
    %245 = arith.andi %244, %238 : vector<1x256xi1>
    %cst_100 = arith.constant 0.000000e+00 : f32
    %246 = vector.shape_cast %245 : vector<1x256xi1> to vector<1x256xi1>
    %247 = vector.broadcast %246 : vector<1x256xi1> to vector<64x256xi1>
    %248 = vector.broadcast %cst_100 : f32 to vector<64x256xf32>
    %249 = arith.select %247, %242, %248 : vector<64x256xi1>, vector<64x256xf32>
    %250 = arith.addf %241, %249 : vector<64x256xf32>
    %c17_i32_101 = arith.constant 17 : i32
    %251 = tpu.dynamic_rotate %33 by %c17_i32_101 dim 1 : vector<64x256xf32>, i32 -> vector<64x256xf32>
    %c17_i32_102 = arith.constant 17 : i32
    %252 = tpu.dynamic_rotate %34 by %c17_i32_102 dim 1 : vector<1x256xi32>, i32 -> vector<1x256xi32>
    %253 = arith.cmpi eq, %252, %240 : vector<1x256xi32>
    %254 = arith.andi %253, %238 : vector<1x256xi1>
    %cst_103 = arith.constant 0.000000e+00 : f32
    %255 = vector.shape_cast %254 : vector<1x256xi1> to vector<1x256xi1>
    %256 = vector.broadcast %255 : vector<1x256xi1> to vector<64x256xi1>
    %257 = vector.broadcast %cst_103 : f32 to vector<64x256xf32>
    %258 = arith.select %256, %251, %257 : vector<64x256xi1>, vector<64x256xf32>
    %259 = arith.addf %250, %258 : vector<64x256xf32>
    %c8 = arith.constant 8 : index
    %c0_104 = arith.constant 0 : index
    %c0_105 = arith.constant 0 : index
    %260 = vector.load %arg6[%c8, %c0_104, %c0_105] : memref<9x64x64xf32, #tpu.memory_space<vmem>>, vector<1x64x64xf32>
    %261 = vector.shape_cast %260 : vector<1x64x64xf32> to vector<64x64xf32>
    %cst_106 = arith.constant dense<0.000000e+00> : vector<64x256xf32>
    %262 = tpu.matmul %261, %259, %cst_106 {dimension_numbers = #tpu.dot_dimension_numbers<[1], [0], [0], [1], [0, 0, 1, 1], [], []>} : vector<64x64xf32>, vector<64x256xf32>, vector<64x256xf32> -> vector<64x256xf32>
    %263 = arith.addf %236, %262 : vector<64x256xf32>
    %c0_107 = arith.constant 0 : index
    %c0_108 = arith.constant 0 : index
    %264 = vector.load %arg7[%c0_107, %c0_108] : memref<64x1xf32, #tpu.memory_space<vmem>>, vector<64x1xf32>
    %265 = vector.broadcast %264 : vector<64x1xf32> to vector<64x256xf32>
    %266 = arith.addf %263, %265 : vector<64x256xf32>
    %c0_109 = arith.constant 0 : index
    %c0_110 = arith.constant 0 : index
    %267 = vector.load %arg8[%c0_109, %c0_110] : memref<64x32xf32, #tpu.memory_space<vmem>>, vector<64x32xf32>
    %c0_111 = arith.constant 0 : index
    %c0_112 = arith.constant 0 : index
    %c0_113 = arith.constant 0 : index
    %268 = vector.load %arg2[%c0_111, %c0_112, %c0_113] : memref<1x32x256xf32, #tpu.memory_space<vmem>>, vector<1x32x256xf32>
    %269 = vector.shape_cast %268 : vector<1x32x256xf32> to vector<32x256xf32>
    %cst_114 = arith.constant dense<0.000000e+00> : vector<64x256xf32>
    %270 = tpu.matmul %267, %269, %cst_114 {dimension_numbers = #tpu.dot_dimension_numbers<[1], [0], [0], [1], [0, 0, 1, 1], [], []>} : vector<64x32xf32>, vector<32x256xf32>, vector<64x256xf32> -> vector<64x256xf32>
    %c0_115 = arith.constant 0 : index
    %c0_116 = arith.constant 0 : index
    %271 = vector.load %arg9[%c0_115, %c0_116] : memref<64x1xf32, #tpu.memory_space<vmem>>, vector<64x1xf32>
    %272 = vector.broadcast %271 : vector<64x1xf32> to vector<64x256xf32>
    %273 = arith.addf %270, %272 : vector<64x256xf32>
    %274 = arith.addf %266, %273 : vector<64x256xf32>
    %c0_117 = arith.constant 0 : index
    %c0_118 = arith.constant 0 : index
    %c0_119 = arith.constant 0 : index
    %275 = vector.load %arg10[%c0_117, %c0_118, %c0_119] : memref<1x64x256xf32, #tpu.memory_space<vmem>>, vector<1x64x256xf32>
    %276 = vector.shape_cast %275 : vector<1x64x256xf32> to vector<64x256xf32>
    %277 = vector.shape_cast %274 : vector<64x256xf32> to vector<1x64x256xf32>
    tpu.vector_store %arg10[%c0_117, %c0_118, %c0_119], %277 {strides = array<i32>} : memref<1x64x256xf32, #tpu.memory_space<vmem>>, vector<1x64x256xf32>,
    return
  }
  func.func @transform_0(%arg0: i32) -> (i32, i32, i32) {
    %c0_i32 = arith.constant 0 : i32
    %c0_i32_0 = arith.constant 0 : i32
    %c0_i32_1 = arith.constant 0 : i32
    return %arg0, %c0_i32, %c0_i32_0 : i32, i32, i32
  }
  func.func @transform_1(%arg0: i32) -> (i32, i32, i32) {
    %c0_i32 = arith.constant 0 : i32
    %c0_i32_0 = arith.constant 0 : i32
    %c0_i32_1 = arith.constant 0 : i32
    return %arg0, %c0_i32, %c0_i32_0 : i32, i32, i32
  }
  func.func @transform_2(%arg0: i32) -> (i32, i32) {
    %c0_i32 = arith.constant 0 : i32
    %c0_i32_0 = arith.constant 0 : i32
    %c0_i32_1 = arith.constant 0 : i32
    return %c0_i32, %c0_i32_0 : i32, i32
  }
  func.func @transform_3(%arg0: i32) -> (i32, i32) {
    %c0_i32 = arith.constant 0 : i32
    %c0_i32_0 = arith.constant 0 : i32
    %c0_i32_1 = arith.constant 0 : i32
    return %c0_i32, %c0_i32_0 : i32, i32
  }
  func.func @transform_4(%arg0: i32) -> (i32, i32) {
    %c0_i32 = arith.constant 0 : i32
    %c0_i32_0 = arith.constant 0 : i32
    %c0_i32_1 = arith.constant 0 : i32
    return %c0_i32, %c0_i32_0 : i32, i32
  }
  func.func @transform_5(%arg0: i32) -> (i32, i32, i32) {
    %c0_i32 = arith.constant 0 : i32
    %c0_i32_0 = arith.constant 0 : i32
    %c0_i32_1 = arith.constant 0 : i32
    %c0_i32_2 = arith.constant 0 : i32
    return %c0_i32, %c0_i32_0, %c0_i32_1 : i32, i32, i32
  }
  func.func @transform_6(%arg0: i32) -> (i32, i32) {
    %c0_i32 = arith.constant 0 : i32
    %c0_i32_0 = arith.constant 0 : i32
    %c0_i32_1 = arith.constant 0 : i32
    return %c0_i32, %c0_i32_0 : i32, i32
  }
  func.func @transform_7(%arg0: i32) -> (i32, i32) {
    %c0_i32 = arith.constant 0 : i32
    %c0_i32_0 = arith.constant 0 : i32
    %c0_i32_1 = arith.constant 0 : i32
    return %c0_i32, %c0_i32_0 : i32, i32
  }
  func.func @transform_8(%arg0: i32) -> (i32, i32) {
    %c0_i32 = arith.constant 0 : i32
    %c0_i32_0 = arith.constant 0 : i32
    %c0_i32_1 = arith.constant 0 : i32
    return %c0_i32, %c0_i32_0 : i32, i32
  }
  func.func @transform_9(%arg0: i32) -> (i32, i32, i32) {
    %c0_i32 = arith.constant 0 : i32
    %c0_i32_0 = arith.constant 0 : i32
    %c0_i32_1 = arith.constant 0 : i32
    return %arg0, %c0_i32, %c0_i32_0 : i32, i32, i32
  }
}

</mosaic_0001>

<llo_original>
// kernel: resnet_block_forward.3
$region0: #{resnet_block_forward.3}
  #allocation0 [shape = 'u32[]', space=smem, size = 0x4, offset = 0x4, fixed_abs, tag = 'smem constant byte address 0x4 - core index']
  #allocation1 [shape = 'u32[144,128]{1,0:T(1,128)}', space=vmem, size = 0x12000, scoped, tag = 'internal scratch']
  %s0 = inlined_call_operand.vmem [shape: f32[2,128], index: 0, kind: input, shape index: {}]
  %s1 = inlined_call_operand.vmem [shape: f32[128,64], index: 1, kind: input, shape index: {}]
  %s2 = inlined_call_operand.vmem [shape: f32[1,64], index: 2, kind: input, shape index: {}]
  %s3 = inlined_call_operand.vmem [shape: f32[2,64], index: 3, kind: output, shape index: {}]
  %s4 = sld [smem:[#allocation0]]
  $region22: #{resnet_block_forward.3} parent=0
    _
  %s6 = ssub.s32 1, %s4
  %s7 = scalar_select 0, %s6, %s4
  // Predicated region
  $region2: #{resnet_block_forward.3} parent=0 // pred_check
    _
  $region3: #{resnet_block_forward.3} parent=0 // pred_check_branch
    %9 = sbr.rel (0) target = $region5
  $region4: #{resnet_block_forward.3} parent=0 // pred_region
    _
  $region5: #{resnet_block_forward.3} parent=0 // pred_fallthru
    _
  // Predicated region
  $region6: #{resnet_block_forward.3} parent=0 // pred_check
    _
  $region7: #{resnet_block_forward.3} parent=0 // pred_check_branch
    %11 = sbr.rel (0) target = $region9
  $region8: #{resnet_block_forward.3} parent=0 // pred_region
    _
  $region9: #{resnet_block_forward.3} parent=0 // pred_fallthru
    _
  // Predicated region
  $region10: #{resnet_block_forward.3} parent=0 // pred_check
    _
  $region11: #{resnet_block_forward.3} parent=0 // pred_check_branch
    %13 = sbr.rel (0) target = $region13
  $region12: #{resnet_block_forward.3} parent=0 // pred_region
    _
  $region13: #{resnet_block_forward.3} parent=0 // pred_fallthru
    _
  %v14 = vld [vmem:[%s0] sm:$0x3]
  %v15 = vsub.f32 0.0, %v14
  %v16 = vmul.f32 %v15, 1.442695
  %v17 = vpow.pop %v16
  %v18 = vadd.f32 %v17, 1.0
  %v19 = vrcp.pop %v18
  %v20 = vmul.f32 1.0, %v19
  %v21 = vmul.f32 %v14, %v20
  %v22 = vld [vmem:[%s1] sm:$0xff]
  %v23 = vld [vmem:[%s1 + $0x8] sm:$0xff]
  %v24 = vld [vmem:[%s1 + $0x10] sm:$0xff]
  %v25 = vld [vmem:[%s1 + $0x18] sm:$0xff]
  %v26 = vld [vmem:[%s1 + $0x20] sm:$0xff]
  %v27 = vld [vmem:[%s1 + $0x28] sm:$0xff]
  %v28 = vld [vmem:[%s1 + $0x30] sm:$0xff]
  %v29 = vld [vmem:[%s1 + $0x38] sm:$0xff]
  %v30 = vld [vmem:[%s1 + $0x40] sm:$0xff]
  %v31 = vld [vmem:[%s1 + $0x48] sm:$0xff]
  %v32 = vld [vmem:[%s1 + $0x50] sm:$0xff]
  %v33 = vld [vmem:[%s1 + $0x58] sm:$0xff]
  %v34 = vld [vmem:[%s1 + $0x60] sm:$0xff]
  %v35 = vld [vmem:[%s1 + $0x68] sm:$0xff]
  %v36 = vld [vmem:[%s1 + $0x70] sm:$0xff]
  %v37 = vld [vmem:[%s1 + $0x78] sm:$0xff]
  %v38 = vld [vmem:[%s2] sm:$0x1]
  %v40 = vlaneseq
  %v41 = vshrl.u32 %v40, 7
  %v42 = vsub.s32 0, %v41
  %v43 = vrot.slane %v38, %v42
  %45 = vmatprep.subr.mxu0 0.0
  %46 = vmatpush1.msra.mxu0 %v22
  %47 = vmatprep.subr.mxu0 0.0
  %48 = vmatpush1.msra.mxu0 %v23
  %49 = vmatprep.subr.mxu0 0.0
  %50 = vmatpush1.msra.mxu0 %v24
  %51 = vmatprep.subr.mxu0 0.0
  %52 = vmatpush1.msra.mxu0 %v25
  %53 = vmatprep.subr.mxu0 0.0
  %54 = vmatpush1.msra.mxu0 %v26
  %55 = vmatprep.subr.mxu0 0.0
  %56 = vmatpush1.msra.mxu0 %v27
  %57 = vmatprep.subr.mxu0 0.0
  %58 = vmatpush1.msra.mxu0 %v28
  %59 = vmatprep.subr.mxu0 0.0
  %60 = vmatpush1.msra.mxu0 %v29
  %61 = vmatprep.subr.mxu0 0.0
  %62 = vmatpush1.msra.mxu0 %v30
  %63 = vmatprep.subr.mxu0 0.0
  %64 = vmatpush1.msra.mxu0 %v31
  %65 = vmatprep.subr.mxu0 0.0
  %66 = vmatpush1.msra.mxu0 %v32
  %67 = vmatprep.subr.mxu0 0.0
  %68 = vmatpush1.msra.mxu0 %v33
  %69 = vmatprep.subr.mxu0 0.0
  %70 = vmatpush1.msra.mxu0 %v34
  %71 = vmatprep.subr.mxu0 0.0
  %72 = vmatpush1.msra.mxu0 %v35
  %73 = vmatprep.subr.mxu0 0.0
  %74 = vmatpush1.msra.mxu0 %v36
  %75 = vmatprep.subr.mxu0 0.0
  %76 = vmatpush1.msra.mxu0 %v37
  %77 = vmatprep.subr.mxu0 0.0
  %78 = vmatpush1.msra.mxu0 0.0
  %79 = vmatprep.subr.mxu0 0.0
  %80 = vmatpush1.msra.mxu0 0.0
  %81 = vmatprep.subr.mxu0 0.0
  %82 = vmatpush1.msra.mxu0 0.0
  %83 = vmatprep.subr.mxu0 0.0
  %84 = vmatpush1.msra.mxu0 0.0
  %85 = vmatprep.subr.mxu0 0.0
  %86 = vmatpush1.msra.mxu0 0.0
  %87 = vmatprep.subr.mxu0 0.0
  %88 = vmatpush1.msra.mxu0 0.0
  %89 = vmatprep.subr.mxu0 0.0
  %90 = vmatpush1.msra.mxu0 0.0
  %91 = vmatprep.subr.mxu0 0.0
  %92 = vmatpush1.msra.mxu0 0.0
  %93 = vmatprep.subr.mxu0 0.0
  %94 = vmatpush1.msra.mxu0 0.0
  %95 = vmatprep.subr.mxu0 0.0
  %96 = vmatpush1.msra.mxu0 0.0
  %97 = vmatprep.subr.mxu0 0.0
  %98 = vmatpush1.msra.mxu0 0.0
  %99 = vmatprep.subr.mxu0 0.0
  %100 = vmatpush1.msra.mxu0 0.0
  %101 = vmatprep.subr.mxu0 0.0
  %102 = vmatpush1.msra.mxu0 0.0
  %103 = vmatprep.subr.mxu0 0.0
  %104 = vmatpush1.msra.mxu0 0.0
  %105 = vmatprep.subr.mxu0 0.0
  %106 = vmatpush1.msra.mxu0 0.0
  %107 = vmatprep.subr.mxu0 0.0
  %108 = vmatpush1.msra.mxu0 0.0
  %109 = vmatprep.mubr.f32.mxu0 0.0
  %110 = vmatmul.mubr.f32.gmra.mrb[0].mxu0 %v21
  %v111 = vpop.f32.mrb[0].mxu0
  %v112 = vadd.f32 %v43, %v111
  %v113 = vpop.f32.mrb[0].mxu0
  %114 = vdwg.mxu0
  %vm115 = vcmask 517120
  %116 = vst.msk [vmem:[%s3] sm:$0x3] %vm115, %v112
  // Predicated region
  $region14: #{resnet_block_forward.3} parent=0 // pred_check
    _
  $region15: #{resnet_block_forward.3} parent=0 // pred_check_branch
    %118 = sbr.rel (0) target = $region17
  $region16: #{resnet_block_forward.3} parent=0 // pred_region
    _
  $region17: #{resnet_block_forward.3} parent=0 // pred_fallthru
    _
  // Predicated region
  $region18: #{resnet_block_forward.3} parent=0 // pred_check
    _
  $region19: #{resnet_block_forward.3} parent=0 // pred_check_branch
    %120 = sbr.rel (0) target = $region21
  $region20: #{resnet_block_forward.3} parent=0 // pred_region
    _
  $region21: #{resnet_block_forward.3} parent=0 // pred_fallthru
    _

// kernel: resnet_block_forward.4
$region0: #{resnet_block_forward.4}
  #allocation0 [shape = 'u32[]', space=smem, size = 0x4, offset = 0x4, fixed_abs, tag = 'smem constant byte address 0x4 - core index']
  #allocation1 [shape = 'u32[144,128]{1,0:T(1,128)}', space=vmem, size = 0x12000, scoped, tag = 'internal scratch']
  %s0 = inlined_call_operand.vmem [shape: f32[2,32,256], index: 0, kind: input, shape index: {}]
  %s1 = inlined_call_operand.vmem [shape: f32[32,1], index: 1, kind: input, shape index: {}]
  %s2 = inlined_call_operand.vmem [shape: f32[32,1], index: 2, kind: input, shape index: {}]
  %s3 = inlined_call_operand.vmem [shape: f32[32,32], index: 3, kind: input, shape index: {}]
  %s4 = inlined_call_operand.vmem [shape: f32[9,64,32], index: 4, kind: input, shape index: {}]
  %s5 = inlined_call_operand.vmem [shape: f32[2,64,1], index: 5, kind: input, shape index: {}]
  %s6 = inlined_call_operand.vmem [shape: f32[2,64,256], index: 6, kind: output, shape index: {}]
  %s7 = sld [smem:[#allocation0]]
  $region57: #{resnet_block_forward.4} parent=0
    _
  %s9 = ssub.s32 1, %s7
  %s10 = scalar_select 0, %s9, %s7
  loop: start=0, step=1, limit=4
  $region2: #{resnet_block_forward.4} parent=0 // loop_pre_header
    _
  $region3: #{resnet_block_forward.4} parent=0 // loop_header
    %s12 = sphi 0, %s16
    %p13 = scmp.ge.s32.totalorder %s12, 4
    %s22 = sphi 0, %s24
    %s25 = sphi 0, %s22
    %s26 = sphi 0, %s25
    %s42 = sphi 0, %s26
    %s46 = sphi 0, %s46
    %s48 = sphi 0, %s46
    %s49 = sphi 0, %s48
    %s63 = sphi 0, %s49
    %s67 = sphi 0, %s67
    %s69 = sphi 0, %s67
    %s70 = sphi 0, %s69
    %s84 = sphi 0, %s70
    %s88 = sphi 0, %s88
    %s90 = sphi 0, %s88
    %s91 = sphi 0, %s90
    %s105 = sphi 0, %s91
    %s109 = sphi 0, %s109
    %s111 = sphi 0, %s109
    %s112 = sphi 0, %s111
    %s126 = sphi 0, %s112
    %s132 = sphi 0, %s134
    %s135 = sphi 0, %s132
    %s136 = sphi 0, %s135
    %s152 = sphi 0, %s136
    %s158 = sphi 0, %s160
    %s161 = sphi 0, %s158
    %s162 = sphi 0, %s161
    %s178 = sphi 0, %s162
  $region4: #{resnet_block_forward.4} parent=0 // loop_header_branch
    %15 = sbr.rel (%p13) target = $region8
  $region5: #{resnet_block_forward.4} parent=0 // loop_body
    %s17 = ssub.s32 %s12, 1
    %s18 = ssub.s32 %s12, 2
    %s19 = sadd.s32 %s12, 1
    %s20 = ssub.s32 %s12, %s19
    %p21 = scmp.eq.s32.totalorder %s20, 0
    %s23 = sadd.s32 %s22, 1
    %s24 = scalar_select %p21, %s22, %s23
    %p27 = pneg %p21
    %p28 = scmp.eq.s32.totalorder %s12, 1
    %p29 = por %p27, %p28
    %p30 = scmp.ne.s32.totalorder %s22, %s25
    %p31 = scmp.eq.s32.totalorder %s12, 0
    %p32 = por %p30, %p31
    %p33 = scmp.ne.s32.totalorder %s22, %s25
    %p34 = scmp.eq.s32.totalorder %s17, 1
    %p35 = por %p33, %p34
    %p36 = scmp.ne.s32.totalorder %s25, %s26
    %p37 = scmp.eq.s32.totalorder %s17, 0
    %p38 = por %p36, %p37
    %p39 = scmp.ne.s32.totalorder %s25, %s26
    %p40 = scmp.eq.s32.totalorder %s18, 1
    %p41 = por %p39, %p40
    %p43 = scmp.ne.s32.totalorder %s26, %s42
    %p44 = scmp.eq.s32.totalorder %s18, 0
    %p45 = por %p43, %p44
    %s47 = sadd.s32 %s46, 1
    %p50 = scmp.eq.s32.totalorder %s12, 1
    %p51 = scmp.ne.s32.totalorder %s46, %s48
    %p52 = scmp.eq.s32.totalorder %s12, 0
    %p53 = por %p51, %p52
    %p54 = scmp.ne.s32.totalorder %s46, %s48
    %p55 = scmp.eq.s32.totalorder %s17, 1
    %p56 = por %p54, %p55
    %p57 = scmp.ne.s32.totalorder %s48, %s49
    %p58 = scmp.eq.s32.totalorder %s17, 0
    %p59 = por %p57, %p58
    %p60 = scmp.ne.s32.totalorder %s48, %s49
    %p61 = scmp.eq.s32.totalorder %s18, 1
    %p62 = por %p60, %p61
    %p64 = scmp.ne.s32.totalorder %s49, %s63
    %p65 = scmp.eq.s32.totalorder %s18, 0
    %p66 = por %p64, %p65
    %s68 = sadd.s32 %s67, 1
    %p71 = scmp.eq.s32.totalorder %s12, 1
    %p72 = scmp.ne.s32.totalorder %s67, %s69
    %p73 = scmp.eq.s32.totalorder %s12, 0
    %p74 = por %p72, %p73
    %p75 = scmp.ne.s32.totalorder %s67, %s69
    %p76 = scmp.eq.s32.totalorder %s17, 1
    %p77 = por %p75, %p76
    %p78 = scmp.ne.s32.totalorder %s69, %s70
    %p79 = scmp.eq.s32.totalorder %s17, 0
    %p80 = por %p78, %p79
    %p81 = scmp.ne.s32.totalorder %s69, %s70
    %p82 = scmp.eq.s32.totalorder %s18, 1
    %p83 = por %p81, %p82
    %p85 = scmp.ne.s32.totalorder %s70, %s84
    %p86 = scmp.eq.s32.totalorder %s18, 0
    %p87 = por %p85, %p86
    %s89 = sadd.s32 %s88, 1
    %p92 = scmp.eq.s32.totalorder %s12, 1
    %p93 = scmp.ne.s32.totalorder %s88, %s90
    %p94 = scmp.eq.s32.totalorder %s12, 0
    %p95 = por %p93, %p94
    %p96 = scmp.ne.s32.totalorder %s88, %s90
    %p97 = scmp.eq.s32.totalorder %s17, 1
    %p98 = por %p96, %p97
    %p99 = scmp.ne.s32.totalorder %s90, %s91
    %p100 = scmp.eq.s32.totalorder %s17, 0
    %p101 = por %p99, %p100
    %p102 = scmp.ne.s32.totalorder %s90, %s91
    %p103 = scmp.eq.s32.totalorder %s18, 1
    %p104 = por %p102, %p103
    %p106 = scmp.ne.s32.totalorder %s91, %s105
    %p107 = scmp.eq.s32.totalorder %s18, 0
    %p108 = por %p106, %p107
    %s110 = sadd.s32 %s109, 1
    %p113 = scmp.eq.s32.totalorder %s12, 1
    %p114 = scmp.ne.s32.totalorder %s109, %s111
    %p115 = scmp.eq.s32.totalorder %s12, 0
    %p116 = por %p114, %p115
    %p117 = scmp.ne.s32.totalorder %s109, %s111
    %p118 = scmp.eq.s32.totalorder %s17, 1
    %p119 = por %p117, %p118
    %p120 = scmp.ne.s32.totalorder %s111, %s112
    %p121 = scmp.eq.s32.totalorder %s17, 0
    %p122 = por %p120, %p121
    %p123 = scmp.ne.s32.totalorder %s111, %s112
    %p124 = scmp.eq.s32.totalorder %s18, 1
    %p125 = por %p123, %p124
    %p127 = scmp.ne.s32.totalorder %s112, %s126
    %p128 = scmp.eq.s32.totalorder %s18, 0
    %p129 = por %p127, %p128
    %s130 = ssub.s32 %s12, %s19
    %p131 = scmp.eq.s32.totalorder %s130, 0
    %s133 = sadd.s32 %s132, 1
    %s134 = scalar_select %p131, %s132, %s133
    %p137 = pneg %p131
    %p138 = scmp.eq.s32.totalorder %s12, 1
    %p139 = por %p137, %p138
    %p140 = scmp.ne.s32.totalorder %s132, %s135
    %p141 = scmp.eq.s32.totalorder %s12, 0
    %p142 = por %p140, %p141
    %p143 = scmp.ne.s32.totalorder %s132, %s135
    %p144 = scmp.eq.s32.totalorder %s17, 1
    %p145 = por %p143, %p144
    %p146 = scmp.ne.s32.totalorder %s135, %s136
    %p147 = scmp.eq.s32.totalorder %s17, 0
    %p148 = por %p146, %p147
    %p149 = scmp.ne.s32.totalorder %s135, %s136
    %p150 = scmp.eq.s32.totalorder %s18, 1
    %p151 = por %p149, %p150
    %p153 = scmp.ne.s32.totalorder %s136, %s152
    %p154 = scmp.eq.s32.totalorder %s18, 0
    %p155 = por %p153, %p154
    %s156 = ssub.s32 %s12, %s19
    %p157 = scmp.eq.s32.totalorder %s156, 0
    %s159 = sadd.s32 %s158, 1
    %s160 = scalar_select %p157, %s158, %s159
    %p163 = pneg %p157
    %p164 = scmp.eq.s32.totalorder %s12, 1
    %p165 = por %p163, %p164
    %p166 = scmp.ne.s32.totalorder %s158, %s161
    %p167 = scmp.eq.s32.totalorder %s12, 0
    %p168 = por %p166, %p167
    %p169 = scmp.ne.s32.totalorder %s158, %s161
    %p170 = scmp.eq.s32.totalorder %s17, 1
    %p171 = por %p169, %p170
    %p172 = scmp.ne.s32.totalorder %s161, %s162
    %p173 = scmp.eq.s32.totalorder %s17, 0
    %p174 = por %p172, %p173
    %p175 = scmp.ne.s32.totalorder %s161, %s162
    %p176 = scmp.eq.s32.totalorder %s18, 1
    %p177 = por %p175, %p176
    %p179 = scmp.ne.s32.totalorder %s162, %s178
    %p180 = scmp.eq.s32.totalorder %s18, 0
    %p181 = por %p179, %p180
    %p182 = scmp.le.s32.totalorder 1, %s12
    %p183 = scmp.lt.s32.totalorder %s12, 3
    %p184 = pnand %p182, %p183
    %p185 = pneg %p184
    // Predicated region
    $region9: #{resnet_block_forward.4} parent=5 // pred_check
      _
    $region10: #{resnet_block_forward.4} parent=5 // pred_check_branch
      %187 = sbr.rel (%p184) target = $region12
    $region11: #{resnet_block_forward.4} parent=5 // pred_region
      %s188 = ssub.s32 %s12, 1
      // Predicated region
      $region13: #{resnet_block_forward.4} parent=11 // pred_check
        %p189 = pneg %p59
      $region14: #{resnet_block_forward.4} parent=11 // pred_check_branch
        %191 = sbr.rel (%p189) target = $region16
      $region15: #{resnet_block_forward.4} parent=11 // pred_region
        _
      $region16: #{resnet_block_forward.4} parent=11 // pred_fallthru
        _
      // Predicated region
      $region17: #{resnet_block_forward.4} parent=11 // pred_check
        %p192 = pneg %p80
      $region18: #{resnet_block_forward.4} parent=11 // pred_check_branch
        %194 = sbr.rel (%p192) target = $region20
      $region19: #{resnet_block_forward.4} parent=11 // pred_region
        _
      $region20: #{resnet_block_forward.4} parent=11 // pred_fallthru
        _
      // Predicated region
      $region21: #{resnet_block_forward.4} parent=11 // pred_check
        %p195 = pneg %p101
      $region22: #{resnet_block_forward.4} parent=11 // pred_check_branch
        %197 = sbr.rel (%p195) target = $region24
      $region23: #{resnet_block_forward.4} parent=11 // pred_region
        _
      $region24: #{resnet_block_forward.4} parent=11 // pred_fallthru
        _
      // Predicated region
      $region25: #{resnet_block_forward.4} parent=11 // pred_check
        %p198 = pneg %p122
      $region26: #{resnet_block_forward.4} parent=11 // pred_check_branch
        %200 = sbr.rel (%p198) target = $region28
      $region27: #{resnet_block_forward.4} parent=11 // pred_region
        _
      $region28: #{resnet_block_forward.4} parent=11 // pred_fallthru
        _
    $region12: #{resnet_block_forward.4} parent=5 // pred_fallthru
      _
    %p201 = scmp.lt.s32.totalorder %s12, 2
    // Predicated region
    $region29: #{resnet_block_forward.4} parent=5 // pred_check
      %p202 = pneg %p201
    $region30: #{resnet_block_forward.4} parent=5 // pred_check_branch
      %204 = sbr.rel (%p202) target = $region32
    $region31: #{resnet_block_forward.4} parent=5 // pred_region
      // Predicated region
      $region33: #{resnet_block_forward.4} parent=31 // pred_check
        %p205 = pneg %p32
      $region34: #{resnet_block_forward.4} parent=31 // pred_check_branch
        %207 = sbr.rel (%p205) target = $region36
      $region35: #{resnet_block_forward.4} parent=31 // pred_region
        %p208 = scmp.lt.s32.totalorder %s12, 1
        %s209 = scalar_select %p208, %s12, 1
        %s210 = smul.addr %s209, 8
        %s211 = smul.addr %s210, 8
        %s212 = scalar_lea.vmem %s0, %s211
      $region36: #{resnet_block_forward.4} parent=31 // pred_fallthru
        _
      // Predicated region
      $region37: #{resnet_block_forward.4} parent=31 // pred_check
        %p213 = pneg %p142
      $region38: #{resnet_block_forward.4} parent=31 // pred_check_branch
        %215 = sbr.rel (%p213) target = $region40
      $region39: #{resnet_block_forward.4} parent=31 // pred_region
        %p216 = scmp.lt.s32.totalorder %s12, 1
        %s217 = scalar_select %p216, %s12, 1
        %s218 = smul.addr %s217, 8
        %s219 = smul.addr %s218, 8
        %s220 = scalar_lea.vmem %s5, %s219
      $region40: #{resnet_block_forward.4} parent=31 // pred_fallthru
        _
    $region32: #{resnet_block_forward.4} parent=5 // pred_fallthru
      _
    %p221 = scmp.le.s32.totalorder 1, %s12
    %p222 = scmp.lt.s32.totalorder %s12, 3
    %p223 = pnand %p221, %p222
    %p224 = pneg %p223
    // Predicated region
    $region41: #{resnet_block_forward.4} parent=5 // pred_check
      _
    $region42: #{resnet_block_forward.4} parent=5 // pred_check_branch
      %226 = sbr.rel (%p223) target = $region44
    $region43: #{resnet_block_forward.4} parent=5 // pred_region
      %s227 = ssub.s32 %s12, 1
      %p228 = scmp.lt.s32.totalorder %s17, 1
      %s229 = scalar_select %p228, %s17, 1
      %s230 = smul.addr %s229, 8
      %s231 = smul.addr %s230, 8
      %s232 = scalar_lea.vmem %s0, %s231
      %p233 = pneg %p38
      %p234 = pneg %p35
      %p235 = pneg %p59
      %p236 = pneg %p56
      %p237 = pneg %p80
      %p238 = pneg %p77
      %p239 = pneg %p101
      %p240 = pneg %p98
      %p241 = pneg %p122
      %p242 = pneg %p119
      %p243 = scmp.lt.s32.totalorder %s17, 1
      %s244 = scalar_select %p243, %s17, 1
      %s245 = smul.addr %s244, 8
      %s246 = smul.addr %s245, 8
      %s247 = scalar_lea.vmem %s5, %s246
      %p248 = pneg %p148
      %p249 = pneg %p145
      %p250 = pneg %p174
      %p251 = pneg %p171
      %p252 = scmp.lt.s32.totalorder %s17, 1
      %s253 = scalar_select %p252, %s17, 1
      %s254 = smul.addr %s253, 16
      %s255 = smul.addr %s254, 8
      %s256 = scalar_lea.vmem %s6, %s255
      %p257 = scmp.lt.s32.totalorder %s17, 1
      %s258 = scalar_select %p257, %s17, 1
      %s259 = smul.addr %s258, 8
      %s260 = smul.addr %s259, 8
      %s261 = scalar_lea.vmem %s0, %s260
      %p262 = scmp.lt.s32.totalorder %s17, 1
      %s263 = scalar_select %p262, %s17, 1
      %s264 = smul.addr %s263, 8
      %s265 = smul.addr %s264, 8
      %s266 = scalar_lea.vmem %s5, %s265
      %p267 = scmp.lt.s32.totalorder %s17, 1
      %s268 = scalar_select %p267, %s17, 1
      %s269 = smul.addr %s268, 16
      %s270 = smul.addr %s269, 8
      %s271 = scalar_lea.vmem %s6, %s270
      %v272 = vld [vmem:[%s261] sm:$0xff]
      %v273 = vld [vmem:[%s261 + $0x8] sm:$0xff]
      %v274 = vld [vmem:[%s261 + $0x10] sm:$0xff]
      %v275 = vld [vmem:[%s261 + $0x18] sm:$0xff]
      %v276 = vld [vmem:[%s261 + $0x20] sm:$0xff]
      %v277 = vld [vmem:[%s261 + $0x28] sm:$0xff]
      %v278 = vld [vmem:[%s261 + $0x30] sm:$0xff]
      %v279 = vld [vmem:[%s261 + $0x38] sm:$0xff]
      %v280 = vld [vmem:[%s3] sm:$0xff]
      %v281 = vld [vmem:[%s3 + $0x8] sm:$0xff]
      %v282 = vld [vmem:[%s3 + $0x10] sm:$0xff]
      %v283 = vld [vmem:[%s3 + $0x18] sm:$0xff]
      %vm284 = vcmask 261120
      %v286 = vsel %vm284, %v280, 0
      %v289 = vsel %vm284, %v281, 0
      %v292 = vsel %vm284, %v282, 0
      %v295 = vsel %vm284, %v283, 0
      %297 = vmatprep.subr.mxu0 %v273
      %298 = vmatpush1.msra.mxu0 %v272
      %299 = vmatprep.subr.mxu0 %v275
      %300 = vmatpush1.msra.mxu0 %v274
      %301 = vmatprep.subr.mxu0 %v277
      %302 = vmatpush1.msra.mxu0 %v276
      %303 = vmatprep.subr.mxu0 %v279
      %304 = vmatpush1.msra.mxu0 %v278
      %305 = vmatprep.subr.mxu0 0.0
      %306 = vmatpush1.msra.mxu0 0.0
      %307 = vmatprep.subr.mxu0 0.0
      %308 = vmatpush1.msra.mxu0 0.0
      %309 = vmatprep.subr.mxu0 0.0
      %310 = vmatpush1.msra.mxu0 0.0
      %311 = vmatprep.subr.mxu0 0.0
      %312 = vmatpush1.msra.mxu0 0.0
      %313 = vmatprep.subr.mxu0 0.0
      %314 = vmatpush1.msra.mxu0 0.0
      %315 = vmatprep.subr.mxu0 0.0
      %316 = vmatpush1.msra.mxu0 0.0
      %317 = vmatprep.subr.mxu0 0.0
      %318 = vmatpush1.msra.mxu0 0.0
      %319 = vmatprep.subr.mxu0 0.0
      %320 = vmatpush1.msra.mxu0 0.0
      %321 = vmatprep.subr.mxu0 0.0
      %322 = vmatpush1.msra.mxu0 0.0
      %323 = vmatprep.subr.mxu0 0.0
      %324 = vmatpush1.msra.mxu0 0.0
      %325 = vmatprep.subr.mxu0 0.0
      %326 = vmatpush1.msra.mxu0 0.0
      %327 = vmatprep.subr.mxu0 0.0
      %328 = vmatpush1.msra.mxu0 0.0
      %329 = vmatprep.subr.mxu0 0.0
      %330 = vmatpush1.msra.mxu0 0.0
      %331 = vmatprep.subr.mxu0 0.0
      %332 = vmatpush1.msra.mxu0 0.0
      %333 = vmatprep.subr.mxu0 0.0
      %334 = vmatpush1.msra.mxu0 0.0
      %335 = vmatprep.subr.mxu0 0.0
      %336 = vmatpush1.msra.mxu0 0.0
      %337 = vmatprep.subr.mxu0 0.0
      %338 = vmatpush1.msra.mxu0 0.0
      %339 = vmatprep.subr.mxu0 0.0
      %340 = vmatpush1.msra.mxu0 0.0
      %341 = vmatprep.subr.mxu0 0.0
      %342 = vmatpush1.msra.mxu0 0.0
      %343 = vmatprep.subr.mxu0 0.0
      %344 = vmatpush1.msra.mxu0 0.0
      %345 = vmatprep.subr.mxu0 0.0
      %346 = vmatpush1.msra.mxu0 0.0
      %347 = vmatprep.subr.mxu0 0.0
      %348 = vmatpush1.msra.mxu0 0.0
      %349 = vmatprep.subr.mxu0 0.0
      %350 = vmatpush1.msra.mxu0 0.0
      %351 = vmatprep.subr.mxu0 0.0
      %352 = vmatpush1.msra.mxu0 0.0
      %353 = vmatprep.subr.mxu0 0.0
      %354 = vmatpush1.msra.mxu0 0.0
      %355 = vmatprep.subr.mxu0 0.0
      %356 = vmatpush1.msra.mxu0 0.0
      %357 = vmatprep.subr.mxu0 0.0
      %358 = vmatpush1.msra.mxu0 0.0
      %359 = vmatprep.subr.mxu0 0.0
      %360 = vmatpush1.msra.mxu0 0.0
      %361 = vmatprep.mubr.f32.mxu0 0.0
      %362 = vmatmul.mubr.f32.gmra.mrb[0].mxu0 %v286
      %v363 = vpop.f32.mrb[0].mxu0
      %v364 = vadd.f32 0.0, %v363
      %v365 = vpop.f32.mrb[0].mxu0
      %v366 = vadd.f32 0.0, %v365
      %367 = vmatprep.mubr.f32.mxu0 0.0
      %368 = vmatmul.mubr.f32.gmra.mrb[0].mxu0 %v289
      %v369 = vpop.f32.mrb[0].mxu0
      %v370 = vadd.f32 0.0, %v369
      %v371 = vpop.f32.mrb[0].mxu0
      %v372 = vadd.f32 0.0, %v371
      %373 = vmatprep.mubr.f32.mxu0 0.0
      %374 = vmatmul.mubr.f32.gmra.mrb[0].mxu0 %v292
      %v375 = vpop.f32.mrb[0].mxu0
      %v376 = vadd.f32 0.0, %v375
      %v377 = vpop.f32.mrb[0].mxu0
      %v378 = vadd.f32 0.0, %v377
      %379 = vmatprep.mubr.f32.mxu0 0.0
      %380 = vmatmul.mubr.f32.gmra.mrb[0].mxu0 %v295
      %v381 = vpop.f32.mrb[0].mxu0
      %v382 = vadd.f32 0.0, %v381
      %v383 = vpop.f32.mrb[0].mxu0
      %v384 = vadd.f32 0.0, %v383
      %385 = vdwg.mxu0
      %v386 = vadd.f32 %v364, %v366
      %387 = vadd.xlane.f32.xlu0 %v386
      %v388 = vpop.xlane.xlu0 %387
      %v389 = vadd.f32 %v370, %v372
      %390 = vadd.xlane.f32.xlu0 %v389
      %v391 = vpop.xlane.xlu0 %390
      %v392 = vadd.f32 %v376, %v378
      %393 = vadd.xlane.f32.xlu0 %v392
      %v394 = vpop.xlane.xlu0 %393
      %v395 = vadd.f32 %v382, %v384
      %396 = vadd.xlane.f32.xlu0 %v395
      %v397 = vpop.xlane.xlu0 %396
      %v398 = vmul.f32 %v272, %v272
      %v399 = vmul.f32 %v273, %v273
      %v400 = vmul.f32 %v274, %v274
      %v401 = vmul.f32 %v275, %v275
      %v402 = vmul.f32 %v276, %v276
      %v403 = vmul.f32 %v277, %v277
      %v404 = vmul.f32 %v278, %v278
      %v405 = vmul.f32 %v279, %v279
      %406 = vmatprep.subr.mxu0 %v399
      %407 = vmatpush1.msra.mxu0 %v398
      %408 = vmatprep.subr.mxu0 %v401
      %409 = vmatpush1.msra.mxu0 %v400
      %410 = vmatprep.subr.mxu0 %v403
      %411 = vmatpush1.msra.mxu0 %v402
      %412 = vmatprep.subr.mxu0 %v405
      %413 = vmatpush1.msra.mxu0 %v404
      %414 = vmatprep.subr.mxu0 0.0
      %415 = vmatpush1.msra.mxu0 0.0
      %416 = vmatprep.subr.mxu0 0.0
      %417 = vmatpush1.msra.mxu0 0.0
      %418 = vmatprep.subr.mxu0 0.0
      %419 = vmatpush1.msra.mxu0 0.0
      %420 = vmatprep.subr.mxu0 0.0
      %421 = vmatpush1.msra.mxu0 0.0
      %422 = vmatprep.subr.mxu0 0.0
      %423 = vmatpush1.msra.mxu0 0.0
      %424 = vmatprep.subr.mxu0 0.0
      %425 = vmatpush1.msra.mxu0 0.0
      %426 = vmatprep.subr.mxu0 0.0
      %427 = vmatpush1.msra.mxu0 0.0
      %428 = vmatprep.subr.mxu0 0.0
      %429 = vmatpush1.msra.mxu0 0.0
      %430 = vmatprep.subr.mxu0 0.0
      %431 = vmatpush1.msra.mxu0 0.0
      %432 = vmatprep.subr.mxu0 0.0
      %433 = vmatpush1.msra.mxu0 0.0
      %434 = vmatprep.subr.mxu0 0.0
      %435 = vmatpush1.msra.mxu0 0.0
      %436 = vmatprep.subr.mxu0 0.0
      %437 = vmatpush1.msra.mxu0 0.0
      %438 = vmatprep.subr.mxu0 0.0
      %439 = vmatpush1.msra.mxu0 0.0
      %440 = vmatprep.subr.mxu0 0.0
      %441 = vmatpush1.msra.mxu0 0.0
      %442 = vmatprep.subr.mxu0 0.0
      %443 = vmatpush1.msra.mxu0 0.0
      %444 = vmatprep.subr.mxu0 0.0
      %445 = vmatpush1.msra.mxu0 0.0
      %446 = vmatprep.subr.mxu0 0.0
      %447 = vmatpush1.msra.mxu0 0.0
      %448 = vmatprep.subr.mxu0 0.0
      %449 = vmatpush1.msra.mxu0 0.0
      %450 = vmatprep.subr.mxu0 0.0
      %451 = vmatpush1.msra.mxu0 0.0
      %452 = vmatprep.subr.mxu0 0.0
      %453 = vmatpush1.msra.mxu0 0.0
      %454 = vmatprep.subr.mxu0 0.0
      %455 = vmatpush1.msra.mxu0 0.0
      %456 = vmatprep.subr.mxu0 0.0
      %457 = vmatpush1.msra.mxu0 0.0
      %458 = vmatprep.subr.mxu0 0.0
      %459 = vmatpush1.msra.mxu0 0.0
      %460 = vmatprep.subr.mxu0 0.0
      %461 = vmatpush1.msra.mxu0 0.0
      %462 = vmatprep.subr.mxu0 0.0
      %463 = vmatpush1.msra.mxu0 0.0
      %464 = vmatprep.subr.mxu0 0.0
      %465 = vmatpush1.msra.mxu0 0.0
      %466 = vmatprep.subr.mxu0 0.0
      %467 = vmatpush1.msra.mxu0 0.0
      %468 = vmatprep.subr.mxu0 0.0
      %469 = vmatpush1.msra.mxu0 0.0
      %470 = vmatprep.mubr.f32.mxu0 0.0
      %471 = vmatmul.mubr.f32.gmra.mrb[0].mxu0 %v286
      %v472 = vpop.f32.mrb[0].mxu0
      %v473 = vadd.f32 0.0, %v472
      %v474 = vpop.f32.mrb[0].mxu0
      %v475 = vadd.f32 0.0, %v474
      %476 = vmatprep.mubr.f32.mxu0 0.0
      %477 = vmatmul.mubr.f32.gmra.mrb[0].mxu0 %v289
      %v478 = vpop.f32.mrb[0].mxu0
      %v479 = vadd.f32 0.0, %v478
      %v480 = vpop.f32.mrb[0].mxu0
      %v481 = vadd.f32 0.0, %v480
      %482 = vmatprep.mubr.f32.mxu0 0.0
      %483 = vmatmul.mubr.f32.gmra.mrb[0].mxu0 %v292
      %v484 = vpop.f32.mrb[0].mxu0
      %v485 = vadd.f32 0.0, %v484
      %v486 = vpop.f32.mrb[0].mxu0
      %v487 = vadd.f32 0.0, %v486
      %488 = vmatprep.mubr.f32.mxu0 0.0
      %489 = vmatmul.mubr.f32.gmra.mrb[0].mxu0 %v295
      %v490 = vpop.f32.mrb[0].mxu0
      %v491 = vadd.f32 0.0, %v490
      %v492 = vpop.f32.mrb[0].mxu0
      %v493 = vadd.f32 0.0, %v492
      %494 = vdwg.mxu0
      %v495 = vadd.f32 %v473, %v475
      %496 = vadd.xlane.f32.xlu0 %v495
      %v497 = vpop.xlane.xlu0 %496
      %v498 = vadd.f32 %v479, %v481
      %499 = vadd.xlane.f32.xlu0 %v498
      %v500 = vpop.xlane.xlu0 %499
      %v501 = vadd.f32 %v485, %v487
      %502 = vadd.xlane.f32.xlu0 %v501
      %v503 = vpop.xlane.xlu0 %502
      %v504 = vadd.f32 %v491, %v493
      %505 = vadd.xlane.f32.xlu0 %v504
      %v506 = vpop.xlane.xlu0 %505
      %v507 = vmul.f32 %v388, %v388
      %v508 = vmul.f32 %v391, %v391
      %v509 = vmul.f32 %v394, %v394
      %v510 = vmul.f32 %v397, %v397
      %v511 = vsub.f32 %v497, %v507
      %v512 = vsub.f32 %v500, %v508
      %v513 = vsub.f32 %v503, %v509
      %v514 = vsub.f32 %v506, %v510
      %v515 = vmax.f32 %v511, 0.0
      %v516 = vmax.f32 %v512, 0.0
      %v517 = vmax.f32 %v513, 0.0
      %v518 = vmax.f32 %v514, 0.0
      %v519 = vadd.f32 %v515, 1e-06
      %v520 = vadd.f32 %v516, 1e-06
      %v521 = vadd.f32 %v517, 1e-06
      %v522 = vadd.f32 %v518, 1e-06
      %v523 = vrsqrt.pop %v519
      %v524 = vrsqrt.pop %v520
      %v525 = vrsqrt.pop %v521
      %v526 = vrsqrt.pop %v522
      %v527 = vsub.f32 %v272, %v388
      %v528 = vsub.f32 %v273, %v388
      %v529 = vsub.f32 %v274, %v391
      %v530 = vsub.f32 %v275, %v391
      %v531 = vsub.f32 %v276, %v394
      %v532 = vsub.f32 %v277, %v394
      %v533 = vsub.f32 %v278, %v397
      %v534 = vsub.f32 %v279, %v397
      %v535 = vld [vmem:[%s1] sm:$0xff]
      %v536 = vld [vmem:[%s1 + $0x8] sm:$0xff]
      %v537 = vld [vmem:[%s1 + $0x10] sm:$0xff]
      %v538 = vld [vmem:[%s1 + $0x18] sm:$0xff]
      %v539 = vmul.f32 %v523, %v535
      %v540 = vmul.f32 %v524, %v536
      %v541 = vmul.f32 %v525, %v537
      %v542 = vmul.f32 %v526, %v538
      %544 = vset.pattern.permute.xlu0 0
      %545 = vperm.xlu0 %544, %v539
      %v546 = vpop.permute.xlu0 %545
      %549 = vset.pattern.permute.xlu0 0
      %550 = vperm.xlu0 %549, %v540
      %v551 = vpop.permute.xlu0 %550
      %554 = vset.pattern.permute.xlu0 0
      %555 = vperm.xlu0 %554, %v541
      %v556 = vpop.permute.xlu0 %555
      %559 = vset.pattern.permute.xlu0 0
      %560 = vperm.xlu0 %559, %v542
      %v561 = vpop.permute.xlu0 %560
      %v563 = vmul.f32 %v527, %v546
      %v564 = vmul.f32 %v528, %v546
      %v565 = vmul.f32 %v529, %v551
      %v566 = vmul.f32 %v530, %v551
      %v567 = vmul.f32 %v531, %v556
      %v568 = vmul.f32 %v532, %v556
      %v569 = vmul.f32 %v533, %v561
      %v570 = vmul.f32 %v534, %v561
      %v571 = vld [vmem:[%s2] sm:$0xff]
      %v572 = vld [vmem:[%s2 + $0x8] sm:$0xff]
      %v573 = vld [vmem:[%s2 + $0x10] sm:$0xff]
      %v574 = vld [vmem:[%s2 + $0x18] sm:$0xff]
      %576 = vset.pattern.permute.xlu0 0
      %577 = vperm.xlu0 %576, %v571
      %v578 = vpop.permute.xlu0 %577
      %581 = vset.pattern.permute.xlu0 0
      %582 = vperm.xlu0 %581, %v572
      %v583 = vpop.permute.xlu0 %582
      %586 = vset.pattern.permute.xlu0 0
      %587 = vperm.xlu0 %586, %v573
      %v588 = vpop.permute.xlu0 %587
      %591 = vset.pattern.permute.xlu0 0
      %592 = vperm.xlu0 %591, %v574
      %v593 = vpop.permute.xlu0 %592
      %v595 = vadd.f32 %v563, %v578
      %v596 = vadd.f32 %v564, %v578
      %v597 = vadd.f32 %v565, %v583
      %v598 = vadd.f32 %v566, %v583
      %v599 = vadd.f32 %v567, %v588
      %v600 = vadd.f32 %v568, %v588
      %v601 = vadd.f32 %v569, %v593
      %v602 = vadd.f32 %v570, %v593
      %v603 = vsub.f32 0.0, %v595
      %v604 = vsub.f32 0.0, %v596
      %v605 = vsub.f32 0.0, %v597
      %v606 = vsub.f32 0.0, %v598
      %v607 = vsub.f32 0.0, %v599
      %v608 = vsub.f32 0.0, %v600
      %v609 = vsub.f32 0.0, %v601
      %v610 = vsub.f32 0.0, %v602
      %v611 = vmul.f32 %v603, 1.442695
      %v612 = vpow.pop %v611
      %v613 = vmul.f32 %v604, 1.442695
      %v614 = vpow.pop %v613
      %v615 = vmul.f32 %v605, 1.442695
      %v616 = vpow.pop %v615
      %v617 = vmul.f32 %v606, 1.442695
      %v618 = vpow.pop %v617
      %v619 = vmul.f32 %v607, 1.442695
      %v620 = vpow.pop %v619
      %v621 = vmul.f32 %v608, 1.442695
      %v622 = vpow.pop %v621
      %v623 = vmul.f32 %v609, 1.442695
      %v624 = vpow.pop %v623
      %v625 = vmul.f32 %v610, 1.442695
      %v626 = vpow.pop %v625
      %v627 = vadd.f32 %v612, 1.0
      %v628 = vadd.f32 %v614, 1.0
      %v629 = vadd.f32 %v616, 1.0
      %v630 = vadd.f32 %v618, 1.0
      %v631 = vadd.f32 %v620, 1.0
      %v632 = vadd.f32 %v622, 1.0
      %v633 = vadd.f32 %v624, 1.0
      %v634 = vadd.f32 %v626, 1.0
      %v635 = vrcp.pop %v627
      %v636 = vmul.f32 1.0, %v635
      %v637 = vrcp.pop %v628
      %v638 = vmul.f32 1.0, %v637
      %v639 = vrcp.pop %v629
      %v640 = vmul.f32 1.0, %v639
      %v641 = vrcp.pop %v630
      %v642 = vmul.f32 1.0, %v641
      %v643 = vrcp.pop %v631
      %v644 = vmul.f32 1.0, %v643
      %v645 = vrcp.pop %v632
      %v646 = vmul.f32 1.0, %v645
      %v647 = vrcp.pop %v633
      %v648 = vmul.f32 1.0, %v647
      %v649 = vrcp.pop %v634
      %v650 = vmul.f32 1.0, %v649
      %v651 = vmul.f32 %v595, %v636
      %v652 = vmul.f32 %v596, %v638
      %v653 = vmul.f32 %v597, %v640
      %v654 = vmul.f32 %v598, %v642
      %v655 = vmul.f32 %v599, %v644
      %v656 = vmul.f32 %v600, %v646
      %v657 = vmul.f32 %v601, %v648
      %v658 = vmul.f32 %v602, %v650
      %v659 = vlaneseq
      %v660 = vand.u32 %v659, 127
      %v661 = vadd.s32 %v660, 128
      %vm662 = vcmp.lt.s32.totalorder %v660, 0
      %v663 = vsub.s32 0, %v660
      %v664 = vsel %vm662, %v663, %v660
      %v665 = vshrl.u32 %v664, 4
      %v666 = vand.u32 %v664, 15
      %v667 = vsub.s32 0, %v666
      %v668 = vsel %vm662, %v667, %v666
      %vm669 = vcmp.lt.s32.totalorder %v661, 0
      %v670 = vsub.s32 0, %v661
      %v671 = vsel %vm669, %v670, %v661
      %v672 = vshrl.u32 %v671, 4
      %v673 = vand.u32 %v671, 15
      %v674 = vsub.s32 0, %v673
      %v675 = vsel %vm669, %v674, %v673
      %vm676 = vcmp.ne.s32.totalorder %v668, 0
      %vm677 = vcmp.ne.s32.totalorder %v675, 0
      %vm678 = vcmp.lt.s32.totalorder %v668, 0
      %vm679 = vcmp.lt.s32.totalorder %v675, 0
      %vm680 = vmand %vm678, %vm676
      %vm681 = vmand %vm679, %vm677
      %v682 = vadd.s32 %v668, 16
      %v683 = vadd.s32 %v675, 16
      %v684 = vsel %vm680, %v682, %v668
      %v685 = vsel %vm681, %v683, %v675
      %vm686 = vcmp.ge.s32.totalorder %v684, 1
      %vm687 = vcmp.ge.s32.totalorder %v685, 1
      %v688 = vadd.s32 %v660, 4294967279
      %v689 = vadd.s32 %v661, 4294967279
      %690 = vrot.lane.b32.xlu0 %v651, 17
      %v691 = vpop.permute.xlu0 %690
      %692 = vrot.lane.b32.xlu0 %v653, 17
      %v693 = vpop.permute.xlu0 %692
      %694 = vrot.lane.b32.xlu0 %v655, 17
      %v695 = vpop.permute.xlu0 %694
      %696 = vrot.lane.b32.xlu0 %v657, 17
      %v697 = vpop.permute.xlu0 %696
      %698 = vrot.lane.b32.xlu0 %v652, 17
      %v699 = vpop.permute.xlu0 %698
      %700 = vrot.lane.b32.xlu0 %v654, 17
      %v701 = vpop.permute.xlu0 %700
      %702 = vrot.lane.b32.xlu0 %v656, 17
      %v703 = vpop.permute.xlu0 %702
      %704 = vrot.lane.b32.xlu0 %v658, 17
      %v705 = vpop.permute.xlu0 %704
      %vm706 = vcmp.lt.s32.totalorder %v660, 17
      %v707 = vsel %vm706, %v691, %v699
      %v708 = vsel %vm706, %v693, %v701
      %v709 = vsel %vm706, %v695, %v703
      %v710 = vsel %vm706, %v697, %v705
      %v711 = vsel %vm706, %v699, %v691
      %v712 = vsel %vm706, %v701, %v693
      %v713 = vsel %vm706, %v703, %v695
      %v714 = vsel %vm706, %v705, %v697
      %715 = vrot.lane.b32.xlu0 %v660, 17
      %v716 = vpop.permute.xlu0 %715
      %717 = vrot.lane.b32.xlu0 %v661, 17
      %v718 = vpop.permute.xlu0 %717
      %v719 = vsel %vm706, %v716, %v718
      %v720 = vsel %vm706, %v718, %v716
      %vm721 = vcmp.eq.s32.totalorder %v720, %v688
      %vm722 = vcmp.eq.s32.totalorder %v719, %v689
      %vm723 = vmand %vm721, %vm686
      %vm724 = vmand %vm722, %vm687
      %v725 = vsel %vm723, 1, 0
      %v726 = vsel %vm724, 1, 0
      %v727 = vlaneseq
      %v728 = vshrl.u32 %v727, 7
      %v729 = vsub.s32 0, %v728
      %v730 = vrot.slane %v725, %v729
      %v731 = vlaneseq
      %v732 = vshrl.u32 %v731, 7
      %v733 = vsub.s32 0, %v732
      %v734 = vrot.slane %v726, %v733
      %vm735 = vcmp.eq.s32.totalorder %v730, 1
      %vm736 = vcmp.eq.s32.totalorder %v734, 1
      %v737 = vsel %vm735, %v711, 0.0
      %v738 = vsel %vm736, %v707, 0.0
      %v739 = vsel %vm735, %v712, 0.0
      %v740 = vsel %vm736, %v708, 0.0
      %v741 = vsel %vm735, %v713, 0.0
      %v742 = vsel %vm736, %v709, 0.0
      %v743 = vsel %vm735, %v714, 0.0
      %v744 = vsel %vm736, %v710, 0.0
      %v745 = vadd.f32 %v737, 0.0
      %v746 = vadd.f32 %v738, 0.0
      %v747 = vadd.f32 %v739, 0.0
      %v748 = vadd.f32 %v740, 0.0
      %v749 = vadd.f32 %v741, 0.0
      %v750 = vadd.f32 %v742, 0.0
      %v751 = vadd.f32 %v743, 0.0
      %v752 = vadd.f32 %v744, 0.0
      %753 = vrot.lane.b32.xlu0 %v651, 111
      %v754 = vpop.permute.xlu0 %753
      %755 = vrot.lane.b32.xlu0 %v653, 111
      %v756 = vpop.permute.xlu0 %755
      %757 = vrot.lane.b32.xlu0 %v655, 111
      %v758 = vpop.permute.xlu0 %757
      %759 = vrot.lane.b32.xlu0 %v657, 111
      %v760 = vpop.permute.xlu0 %759
      %761 = vrot.lane.b32.xlu0 %v652, 111
      %v762 = vpop.permute.xlu0 %761
      %763 = vrot.lane.b32.xlu0 %v654, 111
      %v764 = vpop.permute.xlu0 %763
      %765 = vrot.lane.b32.xlu0 %v656, 111
      %v766 = vpop.permute.xlu0 %765
      %767 = vrot.lane.b32.xlu0 %v658, 111
      %v768 = vpop.permute.xlu0 %767
      %vm769 = vcmp.lt.s32.totalorder %v660, 111
      %v770 = vsel %vm769, %v754, %v762
      %v771 = vsel %vm769, %v756, %v764
      %v772 = vsel %vm769, %v758, %v766
      %v773 = vsel %vm769, %v760, %v768
      %v774 = vsel %vm769, %v762, %v754
      %v775 = vsel %vm769, %v764, %v756
      %v776 = vsel %vm769, %v766, %v758
      %v777 = vsel %vm769, %v768, %v760
      %778 = vrot.lane.b32.xlu0 %v660, 111
      %v779 = vpop.permute.xlu0 %778
      %780 = vrot.lane.b32.xlu0 %v661, 111
      %v781 = vpop.permute.xlu0 %780
      %v782 = vsel %vm769, %v779, %v781
      %v783 = vsel %vm769, %v781, %v779
      %vm784 = vcmp.eq.s32.totalorder %v782, %v688
      %vm785 = vcmp.eq.s32.totalorder %v783, %v689
      %vm786 = vmand %vm784, %vm686
      %vm787 = vmand %vm785, %vm687
      %v788 = vsel %vm786, 1, 0
      %v789 = vsel %vm787, 1, 0
      %v790 = vlaneseq
      %v791 = vshrl.u32 %v790, 7
      %v792 = vsub.s32 0, %v791
      %v793 = vrot.slane %v788, %v792
      %v794 = vlaneseq
      %v795 = vshrl.u32 %v794, 7
      %v796 = vsub.s32 0, %v795
      %v797 = vrot.slane %v789, %v796
      %vm798 = vcmp.eq.s32.totalorder %v793, 1
      %vm799 = vcmp.eq.s32.totalorder %v797, 1
      %v800 = vsel %vm798, %v770, 0.0
      %v801 = vsel %vm799, %v774, 0.0
      %v802 = vsel %vm798, %v771, 0.0
      %v803 = vsel %vm799, %v775, 0.0
      %v804 = vsel %vm798, %v772, 0.0
      %v805 = vsel %vm799, %v776, 0.0
      %v806 = vsel %vm798, %v773, 0.0
      %v807 = vsel %vm799, %v777, 0.0
      %v808 = vadd.f32 %v745, %v800
      %v809 = vadd.f32 %v746, %v801
      %v810 = vadd.f32 %v747, %v802
      %v811 = vadd.f32 %v748, %v803
      %v812 = vadd.f32 %v749, %v804
      %v813 = vadd.f32 %v750, %v805
      %v814 = vadd.f32 %v751, %v806
      %v815 = vadd.f32 %v752, %v807
      %v816 = vld [vmem:[%s4] sm:$0xff]
      %v817 = vld [vmem:[%s4 + $0x8] sm:$0xff]
      %v818 = vld [vmem:[%s4 + $0x10] sm:$0xff]
      %v819 = vld [vmem:[%s4 + $0x18] sm:$0xff]
      %v820 = vld [vmem:[%s4 + $0x20] sm:$0xff]
      %v821 = vld [vmem:[%s4 + $0x28] sm:$0xff]
      %v822 = vld [vmem:[%s4 + $0x30] sm:$0xff]
      %v823 = vld [vmem:[%s4 + $0x38] sm:$0xff]
      %v824 = vadd.s32 %v660, 4294967280
      %v825 = vadd.s32 %v661, 4294967280
      %826 = vrot.lane.b32.xlu0 %v651, 16
      %v827 = vpop.permute.xlu0 %826
      %828 = vrot.lane.b32.xlu0 %v653, 16
      %v829 = vpop.permute.xlu0 %828
      %830 = vrot.lane.b32.xlu0 %v655, 16
      %v831 = vpop.permute.xlu0 %830
      %832 = vrot.lane.b32.xlu0 %v657, 16
      %v833 = vpop.permute.xlu0 %832
      %834 = vrot.lane.b32.xlu0 %v652, 16
      %v835 = vpop.permute.xlu0 %834
      %836 = vrot.lane.b32.xlu0 %v654, 16
      %v837 = vpop.permute.xlu0 %836
      %838 = vrot.lane.b32.xlu0 %v656, 16
      %v839 = vpop.permute.xlu0 %838
      %840 = vrot.lane.b32.xlu0 %v658, 16
      %v841 = vpop.permute.xlu0 %840
      %vm842 = vcmp.lt.s32.totalorder %v660, 16
      %v843 = vsel %vm842, %v827, %v835
      %v844 = vsel %vm842, %v829, %v837
      %v845 = vsel %vm842, %v831, %v839
      %v846 = vsel %vm842, %v833, %v841
      %v847 = vsel %vm842, %v835, %v827
      %v848 = vsel %vm842, %v837, %v829
      %v849 = vsel %vm842, %v839, %v831
      %v850 = vsel %vm842, %v841, %v833
      %851 = vrot.lane.b32.xlu0 %v660, 16
      %v852 = vpop.permute.xlu0 %851
      %853 = vrot.lane.b32.xlu0 %v661, 16
      %v854 = vpop.permute.xlu0 %853
      %v855 = vsel %vm842, %v852, %v854
      %v856 = vsel %vm842, %v854, %v852
      %vm857 = vcmp.eq.s32.totalorder %v856, %v824
      %vm858 = vcmp.eq.s32.totalorder %v855, %v825
      %v859 = vsel %vm857, 1, 0
      %v860 = vsel %vm858, 1, 0
      %v861 = vlaneseq
      %v862 = vshrl.u32 %v861, 7
      %v863 = vsub.s32 0, %v862
      %v864 = vrot.slane %v859, %v863
      %v865 = vlaneseq
      %v866 = vshrl.u32 %v865, 7
      %v867 = vsub.s32 0, %v866
      %v868 = vrot.slane %v860, %v867
      %vm869 = vcmp.eq.s32.totalorder %v864, 1
      %vm870 = vcmp.eq.s32.totalorder %v868, 1
      %v871 = vsel %vm869, %v847, 0.0
      %v872 = vsel %vm870, %v843, 0.0
      %v873 = vsel %vm869, %v848, 0.0
      %v874 = vsel %vm870, %v844, 0.0
      %v875 = vsel %vm869, %v849, 0.0
      %v876 = vsel %vm870, %v845, 0.0
      %v877 = vsel %vm869, %v850, 0.0
      %v878 = vsel %vm870, %v846, 0.0
      %v879 = vadd.f32 %v871, 0.0
      %v880 = vadd.f32 %v872, 0.0
      %v881 = vadd.f32 %v873, 0.0
      %v882 = vadd.f32 %v874, 0.0
      %v883 = vadd.f32 %v875, 0.0
      %v884 = vadd.f32 %v876, 0.0
      %v885 = vadd.f32 %v877, 0.0
      %v886 = vadd.f32 %v878, 0.0
      %887 = vrot.lane.b32.xlu0 %v651, 112
      %v888 = vpop.permute.xlu0 %887
      %889 = vrot.lane.b32.xlu0 %v653, 112
      %v890 = vpop.permute.xlu0 %889
      %891 = vrot.lane.b32.xlu0 %v655, 112
      %v892 = vpop.permute.xlu0 %891
      %893 = vrot.lane.b32.xlu0 %v657, 112
      %v894 = vpop.permute.xlu0 %893
      %895 = vrot.lane.b32.xlu0 %v652, 112
      %v896 = vpop.permute.xlu0 %895
      %897 = vrot.lane.b32.xlu0 %v654, 112
      %v898 = vpop.permute.xlu0 %897
      %899 = vrot.lane.b32.xlu0 %v656, 112
      %v900 = vpop.permute.xlu0 %899
      %901 = vrot.lane.b32.xlu0 %v658, 112
      %v902 = vpop.permute.xlu0 %901
      %vm903 = vcmp.lt.s32.totalorder %v660, 112
      %v904 = vsel %vm903, %v888, %v896
      %v905 = vsel %vm903, %v890, %v898
      %v906 = vsel %vm903, %v892, %v900
      %v907 = vsel %vm903, %v894, %v902
      %v908 = vsel %vm903, %v896, %v888
      %v909 = vsel %vm903, %v898, %v890
      %v910 = vsel %vm903, %v900, %v892
      %v911 = vsel %vm903, %v902, %v894
      %912 = vrot.lane.b32.xlu0 %v660, 112
      %v913 = vpop.permute.xlu0 %912
      %914 = vrot.lane.b32.xlu0 %v661, 112
      %v915 = vpop.permute.xlu0 %914
      %v916 = vsel %vm903, %v913, %v915
      %v917 = vsel %vm903, %v915, %v913
      %vm918 = vcmp.eq.s32.totalorder %v916, %v824
      %vm919 = vcmp.eq.s32.totalorder %v917, %v825
      %v920 = vsel %vm918, 1, 0
      %v921 = vsel %vm919, 1, 0
      %v922 = vlaneseq
      %v923 = vshrl.u32 %v922, 7
      %v924 = vsub.s32 0, %v923
      %v925 = vrot.slane %v920, %v924
      %v926 = vlaneseq
      %v927 = vshrl.u32 %v926, 7
      %v928 = vsub.s32 0, %v927
      %v929 = vrot.slane %v921, %v928
      %vm930 = vcmp.eq.s32.totalorder %v925, 1
      %vm931 = vcmp.eq.s32.totalorder %v929, 1
      %v932 = vsel %vm930, %v904, 0.0
      %v933 = vsel %vm931, %v908, 0.0
      %v934 = vsel %vm930, %v905, 0.0
      %v935 = vsel %vm931, %v909, 0.0
      %v936 = vsel %vm930, %v906, 0.0
      %v937 = vsel %vm931, %v910, 0.0
      %v938 = vsel %vm930, %v907, 0.0
      %v939 = vsel %vm931, %v911, 0.0
      %v940 = vadd.f32 %v879, %v932
      %v941 = vadd.f32 %v880, %v933
      %v942 = vadd.f32 %v881, %v934
      %v943 = vadd.f32 %v882, %v935
      %v944 = vadd.f32 %v883, %v936
      %v945 = vadd.f32 %v884, %v937
      %v946 = vadd.f32 %v885, %v938
      %v947 = vadd.f32 %v886, %v939
      %s948 = scalar_lea.vmem %s4, 64
      %v949 = vld [vmem:[%s948] sm:$0xff]
      %v950 = vld [vmem:[%s948 + $0x8] sm:$0xff]
      %v951 = vld [vmem:[%s948 + $0x10] sm:$0xff]
      %v952 = vld [vmem:[%s948 + $0x18] sm:$0xff]
      %v953 = vld [vmem:[%s948 + $0x20] sm:$0xff]
      %v954 = vld [vmem:[%s948 + $0x28] sm:$0xff]
      %v955 = vld [vmem:[%s948 + $0x30] sm:$0xff]
      %v956 = vld [vmem:[%s948 + $0x38] sm:$0xff]
      %v958 = vsel %vm284, %v949, 0
      %v961 = vsel %vm284, %v950, 0
      %v964 = vsel %vm284, %v951, 0
      %v967 = vsel %vm284, %v952, 0
      %v970 = vsel %vm284, %v953, 0
      %v973 = vsel %vm284, %v954, 0
      %v976 = vsel %vm284, %v955, 0
      %v979 = vsel %vm284, %v956, 0
      %981 = vmatprep.subr.mxu0 %v941
      %982 = vmatpush1.msra.mxu0 %v940
      %983 = vmatprep.subr.mxu0 %v943
      %984 = vmatpush1.msra.mxu0 %v942
      %985 = vmatprep.subr.mxu0 %v945
      %986 = vmatpush1.msra.mxu0 %v944
      %987 = vmatprep.subr.mxu0 %v947
      %988 = vmatpush1.msra.mxu0 %v946
      %989 = vmatprep.subr.mxu0 0.0
      %990 = vmatpush1.msra.mxu0 0.0
      %991 = vmatprep.subr.mxu0 0.0
      %992 = vmatpush1.msra.mxu0 0.0
      %993 = vmatprep.subr.mxu0 0.0
      %994 = vmatpush1.msra.mxu0 0.0
      %995 = vmatprep.subr.mxu0 0.0
      %996 = vmatpush1.msra.mxu0 0.0
      %997 = vmatprep.subr.mxu0 0.0
      %998 = vmatpush1.msra.mxu0 0.0
      %999 = vmatprep.subr.mxu0 0.0
      %1000 = vmatpush1.msra.mxu0 0.0
      %1001 = vmatprep.subr.mxu0 0.0
      %1002 = vmatpush1.msra.mxu0 0.0
      %1003 = vmatprep.subr.mxu0 0.0
      %1004 = vmatpush1.msra.mxu0 0.0
      %1005 = vmatprep.subr.mxu0 0.0
      %1006 = vmatpush1.msra.mxu0 0.0
      %1007 = vmatprep.subr.mxu0 0.0
      %1008 = vmatpush1.msra.mxu0 0.0
      %1009 = vmatprep.subr.mxu0 0.0
      %1010 = vmatpush1.msra.mxu0 0.0
      %1011 = vmatprep.subr.mxu0 0.0
      %1012 = vmatpush1.msra.mxu0 0.0
      %1013 = vmatprep.subr.mxu0 0.0
      %1014 = vmatpush1.msra.mxu0 0.0
      %1015 = vmatprep.subr.mxu0 0.0
      %1016 = vmatpush1.msra.mxu0 0.0
      %1017 = vmatprep.subr.mxu0 0.0
      %1018 = vmatpush1.msra.mxu0 0.0
      %1019 = vmatprep.subr.mxu0 0.0
      %1020 = vmatpush1.msra.mxu0 0.0
      %1021 = vmatprep.subr.mxu0 0.0
      %1022 = vmatpush1.msra.mxu0 0.0
      %1023 = vmatprep.subr.mxu0 0.0
      %1024 = vmatpush1.msra.mxu0 0.0
      %1025 = vmatprep.subr.mxu0 0.0
      %1026 = vmatpush1.msra.mxu0 0.0
      %1027 = vmatprep.subr.mxu0 0.0
      %1028 = vmatpush1.msra.mxu0 0.0
      %1029 = vmatprep.subr.mxu0 0.0
      %1030 = vmatpush1.msra.mxu0 0.0
      %1031 = vmatprep.subr.mxu0 0.0
      %1032 = vmatpush1.msra.mxu0 0.0
      %1033 = vmatprep.subr.mxu0 0.0
      %1034 = vmatpush1.msra.mxu0 0.0
      %1035 = vmatprep.subr.mxu0 0.0
      %1036 = vmatpush1.msra.mxu0 0.0
      %1037 = vmatprep.subr.mxu0 0.0
      %1038 = vmatpush1.msra.mxu0 0.0
      %1039 = vmatprep.subr.mxu0 0.0
      %1040 = vmatpush1.msra.mxu0 0.0
      %1041 = vmatprep.subr.mxu0 0.0
      %1042 = vmatpush1.msra.mxu0 0.0
      %1043 = vmatprep.subr.mxu0 0.0
      %1044 = vmatpush1.msra.mxu0 0.0
      %1045 = vmatprep.mubr.f32.mxu0 0.0
      %1046 = vmatmul.mubr.f32.gmra.mrb[0].mxu0 %v958
      %v1047 = vpop.f32.mrb[0].mxu0
      %v1048 = vadd.f32 0.0, %v1047
      %v1049 = vpop.f32.mrb[0].mxu0
      %v1050 = vadd.f32 0.0, %v1049
      %1051 = vmatprep.mubr.f32.mxu0 0.0
      %1052 = vmatmul.mubr.f32.gmra.mrb[0].mxu0 %v961
      %v1053 = vpop.f32.mrb[0].mxu0
      %v1054 = vadd.f32 0.0, %v1053
      %v1055 = vpop.f32.mrb[0].mxu0
      %v1056 = vadd.f32 0.0, %v1055
      %1057 = vmatprep.mubr.f32.mxu0 0.0
      %1058 = vmatmul.mubr.f32.gmra.mrb[0].mxu0 %v964
      %v1059 = vpop.f32.mrb[0].mxu0
      %v1060 = vadd.f32 0.0, %v1059
      %v1061 = vpop.f32.mrb[0].mxu0
      %v1062 = vadd.f32 0.0, %v1061
      %1063 = vmatprep.mubr.f32.mxu0 0.0
      %1064 = vmatmul.mubr.f32.gmra.mrb[0].mxu0 %v967
      %v1065 = vpop.f32.mrb[0].mxu0
      %v1066 = vadd.f32 0.0, %v1065
      %v1067 = vpop.f32.mrb[0].mxu0
      %v1068 = vadd.f32 0.0, %v1067
      %1069 = vmatprep.mubr.f32.mxu0 0.0
      %1070 = vmatmul.mubr.f32.gmra.mrb[0].mxu0 %v970
      %v1071 = vpop.f32.mrb[0].mxu0
      %v1072 = vadd.f32 0.0, %v1071
      %v1073 = vpop.f32.mrb[0].mxu0
      %v1074 = vadd.f32 0.0, %v1073
      %1075 = vmatprep.mubr.f32.mxu0 0.0
      %1076 = vmatmul.mubr.f32.gmra.mrb[0].mxu0 %v973
      %v1077 = vpop.f32.mrb[0].mxu0
      %v1078 = vadd.f32 0.0, %v1077
      %v1079 = vpop.f32.mrb[0].mxu0
      %v1080 = vadd.f32 0.0, %v1079
      %1081 = vmatprep.mubr.f32.mxu0 0.0
      %1082 = vmatmul.mubr.f32.gmra.mrb[0].mxu0 %v976
      %v1083 = vpop.f32.mrb[0].mxu0
      %v1084 = vadd.f32 0.0, %v1083
      %v1085 = vpop.f32.mrb[0].mxu0
      %v1086 = vadd.f32 0.0, %v1085
      %1087 = vmatprep.mubr.f32.mxu0 0.0
      %1088 = vmatmul.mubr.f32.gmra.mrb[0].mxu0 %v979
      %v1089 = vpop.f32.mrb[0].mxu0
      %v1090 = vadd.f32 0.0, %v1089
      %v1091 = vpop.f32.mrb[0].mxu0
      %v1092 = vadd.f32 0.0, %v1091
      %1093 = vdwg.mxu0
      %v1095 = vsel %vm284, %v816, 0
      %v1098 = vsel %vm284, %v817, 0
      %v1101 = vsel %vm284, %v818, 0
      %v1104 = vsel %vm284, %v819, 0
      %v1107 = vsel %vm284, %v820, 0
      %v1110 = vsel %vm284, %v821, 0
      %v1113 = vsel %vm284, %v822, 0
      %v1116 = vsel %vm284, %v823, 0
      %1118 = vmatprep.subr.mxu0 %v809
      %1119 = vmatpush1.msra.mxu0 %v808
      %1120 = vmatprep.subr.mxu0 %v811
      %1121 = vmatpush1.msra.mxu0 %v810
      %1122 = vmatprep.subr.mxu0 %v813
      %1123 = vmatpush1.msra.mxu0 %v812
      %1124 = vmatprep.subr.mxu0 %v815
      %1125 = vmatpush1.msra.mxu0 %v814
      %1126 = vmatprep.subr.mxu0 0.0
      %1127 = vmatpush1.msra.mxu0 0.0
      %1128 = vmatprep.subr.mxu0 0.0
      %1129 = vmatpush1.msra.mxu0 0.0
      %1130 = vmatprep.subr.mxu0 0.0
      %1131 = vmatpush1.msra.mxu0 0.0
      %1132 = vmatprep.subr.mxu0 0.0
      %1133 = vmatpush1.msra.mxu0 0.0
      %1134 = vmatprep.subr.mxu0 0.0
      %1135 = vmatpush1.msra.mxu0 0.0
      %1136 = vmatprep.subr.mxu0 0.0
      %1137 = vmatpush1.msra.mxu0 0.0
      %1138 = vmatprep.subr.mxu0 0.0
      %1139 = vmatpush1.msra.mxu0 0.0
      %1140 = vmatprep.subr.mxu0 0.0
      %1141 = vmatpush1.msra.mxu0 0.0
      %1142 = vmatprep.subr.mxu0 0.0
      %1143 = vmatpush1.msra.mxu0 0.0
      %1144 = vmatprep.subr.mxu0 0.0
      %1145 = vmatpush1.msra.mxu0 0.0
      %1146 = vmatprep.subr.mxu0 0.0
      %1147 = vmatpush1.msra.mxu0 0.0
      %1148 = vmatprep.subr.mxu0 0.0
      %1149 = vmatpush1.msra.mxu0 0.0
      %1150 = vmatprep.subr.mxu0 0.0
      %1151 = vmatpush1.msra.mxu0 0.0
      %1152 = vmatprep.subr.mxu0 0.0
      %1153 = vmatpush1.msra.mxu0 0.0
      %1154 = vmatprep.subr.mxu0 0.0
      %1155 = vmatpush1.msra.mxu0 0.0
      %1156 = vmatprep.subr.mxu0 0.0
      %1157 = vmatpush1.msra.mxu0 0.0
      %1158 = vmatprep.subr.mxu0 0.0
      %1159 = vmatpush1.msra.mxu0 0.0
      %1160 = vmatprep.subr.mxu0 0.0
      %1161 = vmatpush1.msra.mxu0 0.0
      %1162 = vmatprep.subr.mxu0 0.0
      %1163 = vmatpush1.msra.mxu0 0.0
      %1164 = vmatprep.subr.mxu0 0.0
      %1165 = vmatpush1.msra.mxu0 0.0
      %1166 = vmatprep.subr.mxu0 0.0
      %1167 = vmatpush1.msra.mxu0 0.0
      %1168 = vmatprep.subr.mxu0 0.0
      %1169 = vmatpush1.msra.mxu0 0.0
      %1170 = vmatprep.subr.mxu0 0.0
      %1171 = vmatpush1.msra.mxu0 0.0
      %1172 = vmatprep.subr.mxu0 0.0
      %1173 = vmatpush1.msra.mxu0 0.0
      %1174 = vmatprep.subr.mxu0 0.0
      %1175 = vmatpush1.msra.mxu0 0.0
      %1176 = vmatprep.subr.mxu0 0.0
      %1177 = vmatpush1.msra.mxu0 0.0
      %1178 = vmatprep.subr.mxu0 0.0
      %1179 = vmatpush1.msra.mxu0 0.0
      %1180 = vmatprep.subr.mxu0 0.0
      %1181 = vmatpush1.msra.mxu0 0.0
      %1182 = vmatprep.mubr.f32.mxu0 0.0
      %1183 = vmatmul.mubr.f32.gmra.mrb[0].mxu0 %v1095
      %v1184 = vpop.f32.mrb[0].mxu0
      %v1185 = vadd.f32 %v1048, %v1184
      %v1186 = vpop.f32.mrb[0].mxu0
      %v1187 = vadd.f32 %v1050, %v1186
      %1188 = vmatprep.mubr.f32.mxu0 0.0
      %1189 = vmatmul.mubr.f32.gmra.mrb[0].mxu0 %v1098
      %v1190 = vpop.f32.mrb[0].mxu0
      %v1191 = vadd.f32 %v1054, %v1190
      %v1192 = vpop.f32.mrb[0].mxu0
      %v1193 = vadd.f32 %v1056, %v1192
      %1194 = vmatprep.mubr.f32.mxu0 0.0
      %1195 = vmatmul.mubr.f32.gmra.mrb[0].mxu0 %v1101
      %v1196 = vpop.f32.mrb[0].mxu0
      %v1197 = vadd.f32 %v1060, %v1196
      %v1198 = vpop.f32.mrb[0].mxu0
      %v1199 = vadd.f32 %v1062, %v1198
      %1200 = vmatprep.mubr.f32.mxu0 0.0
      %1201 = vmatmul.mubr.f32.gmra.mrb[0].mxu0 %v1104
      %v1202 = vpop.f32.mrb[0].mxu0
      %v1203 = vadd.f32 %v1066, %v1202
      %v1204 = vpop.f32.mrb[0].mxu0
      %v1205 = vadd.f32 %v1068, %v1204
      %1206 = vmatprep.mubr.f32.mxu0 0.0
      %1207 = vmatmul.mubr.f32.gmra.mrb[0].mxu0 %v1107
      %v1208 = vpop.f32.mrb[0].mxu0
      %v1209 = vadd.f32 %v1072, %v1208
      %v1210 = vpop.f32.mrb[0].mxu0
      %v1211 = vadd.f32 %v1074, %v1210
      %1212 = vmatprep.mubr.f32.mxu0 0.0
      %1213 = vmatmul.mubr.f32.gmra.mrb[0].mxu0 %v1110
      %v1214 = vpop.f32.mrb[0].mxu0
      %v1215 = vadd.f32 %v1078, %v1214
      %v1216 = vpop.f32.mrb[0].mxu0
      %v1217 = vadd.f32 %v1080, %v1216
      %1218 = vmatprep.mubr.f32.mxu0 0.0
      %1219 = vmatmul.mubr.f32.gmra.mrb[0].mxu0 %v1113
      %v1220 = vpop.f32.mrb[0].mxu0
      %v1221 = vadd.f32 %v1084, %v1220
      %v1222 = vpop.f32.mrb[0].mxu0
      %v1223 = vadd.f32 %v1086, %v1222
      %1224 = vmatprep.mubr.f32.mxu0 0.0
      %1225 = vmatmul.mubr.f32.gmra.mrb[0].mxu0 %v1116
      %v1226 = vpop.f32.mrb[0].mxu0
      %v1227 = vadd.f32 %v1090, %v1226
      %v1228 = vpop.f32.mrb[0].mxu0
      %v1229 = vadd.f32 %v1092, %v1228
      %1230 = vdwg.mxu0
      %vm1231 = vcmp.le.s32.totalorder %v684, 14
      %vm1232 = vcmp.le.s32.totalorder %v685, 14
      %v1233 = vadd.s32 %v660, 4294967281
      %v1234 = vadd.s32 %v661, 4294967281
      %1235 = vrot.lane.b32.xlu0 %v651, 15
      %v1236 = vpop.permute.xlu0 %1235
      %1237 = vrot.lane.b32.xlu0 %v653, 15
      %v1238 = vpop.permute.xlu0 %1237
      %1239 = vrot.lane.b32.xlu0 %v655, 15
      %v1240 = vpop.permute.xlu0 %1239
      %1241 = vrot.lane.b32.xlu0 %v657, 15
      %v1242 = vpop.permute.xlu0 %1241
      %1243 = vrot.lane.b32.xlu0 %v652, 15
      %v1244 = vpop.permute.xlu0 %1243
      %1245 = vrot.lane.b32.xlu0 %v654, 15
      %v1246 = vpop.permute.xlu0 %1245
      %1247 = vrot.lane.b32.xlu0 %v656, 15
      %v1248 = vpop.permute.xlu0 %1247
      %1249 = vrot.lane.b32.xlu0 %v658, 15
      %v1250 = vpop.permute.xlu0 %1249
      %vm1251 = vcmp.lt.s32.totalorder %v660, 15
      %v1252 = vsel %vm1251, %v1236, %v1244
      %v1253 = vsel %vm1251, %v1238, %v1246
      %v1254 = vsel %vm1251, %v1240, %v1248
      %v1255 = vsel %vm1251, %v1242, %v1250
      %v1256 = vsel %vm1251, %v1244, %v1236
      %v1257 = vsel %vm1251, %v1246, %v1238
      %v1258 = vsel %vm1251, %v1248, %v1240
      %v1259 = vsel %vm1251, %v1250, %v1242
      %1260 = vrot.lane.b32.xlu0 %v660, 15
      %v1261 = vpop.permute.xlu0 %1260
      %1262 = vrot.lane.b32.xlu0 %v661, 15
      %v1263 = vpop.permute.xlu0 %1262
      %v1264 = vsel %vm1251, %v1261, %v1263
      %v1265 = vsel %vm1251, %v1263, %v1261
      %vm1266 = vcmp.eq.s32.totalorder %v1265, %v1233
      %vm1267 = vcmp.eq.s32.totalorder %v1264, %v1234
      %vm1268 = vmand %vm1266, %vm1231
      %vm1269 = vmand %vm1267, %vm1232
      %v1270 = vsel %vm1268, 1, 0
      %v1271 = vsel %vm1269, 1, 0
      %v1272 = vlaneseq
      %v1273 = vshrl.u32 %v1272, 7
      %v1274 = vsub.s32 0, %v1273
      %v1275 = vrot.slane %v1270, %v1274
      %v1276 = vlaneseq
      %v1277 = vshrl.u32 %v1276, 7
      %v1278 = vsub.s32 0, %v1277
      %v1279 = vrot.slane %v1271, %v1278
      %vm1280 = vcmp.eq.s32.totalorder %v1275, 1
      %vm1281 = vcmp.eq.s32.totalorder %v1279, 1
      %v1282 = vsel %vm1280, %v1256, 0.0
      %v1283 = vsel %vm1281, %v1252, 0.0
      %v1284 = vsel %vm1280, %v1257, 0.0
      %v1285 = vsel %vm1281, %v1253, 0.0
      %v1286 = vsel %vm1280, %v1258, 0.0
      %v1287 = vsel %vm1281, %v1254, 0.0
      %v1288 = vsel %vm1280, %v1259, 0.0
      %v1289 = vsel %vm1281, %v1255, 0.0
      %v1290 = vadd.f32 %v1282, 0.0
      %v1291 = vadd.f32 %v1283, 0.0
      %v1292 = vadd.f32 %v1284, 0.0
      %v1293 = vadd.f32 %v1285, 0.0
      %v1294 = vadd.f32 %v1286, 0.0
      %v1295 = vadd.f32 %v1287, 0.0
      %v1296 = vadd.f32 %v1288, 0.0
      %v1297 = vadd.f32 %v1289, 0.0
      %1298 = vrot.lane.b32.xlu0 %v651, 113
      %v1299 = vpop.permute.xlu0 %1298
      %1300 = vrot.lane.b32.xlu0 %v653, 113
      %v1301 = vpop.permute.xlu0 %1300
      %1302 = vrot.lane.b32.xlu0 %v655, 113
      %v1303 = vpop.permute.xlu0 %1302
      %1304 = vrot.lane.b32.xlu0 %v657, 113
      %v1305 = vpop.permute.xlu0 %1304
      %1306 = vrot.lane.b32.xlu0 %v652, 113
      %v1307 = vpop.permute.xlu0 %1306
      %1308 = vrot.lane.b32.xlu0 %v654, 113
      %v1309 = vpop.permute.xlu0 %1308
      %1310 = vrot.lane.b32.xlu0 %v656, 113
      %v1311 = vpop.permute.xlu0 %1310
      %1312 = vrot.lane.b32.xlu0 %v658, 113
      %v1313 = vpop.permute.xlu0 %1312
      %vm1314 = vcmp.lt.s32.totalorder %v660, 113
      %v1315 = vsel %vm1314, %v1299, %v1307
      %v1316 = vsel %vm1314, %v1301, %v1309
      %v1317 = vsel %vm1314, %v1303, %v1311
      %v1318 = vsel %vm1314, %v1305, %v1313
      %v1319 = vsel %vm1314, %v1307, %v1299
      %v1320 = vsel %vm1314, %v1309, %v1301
      %v1321 = vsel %vm1314, %v1311, %v1303
      %v1322 = vsel %vm1314, %v1313, %v1305
      %1323 = vrot.lane.b32.xlu0 %v660, 113
      %v1324 = vpop.permute.xlu0 %1323
      %1325 = vrot.lane.b32.xlu0 %v661, 113
      %v1326 = vpop.permute.xlu0 %1325
      %v1327 = vsel %vm1314, %v1324, %v1326
      %v1328 = vsel %vm1314, %v1326, %v1324
      %vm1329 = vcmp.eq.s32.totalorder %v1327, %v1233
      %vm1330 = vcmp.eq.s32.totalorder %v1328, %v1234
      %vm1331 = vmand %vm1329, %vm1231
      %vm1332 = vmand %vm1330, %vm1232
      %v1333 = vsel %vm1331, 1, 0
      %v1334 = vsel %vm1332, 1, 0
      %v1335 = vlaneseq
      %v1336 = vshrl.u32 %v1335, 7
      %v1337 = vsub.s32 0, %v1336
      %v1338 = vrot.slane %v1333, %v1337
      %v1339 = vlaneseq
      %v1340 = vshrl.u32 %v1339, 7
      %v1341 = vsub.s32 0, %v1340
      %v1342 = vrot.slane %v1334, %v1341
      %vm1343 = vcmp.eq.s32.totalorder %v1338, 1
      %vm1344 = vcmp.eq.s32.totalorder %v1342, 1
      %v1345 = vsel %vm1343, %v1315, 0.0
      %v1346 = vsel %vm1344, %v1319, 0.0
      %v1347 = vsel %vm1343, %v1316, 0.0
      %v1348 = vsel %vm1344, %v1320, 0.0
      %v1349 = vsel %vm1343, %v1317, 0.0
      %v1350 = vsel %vm1344, %v1321, 0.0
      %v1351 = vsel %vm1343, %v1318, 0.0
      %v1352 = vsel %vm1344, %v1322, 0.0
      %v1353 = vadd.f32 %v1290, %v1345
      %v1354 = vadd.f32 %v1291, %v1346
      %v1355 = vadd.f32 %v1292, %v1347
      %v1356 = vadd.f32 %v1293, %v1348
      %v1357 = vadd.f32 %v1294, %v1349
      %v1358 = vadd.f32 %v1295, %v1350
      %v1359 = vadd.f32 %v1296, %v1351
      %v1360 = vadd.f32 %v1297, %v1352
      %s1361 = scalar_lea.vmem %s4, 128
      %v1362 = vld [vmem:[%s1361] sm:$0xff]
      %v1363 = vld [vmem:[%s1361 + $0x8] sm:$0xff]
      %v1364 = vld [vmem:[%s1361 + $0x10] sm:$0xff]
      %v1365 = vld [vmem:[%s1361 + $0x18] sm:$0xff]
      %v1366 = vld [vmem:[%s1361 + $0x20] sm:$0xff]
      %v1367 = vld [vmem:[%s1361 + $0x28] sm:$0xff]
      %v1368 = vld [vmem:[%s1361 + $0x30] sm:$0xff]
      %v1369 = vld [vmem:[%s1361 + $0x38] sm:$0xff]
      %v1371 = vsel %vm284, %v1362, 0
      %v1374 = vsel %vm284, %v1363, 0
      %v1377 = vsel %vm284, %v1364, 0
      %v1380 = vsel %vm284, %v1365, 0
      %v1383 = vsel %vm284, %v1366, 0
      %v1386 = vsel %vm284, %v1367, 0
      %v1389 = vsel %vm284, %v1368, 0
      %v1392 = vsel %vm284, %v1369, 0
      %1394 = vmatprep.subr.mxu0 %v1354
      %1395 = vmatpush1.msra.mxu0 %v1353
      %1396 = vmatprep.subr.mxu0 %v1356
      %1397 = vmatpush1.msra.mxu0 %v1355
      %1398 = vmatprep.subr.mxu0 %v1358
      %1399 = vmatpush1.msra.mxu0 %v1357
      %1400 = vmatprep.subr.mxu0 %v1360
      %1401 = vmatpush1.msra.mxu0 %v1359
      %1402 = vmatprep.subr.mxu0 0.0
      %1403 = vmatpush1.msra.mxu0 0.0
      %1404 = vmatprep.subr.mxu0 0.0
      %1405 = vmatpush1.msra.mxu0 0.0
      %1406 = vmatprep.subr.mxu0 0.0
      %1407 = vmatpush1.msra.mxu0 0.0
      %1408 = vmatprep.subr.mxu0 0.0
      %1409 = vmatpush1.msra.mxu0 0.0
      %1410 = vmatprep.subr.mxu0 0.0
      %1411 = vmatpush1.msra.mxu0 0.0
      %1412 = vmatprep.subr.mxu0 0.0
      %1413 = vmatpush1.msra.mxu0 0.0
      %1414 = vmatprep.subr.mxu0 0.0
      %1415 = vmatpush1.msra.mxu0 0.0
      %1416 = vmatprep.subr.mxu0 0.0
      %1417 = vmatpush1.msra.mxu0 0.0
      %1418 = vmatprep.subr.mxu0 0.0
      %1419 = vmatpush1.msra.mxu0 0.0
      %1420 = vmatprep.subr.mxu0 0.0
      %1421 = vmatpush1.msra.mxu0 0.0
      %1422 = vmatprep.subr.mxu0 0.0
      %1423 = vmatpush1.msra.mxu0 0.0
      %1424 = vmatprep.subr.mxu0 0.0
      %1425 = vmatpush1.msra.mxu0 0.0
      %1426 = vmatprep.subr.mxu0 0.0
      %1427 = vmatpush1.msra.mxu0 0.0
      %1428 = vmatprep.subr.mxu0 0.0
      %1429 = vmatpush1.msra.mxu0 0.0
      %1430 = vmatprep.subr.mxu0 0.0
      %1431 = vmatpush1.msra.mxu0 0.0
      %1432 = vmatprep.subr.mxu0 0.0
      %1433 = vmatpush1.msra.mxu0 0.0
      %1434 = vmatprep.subr.mxu0 0.0
      %1435 = vmatpush1.msra.mxu0 0.0
      %1436 = vmatprep.subr.mxu0 0.0
      %1437 = vmatpush1.msra.mxu0 0.0
      %1438 = vmatprep.subr.mxu0 0.0
      %1439 = vmatpush1.msra.mxu0 0.0
      %1440 = vmatprep.subr.mxu0 0.0
      %1441 = vmatpush1.msra.mxu0 0.0
      %1442 = vmatprep.subr.mxu0 0.0
      %1443 = vmatpush1.msra.mxu0 0.0
      %1444 = vmatprep.subr.mxu0 0.0
      %1445 = vmatpush1.msra.mxu0 0.0
      %1446 = vmatprep.subr.mxu0 0.0
      %1447 = vmatpush1.msra.mxu0 0.0
      %1448 = vmatprep.subr.mxu0 0.0
      %1449 = vmatpush1.msra.mxu0 0.0
      %1450 = vmatprep.subr.mxu0 0.0
      %1451 = vmatpush1.msra.mxu0 0.0
      %1452 = vmatprep.subr.mxu0 0.0
      %1453 = vmatpush1.msra.mxu0 0.0
      %1454 = vmatprep.subr.mxu0 0.0
      %1455 = vmatpush1.msra.mxu0 0.0
      %1456 = vmatprep.subr.mxu0 0.0
      %1457 = vmatpush1.msra.mxu0 0.0
      %1458 = vmatprep.mubr.f32.mxu0 0.0
      %1459 = vmatmul.mubr.f32.gmra.mrb[0].mxu0 %v1371
      %v1460 = vpop.f32.mrb[0].mxu0
      %v1461 = vadd.f32 0.0, %v1460
      %v1462 = vpop.f32.mrb[0].mxu0
      %v1463 = vadd.f32 0.0, %v1462
      %1464 = vmatprep.mubr.f32.mxu0 0.0
      %1465 = vmatmul.mubr.f32.gmra.mrb[0].mxu0 %v1374
      %v1466 = vpop.f32.mrb[0].mxu0
      %v1467 = vadd.f32 0.0, %v1466
      %v1468 = vpop.f32.mrb[0].mxu0
      %v1469 = vadd.f32 0.0, %v1468
      %1470 = vmatprep.mubr.f32.mxu0 0.0
      %1471 = vmatmul.mubr.f32.gmra.mrb[0].mxu0 %v1377
      %v1472 = vpop.f32.mrb[0].mxu0
      %v1473 = vadd.f32 0.0, %v1472
      %v1474 = vpop.f32.mrb[0].mxu0
      %v1475 = vadd.f32 0.0, %v1474
      %1476 = vmatprep.mubr.f32.mxu0 0.0
      %1477 = vmatmul.mubr.f32.gmra.mrb[0].mxu0 %v1380
      %v1478 = vpop.f32.mrb[0].mxu0
      %v1479 = vadd.f32 0.0, %v1478
      %v1480 = vpop.f32.mrb[0].mxu0
      %v1481 = vadd.f32 0.0, %v1480
      %1482 = vmatprep.mubr.f32.mxu0 0.0
      %1483 = vmatmul.mubr.f32.gmra.mrb[0].mxu0 %v1383
      %v1484 = vpop.f32.mrb[0].mxu0
      %v1485 = vadd.f32 0.0, %v1484
      %v1486 = vpop.f32.mrb[0].mxu0
      %v1487 = vadd.f32 0.0, %v1486
      %1488 = vmatprep.mubr.f32.mxu0 0.0
      %1489 = vmatmul.mubr.f32.gmra.mrb[0].mxu0 %v1386
      %v1490 = vpop.f32.mrb[0].mxu0
      %v1491 = vadd.f32 0.0, %v1490
      %v1492 = vpop.f32.mrb[0].mxu0
      %v1493 = vadd.f32 0.0, %v1492
      %1494 = vmatprep.mubr.f32.mxu0 0.0
      %1495 = vmatmul.mubr.f32.gmra.mrb[0].mxu0 %v1389
      %v1496 = vpop.f32.mrb[0].mxu0
      %v1497 = vadd.f32 0.0, %v1496
      %v1498 = vpop.f32.mrb[0].mxu0
      %v1499 = vadd.f32 0.0, %v1498
      %1500 = vmatprep.mubr.f32.mxu0 0.0
      %1501 = vmatmul.mubr.f32.gmra.mrb[0].mxu0 %v1392
      %v1502 = vpop.f32.mrb[0].mxu0
      %v1503 = vadd.f32 0.0, %v1502
      %v1504 = vpop.f32.mrb[0].mxu0
      %v1505 = vadd.f32 0.0, %v1504
      %1506 = vdwg.mxu0
      %v1507 = vadd.f32 %v1185, %v1461
      %v1508 = vadd.f32 %v1187, %v1463
      %v1509 = vadd.f32 %v1191, %v1467
      %v1510 = vadd.f32 %v1193, %v1469
      %v1511 = vadd.f32 %v1197, %v1473
      %v1512 = vadd.f32 %v1199, %v1475
      %v1513 = vadd.f32 %v1203, %v1479
      %v1514 = vadd.f32 %v1205, %v1481
      %v1515 = vadd.f32 %v1209, %v1485
      %v1516 = vadd.f32 %v1211, %v1487
      %v1517 = vadd.f32 %v1215, %v1491
      %v1518 = vadd.f32 %v1217, %v1493
      %v1519 = vadd.f32 %v1221, %v1497
      %v1520 = vadd.f32 %v1223, %v1499
      %v1521 = vadd.f32 %v1227, %v1503
      %v1522 = vadd.f32 %v1229, %v1505
      %v1523 = vadd.s32 %v660, 4294967295
      %v1524 = vadd.s32 %v661, 4294967295
      %1525 = vrot.lane.b32.xlu0 %v651, 1
      %v1526 = vpop.permute.xlu0 %1525
      %1527 = vrot.lane.b32.xlu0 %v653, 1
      %v1528 = vpop.permute.xlu0 %1527
      %1529 = vrot.lane.b32.xlu0 %v655, 1
      %v1530 = vpop.permute.xlu0 %1529
      %1531 = vrot.lane.b32.xlu0 %v657, 1
      %v1532 = vpop.permute.xlu0 %1531
      %1533 = vrot.lane.b32.xlu0 %v652, 1
      %v1534 = vpop.permute.xlu0 %1533
      %1535 = vrot.lane.b32.xlu0 %v654, 1
      %v1536 = vpop.permute.xlu0 %1535
      %1537 = vrot.lane.b32.xlu0 %v656, 1
      %v1538 = vpop.permute.xlu0 %1537
      %1539 = vrot.lane.b32.xlu0 %v658, 1
      %v1540 = vpop.permute.xlu0 %1539
      %vm1541 = vcmp.lt.s32.totalorder %v660, 1
      %v1542 = vsel %vm1541, %v1526, %v1534
      %v1543 = vsel %vm1541, %v1528, %v1536
      %v1544 = vsel %vm1541, %v1530, %v1538
      %v1545 = vsel %vm1541, %v1532, %v1540
      %v1546 = vsel %vm1541, %v1534, %v1526
      %v1547 = vsel %vm1541, %v1536, %v1528
      %v1548 = vsel %vm1541, %v1538, %v1530
      %v1549 = vsel %vm1541, %v1540, %v1532
      %1550 = vrot.lane.b32.xlu0 %v660, 1
      %v1551 = vpop.permute.xlu0 %1550
      %1552 = vrot.lane.b32.xlu0 %v661, 1
      %v1553 = vpop.permute.xlu0 %1552
      %v1554 = vsel %vm1541, %v1551, %v1553
      %v1555 = vsel %vm1541, %v1553, %v1551
      %vm1556 = vcmp.eq.s32.totalorder %v1555, %v1523
      %vm1557 = vcmp.eq.s32.totalorder %v1554, %v1524
      %vm1558 = vmand %vm1556, %vm686
      %vm1559 = vmand %vm1557, %vm687
      %v1560 = vsel %vm1558, 1, 0
      %v1561 = vsel %vm1559, 1, 0
      %v1562 = vlaneseq
      %v1563 = vshrl.u32 %v1562, 7
      %v1564 = vsub.s32 0, %v1563
      %v1565 = vrot.slane %v1560, %v1564
      %v1566 = vlaneseq
      %v1567 = vshrl.u32 %v1566, 7
      %v1568 = vsub.s32 0, %v1567
      %v1569 = vrot.slane %v1561, %v1568
      %vm1570 = vcmp.eq.s32.totalorder %v1565, 1
      %vm1571 = vcmp.eq.s32.totalorder %v1569, 1
      %v1572 = vsel %vm1570, %v1546, 0.0
      %v1573 = vsel %vm1571, %v1542, 0.0
      %v1574 = vsel %vm1570, %v1547, 0.0
      %v1575 = vsel %vm1571, %v1543, 0.0
      %v1576 = vsel %vm1570, %v1548, 0.0
      %v1577 = vsel %vm1571, %v1544, 0.0
      %v1578 = vsel %vm1570, %v1549, 0.0
      %v1579 = vsel %vm1571, %v1545, 0.0
      %v1580 = vadd.f32 %v1572, 0.0
      %v1581 = vadd.f32 %v1573, 0.0
      %v1582 = vadd.f32 %v1574, 0.0
      %v1583 = vadd.f32 %v1575, 0.0
      %v1584 = vadd.f32 %v1576, 0.0
      %v1585 = vadd.f32 %v1577, 0.0
      %v1586 = vadd.f32 %v1578, 0.0
      %v1587 = vadd.f32 %v1579, 0.0
      %1588 = vrot.lane.b32.xlu0 %v651, 127
      %v1589 = vpop.permute.xlu0 %1588
      %1590 = vrot.lane.b32.xlu0 %v653, 127
      %v1591 = vpop.permute.xlu0 %1590
      %1592 = vrot.lane.b32.xlu0 %v655, 127
      %v1593 = vpop.permute.xlu0 %1592
      %1594 = vrot.lane.b32.xlu0 %v657, 127
      %v1595 = vpop.permute.xlu0 %1594
      %1596 = vrot.lane.b32.xlu0 %v652, 127
      %v1597 = vpop.permute.xlu0 %1596
      %1598 = vrot.lane.b32.xlu0 %v654, 127
      %v1599 = vpop.permute.xlu0 %1598
      %1600 = vrot.lane.b32.xlu0 %v656, 127
      %v1601 = vpop.permute.xlu0 %1600
      %1602 = vrot.lane.b32.xlu0 %v658, 127
      %v1603 = vpop.permute.xlu0 %1602
      %vm1604 = vcmp.lt.s32.totalorder %v660, 127
      %v1605 = vsel %vm1604, %v1589, %v1597
      %v1606 = vsel %vm1604, %v1591, %v1599
      %v1607 = vsel %vm1604, %v1593, %v1601
      %v1608 = vsel %vm1604, %v1595, %v1603
      %v1609 = vsel %vm1604, %v1597, %v1589
      %v1610 = vsel %vm1604, %v1599, %v1591
      %v1611 = vsel %vm1604, %v1601, %v1593
      %v1612 = vsel %vm1604, %v1603, %v1595
      %1613 = vrot.lane.b32.xlu0 %v660, 127
      %v1614 = vpop.permute.xlu0 %1613
      %1615 = vrot.lane.b32.xlu0 %v661, 127
      %v1616 = vpop.permute.xlu0 %1615
      %v1617 = vsel %vm1604, %v1614, %v1616
      %v1618 = vsel %vm1604, %v1616, %v1614
      %vm1619 = vcmp.eq.s32.totalorder %v1617, %v1523
      %vm1620 = vcmp.eq.s32.totalorder %v1618, %v1524
      %vm1621 = vmand %vm1619, %vm686
      %vm1622 = vmand %vm1620, %vm687
      %v1623 = vsel %vm1621, 1, 0
      %v1624 = vsel %vm1622, 1, 0
      %v1625 = vlaneseq
      %v1626 = vshrl.u32 %v1625, 7
      %v1627 = vsub.s32 0, %v1626
      %v1628 = vrot.slane %v1623, %v1627
      %v1629 = vlaneseq
      %v1630 = vshrl.u32 %v1629, 7
      %v1631 = vsub.s32 0, %v1630
      %v1632 = vrot.slane %v1624, %v1631
      %vm1633 = vcmp.eq.s32.totalorder %v1628, 1
      %vm1634 = vcmp.eq.s32.totalorder %v1632, 1
      %v1635 = vsel %vm1633, %v1605, 0.0
      %v1636 = vsel %vm1634, %v1609, 0.0
      %v1637 = vsel %vm1633, %v1606, 0.0
      %v1638 = vsel %vm1634, %v1610, 0.0
      %v1639 = vsel %vm1633, %v1607, 0.0
      %v1640 = vsel %vm1634, %v1611, 0.0
      %v1641 = vsel %vm1633, %v1608, 0.0
      %v1642 = vsel %vm1634, %v1612, 0.0
      %v1643 = vadd.f32 %v1580, %v1635
      %v1644 = vadd.f32 %v1581, %v1636
      %v1645 = vadd.f32 %v1582, %v1637
      %v1646 = vadd.f32 %v1583, %v1638
      %v1647 = vadd.f32 %v1584, %v1639
      %v1648 = vadd.f32 %v1585, %v1640
      %v1649 = vadd.f32 %v1586, %v1641
      %v1650 = vadd.f32 %v1587, %v1642
      %s1651 = scalar_lea.vmem %s4, 192
      %v1652 = vld [vmem:[%s1651] sm:$0xff]
      %v1653 = vld [vmem:[%s1651 + $0x8] sm:$0xff]
      %v1654 = vld [vmem:[%s1651 + $0x10] sm:$0xff]
      %v1655 = vld [vmem:[%s1651 + $0x18] sm:$0xff]
      %v1656 = vld [vmem:[%s1651 + $0x20] sm:$0xff]
      %v1657 = vld [vmem:[%s1651 + $0x28] sm:$0xff]
      %v1658 = vld [vmem:[%s1651 + $0x30] sm:$0xff]
      %v1659 = vld [vmem:[%s1651 + $0x38] sm:$0xff]
      %v1661 = vsel %vm284, %v1652, 0
      %v1664 = vsel %vm284, %v1653, 0
      %v1667 = vsel %vm284, %v1654, 0
      %v1670 = vsel %vm284, %v1655, 0
      %v1673 = vsel %vm284, %v1656, 0
      %v1676 = vsel %vm284, %v1657, 0
      %v1679 = vsel %vm284, %v1658, 0
      %v1682 = vsel %vm284, %v1659, 0
      %1684 = vmatprep.subr.mxu0 %v1644
      %1685 = vmatpush1.msra.mxu0 %v1643
      %1686 = vmatprep.subr.mxu0 %v1646
      %1687 = vmatpush1.msra.mxu0 %v1645
      %1688 = vmatprep.subr.mxu0 %v1648
      %1689 = vmatpush1.msra.mxu0 %v1647
      %1690 = vmatprep.subr.mxu0 %v1650
      %1691 = vmatpush1.msra.mxu0 %v1649
      %1692 = vmatprep.subr.mxu0 0.0
      %1693 = vmatpush1.msra.mxu0 0.0
      %1694 = vmatprep.subr.mxu0 0.0
      %1695 = vmatpush1.msra.mxu0 0.0
      %1696 = vmatprep.subr.mxu0 0.0
      %1697 = vmatpush1.msra.mxu0 0.0
      %1698 = vmatprep.subr.mxu0 0.0
      %1699 = vmatpush1.msra.mxu0 0.0
      %1700 = vmatprep.subr.mxu0 0.0
      %1701 = vmatpush1.msra.mxu0 0.0
      %1702 = vmatprep.subr.mxu0 0.0
      %1703 = vmatpush1.msra.mxu0 0.0
      %1704 = vmatprep.subr.mxu0 0.0
      %1705 = vmatpush1.msra.mxu0 0.0
      %1706 = vmatprep.subr.mxu0 0.0
      %1707 = vmatpush1.msra.mxu0 0.0
      %1708 = vmatprep.subr.mxu0 0.0
      %1709 = vmatpush1.msra.mxu0 0.0
      %1710 = vmatprep.subr.mxu0 0.0
      %1711 = vmatpush1.msra.mxu0 0.0
      %1712 = vmatprep.subr.mxu0 0.0
      %1713 = vmatpush1.msra.mxu0 0.0
      %1714 = vmatprep.subr.mxu0 0.0
      %1715 = vmatpush1.msra.mxu0 0.0
      %1716 = vmatprep.subr.mxu0 0.0
      %1717 = vmatpush1.msra.mxu0 0.0
      %1718 = vmatprep.subr.mxu0 0.0
      %1719 = vmatpush1.msra.mxu0 0.0
      %1720 = vmatprep.subr.mxu0 0.0
      %1721 = vmatpush1.msra.mxu0 0.0
      %1722 = vmatprep.subr.mxu0 0.0
      %1723 = vmatpush1.msra.mxu0 0.0
      %1724 = vmatprep.subr.mxu0 0.0
      %1725 = vmatpush1.msra.mxu0 0.0
      %1726 = vmatprep.subr.mxu0 0.0
      %1727 = vmatpush1.msra.mxu0 0.0
      %1728 = vmatprep.subr.mxu0 0.0
      %1729 = vmatpush1.msra.mxu0 0.0
      %1730 = vmatprep.subr.mxu0 0.0
      %1731 = vmatpush1.msra.mxu0 0.0
      %1732 = vmatprep.subr.mxu0 0.0
      %1733 = vmatpush1.msra.mxu0 0.0
      %1734 = vmatprep.subr.mxu0 0.0
      %1735 = vmatpush1.msra.mxu0 0.0
      %1736 = vmatprep.subr.mxu0 0.0
      %1737 = vmatpush1.msra.mxu0 0.0
      %1738 = vmatprep.subr.mxu0 0.0
      %1739 = vmatpush1.msra.mxu0 0.0
      %1740 = vmatprep.subr.mxu0 0.0
      %1741 = vmatpush1.msra.mxu0 0.0
      %1742 = vmatprep.subr.mxu0 0.0
      %1743 = vmatpush1.msra.mxu0 0.0
      %1744 = vmatprep.subr.mxu0 0.0
      %1745 = vmatpush1.msra.mxu0 0.0
      %1746 = vmatprep.subr.mxu0 0.0
      %1747 = vmatpush1.msra.mxu0 0.0
      %1748 = vmatprep.mubr.f32.mxu0 0.0
      %1749 = vmatmul.mubr.f32.gmra.mrb[0].mxu0 %v1661
      %v1750 = vpop.f32.mrb[0].mxu0
      %v1751 = vadd.f32 0.0, %v1750
      %v1752 = vpop.f32.mrb[0].mxu0
      %v1753 = vadd.f32 0.0, %v1752
      %1754 = vmatprep.mubr.f32.mxu0 0.0
      %1755 = vmatmul.mubr.f32.gmra.mrb[0].mxu0 %v1664
      %v1756 = vpop.f32.mrb[0].mxu0
      %v1757 = vadd.f32 0.0, %v1756
      %v1758 = vpop.f32.mrb[0].mxu0
      %v1759 = vadd.f32 0.0, %v1758
      %1760 = vmatprep.mubr.f32.mxu0 0.0
      %1761 = vmatmul.mubr.f32.gmra.mrb[0].mxu0 %v1667
      %v1762 = vpop.f32.mrb[0].mxu0
      %v1763 = vadd.f32 0.0, %v1762
      %v1764 = vpop.f32.mrb[0].mxu0
      %v1765 = vadd.f32 0.0, %v1764
      %1766 = vmatprep.mubr.f32.mxu0 0.0
      %1767 = vmatmul.mubr.f32.gmra.mrb[0].mxu0 %v1670
      %v1768 = vpop.f32.mrb[0].mxu0
      %v1769 = vadd.f32 0.0, %v1768
      %v1770 = vpop.f32.mrb[0].mxu0
      %v1771 = vadd.f32 0.0, %v1770
      %1772 = vmatprep.mubr.f32.mxu0 0.0
      %1773 = vmatmul.mubr.f32.gmra.mrb[0].mxu0 %v1673
      %v1774 = vpop.f32.mrb[0].mxu0
      %v1775 = vadd.f32 0.0, %v1774
      %v1776 = vpop.f32.mrb[0].mxu0
      %v1777 = vadd.f32 0.0, %v1776
      %1778 = vmatprep.mubr.f32.mxu0 0.0
      %1779 = vmatmul.mubr.f32.gmra.mrb[0].mxu0 %v1676
      %v1780 = vpop.f32.mrb[0].mxu0
      %v1781 = vadd.f32 0.0, %v1780
      %v1782 = vpop.f32.mrb[0].mxu0
      %v1783 = vadd.f32 0.0, %v1782
      %1784 = vmatprep.mubr.f32.mxu0 0.0
      %1785 = vmatmul.mubr.f32.gmra.mrb[0].mxu0 %v1679
      %v1786 = vpop.f32.mrb[0].mxu0
      %v1787 = vadd.f32 0.0, %v1786
      %v1788 = vpop.f32.mrb[0].mxu0
      %v1789 = vadd.f32 0.0, %v1788
      %1790 = vmatprep.mubr.f32.mxu0 0.0
      %1791 = vmatmul.mubr.f32.gmra.mrb[0].mxu0 %v1682
      %v1792 = vpop.f32.mrb[0].mxu0
      %v1793 = vadd.f32 0.0, %v1792
      %v1794 = vpop.f32.mrb[0].mxu0
      %v1795 = vadd.f32 0.0, %v1794
      %1796 = vdwg.mxu0
      %v1797 = vadd.f32 %v1507, %v1751
      %v1798 = vadd.f32 %v1508, %v1753
      %v1799 = vadd.f32 %v1509, %v1757
      %v1800 = vadd.f32 %v1510, %v1759
      %v1801 = vadd.f32 %v1511, %v1763
      %v1802 = vadd.f32 %v1512, %v1765
      %v1803 = vadd.f32 %v1513, %v1769
      %v1804 = vadd.f32 %v1514, %v1771
      %v1805 = vadd.f32 %v1515, %v1775
      %v1806 = vadd.f32 %v1516, %v1777
      %v1807 = vadd.f32 %v1517, %v1781
      %v1808 = vadd.f32 %v1518, %v1783
      %v1809 = vadd.f32 %v1519, %v1787
      %v1810 = vadd.f32 %v1520, %v1789
      %v1811 = vadd.f32 %v1521, %v1793
      %v1812 = vadd.f32 %v1522, %v1795
      %s1813 = scalar_lea.vmem %s4, 256
      %v1814 = vld [vmem:[%s1813] sm:$0xff]
      %v1815 = vld [vmem:[%s1813 + $0x8] sm:$0xff]
      %v1816 = vld [vmem:[%s1813 + $0x10] sm:$0xff]
      %v1817 = vld [vmem:[%s1813 + $0x18] sm:$0xff]
      %v1818 = vld [vmem:[%s1813 + $0x20] sm:$0xff]
      %v1819 = vld [vmem:[%s1813 + $0x28] sm:$0xff]
      %v1820 = vld [vmem:[%s1813 + $0x30] sm:$0xff]
      %v1821 = vld [vmem:[%s1813 + $0x38] sm:$0xff]
      %v1823 = vsel %vm284, %v1814, 0
      %v1826 = vsel %vm284, %v1815, 0
      %v1829 = vsel %vm284, %v1816, 0
      %v1832 = vsel %vm284, %v1817, 0
      %v1835 = vsel %vm284, %v1818, 0
      %v1838 = vsel %vm284, %v1819, 0
      %v1841 = vsel %vm284, %v1820, 0
      %v1844 = vsel %vm284, %v1821, 0
      %1846 = vmatprep.subr.mxu0 %v652
      %1847 = vmatpush1.msra.mxu0 %v651
      %1848 = vmatprep.subr.mxu0 %v654
      %1849 = vmatpush1.msra.mxu0 %v653
      %1850 = vmatprep.subr.mxu0 %v656
      %1851 = vmatpush1.msra.mxu0 %v655
      %1852 = vmatprep.subr.mxu0 %v658
      %1853 = vmatpush1.msra.mxu0 %v657
      %1854 = vmatprep.subr.mxu0 0.0
      %1855 = vmatpush1.msra.mxu0 0.0
      %1856 = vmatprep.subr.mxu0 0.0
      %1857 = vmatpush1.msra.mxu0 0.0
      %1858 = vmatprep.subr.mxu0 0.0
      %1859 = vmatpush1.msra.mxu0 0.0
      %1860 = vmatprep.subr.mxu0 0.0
      %1861 = vmatpush1.msra.mxu0 0.0
      %1862 = vmatprep.subr.mxu0 0.0
      %1863 = vmatpush1.msra.mxu0 0.0
      %1864 = vmatprep.subr.mxu0 0.0
      %1865 = vmatpush1.msra.mxu0 0.0
      %1866 = vmatprep.subr.mxu0 0.0
      %1867 = vmatpush1.msra.mxu0 0.0
      %1868 = vmatprep.subr.mxu0 0.0
      %1869 = vmatpush1.msra.mxu0 0.0
      %1870 = vmatprep.subr.mxu0 0.0
      %1871 = vmatpush1.msra.mxu0 0.0
      %1872 = vmatprep.subr.mxu0 0.0
      %1873 = vmatpush1.msra.mxu0 0.0
      %1874 = vmatprep.subr.mxu0 0.0
      %1875 = vmatpush1.msra.mxu0 0.0
      %1876 = vmatprep.subr.mxu0 0.0
      %1877 = vmatpush1.msra.mxu0 0.0
      %1878 = vmatprep.subr.mxu0 0.0
      %1879 = vmatpush1.msra.mxu0 0.0
      %1880 = vmatprep.subr.mxu0 0.0
      %1881 = vmatpush1.msra.mxu0 0.0
      %1882 = vmatprep.subr.mxu0 0.0
      %1883 = vmatpush1.msra.mxu0 0.0
      %1884 = vmatprep.subr.mxu0 0.0
      %1885 = vmatpush1.msra.mxu0 0.0
      %1886 = vmatprep.subr.mxu0 0.0
      %1887 = vmatpush1.msra.mxu0 0.0
      %1888 = vmatprep.subr.mxu0 0.0
      %1889 = vmatpush1.msra.mxu0 0.0
      %1890 = vmatprep.subr.mxu0 0.0
      %1891 = vmatpush1.msra.mxu0 0.0
      %1892 = vmatprep.subr.mxu0 0.0
      %1893 = vmatpush1.msra.mxu0 0.0
      %1894 = vmatprep.subr.mxu0 0.0
      %1895 = vmatpush1.msra.mxu0 0.0
      %1896 = vmatprep.subr.mxu0 0.0
      %1897 = vmatpush1.msra.mxu0 0.0
      %1898 = vmatprep.subr.mxu0 0.0
      %1899 = vmatpush1.msra.mxu0 0.0
      %1900 = vmatprep.subr.mxu0 0.0
      %1901 = vmatpush1.msra.mxu0 0.0
      %1902 = vmatprep.subr.mxu0 0.0
      %1903 = vmatpush1.msra.mxu0 0.0
      %1904 = vmatprep.subr.mxu0 0.0
      %1905 = vmatpush1.msra.mxu0 0.0
      %1906 = vmatprep.subr.mxu0 0.0
      %1907 = vmatpush1.msra.mxu0 0.0
      %1908 = vmatprep.subr.mxu0 0.0
      %1909 = vmatpush1.msra.mxu0 0.0
      %1910 = vmatprep.mubr.f32.mxu0 0.0
      %1911 = vmatmul.mubr.f32.gmra.mrb[0].mxu0 %v1823
      %v1912 = vpop.f32.mrb[0].mxu0
      %v1913 = vadd.f32 0.0, %v1912
      %v1914 = vpop.f32.mrb[0].mxu0
      %v1915 = vadd.f32 0.0, %v1914
      %1916 = vmatprep.mubr.f32.mxu0 0.0
      %1917 = vmatmul.mubr.f32.gmra.mrb[0].mxu0 %v1826
      %v1918 = vpop.f32.mrb[0].mxu0
      %v1919 = vadd.f32 0.0, %v1918
      %v1920 = vpop.f32.mrb[0].mxu0
      %v1921 = vadd.f32 0.0, %v1920
      %1922 = vmatprep.mubr.f32.mxu0 0.0
      %1923 = vmatmul.mubr.f32.gmra.mrb[0].mxu0 %v1829
      %v1924 = vpop.f32.mrb[0].mxu0
      %v1925 = vadd.f32 0.0, %v1924
      %v1926 = vpop.f32.mrb[0].mxu0
      %v1927 = vadd.f32 0.0, %v1926
      %1928 = vmatprep.mubr.f32.mxu0 0.0
      %1929 = vmatmul.mubr.f32.gmra.mrb[0].mxu0 %v1832
      %v1930 = vpop.f32.mrb[0].mxu0
      %v1931 = vadd.f32 0.0, %v1930
      %v1932 = vpop.f32.mrb[0].mxu0
      %v1933 = vadd.f32 0.0, %v1932
      %1934 = vmatprep.mubr.f32.mxu0 0.0
      %1935 = vmatmul.mubr.f32.gmra.mrb[0].mxu0 %v1835
      %v1936 = vpop.f32.mrb[0].mxu0
      %v1937 = vadd.f32 0.0, %v1936
      %v1938 = vpop.f32.mrb[0].mxu0
      %v1939 = vadd.f32 0.0, %v1938
      %1940 = vmatprep.mubr.f32.mxu0 0.0
      %1941 = vmatmul.mubr.f32.gmra.mrb[0].mxu0 %v1838
      %v1942 = vpop.f32.mrb[0].mxu0
      %v1943 = vadd.f32 0.0, %v1942
      %v1944 = vpop.f32.mrb[0].mxu0
      %v1945 = vadd.f32 0.0, %v1944
      %1946 = vmatprep.mubr.f32.mxu0 0.0
      %1947 = vmatmul.mubr.f32.gmra.mrb[0].mxu0 %v1841
      %v1948 = vpop.f32.mrb[0].mxu0
      %v1949 = vadd.f32 0.0, %v1948
      %v1950 = vpop.f32.mrb[0].mxu0
      %v1951 = vadd.f32 0.0, %v1950
      %1952 = vmatprep.mubr.f32.mxu0 0.0
      %1953 = vmatmul.mubr.f32.gmra.mrb[0].mxu0 %v1844
      %v1954 = vpop.f32.mrb[0].mxu0
      %v1955 = vadd.f32 0.0, %v1954
      %v1956 = vpop.f32.mrb[0].mxu0
      %v1957 = vadd.f32 0.0, %v1956
      %1958 = vdwg.mxu0
      %v1959 = vadd.f32 %v1797, %v1913
      %v1960 = vadd.f32 %v1798, %v1915
      %v1961 = vadd.f32 %v1799, %v1919
      %v1962 = vadd.f32 %v1800, %v1921
      %v1963 = vadd.f32 %v1801, %v1925
      %v1964 = vadd.f32 %v1802, %v1927
      %v1965 = vadd.f32 %v1803, %v1931
      %v1966 = vadd.f32 %v1804, %v1933
      %v1967 = vadd.f32 %v1805, %v1937
      %v1968 = vadd.f32 %v1806, %v1939
      %v1969 = vadd.f32 %v1807, %v1943
      %v1970 = vadd.f32 %v1808, %v1945
      %v1971 = vadd.f32 %v1809, %v1949
      %v1972 = vadd.f32 %v1810, %v1951
      %v1973 = vadd.f32 %v1811, %v1955
      %v1974 = vadd.f32 %v1812, %v1957
      %v1975 = vadd.s32 %v660, 1
      %v1976 = vadd.s32 %v661, 1
      %vm1977 = vcmp.eq.s32.totalorder %v1617, %v1975
      %vm1978 = vcmp.eq.s32.totalorder %v1618, %v1976
      %vm1979 = vmand %vm1977, %vm1231
      %vm1980 = vmand %vm1978, %vm1232
      %v1981 = vsel %vm1979, 1, 0
      %v1982 = vsel %vm1980, 1, 0
      %v1983 = vlaneseq
      %v1984 = vshrl.u32 %v1983, 7
      %v1985 = vsub.s32 0, %v1984
      %v1986 = vrot.slane %v1981, %v1985
      %v1987 = vlaneseq
      %v1988 = vshrl.u32 %v1987, 7
      %v1989 = vsub.s32 0, %v1988
      %v1990 = vrot.slane %v1982, %v1989
      %vm1991 = vcmp.eq.s32.totalorder %v1986, 1
      %vm1992 = vcmp.eq.s32.totalorder %v1990, 1
      %v1993 = vsel %vm1991, %v1605, 0.0
      %v1994 = vsel %vm1992, %v1609, 0.0
      %v1995 = vsel %vm1991, %v1606, 0.0
      %v1996 = vsel %vm1992, %v1610, 0.0
      %v1997 = vsel %vm1991, %v1607, 0.0
      %v1998 = vsel %vm1992, %v1611, 0.0
      %v1999 = vsel %vm1991, %v1608, 0.0
      %v2000 = vsel %vm1992, %v1612, 0.0
      %v2001 = vadd.f32 %v1993, 0.0
      %v2002 = vadd.f32 %v1994, 0.0
      %v2003 = vadd.f32 %v1995, 0.0
      %v2004 = vadd.f32 %v1996, 0.0
      %v2005 = vadd.f32 %v1997, 0.0
      %v2006 = vadd.f32 %v1998, 0.0
      %v2007 = vadd.f32 %v1999, 0.0
      %v2008 = vadd.f32 %v2000, 0.0
      %vm2009 = vcmp.eq.s32.totalorder %v1555, %v1975
      %vm2010 = vcmp.eq.s32.totalorder %v1554, %v1976
      %vm2011 = vmand %vm2009, %vm1231
      %vm2012 = vmand %vm2010, %vm1232
      %v2013 = vsel %vm2011, 1, 0
      %v2014 = vsel %vm2012, 1, 0
      %v2015 = vlaneseq
      %v2016 = vshrl.u32 %v2015, 7
      %v2017 = vsub.s32 0, %v2016
      %v2018 = vrot.slane %v2013, %v2017
      %v2019 = vlaneseq
      %v2020 = vshrl.u32 %v2019, 7
      %v2021 = vsub.s32 0, %v2020
      %v2022 = vrot.slane %v2014, %v2021
      %vm2023 = vcmp.eq.s32.totalorder %v2018, 1
      %vm2024 = vcmp.eq.s32.totalorder %v2022, 1
      %v2025 = vsel %vm2023, %v1546, 0.0
      %v2026 = vsel %vm2024, %v1542, 0.0
      %v2027 = vsel %vm2023, %v1547, 0.0
      %v2028 = vsel %vm2024, %v1543, 0.0
      %v2029 = vsel %vm2023, %v1548, 0.0
      %v2030 = vsel %vm2024, %v1544, 0.0
      %v2031 = vsel %vm2023, %v1549, 0.0
      %v2032 = vsel %vm2024, %v1545, 0.0
      %v2033 = vadd.f32 %v2001, %v2025
      %v2034 = vadd.f32 %v2002, %v2026
      %v2035 = vadd.f32 %v2003, %v2027
      %v2036 = vadd.f32 %v2004, %v2028
      %v2037 = vadd.f32 %v2005, %v2029
      %v2038 = vadd.f32 %v2006, %v2030
      %v2039 = vadd.f32 %v2007, %v2031
      %v2040 = vadd.f32 %v2008, %v2032
      %s2041 = scalar_lea.vmem %s4, 320
      %v2042 = vld [vmem:[%s2041] sm:$0xff]
      %v2043 = vld [vmem:[%s2041 + $0x8] sm:$0xff]
      %v2044 = vld [vmem:[%s2041 + $0x10] sm:$0xff]
      %v2045 = vld [vmem:[%s2041 + $0x18] sm:$0xff]
      %v2046 = vld [vmem:[%s2041 + $0x20] sm:$0xff]
      %v2047 = vld [vmem:[%s2041 + $0x28] sm:$0xff]
      %v2048 = vld [vmem:[%s2041 + $0x30] sm:$0xff]
      %v2049 = vld [vmem:[%s2041 + $0x38] sm:$0xff]
      %v2051 = vsel %vm284, %v2042, 0
      %v2054 = vsel %vm284, %v2043, 0
      %v2057 = vsel %vm284, %v2044, 0
      %v2060 = vsel %vm284, %v2045, 0
      %v2063 = vsel %vm284, %v2046, 0
      %v2066 = vsel %vm284, %v2047, 0
      %v2069 = vsel %vm284, %v2048, 0
      %v2072 = vsel %vm284, %v2049, 0
      %2074 = vmatprep.subr.mxu0 %v2034
      %2075 = vmatpush1.msra.mxu0 %v2033
      %2076 = vmatprep.subr.mxu0 %v2036
      %2077 = vmatpush1.msra.mxu0 %v2035
      %2078 = vmatprep.subr.mxu0 %v2038
      %2079 = vmatpush1.msra.mxu0 %v2037
      %2080 = vmatprep.subr.mxu0 %v2040
      %2081 = vmatpush1.msra.mxu0 %v2039
      %2082 = vmatprep.subr.mxu0 0.0
      %2083 = vmatpush1.msra.mxu0 0.0
      %2084 = vmatprep.subr.mxu0 0.0
      %2085 = vmatpush1.msra.mxu0 0.0
      %2086 = vmatprep.subr.mxu0 0.0
      %2087 = vmatpush1.msra.mxu0 0.0
      %2088 = vmatprep.subr.mxu0 0.0
      %2089 = vmatpush1.msra.mxu0 0.0
      %2090 = vmatprep.subr.mxu0 0.0
      %2091 = vmatpush1.msra.mxu0 0.0
      %2092 = vmatprep.subr.mxu0 0.0
      %2093 = vmatpush1.msra.mxu0 0.0
      %2094 = vmatprep.subr.mxu0 0.0
      %2095 = vmatpush1.msra.mxu0 0.0
      %2096 = vmatprep.subr.mxu0 0.0
      %2097 = vmatpush1.msra.mxu0 0.0
      %2098 = vmatprep.subr.mxu0 0.0
      %2099 = vmatpush1.msra.mxu0 0.0
      %2100 = vmatprep.subr.mxu0 0.0
      %2101 = vmatpush1.msra.mxu0 0.0
      %2102 = vmatprep.subr.mxu0 0.0
      %2103 = vmatpush1.msra.mxu0 0.0
      %2104 = vmatprep.subr.mxu0 0.0
      %2105 = vmatpush1.msra.mxu0 0.0
      %2106 = vmatprep.subr.mxu0 0.0
      %2107 = vmatpush1.msra.mxu0 0.0
      %2108 = vmatprep.subr.mxu0 0.0
      %2109 = vmatpush1.msra.mxu0 0.0
      %2110 = vmatprep.subr.mxu0 0.0
      %2111 = vmatpush1.msra.mxu0 0.0
      %2112 = vmatprep.subr.mxu0 0.0
      %2113 = vmatpush1.msra.mxu0 0.0
      %2114 = vmatprep.subr.mxu0 0.0
      %2115 = vmatpush1.msra.mxu0 0.0
      %2116 = vmatprep.subr.mxu0 0.0
      %2117 = vmatpush1.msra.mxu0 0.0
      %2118 = vmatprep.subr.mxu0 0.0
      %2119 = vmatpush1.msra.mxu0 0.0
      %2120 = vmatprep.subr.mxu0 0.0
      %2121 = vmatpush1.msra.mxu0 0.0
      %2122 = vmatprep.subr.mxu0 0.0
      %2123 = vmatpush1.msra.mxu0 0.0
      %2124 = vmatprep.subr.mxu0 0.0
      %2125 = vmatpush1.msra.mxu0 0.0
      %2126 = vmatprep.subr.mxu0 0.0
      %2127 = vmatpush1.msra.mxu0 0.0
      %2128 = vmatprep.subr.mxu0 0.0
      %2129 = vmatpush1.msra.mxu0 0.0
      %2130 = vmatprep.subr.mxu0 0.0
      %2131 = vmatpush1.msra.mxu0 0.0
      %2132 = vmatprep.subr.mxu0 0.0
      %2133 = vmatpush1.msra.mxu0 0.0
      %2134 = vmatprep.subr.mxu0 0.0
      %2135 = vmatpush1.msra.mxu0 0.0
      %2136 = vmatprep.subr.mxu0 0.0
      %2137 = vmatpush1.msra.mxu0 0.0
      %2138 = vmatprep.mubr.f32.mxu0 0.0
      %2139 = vmatmul.mubr.f32.gmra.mrb[0].mxu0 %v2051
      %v2140 = vpop.f32.mrb[0].mxu0
      %v2141 = vadd.f32 0.0, %v2140
      %v2142 = vpop.f32.mrb[0].mxu0
      %v2143 = vadd.f32 0.0, %v2142
      %2144 = vmatprep.mubr.f32.mxu0 0.0
      %2145 = vmatmul.mubr.f32.gmra.mrb[0].mxu0 %v2054
      %v2146 = vpop.f32.mrb[0].mxu0
      %v2147 = vadd.f32 0.0, %v2146
      %v2148 = vpop.f32.mrb[0].mxu0
      %v2149 = vadd.f32 0.0, %v2148
      %2150 = vmatprep.mubr.f32.mxu0 0.0
      %2151 = vmatmul.mubr.f32.gmra.mrb[0].mxu0 %v2057
      %v2152 = vpop.f32.mrb[0].mxu0
      %v2153 = vadd.f32 0.0, %v2152
      %v2154 = vpop.f32.mrb[0].mxu0
      %v2155 = vadd.f32 0.0, %v2154
      %2156 = vmatprep.mubr.f32.mxu0 0.0
      %2157 = vmatmul.mubr.f32.gmra.mrb[0].mxu0 %v2060
      %v2158 = vpop.f32.mrb[0].mxu0
      %v2159 = vadd.f32 0.0, %v2158
      %v2160 = vpop.f32.mrb[0].mxu0
      %v2161 = vadd.f32 0.0, %v2160
      %2162 = vmatprep.mubr.f32.mxu0 0.0
      %2163 = vmatmul.mubr.f32.gmra.mrb[0].mxu0 %v2063
      %v2164 = vpop.f32.mrb[0].mxu0
      %v2165 = vadd.f32 0.0, %v2164
      %v2166 = vpop.f32.mrb[0].mxu0
      %v2167 = vadd.f32 0.0, %v2166
      %2168 = vmatprep.mubr.f32.mxu0 0.0
      %2169 = vmatmul.mubr.f32.gmra.mrb[0].mxu0 %v2066
      %v2170 = vpop.f32.mrb[0].mxu0
      %v2171 = vadd.f32 0.0, %v2170
      %v2172 = vpop.f32.mrb[0].mxu0
      %v2173 = vadd.f32 0.0, %v2172
      %2174 = vmatprep.mubr.f32.mxu0 0.0
      %2175 = vmatmul.mubr.f32.gmra.mrb[0].mxu0 %v2069
      %v2176 = vpop.f32.mrb[0].mxu0
      %v2177 = vadd.f32 0.0, %v2176
      %v2178 = vpop.f32.mrb[0].mxu0
      %v2179 = vadd.f32 0.0, %v2178
      %2180 = vmatprep.mubr.f32.mxu0 0.0
      %2181 = vmatmul.mubr.f32.gmra.mrb[0].mxu0 %v2072
      %v2182 = vpop.f32.mrb[0].mxu0
      %v2183 = vadd.f32 0.0, %v2182
      %v2184 = vpop.f32.mrb[0].mxu0
      %v2185 = vadd.f32 0.0, %v2184
      %2186 = vdwg.mxu0
      %v2187 = vadd.f32 %v1959, %v2141
      %v2188 = vadd.f32 %v1960, %v2143
      %v2189 = vadd.f32 %v1961, %v2147
      %v2190 = vadd.f32 %v1962, %v2149
      %v2191 = vadd.f32 %v1963, %v2153
      %v2192 = vadd.f32 %v1964, %v2155
      %v2193 = vadd.f32 %v1965, %v2159
      %v2194 = vadd.f32 %v1966, %v2161
      %v2195 = vadd.f32 %v1967, %v2165
      %v2196 = vadd.f32 %v1968, %v2167
      %v2197 = vadd.f32 %v1969, %v2171
      %v2198 = vadd.f32 %v1970, %v2173
      %v2199 = vadd.f32 %v1971, %v2177
      %v2200 = vadd.f32 %v1972, %v2179
      %v2201 = vadd.f32 %v1973, %v2183
      %v2202 = vadd.f32 %v1974, %v2185
      %v2203 = vadd.s32 %v660, 15
      %v2204 = vadd.s32 %v661, 15
      %vm2205 = vcmp.eq.s32.totalorder %v1327, %v2203
      %vm2206 = vcmp.eq.s32.totalorder %v1328, %v2204
      %vm2207 = vmand %vm2205, %vm686
      %vm2208 = vmand %vm2206, %vm687
      %v2209 = vsel %vm2207, 1, 0
      %v2210 = vsel %vm2208, 1, 0
      %v2211 = vlaneseq
      %v2212 = vshrl.u32 %v2211, 7
      %v2213 = vsub.s32 0, %v2212
      %v2214 = vrot.slane %v2209, %v2213
      %v2215 = vlaneseq
      %v2216 = vshrl.u32 %v2215, 7
      %v2217 = vsub.s32 0, %v2216
      %v2218 = vrot.slane %v2210, %v2217
      %vm2219 = vcmp.eq.s32.totalorder %v2214, 1
      %vm2220 = vcmp.eq.s32.totalorder %v2218, 1
      %v2221 = vsel %vm2219, %v1315, 0.0
      %v2222 = vsel %vm2220, %v1319, 0.0
      %v2223 = vsel %vm2219, %v1316, 0.0
      %v2224 = vsel %vm2220, %v1320, 0.0
      %v2225 = vsel %vm2219, %v1317, 0.0
      %v2226 = vsel %vm2220, %v1321, 0.0
      %v2227 = vsel %vm2219, %v1318, 0.0
      %v2228 = vsel %vm2220, %v1322, 0.0
      %v2229 = vadd.f32 %v2221, 0.0
      %v2230 = vadd.f32 %v2222, 0.0
      %v2231 = vadd.f32 %v2223, 0.0
      %v2232 = vadd.f32 %v2224, 0.0
      %v2233 = vadd.f32 %v2225, 0.0
      %v2234 = vadd.f32 %v2226, 0.0
      %v2235 = vadd.f32 %v2227, 0.0
      %v2236 = vadd.f32 %v2228, 0.0
      %vm2237 = vcmp.eq.s32.totalorder %v1265, %v2203
      %vm2238 = vcmp.eq.s32.totalorder %v1264, %v2204
      %vm2239 = vmand %vm2237, %vm686
      %vm2240 = vmand %vm2238, %vm687
      %v2241 = vsel %vm2239, 1, 0
      %v2242 = vsel %vm2240, 1, 0
      %v2243 = vlaneseq
      %v2244 = vshrl.u32 %v2243, 7
      %v2245 = vsub.s32 0, %v2244
      %v2246 = vrot.slane %v2241, %v2245
      %v2247 = vlaneseq
      %v2248 = vshrl.u32 %v2247, 7
      %v2249 = vsub.s32 0, %v2248
      %v2250 = vrot.slane %v2242, %v2249
      %vm2251 = vcmp.eq.s32.totalorder %v2246, 1
      %vm2252 = vcmp.eq.s32.totalorder %v2250, 1
      %v2253 = vsel %vm2251, %v1256, 0.0
      %v2254 = vsel %vm2252, %v1252, 0.0
      %v2255 = vsel %vm2251, %v1257, 0.0
      %v2256 = vsel %vm2252, %v1253, 0.0
      %v2257 = vsel %vm2251, %v1258, 0.0
      %v2258 = vsel %vm2252, %v1254, 0.0
      %v2259 = vsel %vm2251, %v1259, 0.0
      %v2260 = vsel %vm2252, %v1255, 0.0
      %v2261 = vadd.f32 %v2229, %v2253
      %v2262 = vadd.f32 %v2230, %v2254
      %v2263 = vadd.f32 %v2231, %v2255
      %v2264 = vadd.f32 %v2232, %v2256
      %v2265 = vadd.f32 %v2233, %v2257
      %v2266 = vadd.f32 %v2234, %v2258
      %v2267 = vadd.f32 %v2235, %v2259
      %v2268 = vadd.f32 %v2236, %v2260
      %s2269 = scalar_lea.vmem %s4, 384
      %v2270 = vld [vmem:[%s2269] sm:$0xff]
      %v2271 = vld [vmem:[%s2269 + $0x8] sm:$0xff]
      %v2272 = vld [vmem:[%s2269 + $0x10] sm:$0xff]
      %v2273 = vld [vmem:[%s2269 + $0x18] sm:$0xff]
      %v2274 = vld [vmem:[%s2269 + $0x20] sm:$0xff]
      %v2275 = vld [vmem:[%s2269 + $0x28] sm:$0xff]
      %v2276 = vld [vmem:[%s2269 + $0x30] sm:$0xff]
      %v2277 = vld [vmem:[%s2269 + $0x38] sm:$0xff]
      %v2279 = vsel %vm284, %v2270, 0
      %v2282 = vsel %vm284, %v2271, 0
      %v2285 = vsel %vm284, %v2272, 0
      %v2288 = vsel %vm284, %v2273, 0
      %v2291 = vsel %vm284, %v2274, 0
      %v2294 = vsel %vm284, %v2275, 0
      %v2297 = vsel %vm284, %v2276, 0
      %v2300 = vsel %vm284, %v2277, 0
      %2302 = vmatprep.subr.mxu0 %v2262
      %2303 = vmatpush1.msra.mxu0 %v2261
      %2304 = vmatprep.subr.mxu0 %v2264
      %2305 = vmatpush1.msra.mxu0 %v2263
      %2306 = vmatprep.subr.mxu0 %v2266
      %2307 = vmatpush1.msra.mxu0 %v2265
      %2308 = vmatprep.subr.mxu0 %v2268
      %2309 = vmatpush1.msra.mxu0 %v2267
      %2310 = vmatprep.subr.mxu0 0.0
      %2311 = vmatpush1.msra.mxu0 0.0
      %2312 = vmatprep.subr.mxu0 0.0
      %2313 = vmatpush1.msra.mxu0 0.0
      %2314 = vmatprep.subr.mxu0 0.0
      %2315 = vmatpush1.msra.mxu0 0.0
      %2316 = vmatprep.subr.mxu0 0.0
      %2317 = vmatpush1.msra.mxu0 0.0
      %2318 = vmatprep.subr.mxu0 0.0
      %2319 = vmatpush1.msra.mxu0 0.0
      %2320 = vmatprep.subr.mxu0 0.0
      %2321 = vmatpush1.msra.mxu0 0.0
      %2322 = vmatprep.subr.mxu0 0.0
      %2323 = vmatpush1.msra.mxu0 0.0
      %2324 = vmatprep.subr.mxu0 0.0
      %2325 = vmatpush1.msra.mxu0 0.0
      %2326 = vmatprep.subr.mxu0 0.0
      %2327 = vmatpush1.msra.mxu0 0.0
      %2328 = vmatprep.subr.mxu0 0.0
      %2329 = vmatpush1.msra.mxu0 0.0
      %2330 = vmatprep.subr.mxu0 0.0
      %2331 = vmatpush1.msra.mxu0 0.0
      %2332 = vmatprep.subr.mxu0 0.0
      %2333 = vmatpush1.msra.mxu0 0.0
      %2334 = vmatprep.subr.mxu0 0.0
      %2335 = vmatpush1.msra.mxu0 0.0
      %2336 = vmatprep.subr.mxu0 0.0
      %2337 = vmatpush1.msra.mxu0 0.0
      %2338 = vmatprep.subr.mxu0 0.0
      %2339 = vmatpush1.msra.mxu0 0.0
      %2340 = vmatprep.subr.mxu0 0.0
      %2341 = vmatpush1.msra.mxu0 0.0
      %2342 = vmatprep.subr.mxu0 0.0
      %2343 = vmatpush1.msra.mxu0 0.0
      %2344 = vmatprep.subr.mxu0 0.0
      %2345 = vmatpush1.msra.mxu0 0.0
      %2346 = vmatprep.subr.mxu0 0.0
      %2347 = vmatpush1.msra.mxu0 0.0
      %2348 = vmatprep.subr.mxu0 0.0
      %2349 = vmatpush1.msra.mxu0 0.0
      %2350 = vmatprep.subr.mxu0 0.0
      %2351 = vmatpush1.msra.mxu0 0.0
      %2352 = vmatprep.subr.mxu0 0.0
      %2353 = vmatpush1.msra.mxu0 0.0
      %2354 = vmatprep.subr.mxu0 0.0
      %2355 = vmatpush1.msra.mxu0 0.0
      %2356 = vmatprep.subr.mxu0 0.0
      %2357 = vmatpush1.msra.mxu0 0.0
      %2358 = vmatprep.subr.mxu0 0.0
      %2359 = vmatpush1.msra.mxu0 0.0
      %2360 = vmatprep.subr.mxu0 0.0
      %2361 = vmatpush1.msra.mxu0 0.0
      %2362 = vmatprep.subr.mxu0 0.0
      %2363 = vmatpush1.msra.mxu0 0.0
      %2364 = vmatprep.subr.mxu0 0.0
      %2365 = vmatpush1.msra.mxu0 0.0
      %2366 = vmatprep.mubr.f32.mxu0 0.0
      %2367 = vmatmul.mubr.f32.gmra.mrb[0].mxu0 %v2279
      %v2368 = vpop.f32.mrb[0].mxu0
      %v2369 = vadd.f32 0.0, %v2368
      %v2370 = vpop.f32.mrb[0].mxu0
      %v2371 = vadd.f32 0.0, %v2370
      %2372 = vmatprep.mubr.f32.mxu0 0.0
      %2373 = vmatmul.mubr.f32.gmra.mrb[0].mxu0 %v2282
      %v2374 = vpop.f32.mrb[0].mxu0
      %v2375 = vadd.f32 0.0, %v2374
      %v2376 = vpop.f32.mrb[0].mxu0
      %v2377 = vadd.f32 0.0, %v2376
      %2378 = vmatprep.mubr.f32.mxu0 0.0
      %2379 = vmatmul.mubr.f32.gmra.mrb[0].mxu0 %v2285
      %v2380 = vpop.f32.mrb[0].mxu0
      %v2381 = vadd.f32 0.0, %v2380
      %v2382 = vpop.f32.mrb[0].mxu0
      %v2383 = vadd.f32 0.0, %v2382
      %2384 = vmatprep.mubr.f32.mxu0 0.0
      %2385 = vmatmul.mubr.f32.gmra.mrb[0].mxu0 %v2288
      %v2386 = vpop.f32.mrb[0].mxu0
      %v2387 = vadd.f32 0.0, %v2386
      %v2388 = vpop.f32.mrb[0].mxu0
      %v2389 = vadd.f32 0.0, %v2388
      %2390 = vmatprep.mubr.f32.mxu0 0.0
      %2391 = vmatmul.mubr.f32.gmra.mrb[0].mxu0 %v2291
      %v2392 = vpop.f32.mrb[0].mxu0
      %v2393 = vadd.f32 0.0, %v2392
      %v2394 = vpop.f32.mrb[0].mxu0
      %v2395 = vadd.f32 0.0, %v2394
      %2396 = vmatprep.mubr.f32.mxu0 0.0
      %2397 = vmatmul.mubr.f32.gmra.mrb[0].mxu0 %v2294
      %v2398 = vpop.f32.mrb[0].mxu0
      %v2399 = vadd.f32 0.0, %v2398
      %v2400 = vpop.f32.mrb[0].mxu0
      %v2401 = vadd.f32 0.0, %v2400
      %2402 = vmatprep.mubr.f32.mxu0 0.0
      %2403 = vmatmul.mubr.f32.gmra.mrb[0].mxu0 %v2297
      %v2404 = vpop.f32.mrb[0].mxu0
      %v2405 = vadd.f32 0.0, %v2404
      %v2406 = vpop.f32.mrb[0].mxu0
      %v2407 = vadd.f32 0.0, %v2406
      %2408 = vmatprep.mubr.f32.mxu0 0.0
      %2409 = vmatmul.mubr.f32.gmra.mrb[0].mxu0 %v2300
      %v2410 = vpop.f32.mrb[0].mxu0
      %v2411 = vadd.f32 0.0, %v2410
      %v2412 = vpop.f32.mrb[0].mxu0
      %v2413 = vadd.f32 0.0, %v2412
      %2414 = vdwg.mxu0
      %v2415 = vadd.f32 %v2187, %v2369
      %v2416 = vadd.f32 %v2188, %v2371
      %v2417 = vadd.f32 %v2189, %v2375
      %v2418 = vadd.f32 %v2190, %v2377
      %v2419 = vadd.f32 %v2191, %v2381
      %v2420 = vadd.f32 %v2192, %v2383
      %v2421 = vadd.f32 %v2193, %v2387
      %v2422 = vadd.f32 %v2194, %v2389
      %v2423 = vadd.f32 %v2195, %v2393
      %v2424 = vadd.f32 %v2196, %v2395
      %v2425 = vadd.f32 %v2197, %v2399
      %v2426 = vadd.f32 %v2198, %v2401
      %v2427 = vadd.f32 %v2199, %v2405
      %v2428 = vadd.f32 %v2200, %v2407
      %v2429 = vadd.f32 %v2201, %v2411
      %v2430 = vadd.f32 %v2202, %v2413
      %v2431 = vadd.s32 %v660, 16
      %v2432 = vadd.s32 %v661, 16
      %vm2433 = vcmp.eq.s32.totalorder %v916, %v2431
      %vm2434 = vcmp.eq.s32.totalorder %v917, %v2432
      %v2435 = vsel %vm2433, 1, 0
      %v2436 = vsel %vm2434, 1, 0
      %v2437 = vlaneseq
      %v2438 = vshrl.u32 %v2437, 7
      %v2439 = vsub.s32 0, %v2438
      %v2440 = vrot.slane %v2435, %v2439
      %v2441 = vlaneseq
      %v2442 = vshrl.u32 %v2441, 7
      %v2443 = vsub.s32 0, %v2442
      %v2444 = vrot.slane %v2436, %v2443
      %vm2445 = vcmp.eq.s32.totalorder %v2440, 1
      %vm2446 = vcmp.eq.s32.totalorder %v2444, 1
      %v2447 = vsel %vm2445, %v904, 0.0
      %v2448 = vsel %vm2446, %v908, 0.0
      %v2449 = vsel %vm2445, %v905, 0.0
      %v2450 = vsel %vm2446, %v909, 0.0
      %v2451 = vsel %vm2445, %v906, 0.0
      %v2452 = vsel %vm2446, %v910, 0.0
      %v2453 = vsel %vm2445, %v907, 0.0
      %v2454 = vsel %vm2446, %v911, 0.0
      %v2455 = vadd.f32 %v2447, 0.0
      %v2456 = vadd.f32 %v2448, 0.0
      %v2457 = vadd.f32 %v2449, 0.0
      %v2458 = vadd.f32 %v2450, 0.0
      %v2459 = vadd.f32 %v2451, 0.0
      %v2460 = vadd.f32 %v2452, 0.0
      %v2461 = vadd.f32 %v2453, 0.0
      %v2462 = vadd.f32 %v2454, 0.0
      %vm2463 = vcmp.eq.s32.totalorder %v856, %v2431
      %vm2464 = vcmp.eq.s32.totalorder %v855, %v2432
      %v2465 = vsel %vm2463, 1, 0
      %v2466 = vsel %vm2464, 1, 0
      %v2467 = vlaneseq
      %v2468 = vshrl.u32 %v2467, 7
      %v2469 = vsub.s32 0, %v2468
      %v2470 = vrot.slane %v2465, %v2469
      %v2471 = vlaneseq
      %v2472 = vshrl.u32 %v2471, 7
      %v2473 = vsub.s32 0, %v2472
      %v2474 = vrot.slane %v2466, %v2473
      %vm2475 = vcmp.eq.s32.totalorder %v2470, 1
      %vm2476 = vcmp.eq.s32.totalorder %v2474, 1
      %v2477 = vsel %vm2475, %v847, 0.0
      %v2478 = vsel %vm2476, %v843, 0.0
      %v2479 = vsel %vm2475, %v848, 0.0
      %v2480 = vsel %vm2476, %v844, 0.0
      %v2481 = vsel %vm2475, %v849, 0.0
      %v2482 = vsel %vm2476, %v845, 0.0
      %v2483 = vsel %vm2475, %v850, 0.0
      %v2484 = vsel %vm2476, %v846, 0.0
      %v2485 = vadd.f32 %v2455, %v2477
      %v2486 = vadd.f32 %v2456, %v2478
      %v2487 = vadd.f32 %v2457, %v2479
      %v2488 = vadd.f32 %v2458, %v2480
      %v2489 = vadd.f32 %v2459, %v2481
      %v2490 = vadd.f32 %v2460, %v2482
      %v2491 = vadd.f32 %v2461, %v2483
      %v2492 = vadd.f32 %v2462, %v2484
      %s2493 = scalar_lea.vmem %s4, 448
      %v2494 = vld [vmem:[%s2493] sm:$0xff]
      %v2495 = vld [vmem:[%s2493 + $0x8] sm:$0xff]
      %v2496 = vld [vmem:[%s2493 + $0x10] sm:$0xff]
      %v2497 = vld [vmem:[%s2493 + $0x18] sm:$0xff]
      %v2498 = vld [vmem:[%s2493 + $0x20] sm:$0xff]
      %v2499 = vld [vmem:[%s2493 + $0x28] sm:$0xff]
      %v2500 = vld [vmem:[%s2493 + $0x30] sm:$0xff]
      %v2501 = vld [vmem:[%s2493 + $0x38] sm:$0xff]
      %v2503 = vsel %vm284, %v2494, 0
      %v2506 = vsel %vm284, %v2495, 0
      %v2509 = vsel %vm284, %v2496, 0
      %v2512 = vsel %vm284, %v2497, 0
      %v2515 = vsel %vm284, %v2498, 0
      %v2518 = vsel %vm284, %v2499, 0
      %v2521 = vsel %vm284, %v2500, 0
      %v2524 = vsel %vm284, %v2501, 0
      %2526 = vmatprep.subr.mxu0 %v2486
      %2527 = vmatpush1.msra.mxu0 %v2485
      %2528 = vmatprep.subr.mxu0 %v2488
      %2529 = vmatpush1.msra.mxu0 %v2487
      %2530 = vmatprep.subr.mxu0 %v2490
      %2531 = vmatpush1.msra.mxu0 %v2489
      %2532 = vmatprep.subr.mxu0 %v2492
      %2533 = vmatpush1.msra.mxu0 %v2491
      %2534 = vmatprep.subr.mxu0 0.0
      %2535 = vmatpush1.msra.mxu0 0.0
      %2536 = vmatprep.subr.mxu0 0.0
      %2537 = vmatpush1.msra.mxu0 0.0
      %2538 = vmatprep.subr.mxu0 0.0
      %2539 = vmatpush1.msra.mxu0 0.0
      %2540 = vmatprep.subr.mxu0 0.0
      %2541 = vmatpush1.msra.mxu0 0.0
      %2542 = vmatprep.subr.mxu0 0.0
      %2543 = vmatpush1.msra.mxu0 0.0
      %2544 = vmatprep.subr.mxu0 0.0
      %2545 = vmatpush1.msra.mxu0 0.0
      %2546 = vmatprep.subr.mxu0 0.0
      %2547 = vmatpush1.msra.mxu0 0.0
      %2548 = vmatprep.subr.mxu0 0.0
      %2549 = vmatpush1.msra.mxu0 0.0
      %2550 = vmatprep.subr.mxu0 0.0
      %2551 = vmatpush1.msra.mxu0 0.0
      %2552 = vmatprep.subr.mxu0 0.0
      %2553 = vmatpush1.msra.mxu0 0.0
      %2554 = vmatprep.subr.mxu0 0.0
      %2555 = vmatpush1.msra.mxu0 0.0
      %2556 = vmatprep.subr.mxu0 0.0
      %2557 = vmatpush1.msra.mxu0 0.0
      %2558 = vmatprep.subr.mxu0 0.0
      %2559 = vmatpush1.msra.mxu0 0.0
      %2560 = vmatprep.subr.mxu0 0.0
      %2561 = vmatpush1.msra.mxu0 0.0
      %2562 = vmatprep.subr.mxu0 0.0
      %2563 = vmatpush1.msra.mxu0 0.0
      %2564 = vmatprep.subr.mxu0 0.0
      %2565 = vmatpush1.msra.mxu0 0.0
      %2566 = vmatprep.subr.mxu0 0.0
      %2567 = vmatpush1.msra.mxu0 0.0
      %2568 = vmatprep.subr.mxu0 0.0
      %2569 = vmatpush1.msra.mxu0 0.0
      %2570 = vmatprep.subr.mxu0 0.0
      %2571 = vmatpush1.msra.mxu0 0.0
      %2572 = vmatprep.subr.mxu0 0.0
      %2573 = vmatpush1.msra.mxu0 0.0
      %2574 = vmatprep.subr.mxu0 0.0
      %2575 = vmatpush1.msra.mxu0 0.0
      %2576 = vmatprep.subr.mxu0 0.0
      %2577 = vmatpush1.msra.mxu0 0.0
      %2578 = vmatprep.subr.mxu0 0.0
      %2579 = vmatpush1.msra.mxu0 0.0
      %2580 = vmatprep.subr.mxu0 0.0
      %2581 = vmatpush1.msra.mxu0 0.0
      %2582 = vmatprep.subr.mxu0 0.0
      %2583 = vmatpush1.msra.mxu0 0.0
      %2584 = vmatprep.subr.mxu0 0.0
      %2585 = vmatpush1.msra.mxu0 0.0
      %2586 = vmatprep.subr.mxu0 0.0
      %2587 = vmatpush1.msra.mxu0 0.0
      %2588 = vmatprep.subr.mxu0 0.0
      %2589 = vmatpush1.msra.mxu0 0.0
      %2590 = vmatprep.mubr.f32.mxu0 0.0
      %2591 = vmatmul.mubr.f32.gmra.mrb[0].mxu0 %v2503
      %v2592 = vpop.f32.mrb[0].mxu0
      %v2593 = vadd.f32 0.0, %v2592
      %v2594 = vpop.f32.mrb[0].mxu0
      %v2595 = vadd.f32 0.0, %v2594
      %2596 = vmatprep.mubr.f32.mxu0 0.0
      %2597 = vmatmul.mubr.f32.gmra.mrb[0].mxu0 %v2506
      %v2598 = vpop.f32.mrb[0].mxu0
      %v2599 = vadd.f32 0.0, %v2598
      %v2600 = vpop.f32.mrb[0].mxu0
      %v2601 = vadd.f32 0.0, %v2600
      %2602 = vmatprep.mubr.f32.mxu0 0.0
      %2603 = vmatmul.mubr.f32.gmra.mrb[0].mxu0 %v2509
      %v2604 = vpop.f32.mrb[0].mxu0
      %v2605 = vadd.f32 0.0, %v2604
      %v2606 = vpop.f32.mrb[0].mxu0
      %v2607 = vadd.f32 0.0, %v2606
      %2608 = vmatprep.mubr.f32.mxu0 0.0
      %2609 = vmatmul.mubr.f32.gmra.mrb[0].mxu0 %v2512
      %v2610 = vpop.f32.mrb[0].mxu0
      %v2611 = vadd.f32 0.0, %v2610
      %v2612 = vpop.f32.mrb[0].mxu0
      %v2613 = vadd.f32 0.0, %v2612
      %2614 = vmatprep.mubr.f32.mxu0 0.0
      %2615 = vmatmul.mubr.f32.gmra.mrb[0].mxu0 %v2515
      %v2616 = vpop.f32.mrb[0].mxu0
      %v2617 = vadd.f32 0.0, %v2616
      %v2618 = vpop.f32.mrb[0].mxu0
      %v2619 = vadd.f32 0.0, %v2618
      %2620 = vmatprep.mubr.f32.mxu0 0.0
      %2621 = vmatmul.mubr.f32.gmra.mrb[0].mxu0 %v2518
      %v2622 = vpop.f32.mrb[0].mxu0
      %v2623 = vadd.f32 0.0, %v2622
      %v2624 = vpop.f32.mrb[0].mxu0
      %v2625 = vadd.f32 0.0, %v2624
      %2626 = vmatprep.mubr.f32.mxu0 0.0
      %2627 = vmatmul.mubr.f32.gmra.mrb[0].mxu0 %v2521
      %v2628 = vpop.f32.mrb[0].mxu0
      %v2629 = vadd.f32 0.0, %v2628
      %v2630 = vpop.f32.mrb[0].mxu0
      %v2631 = vadd.f32 0.0, %v2630
      %2632 = vmatprep.mubr.f32.mxu0 0.0
      %2633 = vmatmul.mubr.f32.gmra.mrb[0].mxu0 %v2524
      %v2634 = vpop.f32.mrb[0].mxu0
      %v2635 = vadd.f32 0.0, %v2634
      %v2636 = vpop.f32.mrb[0].mxu0
      %v2637 = vadd.f32 0.0, %v2636
      %2638 = vdwg.mxu0
      %v2639 = vadd.f32 %v2415, %v2593
      %v2640 = vadd.f32 %v2416, %v2595
      %v2641 = vadd.f32 %v2417, %v2599
      %v2642 = vadd.f32 %v2418, %v2601
      %v2643 = vadd.f32 %v2419, %v2605
      %v2644 = vadd.f32 %v2420, %v2607
      %v2645 = vadd.f32 %v2421, %v2611
      %v2646 = vadd.f32 %v2422, %v2613
      %v2647 = vadd.f32 %v2423, %v2617
      %v2648 = vadd.f32 %v2424, %v2619
      %v2649 = vadd.f32 %v2425, %v2623
      %v2650 = vadd.f32 %v2426, %v2625
      %v2651 = vadd.f32 %v2427, %v2629
      %v2652 = vadd.f32 %v2428, %v2631
      %v2653 = vadd.f32 %v2429, %v2635
      %v2654 = vadd.f32 %v2430, %v2637
      %v2655 = vadd.s32 %v660, 17
      %v2656 = vadd.s32 %v661, 17
      %vm2657 = vcmp.eq.s32.totalorder %v782, %v2655
      %vm2658 = vcmp.eq.s32.totalorder %v783, %v2656
      %vm2659 = vmand %vm2657, %vm1231
      %vm2660 = vmand %vm2658, %vm1232
      %v2661 = vsel %vm2659, 1, 0
      %v2662 = vsel %vm2660, 1, 0
      %v2663 = vlaneseq
      %v2664 = vshrl.u32 %v2663, 7
      %v2665 = vsub.s32 0, %v2664
      %v2666 = vrot.slane %v2661, %v2665
      %v2667 = vlaneseq
      %v2668 = vshrl.u32 %v2667, 7
      %v2669 = vsub.s32 0, %v2668
      %v2670 = vrot.slane %v2662, %v2669
      %vm2671 = vcmp.eq.s32.totalorder %v2666, 1
      %vm2672 = vcmp.eq.s32.totalorder %v2670, 1
      %v2673 = vsel %vm2671, %v770, 0.0
      %v2674 = vsel %vm2672, %v774, 0.0
      %v2675 = vsel %vm2671, %v771, 0.0
      %v2676 = vsel %vm2672, %v775, 0.0
      %v2677 = vsel %vm2671, %v772, 0.0
      %v2678 = vsel %vm2672, %v776, 0.0
      %v2679 = vsel %vm2671, %v773, 0.0
      %v2680 = vsel %vm2672, %v777, 0.0
      %v2681 = vadd.f32 %v2673, 0.0
      %v2682 = vadd.f32 %v2674, 0.0
      %v2683 = vadd.f32 %v2675, 0.0
      %v2684 = vadd.f32 %v2676, 0.0
      %v2685 = vadd.f32 %v2677, 0.0
      %v2686 = vadd.f32 %v2678, 0.0
      %v2687 = vadd.f32 %v2679, 0.0
      %v2688 = vadd.f32 %v2680, 0.0
      %vm2689 = vcmp.eq.s32.totalorder %v720, %v2655
      %vm2690 = vcmp.eq.s32.totalorder %v719, %v2656
      %vm2691 = vmand %vm2689, %vm1231
      %vm2692 = vmand %vm2690, %vm1232
      %v2693 = vsel %vm2691, 1, 0
      %v2694 = vsel %vm2692, 1, 0
      %v2695 = vlaneseq
      %v2696 = vshrl.u32 %v2695, 7
      %v2697 = vsub.s32 0, %v2696
      %v2698 = vrot.slane %v2693, %v2697
      %v2699 = vlaneseq
      %v2700 = vshrl.u32 %v2699, 7
      %v2701 = vsub.s32 0, %v2700
      %v2702 = vrot.slane %v2694, %v2701
      %vm2703 = vcmp.eq.s32.totalorder %v2698, 1
      %vm2704 = vcmp.eq.s32.totalorder %v2702, 1
      %v2705 = vsel %vm2703, %v711, 0.0
      %v2706 = vsel %vm2704, %v707, 0.0
      %v2707 = vsel %vm2703, %v712, 0.0
      %v2708 = vsel %vm2704, %v708, 0.0
      %v2709 = vsel %vm2703, %v713, 0.0
      %v2710 = vsel %vm2704, %v709, 0.0
      %v2711 = vsel %vm2703, %v714, 0.0
      %v2712 = vsel %vm2704, %v710, 0.0
      %v2713 = vadd.f32 %v2681, %v2705
      %v2714 = vadd.f32 %v2682, %v2706
      %v2715 = vadd.f32 %v2683, %v2707
      %v2716 = vadd.f32 %v2684, %v2708
      %v2717 = vadd.f32 %v2685, %v2709
      %v2718 = vadd.f32 %v2686, %v2710
      %v2719 = vadd.f32 %v2687, %v2711
      %v2720 = vadd.f32 %v2688, %v2712
      %s2721 = scalar_lea.vmem %s4, 512
      %v2722 = vld [vmem:[%s2721] sm:$0xff]
      %v2723 = vld [vmem:[%s2721 + $0x8] sm:$0xff]
      %v2724 = vld [vmem:[%s2721 + $0x10] sm:$0xff]
      %v2725 = vld [vmem:[%s2721 + $0x18] sm:$0xff]
      %v2726 = vld [vmem:[%s2721 + $0x20] sm:$0xff]
      %v2727 = vld [vmem:[%s2721 + $0x28] sm:$0xff]
      %v2728 = vld [vmem:[%s2721 + $0x30] sm:$0xff]
      %v2729 = vld [vmem:[%s2721 + $0x38] sm:$0xff]
      %v2731 = vsel %vm284, %v2722, 0
      %v2734 = vsel %vm284, %v2723, 0
      %v2737 = vsel %vm284, %v2724, 0
      %v2740 = vsel %vm284, %v2725, 0
      %v2743 = vsel %vm284, %v2726, 0
      %v2746 = vsel %vm284, %v2727, 0
      %v2749 = vsel %vm284, %v2728, 0
      %v2752 = vsel %vm284, %v2729, 0
      %2754 = vmatprep.subr.mxu0 %v2714
      %2755 = vmatpush1.msra.mxu0 %v2713
      %2756 = vmatprep.subr.mxu0 %v2716
      %2757 = vmatpush1.msra.mxu0 %v2715
      %2758 = vmatprep.subr.mxu0 %v2718
      %2759 = vmatpush1.msra.mxu0 %v2717
      %2760 = vmatprep.subr.mxu0 %v2720
      %2761 = vmatpush1.msra.mxu0 %v2719
      %2762 = vmatprep.subr.mxu0 0.0
      %2763 = vmatpush1.msra.mxu0 0.0
      %2764 = vmatprep.subr.mxu0 0.0
      %2765 = vmatpush1.msra.mxu0 0.0
      %2766 = vmatprep.subr.mxu0 0.0
      %2767 = vmatpush1.msra.mxu0 0.0
      %2768 = vmatprep.subr.mxu0 0.0
      %2769 = vmatpush1.msra.mxu0 0.0
      %2770 = vmatprep.subr.mxu0 0.0
      %2771 = vmatpush1.msra.mxu0 0.0
      %2772 = vmatprep.subr.mxu0 0.0
      %2773 = vmatpush1.msra.mxu0 0.0
      %2774 = vmatprep.subr.mxu0 0.0
      %2775 = vmatpush1.msra.mxu0 0.0
      %2776 = vmatprep.subr.mxu0 0.0
      %2777 = vmatpush1.msra.mxu0 0.0
      %2778 = vmatprep.subr.mxu0 0.0
      %2779 = vmatpush1.msra.mxu0 0.0
      %2780 = vmatprep.subr.mxu0 0.0
      %2781 = vmatpush1.msra.mxu0 0.0
      %2782 = vmatprep.subr.mxu0 0.0
      %2783 = vmatpush1.msra.mxu0 0.0
      %2784 = vmatprep.subr.mxu0 0.0
      %2785 = vmatpush1.msra.mxu0 0.0
      %2786 = vmatprep.subr.mxu0 0.0
      %2787 = vmatpush1.msra.mxu0 0.0
      %2788 = vmatprep.subr.mxu0 0.0
      %2789 = vmatpush1.msra.mxu0 0.0
      %2790 = vmatprep.subr.mxu0 0.0
      %2791 = vmatpush1.msra.mxu0 0.0
      %2792 = vmatprep.subr.mxu0 0.0
      %2793 = vmatpush1.msra.mxu0 0.0
      %2794 = vmatprep.subr.mxu0 0.0
      %2795 = vmatpush1.msra.mxu0 0.0
      %2796 = vmatprep.subr.mxu0 0.0
      %2797 = vmatpush1.msra.mxu0 0.0
      %2798 = vmatprep.subr.mxu0 0.0
      %2799 = vmatpush1.msra.mxu0 0.0
      %2800 = vmatprep.subr.mxu0 0.0
      %2801 = vmatpush1.msra.mxu0 0.0
      %2802 = vmatprep.subr.mxu0 0.0
      %2803 = vmatpush1.msra.mxu0 0.0
      %2804 = vmatprep.subr.mxu0 0.0
      %2805 = vmatpush1.msra.mxu0 0.0
      %2806 = vmatprep.subr.mxu0 0.0
      %2807 = vmatpush1.msra.mxu0 0.0
      %2808 = vmatprep.subr.mxu0 0.0
      %2809 = vmatpush1.msra.mxu0 0.0
      %2810 = vmatprep.subr.mxu0 0.0
      %2811 = vmatpush1.msra.mxu0 0.0
      %2812 = vmatprep.subr.mxu0 0.0
      %2813 = vmatpush1.msra.mxu0 0.0
      %2814 = vmatprep.subr.mxu0 0.0
      %2815 = vmatpush1.msra.mxu0 0.0
      %2816 = vmatprep.subr.mxu0 0.0
      %2817 = vmatpush1.msra.mxu0 0.0
      %2818 = vmatprep.mubr.f32.mxu0 0.0
      %2819 = vmatmul.mubr.f32.gmra.mrb[0].mxu0 %v2731
      %v2820 = vpop.f32.mrb[0].mxu0
      %v2821 = vadd.f32 0.0, %v2820
      %v2822 = vpop.f32.mrb[0].mxu0
      %v2823 = vadd.f32 0.0, %v2822
      %2824 = vmatprep.mubr.f32.mxu0 0.0
      %2825 = vmatmul.mubr.f32.gmra.mrb[0].mxu0 %v2734
      %v2826 = vpop.f32.mrb[0].mxu0
      %v2827 = vadd.f32 0.0, %v2826
      %v2828 = vpop.f32.mrb[0].mxu0
      %v2829 = vadd.f32 0.0, %v2828
      %2830 = vmatprep.mubr.f32.mxu0 0.0
      %2831 = vmatmul.mubr.f32.gmra.mrb[0].mxu0 %v2737
      %v2832 = vpop.f32.mrb[0].mxu0
      %v2833 = vadd.f32 0.0, %v2832
      %v2834 = vpop.f32.mrb[0].mxu0
      %v2835 = vadd.f32 0.0, %v2834
      %2836 = vmatprep.mubr.f32.mxu0 0.0
      %2837 = vmatmul.mubr.f32.gmra.mrb[0].mxu0 %v2740
      %v2838 = vpop.f32.mrb[0].mxu0
      %v2839 = vadd.f32 0.0, %v2838
      %v2840 = vpop.f32.mrb[0].mxu0
      %v2841 = vadd.f32 0.0, %v2840
      %2842 = vmatprep.mubr.f32.mxu0 0.0
      %2843 = vmatmul.mubr.f32.gmra.mrb[0].mxu0 %v2743
      %v2844 = vpop.f32.mrb[0].mxu0
      %v2845 = vadd.f32 0.0, %v2844
      %v2846 = vpop.f32.mrb[0].mxu0
      %v2847 = vadd.f32 0.0, %v2846
      %2848 = vmatprep.mubr.f32.mxu0 0.0
      %2849 = vmatmul.mubr.f32.gmra.mrb[0].mxu0 %v2746
      %v2850 = vpop.f32.mrb[0].mxu0
      %v2851 = vadd.f32 0.0, %v2850
      %v2852 = vpop.f32.mrb[0].mxu0
      %v2853 = vadd.f32 0.0, %v2852
      %2854 = vmatprep.mubr.f32.mxu0 0.0
      %2855 = vmatmul.mubr.f32.gmra.mrb[0].mxu0 %v2749
      %v2856 = vpop.f32.mrb[0].mxu0
      %v2857 = vadd.f32 0.0, %v2856
      %v2858 = vpop.f32.mrb[0].mxu0
      %v2859 = vadd.f32 0.0, %v2858
      %2860 = vmatprep.mubr.f32.mxu0 0.0
      %2861 = vmatmul.mubr.f32.gmra.mrb[0].mxu0 %v2752
      %v2862 = vpop.f32.mrb[0].mxu0
      %v2863 = vadd.f32 0.0, %v2862
      %v2864 = vpop.f32.mrb[0].mxu0
      %v2865 = vadd.f32 0.0, %v2864
      %2866 = vdwg.mxu0
      %v2867 = vadd.f32 %v2639, %v2821
      %v2868 = vadd.f32 %v2640, %v2823
      %v2869 = vadd.f32 %v2641, %v2827
      %v2870 = vadd.f32 %v2642, %v2829
      %v2871 = vadd.f32 %v2643, %v2833
      %v2872 = vadd.f32 %v2644, %v2835
      %v2873 = vadd.f32 %v2645, %v2839
      %v2874 = vadd.f32 %v2646, %v2841
      %v2875 = vadd.f32 %v2647, %v2845
      %v2876 = vadd.f32 %v2648, %v2847
      %v2877 = vadd.f32 %v2649, %v2851
      %v2878 = vadd.f32 %v2650, %v2853
      %v2879 = vadd.f32 %v2651, %v2857
      %v2880 = vadd.f32 %v2652, %v2859
      %v2881 = vadd.f32 %v2653, %v2863
      %v2882 = vadd.f32 %v2654, %v2865
      %v2883 = vld [vmem:[%s266] sm:$0xff]
      %v2884 = vld [vmem:[%s266 + $0x8] sm:$0xff]
      %v2885 = vld [vmem:[%s266 + $0x10] sm:$0xff]
      %v2886 = vld [vmem:[%s266 + $0x18] sm:$0xff]
      %v2887 = vld [vmem:[%s266 + $0x20] sm:$0xff]
      %v2888 = vld [vmem:[%s266 + $0x28] sm:$0xff]
      %v2889 = vld [vmem:[%s266 + $0x30] sm:$0xff]
      %v2890 = vld [vmem:[%s266 + $0x38] sm:$0xff]
      %2892 = vset.pattern.permute.xlu0 0
      %2893 = vperm.xlu0 %2892, %v2883
      %v2894 = vpop.permute.xlu0 %2893
      %2897 = vset.pattern.permute.xlu0 0
      %2898 = vperm.xlu0 %2897, %v2884
      %v2899 = vpop.permute.xlu0 %2898
      %2902 = vset.pattern.permute.xlu0 0
      %2903 = vperm.xlu0 %2902, %v2885
      %v2904 = vpop.permute.xlu0 %2903
      %2907 = vset.pattern.permute.xlu0 0
      %2908 = vperm.xlu0 %2907, %v2886
      %v2909 = vpop.permute.xlu0 %2908
      %2912 = vset.pattern.permute.xlu0 0
      %2913 = vperm.xlu0 %2912, %v2887
      %v2914 = vpop.permute.xlu0 %2913
      %2917 = vset.pattern.permute.xlu0 0
      %2918 = vperm.xlu0 %2917, %v2888
      %v2919 = vpop.permute.xlu0 %2918
      %2922 = vset.pattern.permute.xlu0 0
      %2923 = vperm.xlu0 %2922, %v2889
      %v2924 = vpop.permute.xlu0 %2923
      %2927 = vset.pattern.permute.xlu0 0
      %2928 = vperm.xlu0 %2927, %v2890
      %v2929 = vpop.permute.xlu0 %2928
      %v2931 = vadd.f32 %v2867, %v2894
      %v2932 = vadd.f32 %v2868, %v2894
      %v2933 = vadd.f32 %v2869, %v2899
      %v2934 = vadd.f32 %v2870, %v2899
      %v2935 = vadd.f32 %v2871, %v2904
      %v2936 = vadd.f32 %v2872, %v2904
      %v2937 = vadd.f32 %v2873, %v2909
      %v2938 = vadd.f32 %v2874, %v2909
      %v2939 = vadd.f32 %v2875, %v2914
      %v2940 = vadd.f32 %v2876, %v2914
      %v2941 = vadd.f32 %v2877, %v2919
      %v2942 = vadd.f32 %v2878, %v2919
      %v2943 = vadd.f32 %v2879, %v2924
      %v2944 = vadd.f32 %v2880, %v2924
      %v2945 = vadd.f32 %v2881, %v2929
      %v2946 = vadd.f32 %v2882, %v2929
      %2947 = vst [vmem:[%s271] sm:$0xff] %v2931
      %2948 = vst [vmem:[%s271 + $0x8] sm:$0xff] %v2932
      %2949 = vst [vmem:[%s271 + $0x10] sm:$0xff] %v2933
      %2950 = vst [vmem:[%s271 + $0x18] sm:$0xff] %v2934
      %2951 = vst [vmem:[%s271 + $0x20] sm:$0xff] %v2935
      %2952 = vst [vmem:[%s271 + $0x28] sm:$0xff] %v2936
      %2953 = vst [vmem:[%s271 + $0x30] sm:$0xff] %v2937
      %2954 = vst [vmem:[%s271 + $0x38] sm:$0xff] %v2938
      %2955 = vst [vmem:[%s271 + $0x40] sm:$0xff] %v2939
      %2956 = vst [vmem:[%s271 + $0x48] sm:$0xff] %v2940
      %2957 = vst [vmem:[%s271 + $0x50] sm:$0xff] %v2941
      %2958 = vst [vmem:[%s271 + $0x58] sm:$0xff] %v2942
      %2959 = vst [vmem:[%s271 + $0x60] sm:$0xff] %v2943
      %2960 = vst [vmem:[%s271 + $0x68] sm:$0xff] %v2944
      %2961 = vst [vmem:[%s271 + $0x70] sm:$0xff] %v2945
      %2962 = vst [vmem:[%s271 + $0x78] sm:$0xff] %v2946
      %p2963 = scmp.lt.s32.totalorder %s17, 1
      %s2964 = scalar_select %p2963, %s17, 1
      %s2965 = smul.addr %s2964, 16
      %s2966 = smul.addr %s2965, 8
      %s2967 = scalar_lea.vmem %s6, %s2966
      // Predicated region
      $region45: #{resnet_block_forward.4} parent=43 // pred_check
        %p2968 = pneg %p171
      $region46: #{resnet_block_forward.4} parent=43 // pred_check_branch
        %2970 = sbr.rel (%p2968) target = $region48
      $region47: #{resnet_block_forward.4} parent=43 // pred_region
        _
      $region48: #{resnet_block_forward.4} parent=43 // pred_fallthru
        _
    $region44: #{resnet_block_forward.4} parent=5 // pred_fallthru
      _
    %p2971 = scmp.le.s32.totalorder 2, %s12
    // Predicated region
    $region49: #{resnet_block_forward.4} parent=5 // pred_check
      %p2972 = pneg %p2971
    $region50: #{resnet_block_forward.4} parent=5 // pred_check_branch
      %2974 = sbr.rel (%p2972) target = $region52
    $region51: #{resnet_block_forward.4} parent=5 // pred_region
      %s2975 = ssub.s32 %s12, 2
      // Predicated region
      $region53: #{resnet_block_forward.4} parent=51 // pred_check
        %p2976 = pneg %p177
      $region54: #{resnet_block_forward.4} parent=51 // pred_check_branch
        %2978 = sbr.rel (%p2976) target = $region56
      $region55: #{resnet_block_forward.4} parent=51 // pred_region
        %p2979 = scmp.lt.s32.totalorder %s18, 1
        %s2980 = scalar_select %p2979, %s18, 1
        %s2981 = smul.addr %s2980, 16
        %s2982 = smul.addr %s2981, 8
        %s2983 = scalar_lea.vmem %s6, %s2982
      $region56: #{resnet_block_forward.4} parent=51 // pred_fallthru
        _
    $region52: #{resnet_block_forward.4} parent=5 // pred_fallthru
      _
  $region6: #{resnet_block_forward.4} parent=0 // loop_footer
    %s16 = sadd.s32 1, %s12
  $region7: #{resnet_block_forward.4} parent=0 // loop_footer_branch
    %11 = sbr.rel target = $region3
  $region8: #{resnet_block_forward.4} parent=0 // loop_exit
    _

// kernel: resnet_block_forward.5
$region0: #{resnet_block_forward.5}
  #allocation0 [shape = 'u32[]', space=smem, size = 0x4, offset = 0x4, fixed_abs, tag = 'smem constant byte address 0x4 - core index']
  #allocation1 [shape = 'u32[144,128]{1,0:T(1,128)}', space=vmem, size = 0x12000, scoped, tag = 'internal scratch']
  %s0 = inlined_call_operand.vmem [shape: f32[2,64,256], index: 0, kind: input, shape index: {}]
  %s1 = inlined_call_operand.vmem [shape: f32[2,32,256], index: 1, kind: input, shape index: {}]
  %s2 = inlined_call_operand.vmem [shape: f32[64,1], index: 2, kind: input, shape index: {}]
  %s3 = inlined_call_operand.vmem [shape: f32[64,1], index: 3, kind: input, shape index: {}]
  %s4 = inlined_call_operand.vmem [shape: f32[64,64], index: 4, kind: input, shape index: {}]
  %s5 = inlined_call_operand.vmem [shape: f32[9,64,64], index: 5, kind: input, shape index: {}]
  %s6 = inlined_call_operand.vmem [shape: f32[64,1], index: 6, kind: input, shape index: {}]
  %s7 = inlined_call_operand.vmem [shape: f32[64,32], index: 7, kind: input, shape index: {}]
  %s8 = inlined_call_operand.vmem [shape: f32[64,1], index: 8, kind: input, shape index: {}]
  %s9 = inlined_call_operand.vmem [shape: f32[2,64,256], index: 9, kind: output, shape index: {}]
  %s10 = sld [smem:[#allocation0]]
  $region69: #{resnet_block_forward.5} parent=0
    _
  %s12 = ssub.s32 1, %s10
  %s13 = scalar_select 0, %s12, %s10
  loop: start=0, step=1, limit=4
  $region2: #{resnet_block_forward.5} parent=0 // loop_pre_header
    _
  $region3: #{resnet_block_forward.5} parent=0 // loop_header
    %s15 = sphi 0, %s19
    %p16 = scmp.ge.s32.totalorder %s15, 4
    %s25 = sphi 0, %s27
    %s28 = sphi 0, %s25
    %s29 = sphi 0, %s28
    %s45 = sphi 0, %s29
    %s51 = sphi 0, %s53
    %s54 = sphi 0, %s51
    %s55 = sphi 0, %s54
    %s71 = sphi 0, %s55
    %s75 = sphi 0, %s75
    %s77 = sphi 0, %s75
    %s78 = sphi 0, %s77
    %s92 = sphi 0, %s78
    %s96 = sphi 0, %s96
    %s98 = sphi 0, %s96
    %s99 = sphi 0, %s98
    %s113 = sphi 0, %s99
    %s117 = sphi 0, %s117
    %s119 = sphi 0, %s117
    %s120 = sphi 0, %s119
    %s134 = sphi 0, %s120
    %s138 = sphi 0, %s138
    %s140 = sphi 0, %s138
    %s141 = sphi 0, %s140
    %s155 = sphi 0, %s141
    %s159 = sphi 0, %s159
    %s161 = sphi 0, %s159
    %s162 = sphi 0, %s161
    %s176 = sphi 0, %s162
    %s180 = sphi 0, %s180
    %s182 = sphi 0, %s180
    %s183 = sphi 0, %s182
    %s197 = sphi 0, %s183
    %s201 = sphi 0, %s201
    %s203 = sphi 0, %s201
    %s204 = sphi 0, %s203
    %s218 = sphi 0, %s204
    %s224 = sphi 0, %s226
    %s227 = sphi 0, %s224
    %s228 = sphi 0, %s227
    %s244 = sphi 0, %s228
  $region4: #{resnet_block_forward.5} parent=0 // loop_header_branch
    %18 = sbr.rel (%p16) target = $region8
  $region5: #{resnet_block_forward.5} parent=0 // loop_body
    %s20 = ssub.s32 %s15, 1
    %s21 = ssub.s32 %s15, 2
    %s22 = sadd.s32 %s15, 1
    %s23 = ssub.s32 %s15, %s22
    %p24 = scmp.eq.s32.totalorder %s23, 0
    %s26 = sadd.s32 %s25, 1
    %s27 = scalar_select %p24, %s25, %s26
    %p30 = pneg %p24
    %p31 = scmp.eq.s32.totalorder %s15, 1
    %p32 = por %p30, %p31
    %p33 = scmp.ne.s32.totalorder %s25, %s28
    %p34 = scmp.eq.s32.totalorder %s15, 0
    %p35 = por %p33, %p34
    %p36 = scmp.ne.s32.totalorder %s25, %s28
    %p37 = scmp.eq.s32.totalorder %s20, 1
    %p38 = por %p36, %p37
    %p39 = scmp.ne.s32.totalorder %s28, %s29
    %p40 = scmp.eq.s32.totalorder %s20, 0
    %p41 = por %p39, %p40
    %p42 = scmp.ne.s32.totalorder %s28, %s29
    %p43 = scmp.eq.s32.totalorder %s21, 1
    %p44 = por %p42, %p43
    %p46 = scmp.ne.s32.totalorder %s29, %s45
    %p47 = scmp.eq.s32.totalorder %s21, 0
    %p48 = por %p46, %p47
    %s49 = ssub.s32 %s15, %s22
    %p50 = scmp.eq.s32.totalorder %s49, 0
    %s52 = sadd.s32 %s51, 1
    %s53 = scalar_select %p50, %s51, %s52
    %p56 = pneg %p50
    %p57 = scmp.eq.s32.totalorder %s15, 1
    %p58 = por %p56, %p57
    %p59 = scmp.ne.s32.totalorder %s51, %s54
    %p60 = scmp.eq.s32.totalorder %s15, 0
    %p61 = por %p59, %p60
    %p62 = scmp.ne.s32.totalorder %s51, %s54
    %p63 = scmp.eq.s32.totalorder %s20, 1
    %p64 = por %p62, %p63
    %p65 = scmp.ne.s32.totalorder %s54, %s55
    %p66 = scmp.eq.s32.totalorder %s20, 0
    %p67 = por %p65, %p66
    %p68 = scmp.ne.s32.totalorder %s54, %s55
    %p69 = scmp.eq.s32.totalorder %s21, 1
    %p70 = por %p68, %p69
    %p72 = scmp.ne.s32.totalorder %s55, %s71
    %p73 = scmp.eq.s32.totalorder %s21, 0
    %p74 = por %p72, %p73
    %s76 = sadd.s32 %s75, 1
    %p79 = scmp.eq.s32.totalorder %s15, 1
    %p80 = scmp.ne.s32.totalorder %s75, %s77
    %p81 = scmp.eq.s32.totalorder %s15, 0
    %p82 = por %p80, %p81
    %p83 = scmp.ne.s32.totalorder %s75, %s77
    %p84 = scmp.eq.s32.totalorder %s20, 1
    %p85 = por %p83, %p84
    %p86 = scmp.ne.s32.totalorder %s77, %s78
    %p87 = scmp.eq.s32.totalorder %s20, 0
    %p88 = por %p86, %p87
    %p89 = scmp.ne.s32.totalorder %s77, %s78
    %p90 = scmp.eq.s32.totalorder %s21, 1
    %p91 = por %p89, %p90
    %p93 = scmp.ne.s32.totalorder %s78, %s92
    %p94 = scmp.eq.s32.totalorder %s21, 0
    %p95 = por %p93, %p94
    %s97 = sadd.s32 %s96, 1
    %p100 = scmp.eq.s32.totalorder %s15, 1
    %p101 = scmp.ne.s32.totalorder %s96, %s98
    %p102 = scmp.eq.s32.totalorder %s15, 0
    %p103 = por %p101, %p102
    %p104 = scmp.ne.s32.totalorder %s96, %s98
    %p105 = scmp.eq.s32.totalorder %s20, 1
    %p106 = por %p104, %p105
    %p107 = scmp.ne.s32.totalorder %s98, %s99
    %p108 = scmp.eq.s32.totalorder %s20, 0
    %p109 = por %p107, %p108
    %p110 = scmp.ne.s32.totalorder %s98, %s99
    %p111 = scmp.eq.s32.totalorder %s21, 1
    %p112 = por %p110, %p111
    %p114 = scmp.ne.s32.totalorder %s99, %s113
    %p115 = scmp.eq.s32.totalorder %s21, 0
    %p116 = por %p114, %p115
    %s118 = sadd.s32 %s117, 1
    %p121 = scmp.eq.s32.totalorder %s15, 1
    %p122 = scmp.ne.s32.totalorder %s117, %s119
    %p123 = scmp.eq.s32.totalorder %s15, 0
    %p124 = por %p122, %p123
    %p125 = scmp.ne.s32.totalorder %s117, %s119
    %p126 = scmp.eq.s32.totalorder %s20, 1
    %p127 = por %p125, %p126
    %p128 = scmp.ne.s32.totalorder %s119, %s120
    %p129 = scmp.eq.s32.totalorder %s20, 0
    %p130 = por %p128, %p129
    %p131 = scmp.ne.s32.totalorder %s119, %s120
    %p132 = scmp.eq.s32.totalorder %s21, 1
    %p133 = por %p131, %p132
    %p135 = scmp.ne.s32.totalorder %s120, %s134
    %p136 = scmp.eq.s32.totalorder %s21, 0
    %p137 = por %p135, %p136
    %s139 = sadd.s32 %s138, 1
    %p142 = scmp.eq.s32.totalorder %s15, 1
    %p143 = scmp.ne.s32.totalorder %s138, %s140
    %p144 = scmp.eq.s32.totalorder %s15, 0
    %p145 = por %p143, %p144
    %p146 = scmp.ne.s32.totalorder %s138, %s140
    %p147 = scmp.eq.s32.totalorder %s20, 1
    %p148 = por %p146, %p147
    %p149 = scmp.ne.s32.totalorder %s140, %s141
    %p150 = scmp.eq.s32.totalorder %s20, 0
    %p151 = por %p149, %p150
    %p152 = scmp.ne.s32.totalorder %s140, %s141
    %p153 = scmp.eq.s32.totalorder %s21, 1
    %p154 = por %p152, %p153
    %p156 = scmp.ne.s32.totalorder %s141, %s155
    %p157 = scmp.eq.s32.totalorder %s21, 0
    %p158 = por %p156, %p157
    %s160 = sadd.s32 %s159, 1
    %p163 = scmp.eq.s32.totalorder %s15, 1
    %p164 = scmp.ne.s32.totalorder %s159, %s161
    %p165 = scmp.eq.s32.totalorder %s15, 0
    %p166 = por %p164, %p165
    %p167 = scmp.ne.s32.totalorder %s159, %s161
    %p168 = scmp.eq.s32.totalorder %s20, 1
    %p169 = por %p167, %p168
    %p170 = scmp.ne.s32.totalorder %s161, %s162
    %p171 = scmp.eq.s32.totalorder %s20, 0
    %p172 = por %p170, %p171
    %p173 = scmp.ne.s32.totalorder %s161, %s162
    %p174 = scmp.eq.s32.totalorder %s21, 1
    %p175 = por %p173, %p174
    %p177 = scmp.ne.s32.totalorder %s162, %s176
    %p178 = scmp.eq.s32.totalorder %s21, 0
    %p179 = por %p177, %p178
    %s181 = sadd.s32 %s180, 1
    %p184 = scmp.eq.s32.totalorder %s15, 1
    %p185 = scmp.ne.s32.totalorder %s180, %s182
    %p186 = scmp.eq.s32.totalorder %s15, 0
    %p187 = por %p185, %p186
    %p188 = scmp.ne.s32.totalorder %s180, %s182
    %p189 = scmp.eq.s32.totalorder %s20, 1
    %p190 = por %p188, %p189
    %p191 = scmp.ne.s32.totalorder %s182, %s183
    %p192 = scmp.eq.s32.totalorder %s20, 0
    %p193 = por %p191, %p192
    %p194 = scmp.ne.s32.totalorder %s182, %s183
    %p195 = scmp.eq.s32.totalorder %s21, 1
    %p196 = por %p194, %p195
    %p198 = scmp.ne.s32.totalorder %s183, %s197
    %p199 = scmp.eq.s32.totalorder %s21, 0
    %p200 = por %p198, %p199
    %s202 = sadd.s32 %s201, 1
    %p205 = scmp.eq.s32.totalorder %s15, 1
    %p206 = scmp.ne.s32.totalorder %s201, %s203
    %p207 = scmp.eq.s32.totalorder %s15, 0
    %p208 = por %p206, %p207
    %p209 = scmp.ne.s32.totalorder %s201, %s203
    %p210 = scmp.eq.s32.totalorder %s20, 1
    %p211 = por %p209, %p210
    %p212 = scmp.ne.s32.totalorder %s203, %s204
    %p213 = scmp.eq.s32.totalorder %s20, 0
    %p214 = por %p212, %p213
    %p215 = scmp.ne.s32.totalorder %s203, %s204
    %p216 = scmp.eq.s32.totalorder %s21, 1
    %p217 = por %p215, %p216
    %p219 = scmp.ne.s32.totalorder %s204, %s218
    %p220 = scmp.eq.s32.totalorder %s21, 0
    %p221 = por %p219, %p220
    %s222 = ssub.s32 %s15, %s22
    %p223 = scmp.eq.s32.totalorder %s222, 0
    %s225 = sadd.s32 %s224, 1
    %s226 = scalar_select %p223, %s224, %s225
    %p229 = pneg %p223
    %p230 = scmp.eq.s32.totalorder %s15, 1
    %p231 = por %p229, %p230
    %p232 = scmp.ne.s32.totalorder %s224, %s227
    %p233 = scmp.eq.s32.totalorder %s15, 0
    %p234 = por %p232, %p233
    %p235 = scmp.ne.s32.totalorder %s224, %s227
    %p236 = scmp.eq.s32.totalorder %s20, 1
    %p237 = por %p235, %p236
    %p238 = scmp.ne.s32.totalorder %s227, %s228
    %p239 = scmp.eq.s32.totalorder %s20, 0
    %p240 = por %p238, %p239
    %p241 = scmp.ne.s32.totalorder %s227, %s228
    %p242 = scmp.eq.s32.totalorder %s21, 1
    %p243 = por %p241, %p242
    %p245 = scmp.ne.s32.totalorder %s228, %s244
    %p246 = scmp.eq.s32.totalorder %s21, 0
    %p247 = por %p245, %p246
    %p248 = scmp.le.s32.totalorder 1, %s15
    %p249 = scmp.lt.s32.totalorder %s15, 3
    %p250 = pnand %p248, %p249
    %p251 = pneg %p250
    // Predicated region
    $region9: #{resnet_block_forward.5} parent=5 // pred_check
      _
    $region10: #{resnet_block_forward.5} parent=5 // pred_check_branch
      %253 = sbr.rel (%p250) target = $region12
    $region11: #{resnet_block_forward.5} parent=5 // pred_region
      %s254 = ssub.s32 %s15, 1
      // Predicated region
      $region13: #{resnet_block_forward.5} parent=11 // pred_check
        %p255 = pneg %p88
      $region14: #{resnet_block_forward.5} parent=11 // pred_check_branch
        %257 = sbr.rel (%p255) target = $region16
      $region15: #{resnet_block_forward.5} parent=11 // pred_region
        _
      $region16: #{resnet_block_forward.5} parent=11 // pred_fallthru
        _
      // Predicated region
      $region17: #{resnet_block_forward.5} parent=11 // pred_check
        %p258 = pneg %p109
      $region18: #{resnet_block_forward.5} parent=11 // pred_check_branch
        %260 = sbr.rel (%p258) target = $region20
      $region19: #{resnet_block_forward.5} parent=11 // pred_region
        _
      $region20: #{resnet_block_forward.5} parent=11 // pred_fallthru
        _
      // Predicated region
      $region21: #{resnet_block_forward.5} parent=11 // pred_check
        %p261 = pneg %p130
      $region22: #{resnet_block_forward.5} parent=11 // pred_check_branch
        %263 = sbr.rel (%p261) target = $region24
      $region23: #{resnet_block_forward.5} parent=11 // pred_region
        _
      $region24: #{resnet_block_forward.5} parent=11 // pred_fallthru
        _
      // Predicated region
      $region25: #{resnet_block_forward.5} parent=11 // pred_check
        %p264 = pneg %p151
      $region26: #{resnet_block_forward.5} parent=11 // pred_check_branch
        %266 = sbr.rel (%p264) target = $region28
      $region27: #{resnet_block_forward.5} parent=11 // pred_region
        _
      $region28: #{resnet_block_forward.5} parent=11 // pred_fallthru
        _
      // Predicated region
      $region29: #{resnet_block_forward.5} parent=11 // pred_check
        %p267 = pneg %p172
      $region30: #{resnet_block_forward.5} parent=11 // pred_check_branch
        %269 = sbr.rel (%p267) target = $region32
      $region31: #{resnet_block_forward.5} parent=11 // pred_region
        _
      $region32: #{resnet_block_forward.5} parent=11 // pred_fallthru
        _
      // Predicated region
      $region33: #{resnet_block_forward.5} parent=11 // pred_check
        %p270 = pneg %p193
      $region34: #{resnet_block_forward.5} parent=11 // pred_check_branch
        %272 = sbr.rel (%p270) target = $region36
      $region35: #{resnet_block_forward.5} parent=11 // pred_region
        _
      $region36: #{resnet_block_forward.5} parent=11 // pred_fallthru
        _
      // Predicated region
      $region37: #{resnet_block_forward.5} parent=11 // pred_check
        %p273 = pneg %p214
      $region38: #{resnet_block_forward.5} parent=11 // pred_check_branch
        %275 = sbr.rel (%p273) target = $region40
      $region39: #{resnet_block_forward.5} parent=11 // pred_region
        _
      $region40: #{resnet_block_forward.5} parent=11 // pred_fallthru
        _
    $region12: #{resnet_block_forward.5} parent=5 // pred_fallthru
      _
    %p276 = scmp.lt.s32.totalorder %s15, 2
    // Predicated region
    $region41: #{resnet_block_forward.5} parent=5 // pred_check
      %p277 = pneg %p276
    $region42: #{resnet_block_forward.5} parent=5 // pred_check_branch
      %279 = sbr.rel (%p277) target = $region44
    $region43: #{resnet_block_forward.5} parent=5 // pred_region
      // Predicated region
      $region45: #{resnet_block_forward.5} parent=43 // pred_check
        %p280 = pneg %p35
      $region46: #{resnet_block_forward.5} parent=43 // pred_check_branch
        %282 = sbr.rel (%p280) target = $region48
      $region47: #{resnet_block_forward.5} parent=43 // pred_region
        %p283 = scmp.lt.s32.totalorder %s15, 1
        %s284 = scalar_select %p283, %s15, 1
        %s285 = smul.addr %s284, 16
        %s286 = smul.addr %s285, 8
        %s287 = scalar_lea.vmem %s0, %s286
      $region48: #{resnet_block_forward.5} parent=43 // pred_fallthru
        _
      // Predicated region
      $region49: #{resnet_block_forward.5} parent=43 // pred_check
        %p288 = pneg %p61
      $region50: #{resnet_block_forward.5} parent=43 // pred_check_branch
        %290 = sbr.rel (%p288) target = $region52
      $region51: #{resnet_block_forward.5} parent=43 // pred_region
        %p291 = scmp.lt.s32.totalorder %s15, 1
        %s292 = scalar_select %p291, %s15, 1
        %s293 = smul.addr %s292, 8
        %s294 = smul.addr %s293, 8
        %s295 = scalar_lea.vmem %s1, %s294
      $region52: #{resnet_block_forward.5} parent=43 // pred_fallthru
        _
    $region44: #{resnet_block_forward.5} parent=5 // pred_fallthru
      _
    %p296 = scmp.le.s32.totalorder 1, %s15
    %p297 = scmp.lt.s32.totalorder %s15, 3
    %p298 = pnand %p296, %p297
    %p299 = pneg %p298
    // Predicated region
    $region53: #{resnet_block_forward.5} parent=5 // pred_check
      _
    $region54: #{resnet_block_forward.5} parent=5 // pred_check_branch
      %301 = sbr.rel (%p298) target = $region56
    $region55: #{resnet_block_forward.5} parent=5 // pred_region
      %s302 = ssub.s32 %s15, 1
      %p303 = scmp.lt.s32.totalorder %s20, 1
      %s304 = scalar_select %p303, %s20, 1
      %s305 = smul.addr %s304, 16
      %s306 = smul.addr %s305, 8
      %s307 = scalar_lea.vmem %s0, %s306
      %p308 = pneg %p41
      %p309 = pneg %p38
      %p310 = scmp.lt.s32.totalorder %s20, 1
      %s311 = scalar_select %p310, %s20, 1
      %s312 = smul.addr %s311, 8
      %s313 = smul.addr %s312, 8
      %s314 = scalar_lea.vmem %s1, %s313
      %p315 = pneg %p67
      %p316 = pneg %p64
      %p317 = pneg %p88
      %p318 = pneg %p85
      %p319 = pneg %p109
      %p320 = pneg %p106
      %p321 = pneg %p130
      %p322 = pneg %p127
      %p323 = pneg %p151
      %p324 = pneg %p148
      %p325 = pneg %p172
      %p326 = pneg %p169
      %p327 = pneg %p193
      %p328 = pneg %p190
      %p329 = pneg %p214
      %p330 = pneg %p211
      %p331 = pneg %p240
      %p332 = pneg %p237
      %p333 = scmp.lt.s32.totalorder %s20, 1
      %s334 = scalar_select %p333, %s20, 1
      %s335 = smul.addr %s334, 16
      %s336 = smul.addr %s335, 8
      %s337 = scalar_lea.vmem %s9, %s336
      %p338 = scmp.lt.s32.totalorder %s20, 1
      %s339 = scalar_select %p338, %s20, 1
      %s340 = smul.addr %s339, 16
      %s341 = smul.addr %s340, 8
      %s342 = scalar_lea.vmem %s0, %s341
      %p343 = scmp.lt.s32.totalorder %s20, 1
      %s344 = scalar_select %p343, %s20, 1
      %s345 = smul.addr %s344, 8
      %s346 = smul.addr %s345, 8
      %s347 = scalar_lea.vmem %s1, %s346
      %p348 = scmp.lt.s32.totalorder %s20, 1
      %s349 = scalar_select %p348, %s20, 1
      %s350 = smul.addr %s349, 16
      %s351 = smul.addr %s350, 8
      %s352 = scalar_lea.vmem %s9, %s351
      %v353 = vld [vmem:[%s342] sm:$0xff]
      %v354 = vld [vmem:[%s342 + $0x8] sm:$0xff]
      %v355 = vld [vmem:[%s342 + $0x10] sm:$0xff]
      %v356 = vld [vmem:[%s342 + $0x18] sm:$0xff]
      %v357 = vld [vmem:[%s342 + $0x20] sm:$0xff]
      %v358 = vld [vmem:[%s342 + $0x28] sm:$0xff]
      %v359 = vld [vmem:[%s342 + $0x30] sm:$0xff]
      %v360 = vld [vmem:[%s342 + $0x38] sm:$0xff]
      %v361 = vld [vmem:[%s342 + $0x40] sm:$0xff]
      %v362 = vld [vmem:[%s342 + $0x48] sm:$0xff]
      %v363 = vld [vmem:[%s342 + $0x50] sm:$0xff]
      %v364 = vld [vmem:[%s342 + $0x58] sm:$0xff]
      %v365 = vld [vmem:[%s342 + $0x60] sm:$0xff]
      %v366 = vld [vmem:[%s342 + $0x68] sm:$0xff]
      %v367 = vld [vmem:[%s342 + $0x70] sm:$0xff]
      %v368 = vld [vmem:[%s342 + $0x78] sm:$0xff]
      %v369 = vld [vmem:[%s4] sm:$0xff]
      %v370 = vld [vmem:[%s4 + $0x8] sm:$0xff]
      %v371 = vld [vmem:[%s4 + $0x10] sm:$0xff]
      %v372 = vld [vmem:[%s4 + $0x18] sm:$0xff]
      %v373 = vld [vmem:[%s4 + $0x20] sm:$0xff]
      %v374 = vld [vmem:[%s4 + $0x28] sm:$0xff]
      %v375 = vld [vmem:[%s4 + $0x30] sm:$0xff]
      %v376 = vld [vmem:[%s4 + $0x38] sm:$0xff]
      %vm377 = vcmask 523264
      %v379 = vsel %vm377, %v369, 0
      %v382 = vsel %vm377, %v370, 0
      %v385 = vsel %vm377, %v371, 0
      %v388 = vsel %vm377, %v372, 0
      %v391 = vsel %vm377, %v373, 0
      %v394 = vsel %vm377, %v374, 0
      %v397 = vsel %vm377, %v375, 0
      %v400 = vsel %vm377, %v376, 0
      %402 = vmatprep.subr.mxu0 %v354
      %403 = vmatpush1.msra.mxu0 %v353
      %404 = vmatprep.subr.mxu0 %v356
      %405 = vmatpush1.msra.mxu0 %v355
      %406 = vmatprep.subr.mxu0 %v358
      %407 = vmatpush1.msra.mxu0 %v357
      %408 = vmatprep.subr.mxu0 %v360
      %409 = vmatpush1.msra.mxu0 %v359
      %410 = vmatprep.subr.mxu0 %v362
      %411 = vmatpush1.msra.mxu0 %v361
      %412 = vmatprep.subr.mxu0 %v364
      %413 = vmatpush1.msra.mxu0 %v363
      %414 = vmatprep.subr.mxu0 %v366
      %415 = vmatpush1.msra.mxu0 %v365
      %416 = vmatprep.subr.mxu0 %v368
      %417 = vmatpush1.msra.mxu0 %v367
      %418 = vmatprep.subr.mxu0 0.0
      %419 = vmatpush1.msra.mxu0 0.0
      %420 = vmatprep.subr.mxu0 0.0
      %421 = vmatpush1.msra.mxu0 0.0
      %422 = vmatprep.subr.mxu0 0.0
      %423 = vmatpush1.msra.mxu0 0.0
      %424 = vmatprep.subr.mxu0 0.0
      %425 = vmatpush1.msra.mxu0 0.0
      %426 = vmatprep.subr.mxu0 0.0
      %427 = vmatpush1.msra.mxu0 0.0
      %428 = vmatprep.subr.mxu0 0.0
      %429 = vmatpush1.msra.mxu0 0.0
      %430 = vmatprep.subr.mxu0 0.0
      %431 = vmatpush1.msra.mxu0 0.0
      %432 = vmatprep.subr.mxu0 0.0
      %433 = vmatpush1.msra.mxu0 0.0
      %434 = vmatprep.subr.mxu0 0.0
      %435 = vmatpush1.msra.mxu0 0.0
      %436 = vmatprep.subr.mxu0 0.0
      %437 = vmatpush1.msra.mxu0 0.0
      %438 = vmatprep.subr.mxu0 0.0
      %439 = vmatpush1.msra.mxu0 0.0
      %440 = vmatprep.subr.mxu0 0.0
      %441 = vmatpush1.msra.mxu0 0.0
      %442 = vmatprep.subr.mxu0 0.0
      %443 = vmatpush1.msra.mxu0 0.0
      %444 = vmatprep.subr.mxu0 0.0
      %445 = vmatpush1.msra.mxu0 0.0
      %446 = vmatprep.subr.mxu0 0.0
      %447 = vmatpush1.msra.mxu0 0.0
      %448 = vmatprep.subr.mxu0 0.0
      %449 = vmatpush1.msra.mxu0 0.0
      %450 = vmatprep.subr.mxu0 0.0
      %451 = vmatpush1.msra.mxu0 0.0
      %452 = vmatprep.subr.mxu0 0.0
      %453 = vmatpush1.msra.mxu0 0.0
      %454 = vmatprep.subr.mxu0 0.0
      %455 = vmatpush1.msra.mxu0 0.0
      %456 = vmatprep.subr.mxu0 0.0
      %457 = vmatpush1.msra.mxu0 0.0
      %458 = vmatprep.subr.mxu0 0.0
      %459 = vmatpush1.msra.mxu0 0.0
      %460 = vmatprep.subr.mxu0 0.0
      %461 = vmatpush1.msra.mxu0 0.0
      %462 = vmatprep.subr.mxu0 0.0
      %463 = vmatpush1.msra.mxu0 0.0
      %464 = vmatprep.subr.mxu0 0.0
      %465 = vmatpush1.msra.mxu0 0.0
      %466 = vmatprep.mubr.f32.mxu0 0.0
      %467 = vmatmul.mubr.f32.gmra.mrb[0].mxu0 %v379
      %v468 = vpop.f32.mrb[0].mxu0
      %v469 = vadd.f32 0.0, %v468
      %v470 = vpop.f32.mrb[0].mxu0
      %v471 = vadd.f32 0.0, %v470
      %472 = vmatprep.mubr.f32.mxu0 0.0
      %473 = vmatmul.mubr.f32.gmra.mrb[0].mxu0 %v382
      %v474 = vpop.f32.mrb[0].mxu0
      %v475 = vadd.f32 0.0, %v474
      %v476 = vpop.f32.mrb[0].mxu0
      %v477 = vadd.f32 0.0, %v476
      %478 = vmatprep.mubr.f32.mxu0 0.0
      %479 = vmatmul.mubr.f32.gmra.mrb[0].mxu0 %v385
      %v480 = vpop.f32.mrb[0].mxu0
      %v481 = vadd.f32 0.0, %v480
      %v482 = vpop.f32.mrb[0].mxu0
      %v483 = vadd.f32 0.0, %v482
      %484 = vmatprep.mubr.f32.mxu0 0.0
      %485 = vmatmul.mubr.f32.gmra.mrb[0].mxu0 %v388
      %v486 = vpop.f32.mrb[0].mxu0
      %v487 = vadd.f32 0.0, %v486
      %v488 = vpop.f32.mrb[0].mxu0
      %v489 = vadd.f32 0.0, %v488
      %490 = vmatprep.mubr.f32.mxu0 0.0
      %491 = vmatmul.mubr.f32.gmra.mrb[0].mxu0 %v391
      %v492 = vpop.f32.mrb[0].mxu0
      %v493 = vadd.f32 0.0, %v492
      %v494 = vpop.f32.mrb[0].mxu0
      %v495 = vadd.f32 0.0, %v494
      %496 = vmatprep.mubr.f32.mxu0 0.0
      %497 = vmatmul.mubr.f32.gmra.mrb[0].mxu0 %v394
      %v498 = vpop.f32.mrb[0].mxu0
      %v499 = vadd.f32 0.0, %v498
      %v500 = vpop.f32.mrb[0].mxu0
      %v501 = vadd.f32 0.0, %v500
      %502 = vmatprep.mubr.f32.mxu0 0.0
      %503 = vmatmul.mubr.f32.gmra.mrb[0].mxu0 %v397
      %v504 = vpop.f32.mrb[0].mxu0
      %v505 = vadd.f32 0.0, %v504
      %v506 = vpop.f32.mrb[0].mxu0
      %v507 = vadd.f32 0.0, %v506
      %508 = vmatprep.mubr.f32.mxu0 0.0
      %509 = vmatmul.mubr.f32.gmra.mrb[0].mxu0 %v400
      %v510 = vpop.f32.mrb[0].mxu0
      %v511 = vadd.f32 0.0, %v510
      %v512 = vpop.f32.mrb[0].mxu0
      %v513 = vadd.f32 0.0, %v512
      %514 = vdwg.mxu0
      %v515 = vadd.f32 %v469, %v471
      %516 = vadd.xlane.f32.xlu0 %v515
      %v517 = vpop.xlane.xlu0 %516
      %v518 = vadd.f32 %v475, %v477
      %519 = vadd.xlane.f32.xlu0 %v518
      %v520 = vpop.xlane.xlu0 %519
      %v521 = vadd.f32 %v481, %v483
      %522 = vadd.xlane.f32.xlu0 %v521
      %v523 = vpop.xlane.xlu0 %522
      %v524 = vadd.f32 %v487, %v489
      %525 = vadd.xlane.f32.xlu0 %v524
      %v526 = vpop.xlane.xlu0 %525
      %v527 = vadd.f32 %v493, %v495
      %528 = vadd.xlane.f32.xlu0 %v527
      %v529 = vpop.xlane.xlu0 %528
      %v530 = vadd.f32 %v499, %v501
      %531 = vadd.xlane.f32.xlu0 %v530
      %v532 = vpop.xlane.xlu0 %531
      %v533 = vadd.f32 %v505, %v507
      %534 = vadd.xlane.f32.xlu0 %v533
      %v535 = vpop.xlane.xlu0 %534
      %v536 = vadd.f32 %v511, %v513
      %537 = vadd.xlane.f32.xlu0 %v536
      %v538 = vpop.xlane.xlu0 %537
      %v539 = vmul.f32 %v353, %v353
      %v540 = vmul.f32 %v354, %v354
      %v541 = vmul.f32 %v355, %v355
      %v542 = vmul.f32 %v356, %v356
      %v543 = vmul.f32 %v357, %v357
      %v544 = vmul.f32 %v358, %v358
      %v545 = vmul.f32 %v359, %v359
      %v546 = vmul.f32 %v360, %v360
      %v547 = vmul.f32 %v361, %v361
      %v548 = vmul.f32 %v362, %v362
      %v549 = vmul.f32 %v363, %v363
      %v550 = vmul.f32 %v364, %v364
      %v551 = vmul.f32 %v365, %v365
      %v552 = vmul.f32 %v366, %v366
      %v553 = vmul.f32 %v367, %v367
      %v554 = vmul.f32 %v368, %v368
      %555 = vmatprep.subr.mxu0 %v540
      %556 = vmatpush1.msra.mxu0 %v539
      %557 = vmatprep.subr.mxu0 %v542
      %558 = vmatpush1.msra.mxu0 %v541
      %559 = vmatprep.subr.mxu0 %v544
      %560 = vmatpush1.msra.mxu0 %v543
      %561 = vmatprep.subr.mxu0 %v546
      %562 = vmatpush1.msra.mxu0 %v545
      %563 = vmatprep.subr.mxu0 %v548
      %564 = vmatpush1.msra.mxu0 %v547
      %565 = vmatprep.subr.mxu0 %v550
      %566 = vmatpush1.msra.mxu0 %v549
      %567 = vmatprep.subr.mxu0 %v552
      %568 = vmatpush1.msra.mxu0 %v551
      %569 = vmatprep.subr.mxu0 %v554
      %570 = vmatpush1.msra.mxu0 %v553
      %571 = vmatprep.subr.mxu0 0.0
      %572 = vmatpush1.msra.mxu0 0.0
      %573 = vmatprep.subr.mxu0 0.0
      %574 = vmatpush1.msra.mxu0 0.0
      %575 = vmatprep.subr.mxu0 0.0
      %576 = vmatpush1.msra.mxu0 0.0
      %577 = vmatprep.subr.mxu0 0.0
      %578 = vmatpush1.msra.mxu0 0.0
      %579 = vmatprep.subr.mxu0 0.0
      %580 = vmatpush1.msra.mxu0 0.0
      %581 = vmatprep.subr.mxu0 0.0
      %582 = vmatpush1.msra.mxu0 0.0
      %583 = vmatprep.subr.mxu0 0.0
      %584 = vmatpush1.msra.mxu0 0.0
      %585 = vmatprep.subr.mxu0 0.0
      %586 = vmatpush1.msra.mxu0 0.0
      %587 = vmatprep.subr.mxu0 0.0
      %588 = vmatpush1.msra.mxu0 0.0
      %589 = vmatprep.subr.mxu0 0.0
      %590 = vmatpush1.msra.mxu0 0.0
      %591 = vmatprep.subr.mxu0 0.0
      %592 = vmatpush1.msra.mxu0 0.0
      %593 = vmatprep.subr.mxu0 0.0
      %594 = vmatpush1.msra.mxu0 0.0
      %595 = vmatprep.subr.mxu0 0.0
      %596 = vmatpush1.msra.mxu0 0.0
      %597 = vmatprep.subr.mxu0 0.0
      %598 = vmatpush1.msra.mxu0 0.0
      %599 = vmatprep.subr.mxu0 0.0
      %600 = vmatpush1.msra.mxu0 0.0
      %601 = vmatprep.subr.mxu0 0.0
      %602 = vmatpush1.msra.mxu0 0.0
      %603 = vmatprep.subr.mxu0 0.0
      %604 = vmatpush1.msra.mxu0 0.0
      %605 = vmatprep.subr.mxu0 0.0
      %606 = vmatpush1.msra.mxu0 0.0
      %607 = vmatprep.subr.mxu0 0.0
      %608 = vmatpush1.msra.mxu0 0.0
      %609 = vmatprep.subr.mxu0 0.0
      %610 = vmatpush1.msra.mxu0 0.0
      %611 = vmatprep.subr.mxu0 0.0
      %612 = vmatpush1.msra.mxu0 0.0
      %613 = vmatprep.subr.mxu0 0.0
      %614 = vmatpush1.msra.mxu0 0.0
      %615 = vmatprep.subr.mxu0 0.0
      %616 = vmatpush1.msra.mxu0 0.0
      %617 = vmatprep.subr.mxu0 0.0
      %618 = vmatpush1.msra.mxu0 0.0
      %619 = vmatprep.mubr.f32.mxu0 0.0
      %620 = vmatmul.mubr.f32.gmra.mrb[0].mxu0 %v379
      %v621 = vpop.f32.mrb[0].mxu0
      %v622 = vadd.f32 0.0, %v621
      %v623 = vpop.f32.mrb[0].mxu0
      %v624 = vadd.f32 0.0, %v623
      %625 = vmatprep.mubr.f32.mxu0 0.0
      %626 = vmatmul.mubr.f32.gmra.mrb[0].mxu0 %v382
      %v627 = vpop.f32.mrb[0].mxu0
      %v628 = vadd.f32 0.0, %v627
      %v629 = vpop.f32.mrb[0].mxu0
      %v630 = vadd.f32 0.0, %v629
      %631 = vmatprep.mubr.f32.mxu0 0.0
      %632 = vmatmul.mubr.f32.gmra.mrb[0].mxu0 %v385
      %v633 = vpop.f32.mrb[0].mxu0
      %v634 = vadd.f32 0.0, %v633
      %v635 = vpop.f32.mrb[0].mxu0
      %v636 = vadd.f32 0.0, %v635
      %637 = vmatprep.mubr.f32.mxu0 0.0
      %638 = vmatmul.mubr.f32.gmra.mrb[0].mxu0 %v388
      %v639 = vpop.f32.mrb[0].mxu0
      %v640 = vadd.f32 0.0, %v639
      %v641 = vpop.f32.mrb[0].mxu0
      %v642 = vadd.f32 0.0, %v641
      %643 = vmatprep.mubr.f32.mxu0 0.0
      %644 = vmatmul.mubr.f32.gmra.mrb[0].mxu0 %v391
      %v645 = vpop.f32.mrb[0].mxu0
      %v646 = vadd.f32 0.0, %v645
      %v647 = vpop.f32.mrb[0].mxu0
      %v648 = vadd.f32 0.0, %v647
      %649 = vmatprep.mubr.f32.mxu0 0.0
      %650 = vmatmul.mubr.f32.gmra.mrb[0].mxu0 %v394
      %v651 = vpop.f32.mrb[0].mxu0
      %v652 = vadd.f32 0.0, %v651
      %v653 = vpop.f32.mrb[0].mxu0
      %v654 = vadd.f32 0.0, %v653
      %655 = vmatprep.mubr.f32.mxu0 0.0
      %656 = vmatmul.mubr.f32.gmra.mrb[0].mxu0 %v397
      %v657 = vpop.f32.mrb[0].mxu0
      %v658 = vadd.f32 0.0, %v657
      %v659 = vpop.f32.mrb[0].mxu0
      %v660 = vadd.f32 0.0, %v659
      %661 = vmatprep.mubr.f32.mxu0 0.0
      %662 = vmatmul.mubr.f32.gmra.mrb[0].mxu0 %v400
      %v663 = vpop.f32.mrb[0].mxu0
      %v664 = vadd.f32 0.0, %v663
      %v665 = vpop.f32.mrb[0].mxu0
      %v666 = vadd.f32 0.0, %v665
      %667 = vdwg.mxu0
      %v668 = vadd.f32 %v622, %v624
      %669 = vadd.xlane.f32.xlu0 %v668
      %v670 = vpop.xlane.xlu0 %669
      %v671 = vadd.f32 %v628, %v630
      %672 = vadd.xlane.f32.xlu0 %v671
      %v673 = vpop.xlane.xlu0 %672
      %v674 = vadd.f32 %v634, %v636
      %675 = vadd.xlane.f32.xlu0 %v674
      %v676 = vpop.xlane.xlu0 %675
      %v677 = vadd.f32 %v640, %v642
      %678 = vadd.xlane.f32.xlu0 %v677
      %v679 = vpop.xlane.xlu0 %678
      %v680 = vadd.f32 %v646, %v648
      %681 = vadd.xlane.f32.xlu0 %v680
      %v682 = vpop.xlane.xlu0 %681
      %v683 = vadd.f32 %v652, %v654
      %684 = vadd.xlane.f32.xlu0 %v683
      %v685 = vpop.xlane.xlu0 %684
      %v686 = vadd.f32 %v658, %v660
      %687 = vadd.xlane.f32.xlu0 %v686
      %v688 = vpop.xlane.xlu0 %687
      %v689 = vadd.f32 %v664, %v666
      %690 = vadd.xlane.f32.xlu0 %v689
      %v691 = vpop.xlane.xlu0 %690
      %v692 = vmul.f32 %v517, %v517
      %v693 = vmul.f32 %v520, %v520
      %v694 = vmul.f32 %v523, %v523
      %v695 = vmul.f32 %v526, %v526
      %v696 = vmul.f32 %v529, %v529
      %v697 = vmul.f32 %v532, %v532
      %v698 = vmul.f32 %v535, %v535
      %v699 = vmul.f32 %v538, %v538
      %v700 = vsub.f32 %v670, %v692
      %v701 = vsub.f32 %v673, %v693
      %v702 = vsub.f32 %v676, %v694
      %v703 = vsub.f32 %v679, %v695
      %v704 = vsub.f32 %v682, %v696
      %v705 = vsub.f32 %v685, %v697
      %v706 = vsub.f32 %v688, %v698
      %v707 = vsub.f32 %v691, %v699
      %v708 = vmax.f32 %v700, 0.0
      %v709 = vmax.f32 %v701, 0.0
      %v710 = vmax.f32 %v702, 0.0
      %v711 = vmax.f32 %v703, 0.0
      %v712 = vmax.f32 %v704, 0.0
      %v713 = vmax.f32 %v705, 0.0
      %v714 = vmax.f32 %v706, 0.0
      %v715 = vmax.f32 %v707, 0.0
      %v716 = vadd.f32 %v708, 1e-06
      %v717 = vadd.f32 %v709, 1e-06
      %v718 = vadd.f32 %v710, 1e-06
      %v719 = vadd.f32 %v711, 1e-06
      %v720 = vadd.f32 %v712, 1e-06
      %v721 = vadd.f32 %v713, 1e-06
      %v722 = vadd.f32 %v714, 1e-06
      %v723 = vadd.f32 %v715, 1e-06
      %v724 = vrsqrt.pop %v716
      %v725 = vrsqrt.pop %v717
      %v726 = vrsqrt.pop %v718
      %v727 = vrsqrt.pop %v719
      %v728 = vrsqrt.pop %v720
      %v729 = vrsqrt.pop %v721
      %v730 = vrsqrt.pop %v722
      %v731 = vrsqrt.pop %v723
      %v732 = vsub.f32 %v353, %v517
      %v733 = vsub.f32 %v354, %v517
      %v734 = vsub.f32 %v355, %v520
      %v735 = vsub.f32 %v356, %v520
      %v736 = vsub.f32 %v357, %v523
      %v737 = vsub.f32 %v358, %v523
      %v738 = vsub.f32 %v359, %v526
      %v739 = vsub.f32 %v360, %v526
      %v740 = vsub.f32 %v361, %v529
      %v741 = vsub.f32 %v362, %v529
      %v742 = vsub.f32 %v363, %v532
      %v743 = vsub.f32 %v364, %v532
      %v744 = vsub.f32 %v365, %v535
      %v745 = vsub.f32 %v366, %v535
      %v746 = vsub.f32 %v367, %v538
      %v747 = vsub.f32 %v368, %v538
      %v748 = vld [vmem:[%s2] sm:$0xff]
      %v749 = vld [vmem:[%s2 + $0x8] sm:$0xff]
      %v750 = vld [vmem:[%s2 + $0x10] sm:$0xff]
      %v751 = vld [vmem:[%s2 + $0x18] sm:$0xff]
      %v752 = vld [vmem:[%s2 + $0x20] sm:$0xff]
      %v753 = vld [vmem:[%s2 + $0x28] sm:$0xff]
      %v754 = vld [vmem:[%s2 + $0x30] sm:$0xff]
      %v755 = vld [vmem:[%s2 + $0x38] sm:$0xff]
      %v756 = vmul.f32 %v724, %v748
      %v757 = vmul.f32 %v725, %v749
      %v758 = vmul.f32 %v726, %v750
      %v759 = vmul.f32 %v727, %v751
      %v760 = vmul.f32 %v728, %v752
      %v761 = vmul.f32 %v729, %v753
      %v762 = vmul.f32 %v730, %v754
      %v763 = vmul.f32 %v731, %v755
      %765 = vset.pattern.permute.xlu0 0
      %766 = vperm.xlu0 %765, %v756
      %v767 = vpop.permute.xlu0 %766
      %770 = vset.pattern.permute.xlu0 0
      %771 = vperm.xlu0 %770, %v757
      %v772 = vpop.permute.xlu0 %771
      %775 = vset.pattern.permute.xlu0 0
      %776 = vperm.xlu0 %775, %v758
      %v777 = vpop.permute.xlu0 %776
      %780 = vset.pattern.permute.xlu0 0
      %781 = vperm.xlu0 %780, %v759
      %v782 = vpop.permute.xlu0 %781
      %785 = vset.pattern.permute.xlu0 0
      %786 = vperm.xlu0 %785, %v760
      %v787 = vpop.permute.xlu0 %786
      %790 = vset.pattern.permute.xlu0 0
      %791 = vperm.xlu0 %790, %v761
      %v792 = vpop.permute.xlu0 %791
      %795 = vset.pattern.permute.xlu0 0
      %796 = vperm.xlu0 %795, %v762
      %v797 = vpop.permute.xlu0 %796
      %800 = vset.pattern.permute.xlu0 0
      %801 = vperm.xlu0 %800, %v763
      %v802 = vpop.permute.xlu0 %801
      %v804 = vmul.f32 %v732, %v767
      %v805 = vmul.f32 %v733, %v767
      %v806 = vmul.f32 %v734, %v772
      %v807 = vmul.f32 %v735, %v772
      %v808 = vmul.f32 %v736, %v777
      %v809 = vmul.f32 %v737, %v777
      %v810 = vmul.f32 %v738, %v782
      %v811 = vmul.f32 %v739, %v782
      %v812 = vmul.f32 %v740, %v787
      %v813 = vmul.f32 %v741, %v787
      %v814 = vmul.f32 %v742, %v792
      %v815 = vmul.f32 %v743, %v792
      %v816 = vmul.f32 %v744, %v797
      %v817 = vmul.f32 %v745, %v797
      %v818 = vmul.f32 %v746, %v802
      %v819 = vmul.f32 %v747, %v802
      %v820 = vld [vmem:[%s3] sm:$0xff]
      %v821 = vld [vmem:[%s3 + $0x8] sm:$0xff]
      %v822 = vld [vmem:[%s3 + $0x10] sm:$0xff]
      %v823 = vld [vmem:[%s3 + $0x18] sm:$0xff]
      %v824 = vld [vmem:[%s3 + $0x20] sm:$0xff]
      %v825 = vld [vmem:[%s3 + $0x28] sm:$0xff]
      %v826 = vld [vmem:[%s3 + $0x30] sm:$0xff]
      %v827 = vld [vmem:[%s3 + $0x38] sm:$0xff]
      %829 = vset.pattern.permute.xlu0 0
      %830 = vperm.xlu0 %829, %v820
      %v831 = vpop.permute.xlu0 %830
      %834 = vset.pattern.permute.xlu0 0
      %835 = vperm.xlu0 %834, %v821
      %v836 = vpop.permute.xlu0 %835
      %839 = vset.pattern.permute.xlu0 0
      %840 = vperm.xlu0 %839, %v822
      %v841 = vpop.permute.xlu0 %840
      %844 = vset.pattern.permute.xlu0 0
      %845 = vperm.xlu0 %844, %v823
      %v846 = vpop.permute.xlu0 %845
      %849 = vset.pattern.permute.xlu0 0
      %850 = vperm.xlu0 %849, %v824
      %v851 = vpop.permute.xlu0 %850
      %854 = vset.pattern.permute.xlu0 0
      %855 = vperm.xlu0 %854, %v825
      %v856 = vpop.permute.xlu0 %855
      %859 = vset.pattern.permute.xlu0 0
      %860 = vperm.xlu0 %859, %v826
      %v861 = vpop.permute.xlu0 %860
      %864 = vset.pattern.permute.xlu0 0
      %865 = vperm.xlu0 %864, %v827
      %v866 = vpop.permute.xlu0 %865
      %v868 = vadd.f32 %v804, %v831
      %v869 = vadd.f32 %v805, %v831
      %v870 = vadd.f32 %v806, %v836
      %v871 = vadd.f32 %v807, %v836
      %v872 = vadd.f32 %v808, %v841
      %v873 = vadd.f32 %v809, %v841
      %v874 = vadd.f32 %v810, %v846
      %v875 = vadd.f32 %v811, %v846
      %v876 = vadd.f32 %v812, %v851
      %v877 = vadd.f32 %v813, %v851
      %v878 = vadd.f32 %v814, %v856
      %v879 = vadd.f32 %v815, %v856
      %v880 = vadd.f32 %v816, %v861
      %v881 = vadd.f32 %v817, %v861
      %v882 = vadd.f32 %v818, %v866
      %v883 = vadd.f32 %v819, %v866
      %v884 = vsub.f32 0.0, %v868
      %v885 = vsub.f32 0.0, %v869
      %v886 = vsub.f32 0.0, %v870
      %v887 = vsub.f32 0.0, %v871
      %v888 = vsub.f32 0.0, %v872
      %v889 = vsub.f32 0.0, %v873
      %v890 = vsub.f32 0.0, %v874
      %v891 = vsub.f32 0.0, %v875
      %v892 = vsub.f32 0.0, %v876
      %v893 = vsub.f32 0.0, %v877
      %v894 = vsub.f32 0.0, %v878
      %v895 = vsub.f32 0.0, %v879
      %v896 = vsub.f32 0.0, %v880
      %v897 = vsub.f32 0.0, %v881
      %v898 = vsub.f32 0.0, %v882
      %v899 = vsub.f32 0.0, %v883
      %v900 = vmul.f32 %v884, 1.442695
      %v901 = vpow.pop %v900
      %v902 = vmul.f32 %v885, 1.442695
      %v903 = vpow.pop %v902
      %v904 = vmul.f32 %v886, 1.442695
      %v905 = vpow.pop %v904
      %v906 = vmul.f32 %v887, 1.442695
      %v907 = vpow.pop %v906
      %v908 = vmul.f32 %v888, 1.442695
      %v909 = vpow.pop %v908
      %v910 = vmul.f32 %v889, 1.442695
      %v911 = vpow.pop %v910
      %v912 = vmul.f32 %v890, 1.442695
      %v913 = vpow.pop %v912
      %v914 = vmul.f32 %v891, 1.442695
      %v915 = vpow.pop %v914
      %v916 = vmul.f32 %v892, 1.442695
      %v917 = vpow.pop %v916
      %v918 = vmul.f32 %v893, 1.442695
      %v919 = vpow.pop %v918
      %v920 = vmul.f32 %v894, 1.442695
      %v921 = vpow.pop %v920
      %v922 = vmul.f32 %v895, 1.442695
      %v923 = vpow.pop %v922
      %v924 = vmul.f32 %v896, 1.442695
      %v925 = vpow.pop %v924
      %v926 = vmul.f32 %v897, 1.442695
      %v927 = vpow.pop %v926
      %v928 = vmul.f32 %v898, 1.442695
      %v929 = vpow.pop %v928
      %v930 = vmul.f32 %v899, 1.442695
      %v931 = vpow.pop %v930
      %v932 = vadd.f32 %v901, 1.0
      %v933 = vadd.f32 %v903, 1.0
      %v934 = vadd.f32 %v905, 1.0
      %v935 = vadd.f32 %v907, 1.0
      %v936 = vadd.f32 %v909, 1.0
      %v937 = vadd.f32 %v911, 1.0
      %v938 = vadd.f32 %v913, 1.0
      %v939 = vadd.f32 %v915, 1.0
      %v940 = vadd.f32 %v917, 1.0
      %v941 = vadd.f32 %v919, 1.0
      %v942 = vadd.f32 %v921, 1.0
      %v943 = vadd.f32 %v923, 1.0
      %v944 = vadd.f32 %v925, 1.0
      %v945 = vadd.f32 %v927, 1.0
      %v946 = vadd.f32 %v929, 1.0
      %v947 = vadd.f32 %v931, 1.0
      %v948 = vrcp.pop %v932
      %v949 = vmul.f32 1.0, %v948
      %v950 = vrcp.pop %v933
      %v951 = vmul.f32 1.0, %v950
      %v952 = vrcp.pop %v934
      %v953 = vmul.f32 1.0, %v952
      %v954 = vrcp.pop %v935
      %v955 = vmul.f32 1.0, %v954
      %v956 = vrcp.pop %v936
      %v957 = vmul.f32 1.0, %v956
      %v958 = vrcp.pop %v937
      %v959 = vmul.f32 1.0, %v958
      %v960 = vrcp.pop %v938
      %v961 = vmul.f32 1.0, %v960
      %v962 = vrcp.pop %v939
      %v963 = vmul.f32 1.0, %v962
      %v964 = vrcp.pop %v940
      %v965 = vmul.f32 1.0, %v964
      %v966 = vrcp.pop %v941
      %v967 = vmul.f32 1.0, %v966
      %v968 = vrcp.pop %v942
      %v969 = vmul.f32 1.0, %v968
      %v970 = vrcp.pop %v943
      %v971 = vmul.f32 1.0, %v970
      %v972 = vrcp.pop %v944
      %v973 = vmul.f32 1.0, %v972
      %v974 = vrcp.pop %v945
      %v975 = vmul.f32 1.0, %v974
      %v976 = vrcp.pop %v946
      %v977 = vmul.f32 1.0, %v976
      %v978 = vrcp.pop %v947
      %v979 = vmul.f32 1.0, %v978
      %v980 = vmul.f32 %v868, %v949
      %v981 = vmul.f32 %v869, %v951
      %v982 = vmul.f32 %v870, %v953
      %v983 = vmul.f32 %v871, %v955
      %v984 = vmul.f32 %v872, %v957
      %v985 = vmul.f32 %v873, %v959
      %v986 = vmul.f32 %v874, %v961
      %v987 = vmul.f32 %v875, %v963
      %v988 = vmul.f32 %v876, %v965
      %v989 = vmul.f32 %v877, %v967
      %v990 = vmul.f32 %v878, %v969
      %v991 = vmul.f32 %v879, %v971
      %v992 = vmul.f32 %v880, %v973
      %v993 = vmul.f32 %v881, %v975
      %v994 = vmul.f32 %v882, %v977
      %v995 = vmul.f32 %v883, %v979
      %v996 = vlaneseq
      %v997 = vand.u32 %v996, 127
      %v998 = vadd.s32 %v997, 128
      %vm999 = vcmp.lt.s32.totalorder %v997, 0
      %v1000 = vsub.s32 0, %v997
      %v1001 = vsel %vm999, %v1000, %v997
      %v1002 = vshrl.u32 %v1001, 4
      %v1003 = vand.u32 %v1001, 15
      %v1004 = vsub.s32 0, %v1003
      %v1005 = vsel %vm999, %v1004, %v1003
      %vm1006 = vcmp.lt.s32.totalorder %v998, 0
      %v1007 = vsub.s32 0, %v998
      %v1008 = vsel %vm1006, %v1007, %v998
      %v1009 = vshrl.u32 %v1008, 4
      %v1010 = vand.u32 %v1008, 15
      %v1011 = vsub.s32 0, %v1010
      %v1012 = vsel %vm1006, %v1011, %v1010
      %vm1013 = vcmp.ne.s32.totalorder %v1005, 0
      %vm1014 = vcmp.ne.s32.totalorder %v1012, 0
      %vm1015 = vcmp.lt.s32.totalorder %v1005, 0
      %vm1016 = vcmp.lt.s32.totalorder %v1012, 0
      %vm1017 = vmand %vm1015, %vm1013
      %vm1018 = vmand %vm1016, %vm1014
      %v1019 = vadd.s32 %v1005, 16
      %v1020 = vadd.s32 %v1012, 16
      %v1021 = vsel %vm1017, %v1019, %v1005
      %v1022 = vsel %vm1018, %v1020, %v1012
      %vm1023 = vcmp.ge.s32.totalorder %v1021, 1
      %vm1024 = vcmp.ge.s32.totalorder %v1022, 1
      %v1025 = vadd.s32 %v997, 4294967279
      %v1026 = vadd.s32 %v998, 4294967279
      %1027 = vrot.lane.b32.xlu0 %v980, 17
      %v1028 = vpop.permute.xlu0 %1027
      %1029 = vrot.lane.b32.xlu0 %v982, 17
      %v1030 = vpop.permute.xlu0 %1029
      %1031 = vrot.lane.b32.xlu0 %v984, 17
      %v1032 = vpop.permute.xlu0 %1031
      %1033 = vrot.lane.b32.xlu0 %v986, 17
      %v1034 = vpop.permute.xlu0 %1033
      %1035 = vrot.lane.b32.xlu0 %v988, 17
      %v1036 = vpop.permute.xlu0 %1035
      %1037 = vrot.lane.b32.xlu0 %v990, 17
      %v1038 = vpop.permute.xlu0 %1037
      %1039 = vrot.lane.b32.xlu0 %v992, 17
      %v1040 = vpop.permute.xlu0 %1039
      %1041 = vrot.lane.b32.xlu0 %v994, 17
      %v1042 = vpop.permute.xlu0 %1041
      %1043 = vrot.lane.b32.xlu0 %v981, 17
      %v1044 = vpop.permute.xlu0 %1043
      %1045 = vrot.lane.b32.xlu0 %v983, 17
      %v1046 = vpop.permute.xlu0 %1045
      %1047 = vrot.lane.b32.xlu0 %v985, 17
      %v1048 = vpop.permute.xlu0 %1047
      %1049 = vrot.lane.b32.xlu0 %v987, 17
      %v1050 = vpop.permute.xlu0 %1049
      %1051 = vrot.lane.b32.xlu0 %v989, 17
      %v1052 = vpop.permute.xlu0 %1051
      %1053 = vrot.lane.b32.xlu0 %v991, 17
      %v1054 = vpop.permute.xlu0 %1053
      %1055 = vrot.lane.b32.xlu0 %v993, 17
      %v1056 = vpop.permute.xlu0 %1055
      %1057 = vrot.lane.b32.xlu0 %v995, 17
      %v1058 = vpop.permute.xlu0 %1057
      %vm1059 = vcmp.lt.s32.totalorder %v997, 17
      %v1060 = vsel %vm1059, %v1028, %v1044
      %v1061 = vsel %vm1059, %v1030, %v1046
      %v1062 = vsel %vm1059, %v1032, %v1048
      %v1063 = vsel %vm1059, %v1034, %v1050
      %v1064 = vsel %vm1059, %v1036, %v1052
      %v1065 = vsel %vm1059, %v1038, %v1054
      %v1066 = vsel %vm1059, %v1040, %v1056
      %v1067 = vsel %vm1059, %v1042, %v1058
      %v1068 = vsel %vm1059, %v1044, %v1028
      %v1069 = vsel %vm1059, %v1046, %v1030
      %v1070 = vsel %vm1059, %v1048, %v1032
      %v1071 = vsel %vm1059, %v1050, %v1034
      %v1072 = vsel %vm1059, %v1052, %v1036
      %v1073 = vsel %vm1059, %v1054, %v1038
      %v1074 = vsel %vm1059, %v1056, %v1040
      %v1075 = vsel %vm1059, %v1058, %v1042
      %1076 = vrot.lane.b32.xlu0 %v997, 17
      %v1077 = vpop.permute.xlu0 %1076
      %1078 = vrot.lane.b32.xlu0 %v998, 17
      %v1079 = vpop.permute.xlu0 %1078
      %v1080 = vsel %vm1059, %v1077, %v1079
      %v1081 = vsel %vm1059, %v1079, %v1077
      %vm1082 = vcmp.eq.s32.totalorder %v1081, %v1025
      %vm1083 = vcmp.eq.s32.totalorder %v1080, %v1026
      %vm1084 = vmand %vm1082, %vm1023
      %vm1085 = vmand %vm1083, %vm1024
      %v1086 = vsel %vm1084, 1, 0
      %v1087 = vsel %vm1085, 1, 0
      %v1088 = vlaneseq
      %v1089 = vshrl.u32 %v1088, 7
      %v1090 = vsub.s32 0, %v1089
      %v1091 = vrot.slane %v1086, %v1090
      %v1092 = vlaneseq
      %v1093 = vshrl.u32 %v1092, 7
      %v1094 = vsub.s32 0, %v1093
      %v1095 = vrot.slane %v1087, %v1094
      %vm1096 = vcmp.eq.s32.totalorder %v1091, 1
      %vm1097 = vcmp.eq.s32.totalorder %v1095, 1
      %v1098 = vsel %vm1096, %v1068, 0.0
      %v1099 = vsel %vm1097, %v1060, 0.0
      %v1100 = vsel %vm1096, %v1069, 0.0
      %v1101 = vsel %vm1097, %v1061, 0.0
      %v1102 = vsel %vm1096, %v1070, 0.0
      %v1103 = vsel %vm1097, %v1062, 0.0
      %v1104 = vsel %vm1096, %v1071, 0.0
      %v1105 = vsel %vm1097, %v1063, 0.0
      %v1106 = vsel %vm1096, %v1072, 0.0
      %v1107 = vsel %vm1097, %v1064, 0.0
      %v1108 = vsel %vm1096, %v1073, 0.0
      %v1109 = vsel %vm1097, %v1065, 0.0
      %v1110 = vsel %vm1096, %v1074, 0.0
      %v1111 = vsel %vm1097, %v1066, 0.0
      %v1112 = vsel %vm1096, %v1075, 0.0
      %v1113 = vsel %vm1097, %v1067, 0.0
      %v1114 = vadd.f32 %v1098, 0.0
      %v1115 = vadd.f32 %v1099, 0.0
      %v1116 = vadd.f32 %v1100, 0.0
      %v1117 = vadd.f32 %v1101, 0.0
      %v1118 = vadd.f32 %v1102, 0.0
      %v1119 = vadd.f32 %v1103, 0.0
      %v1120 = vadd.f32 %v1104, 0.0
      %v1121 = vadd.f32 %v1105, 0.0
      %v1122 = vadd.f32 %v1106, 0.0
      %v1123 = vadd.f32 %v1107, 0.0
      %v1124 = vadd.f32 %v1108, 0.0
      %v1125 = vadd.f32 %v1109, 0.0
      %v1126 = vadd.f32 %v1110, 0.0
      %v1127 = vadd.f32 %v1111, 0.0
      %v1128 = vadd.f32 %v1112, 0.0
      %v1129 = vadd.f32 %v1113, 0.0
      %1130 = vrot.lane.b32.xlu0 %v980, 111
      %v1131 = vpop.permute.xlu0 %1130
      %1132 = vrot.lane.b32.xlu0 %v982, 111
      %v1133 = vpop.permute.xlu0 %1132
      %1134 = vrot.lane.b32.xlu0 %v984, 111
      %v1135 = vpop.permute.xlu0 %1134
      %1136 = vrot.lane.b32.xlu0 %v986, 111
      %v1137 = vpop.permute.xlu0 %1136
      %1138 = vrot.lane.b32.xlu0 %v988, 111
      %v1139 = vpop.permute.xlu0 %1138
      %1140 = vrot.lane.b32.xlu0 %v990, 111
      %v1141 = vpop.permute.xlu0 %1140
      %1142 = vrot.lane.b32.xlu0 %v992, 111
      %v1143 = vpop.permute.xlu0 %1142
      %1144 = vrot.lane.b32.xlu0 %v994, 111
      %v1145 = vpop.permute.xlu0 %1144
      %1146 = vrot.lane.b32.xlu0 %v981, 111
      %v1147 = vpop.permute.xlu0 %1146
      %1148 = vrot.lane.b32.xlu0 %v983, 111
      %v1149 = vpop.permute.xlu0 %1148
      %1150 = vrot.lane.b32.xlu0 %v985, 111
      %v1151 = vpop.permute.xlu0 %1150
      %1152 = vrot.lane.b32.xlu0 %v987, 111
      %v1153 = vpop.permute.xlu0 %1152
      %1154 = vrot.lane.b32.xlu0 %v989, 111
      %v1155 = vpop.permute.xlu0 %1154
      %1156 = vrot.lane.b32.xlu0 %v991, 111
      %v1157 = vpop.permute.xlu0 %1156
      %1158 = vrot.lane.b32.xlu0 %v993, 111
      %v1159 = vpop.permute.xlu0 %1158
      %1160 = vrot.lane.b32.xlu0 %v995, 111
      %v1161 = vpop.permute.xlu0 %1160
      %vm1162 = vcmp.lt.s32.totalorder %v997, 111
      %v1163 = vsel %vm1162, %v1131, %v1147
      %v1164 = vsel %vm1162, %v1133, %v1149
      %v1165 = vsel %vm1162, %v1135, %v1151
      %v1166 = vsel %vm1162, %v1137, %v1153
      %v1167 = vsel %vm1162, %v1139, %v1155
      %v1168 = vsel %vm1162, %v1141, %v1157
      %v1169 = vsel %vm1162, %v1143, %v1159
      %v1170 = vsel %vm1162, %v1145, %v1161
      %v1171 = vsel %vm1162, %v1147, %v1131
      %v1172 = vsel %vm1162, %v1149, %v1133
      %v1173 = vsel %vm1162, %v1151, %v1135
      %v1174 = vsel %vm1162, %v1153, %v1137
      %v1175 = vsel %vm1162, %v1155, %v1139
      %v1176 = vsel %vm1162, %v1157, %v1141
      %v1177 = vsel %vm1162, %v1159, %v1143
      %v1178 = vsel %vm1162, %v1161, %v1145
      %1179 = vrot.lane.b32.xlu0 %v997, 111
      %v1180 = vpop.permute.xlu0 %1179
      %1181 = vrot.lane.b32.xlu0 %v998, 111
      %v1182 = vpop.permute.xlu0 %1181
      %v1183 = vsel %vm1162, %v1180, %v1182
      %v1184 = vsel %vm1162, %v1182, %v1180
      %vm1185 = vcmp.eq.s32.totalorder %v1183, %v1025
      %vm1186 = vcmp.eq.s32.totalorder %v1184, %v1026
      %vm1187 = vmand %vm1185, %vm1023
      %vm1188 = vmand %vm1186, %vm1024
      %v1189 = vsel %vm1187, 1, 0
      %v1190 = vsel %vm1188, 1, 0
      %v1191 = vlaneseq
      %v1192 = vshrl.u32 %v1191, 7
      %v1193 = vsub.s32 0, %v1192
      %v1194 = vrot.slane %v1189, %v1193
      %v1195 = vlaneseq
      %v1196 = vshrl.u32 %v1195, 7
      %v1197 = vsub.s32 0, %v1196
      %v1198 = vrot.slane %v1190, %v1197
      %vm1199 = vcmp.eq.s32.totalorder %v1194, 1
      %vm1200 = vcmp.eq.s32.totalorder %v1198, 1
      %v1201 = vsel %vm1199, %v1163, 0.0
      %v1202 = vsel %vm1200, %v1171, 0.0
      %v1203 = vsel %vm1199, %v1164, 0.0
      %v1204 = vsel %vm1200, %v1172, 0.0
      %v1205 = vsel %vm1199, %v1165, 0.0
      %v1206 = vsel %vm1200, %v1173, 0.0
      %v1207 = vsel %vm1199, %v1166, 0.0
      %v1208 = vsel %vm1200, %v1174, 0.0
      %v1209 = vsel %vm1199, %v1167, 0.0
      %v1210 = vsel %vm1200, %v1175, 0.0
      %v1211 = vsel %vm1199, %v1168, 0.0
      %v1212 = vsel %vm1200, %v1176, 0.0
      %v1213 = vsel %vm1199, %v1169, 0.0
      %v1214 = vsel %vm1200, %v1177, 0.0
      %v1215 = vsel %vm1199, %v1170, 0.0
      %v1216 = vsel %vm1200, %v1178, 0.0
      %v1217 = vadd.f32 %v1114, %v1201
      %v1218 = vadd.f32 %v1115, %v1202
      %v1219 = vadd.f32 %v1116, %v1203
      %v1220 = vadd.f32 %v1117, %v1204
      %v1221 = vadd.f32 %v1118, %v1205
      %v1222 = vadd.f32 %v1119, %v1206
      %v1223 = vadd.f32 %v1120, %v1207
      %v1224 = vadd.f32 %v1121, %v1208
      %v1225 = vadd.f32 %v1122, %v1209
      %v1226 = vadd.f32 %v1123, %v1210
      %v1227 = vadd.f32 %v1124, %v1211
      %v1228 = vadd.f32 %v1125, %v1212
      %v1229 = vadd.f32 %v1126, %v1213
      %v1230 = vadd.f32 %v1127, %v1214
      %v1231 = vadd.f32 %v1128, %v1215
      %v1232 = vadd.f32 %v1129, %v1216
      %v1233 = vld [vmem:[%s5] sm:$0xff]
      %v1234 = vld [vmem:[%s5 + $0x8] sm:$0xff]
      %v1235 = vld [vmem:[%s5 + $0x10] sm:$0xff]
      %v1236 = vld [vmem:[%s5 + $0x18] sm:$0xff]
      %v1237 = vld [vmem:[%s5 + $0x20] sm:$0xff]
      %v1238 = vld [vmem:[%s5 + $0x28] sm:$0xff]
      %v1239 = vld [vmem:[%s5 + $0x30] sm:$0xff]
      %v1240 = vld [vmem:[%s5 + $0x38] sm:$0xff]
      %v1241 = vadd.s32 %v997, 4294967280
      %v1242 = vadd.s32 %v998, 4294967280
      %1243 = vrot.lane.b32.xlu0 %v980, 16
      %v1244 = vpop.permute.xlu0 %1243
      %1245 = vrot.lane.b32.xlu0 %v982, 16
      %v1246 = vpop.permute.xlu0 %1245
      %1247 = vrot.lane.b32.xlu0 %v984, 16
      %v1248 = vpop.permute.xlu0 %1247
      %1249 = vrot.lane.b32.xlu0 %v986, 16
      %v1250 = vpop.permute.xlu0 %1249
      %1251 = vrot.lane.b32.xlu0 %v988, 16
      %v1252 = vpop.permute.xlu0 %1251
      %1253 = vrot.lane.b32.xlu0 %v990, 16
      %v1254 = vpop.permute.xlu0 %1253
      %1255 = vrot.lane.b32.xlu0 %v992, 16
      %v1256 = vpop.permute.xlu0 %1255
      %1257 = vrot.lane.b32.xlu0 %v994, 16
      %v1258 = vpop.permute.xlu0 %1257
      %1259 = vrot.lane.b32.xlu0 %v981, 16
      %v1260 = vpop.permute.xlu0 %1259
      %1261 = vrot.lane.b32.xlu0 %v983, 16
      %v1262 = vpop.permute.xlu0 %1261
      %1263 = vrot.lane.b32.xlu0 %v985, 16
      %v1264 = vpop.permute.xlu0 %1263
      %1265 = vrot.lane.b32.xlu0 %v987, 16
      %v1266 = vpop.permute.xlu0 %1265
      %1267 = vrot.lane.b32.xlu0 %v989, 16
      %v1268 = vpop.permute.xlu0 %1267
      %1269 = vrot.lane.b32.xlu0 %v991, 16
      %v1270 = vpop.permute.xlu0 %1269
      %1271 = vrot.lane.b32.xlu0 %v993, 16
      %v1272 = vpop.permute.xlu0 %1271
      %1273 = vrot.lane.b32.xlu0 %v995, 16
      %v1274 = vpop.permute.xlu0 %1273
      %vm1275 = vcmp.lt.s32.totalorder %v997, 16
      %v1276 = vsel %vm1275, %v1244, %v1260
      %v1277 = vsel %vm1275, %v1246, %v1262
      %v1278 = vsel %vm1275, %v1248, %v1264
      %v1279 = vsel %vm1275, %v1250, %v1266
      %v1280 = vsel %vm1275, %v1252, %v1268
      %v1281 = vsel %vm1275, %v1254, %v1270
      %v1282 = vsel %vm1275, %v1256, %v1272
      %v1283 = vsel %vm1275, %v1258, %v1274
      %v1284 = vsel %vm1275, %v1260, %v1244
      %v1285 = vsel %vm1275, %v1262, %v1246
      %v1286 = vsel %vm1275, %v1264, %v1248
      %v1287 = vsel %vm1275, %v1266, %v1250
      %v1288 = vsel %vm1275, %v1268, %v1252
      %v1289 = vsel %vm1275, %v1270, %v1254
      %v1290 = vsel %vm1275, %v1272, %v1256
      %v1291 = vsel %vm1275, %v1274, %v1258
      %1292 = vrot.lane.b32.xlu0 %v997, 16
      %v1293 = vpop.permute.xlu0 %1292
      %1294 = vrot.lane.b32.xlu0 %v998, 16
      %v1295 = vpop.permute.xlu0 %1294
      %v1296 = vsel %vm1275, %v1293, %v1295
      %v1297 = vsel %vm1275, %v1295, %v1293
      %vm1298 = vcmp.eq.s32.totalorder %v1297, %v1241
      %vm1299 = vcmp.eq.s32.totalorder %v1296, %v1242
      %v1300 = vsel %vm1298, 1, 0
      %v1301 = vsel %vm1299, 1, 0
      %v1302 = vlaneseq
      %v1303 = vshrl.u32 %v1302, 7
      %v1304 = vsub.s32 0, %v1303
      %v1305 = vrot.slane %v1300, %v1304
      %v1306 = vlaneseq
      %v1307 = vshrl.u32 %v1306, 7
      %v1308 = vsub.s32 0, %v1307
      %v1309 = vrot.slane %v1301, %v1308
      %vm1310 = vcmp.eq.s32.totalorder %v1305, 1
      %vm1311 = vcmp.eq.s32.totalorder %v1309, 1
      %v1312 = vsel %vm1310, %v1284, 0.0
      %v1313 = vsel %vm1311, %v1276, 0.0
      %v1314 = vsel %vm1310, %v1285, 0.0
      %v1315 = vsel %vm1311, %v1277, 0.0
      %v1316 = vsel %vm1310, %v1286, 0.0
      %v1317 = vsel %vm1311, %v1278, 0.0
      %v1318 = vsel %vm1310, %v1287, 0.0
      %v1319 = vsel %vm1311, %v1279, 0.0
      %v1320 = vsel %vm1310, %v1288, 0.0
      %v1321 = vsel %vm1311, %v1280, 0.0
      %v1322 = vsel %vm1310, %v1289, 0.0
      %v1323 = vsel %vm1311, %v1281, 0.0
      %v1324 = vsel %vm1310, %v1290, 0.0
      %v1325 = vsel %vm1311, %v1282, 0.0
      %v1326 = vsel %vm1310, %v1291, 0.0
      %v1327 = vsel %vm1311, %v1283, 0.0
      %v1328 = vadd.f32 %v1312, 0.0
      %v1329 = vadd.f32 %v1313, 0.0
      %v1330 = vadd.f32 %v1314, 0.0
      %v1331 = vadd.f32 %v1315, 0.0
      %v1332 = vadd.f32 %v1316, 0.0
      %v1333 = vadd.f32 %v1317, 0.0
      %v1334 = vadd.f32 %v1318, 0.0
      %v1335 = vadd.f32 %v1319, 0.0
      %v1336 = vadd.f32 %v1320, 0.0
      %v1337 = vadd.f32 %v1321, 0.0
      %v1338 = vadd.f32 %v1322, 0.0
      %v1339 = vadd.f32 %v1323, 0.0
      %v1340 = vadd.f32 %v1324, 0.0
      %v1341 = vadd.f32 %v1325, 0.0
      %v1342 = vadd.f32 %v1326, 0.0
      %v1343 = vadd.f32 %v1327, 0.0
      %1344 = vrot.lane.b32.xlu0 %v980, 112
      %v1345 = vpop.permute.xlu0 %1344
      %1346 = vrot.lane.b32.xlu0 %v982, 112
      %v1347 = vpop.permute.xlu0 %1346
      %1348 = vrot.lane.b32.xlu0 %v984, 112
      %v1349 = vpop.permute.xlu0 %1348
      %1350 = vrot.lane.b32.xlu0 %v986, 112
      %v1351 = vpop.permute.xlu0 %1350
      %1352 = vrot.lane.b32.xlu0 %v988, 112
      %v1353 = vpop.permute.xlu0 %1352
      %1354 = vrot.lane.b32.xlu0 %v990, 112
      %v1355 = vpop.permute.xlu0 %1354
      %1356 = vrot.lane.b32.xlu0 %v992, 112
      %v1357 = vpop.permute.xlu0 %1356
      %1358 = vrot.lane.b32.xlu0 %v994, 112
      %v1359 = vpop.permute.xlu0 %1358
      %1360 = vrot.lane.b32.xlu0 %v981, 112
      %v1361 = vpop.permute.xlu0 %1360
      %1362 = vrot.lane.b32.xlu0 %v983, 112
      %v1363 = vpop.permute.xlu0 %1362
      %1364 = vrot.lane.b32.xlu0 %v985, 112
      %v1365 = vpop.permute.xlu0 %1364
      %1366 = vrot.lane.b32.xlu0 %v987, 112
      %v1367 = vpop.permute.xlu0 %1366
      %1368 = vrot.lane.b32.xlu0 %v989, 112
      %v1369 = vpop.permute.xlu0 %1368
      %1370 = vrot.lane.b32.xlu0 %v991, 112
      %v1371 = vpop.permute.xlu0 %1370
      %1372 = vrot.lane.b32.xlu0 %v993, 112
      %v1373 = vpop.permute.xlu0 %1372
      %1374 = vrot.lane.b32.xlu0 %v995, 112
      %v1375 = vpop.permute.xlu0 %1374
      %vm1376 = vcmp.lt.s32.totalorder %v997, 112
      %v1377 = vsel %vm1376, %v1345, %v1361
      %v1378 = vsel %vm1376, %v1347, %v1363
      %v1379 = vsel %vm1376, %v1349, %v1365
      %v1380 = vsel %vm1376, %v1351, %v1367
      %v1381 = vsel %vm1376, %v1353, %v1369
      %v1382 = vsel %vm1376, %v1355, %v1371
      %v1383 = vsel %vm1376, %v1357, %v1373
      %v1384 = vsel %vm1376, %v1359, %v1375
      %v1385 = vsel %vm1376, %v1361, %v1345
      %v1386 = vsel %vm1376, %v1363, %v1347
      %v1387 = vsel %vm1376, %v1365, %v1349
      %v1388 = vsel %vm1376, %v1367, %v1351
      %v1389 = vsel %vm1376, %v1369, %v1353
      %v1390 = vsel %vm1376, %v1371, %v1355
      %v1391 = vsel %vm1376, %v1373, %v1357
      %v1392 = vsel %vm1376, %v1375, %v1359
      %1393 = vrot.lane.b32.xlu0 %v997, 112
      %v1394 = vpop.permute.xlu0 %1393
      %1395 = vrot.lane.b32.xlu0 %v998, 112
      %v1396 = vpop.permute.xlu0 %1395
      %v1397 = vsel %vm1376, %v1394, %v1396
      %v1398 = vsel %vm1376, %v1396, %v1394
      %vm1399 = vcmp.eq.s32.totalorder %v1397, %v1241
      %vm1400 = vcmp.eq.s32.totalorder %v1398, %v1242
      %v1401 = vsel %vm1399, 1, 0
      %v1402 = vsel %vm1400, 1, 0
      %v1403 = vlaneseq
      %v1404 = vshrl.u32 %v1403, 7
      %v1405 = vsub.s32 0, %v1404
      %v1406 = vrot.slane %v1401, %v1405
      %v1407 = vlaneseq
      %v1408 = vshrl.u32 %v1407, 7
      %v1409 = vsub.s32 0, %v1408
      %v1410 = vrot.slane %v1402, %v1409
      %vm1411 = vcmp.eq.s32.totalorder %v1406, 1
      %vm1412 = vcmp.eq.s32.totalorder %v1410, 1
      %v1413 = vsel %vm1411, %v1377, 0.0
      %v1414 = vsel %vm1412, %v1385, 0.0
      %v1415 = vsel %vm1411, %v1378, 0.0
      %v1416 = vsel %vm1412, %v1386, 0.0
      %v1417 = vsel %vm1411, %v1379, 0.0
      %v1418 = vsel %vm1412, %v1387, 0.0
      %v1419 = vsel %vm1411, %v1380, 0.0
      %v1420 = vsel %vm1412, %v1388, 0.0
      %v1421 = vsel %vm1411, %v1381, 0.0
      %v1422 = vsel %vm1412, %v1389, 0.0
      %v1423 = vsel %vm1411, %v1382, 0.0
      %v1424 = vsel %vm1412, %v1390, 0.0
      %v1425 = vsel %vm1411, %v1383, 0.0
      %v1426 = vsel %vm1412, %v1391, 0.0
      %v1427 = vsel %vm1411, %v1384, 0.0
      %v1428 = vsel %vm1412, %v1392, 0.0
      %v1429 = vadd.f32 %v1328, %v1413
      %v1430 = vadd.f32 %v1329, %v1414
      %v1431 = vadd.f32 %v1330, %v1415
      %v1432 = vadd.f32 %v1331, %v1416
      %v1433 = vadd.f32 %v1332, %v1417
      %v1434 = vadd.f32 %v1333, %v1418
      %v1435 = vadd.f32 %v1334, %v1419
      %v1436 = vadd.f32 %v1335, %v1420
      %v1437 = vadd.f32 %v1336, %v1421
      %v1438 = vadd.f32 %v1337, %v1422
      %v1439 = vadd.f32 %v1338, %v1423
      %v1440 = vadd.f32 %v1339, %v1424
      %v1441 = vadd.f32 %v1340, %v1425
      %v1442 = vadd.f32 %v1341, %v1426
      %v1443 = vadd.f32 %v1342, %v1427
      %v1444 = vadd.f32 %v1343, %v1428
      %s1445 = scalar_lea.vmem %s5, 64
      %v1446 = vld [vmem:[%s1445] sm:$0xff]
      %v1447 = vld [vmem:[%s1445 + $0x8] sm:$0xff]
      %v1448 = vld [vmem:[%s1445 + $0x10] sm:$0xff]
      %v1449 = vld [vmem:[%s1445 + $0x18] sm:$0xff]
      %v1450 = vld [vmem:[%s1445 + $0x20] sm:$0xff]
      %v1451 = vld [vmem:[%s1445 + $0x28] sm:$0xff]
      %v1452 = vld [vmem:[%s1445 + $0x30] sm:$0xff]
      %v1453 = vld [vmem:[%s1445 + $0x38] sm:$0xff]
      %v1455 = vsel %vm377, %v1446, 0
      %v1458 = vsel %vm377, %v1447, 0
      %v1461 = vsel %vm377, %v1448, 0
      %v1464 = vsel %vm377, %v1449, 0
      %v1467 = vsel %vm377, %v1450, 0
      %v1470 = vsel %vm377, %v1451, 0
      %v1473 = vsel %vm377, %v1452, 0
      %v1476 = vsel %vm377, %v1453, 0
      %1478 = vmatprep.subr.mxu0 %v1430
      %1479 = vmatpush1.msra.mxu0 %v1429
      %1480 = vmatprep.subr.mxu0 %v1432
      %1481 = vmatpush1.msra.mxu0 %v1431
      %1482 = vmatprep.subr.mxu0 %v1434
      %1483 = vmatpush1.msra.mxu0 %v1433
      %1484 = vmatprep.subr.mxu0 %v1436
      %1485 = vmatpush1.msra.mxu0 %v1435
      %1486 = vmatprep.subr.mxu0 %v1438
      %1487 = vmatpush1.msra.mxu0 %v1437
      %1488 = vmatprep.subr.mxu0 %v1440
      %1489 = vmatpush1.msra.mxu0 %v1439
      %1490 = vmatprep.subr.mxu0 %v1442
      %1491 = vmatpush1.msra.mxu0 %v1441
      %1492 = vmatprep.subr.mxu0 %v1444
      %1493 = vmatpush1.msra.mxu0 %v1443
      %1494 = vmatprep.subr.mxu0 0.0
      %1495 = vmatpush1.msra.mxu0 0.0
      %1496 = vmatprep.subr.mxu0 0.0
      %1497 = vmatpush1.msra.mxu0 0.0
      %1498 = vmatprep.subr.mxu0 0.0
      %1499 = vmatpush1.msra.mxu0 0.0
      %1500 = vmatprep.subr.mxu0 0.0
      %1501 = vmatpush1.msra.mxu0 0.0
      %1502 = vmatprep.subr.mxu0 0.0
      %1503 = vmatpush1.msra.mxu0 0.0
      %1504 = vmatprep.subr.mxu0 0.0
      %1505 = vmatpush1.msra.mxu0 0.0
      %1506 = vmatprep.subr.mxu0 0.0
      %1507 = vmatpush1.msra.mxu0 0.0
      %1508 = vmatprep.subr.mxu0 0.0
      %1509 = vmatpush1.msra.mxu0 0.0
      %1510 = vmatprep.subr.mxu0 0.0
      %1511 = vmatpush1.msra.mxu0 0.0
      %1512 = vmatprep.subr.mxu0 0.0
      %1513 = vmatpush1.msra.mxu0 0.0
      %1514 = vmatprep.subr.mxu0 0.0
      %1515 = vmatpush1.msra.mxu0 0.0
      %1516 = vmatprep.subr.mxu0 0.0
      %1517 = vmatpush1.msra.mxu0 0.0
      %1518 = vmatprep.subr.mxu0 0.0
      %1519 = vmatpush1.msra.mxu0 0.0
      %1520 = vmatprep.subr.mxu0 0.0
      %1521 = vmatpush1.msra.mxu0 0.0
      %1522 = vmatprep.subr.mxu0 0.0
      %1523 = vmatpush1.msra.mxu0 0.0
      %1524 = vmatprep.subr.mxu0 0.0
      %1525 = vmatpush1.msra.mxu0 0.0
      %1526 = vmatprep.subr.mxu0 0.0
      %1527 = vmatpush1.msra.mxu0 0.0
      %1528 = vmatprep.subr.mxu0 0.0
      %1529 = vmatpush1.msra.mxu0 0.0
      %1530 = vmatprep.subr.mxu0 0.0
      %1531 = vmatpush1.msra.mxu0 0.0
      %1532 = vmatprep.subr.mxu0 0.0
      %1533 = vmatpush1.msra.mxu0 0.0
      %1534 = vmatprep.subr.mxu0 0.0
      %1535 = vmatpush1.msra.mxu0 0.0
      %1536 = vmatprep.subr.mxu0 0.0
      %1537 = vmatpush1.msra.mxu0 0.0
      %1538 = vmatprep.subr.mxu0 0.0
      %1539 = vmatpush1.msra.mxu0 0.0
      %1540 = vmatprep.subr.mxu0 0.0
      %1541 = vmatpush1.msra.mxu0 0.0
      %1542 = vmatprep.mubr.f32.mxu0 0.0
      %1543 = vmatmul.mubr.f32.gmra.mrb[0].mxu0 %v1455
      %v1544 = vpop.f32.mrb[0].mxu0
      %v1545 = vadd.f32 0.0, %v1544
      %v1546 = vpop.f32.mrb[0].mxu0
      %v1547 = vadd.f32 0.0, %v1546
      %1548 = vmatprep.mubr.f32.mxu0 0.0
      %1549 = vmatmul.mubr.f32.gmra.mrb[0].mxu0 %v1458
      %v1550 = vpop.f32.mrb[0].mxu0
      %v1551 = vadd.f32 0.0, %v1550
      %v1552 = vpop.f32.mrb[0].mxu0
      %v1553 = vadd.f32 0.0, %v1552
      %1554 = vmatprep.mubr.f32.mxu0 0.0
      %1555 = vmatmul.mubr.f32.gmra.mrb[0].mxu0 %v1461
      %v1556 = vpop.f32.mrb[0].mxu0
      %v1557 = vadd.f32 0.0, %v1556
      %v1558 = vpop.f32.mrb[0].mxu0
      %v1559 = vadd.f32 0.0, %v1558
      %1560 = vmatprep.mubr.f32.mxu0 0.0
      %1561 = vmatmul.mubr.f32.gmra.mrb[0].mxu0 %v1464
      %v1562 = vpop.f32.mrb[0].mxu0
      %v1563 = vadd.f32 0.0, %v1562
      %v1564 = vpop.f32.mrb[0].mxu0
      %v1565 = vadd.f32 0.0, %v1564
      %1566 = vmatprep.mubr.f32.mxu0 0.0
      %1567 = vmatmul.mubr.f32.gmra.mrb[0].mxu0 %v1467
      %v1568 = vpop.f32.mrb[0].mxu0
      %v1569 = vadd.f32 0.0, %v1568
      %v1570 = vpop.f32.mrb[0].mxu0
      %v1571 = vadd.f32 0.0, %v1570
      %1572 = vmatprep.mubr.f32.mxu0 0.0
      %1573 = vmatmul.mubr.f32.gmra.mrb[0].mxu0 %v1470
      %v1574 = vpop.f32.mrb[0].mxu0
      %v1575 = vadd.f32 0.0, %v1574
      %v1576 = vpop.f32.mrb[0].mxu0
      %v1577 = vadd.f32 0.0, %v1576
      %1578 = vmatprep.mubr.f32.mxu0 0.0
      %1579 = vmatmul.mubr.f32.gmra.mrb[0].mxu0 %v1473
      %v1580 = vpop.f32.mrb[0].mxu0
      %v1581 = vadd.f32 0.0, %v1580
      %v1582 = vpop.f32.mrb[0].mxu0
      %v1583 = vadd.f32 0.0, %v1582
      %1584 = vmatprep.mubr.f32.mxu0 0.0
      %1585 = vmatmul.mubr.f32.gmra.mrb[0].mxu0 %v1476
      %v1586 = vpop.f32.mrb[0].mxu0
      %v1587 = vadd.f32 0.0, %v1586
      %v1588 = vpop.f32.mrb[0].mxu0
      %v1589 = vadd.f32 0.0, %v1588
      %1590 = vdwg.mxu0
      %v1592 = vsel %vm377, %v1233, 0
      %v1595 = vsel %vm377, %v1234, 0
      %v1598 = vsel %vm377, %v1235, 0
      %v1601 = vsel %vm377, %v1236, 0
      %v1604 = vsel %vm377, %v1237, 0
      %v1607 = vsel %vm377, %v1238, 0
      %v1610 = vsel %vm377, %v1239, 0
      %v1613 = vsel %vm377, %v1240, 0
      %1615 = vmatprep.subr.mxu0 %v1218
      %1616 = vmatpush1.msra.mxu0 %v1217
      %1617 = vmatprep.subr.mxu0 %v1220
      %1618 = vmatpush1.msra.mxu0 %v1219
      %1619 = vmatprep.subr.mxu0 %v1222
      %1620 = vmatpush1.msra.mxu0 %v1221
      %1621 = vmatprep.subr.mxu0 %v1224
      %1622 = vmatpush1.msra.mxu0 %v1223
      %1623 = vmatprep.subr.mxu0 %v1226
      %1624 = vmatpush1.msra.mxu0 %v1225
      %1625 = vmatprep.subr.mxu0 %v1228
      %1626 = vmatpush1.msra.mxu0 %v1227
      %1627 = vmatprep.subr.mxu0 %v1230
      %1628 = vmatpush1.msra.mxu0 %v1229
      %1629 = vmatprep.subr.mxu0 %v1232
      %1630 = vmatpush1.msra.mxu0 %v1231
      %1631 = vmatprep.subr.mxu0 0.0
      %1632 = vmatpush1.msra.mxu0 0.0
      %1633 = vmatprep.subr.mxu0 0.0
      %1634 = vmatpush1.msra.mxu0 0.0
      %1635 = vmatprep.subr.mxu0 0.0
      %1636 = vmatpush1.msra.mxu0 0.0
      %1637 = vmatprep.subr.mxu0 0.0
      %1638 = vmatpush1.msra.mxu0 0.0
      %1639 = vmatprep.subr.mxu0 0.0
      %1640 = vmatpush1.msra.mxu0 0.0
      %1641 = vmatprep.subr.mxu0 0.0
      %1642 = vmatpush1.msra.mxu0 0.0
      %1643 = vmatprep.subr.mxu0 0.0
      %1644 = vmatpush1.msra.mxu0 0.0
      %1645 = vmatprep.subr.mxu0 0.0
      %1646 = vmatpush1.msra.mxu0 0.0
      %1647 = vmatprep.subr.mxu0 0.0
      %1648 = vmatpush1.msra.mxu0 0.0
      %1649 = vmatprep.subr.mxu0 0.0
      %1650 = vmatpush1.msra.mxu0 0.0
      %1651 = vmatprep.subr.mxu0 0.0
      %1652 = vmatpush1.msra.mxu0 0.0
      %1653 = vmatprep.subr.mxu0 0.0
      %1654 = vmatpush1.msra.mxu0 0.0
      %1655 = vmatprep.subr.mxu0 0.0
      %1656 = vmatpush1.msra.mxu0 0.0
      %1657 = vmatprep.subr.mxu0 0.0
      %1658 = vmatpush1.msra.mxu0 0.0
      %1659 = vmatprep.subr.mxu0 0.0
      %1660 = vmatpush1.msra.mxu0 0.0
      %1661 = vmatprep.subr.mxu0 0.0
      %1662 = vmatpush1.msra.mxu0 0.0
      %1663 = vmatprep.subr.mxu0 0.0
      %1664 = vmatpush1.msra.mxu0 0.0
      %1665 = vmatprep.subr.mxu0 0.0
      %1666 = vmatpush1.msra.mxu0 0.0
      %1667 = vmatprep.subr.mxu0 0.0
      %1668 = vmatpush1.msra.mxu0 0.0
      %1669 = vmatprep.subr.mxu0 0.0
      %1670 = vmatpush1.msra.mxu0 0.0
      %1671 = vmatprep.subr.mxu0 0.0
      %1672 = vmatpush1.msra.mxu0 0.0
      %1673 = vmatprep.subr.mxu0 0.0
      %1674 = vmatpush1.msra.mxu0 0.0
      %1675 = vmatprep.subr.mxu0 0.0
      %1676 = vmatpush1.msra.mxu0 0.0
      %1677 = vmatprep.subr.mxu0 0.0
      %1678 = vmatpush1.msra.mxu0 0.0
      %1679 = vmatprep.mubr.f32.mxu0 0.0
      %1680 = vmatmul.mubr.f32.gmra.mrb[0].mxu0 %v1592
      %v1681 = vpop.f32.mrb[0].mxu0
      %v1682 = vadd.f32 %v1545, %v1681
      %v1683 = vpop.f32.mrb[0].mxu0
      %v1684 = vadd.f32 %v1547, %v1683
      %1685 = vmatprep.mubr.f32.mxu0 0.0
      %1686 = vmatmul.mubr.f32.gmra.mrb[0].mxu0 %v1595
      %v1687 = vpop.f32.mrb[0].mxu0
      %v1688 = vadd.f32 %v1551, %v1687
      %v1689 = vpop.f32.mrb[0].mxu0
      %v1690 = vadd.f32 %v1553, %v1689
      %1691 = vmatprep.mubr.f32.mxu0 0.0
      %1692 = vmatmul.mubr.f32.gmra.mrb[0].mxu0 %v1598
      %v1693 = vpop.f32.mrb[0].mxu0
      %v1694 = vadd.f32 %v1557, %v1693
      %v1695 = vpop.f32.mrb[0].mxu0
      %v1696 = vadd.f32 %v1559, %v1695
      %1697 = vmatprep.mubr.f32.mxu0 0.0
      %1698 = vmatmul.mubr.f32.gmra.mrb[0].mxu0 %v1601
      %v1699 = vpop.f32.mrb[0].mxu0
      %v1700 = vadd.f32 %v1563, %v1699
      %v1701 = vpop.f32.mrb[0].mxu0
      %v1702 = vadd.f32 %v1565, %v1701
      %1703 = vmatprep.mubr.f32.mxu0 0.0
      %1704 = vmatmul.mubr.f32.gmra.mrb[0].mxu0 %v1604
      %v1705 = vpop.f32.mrb[0].mxu0
      %v1706 = vadd.f32 %v1569, %v1705
      %v1707 = vpop.f32.mrb[0].mxu0
      %v1708 = vadd.f32 %v1571, %v1707
      %1709 = vmatprep.mubr.f32.mxu0 0.0
      %1710 = vmatmul.mubr.f32.gmra.mrb[0].mxu0 %v1607
      %v1711 = vpop.f32.mrb[0].mxu0
      %v1712 = vadd.f32 %v1575, %v1711
      %v1713 = vpop.f32.mrb[0].mxu0
      %v1714 = vadd.f32 %v1577, %v1713
      %1715 = vmatprep.mubr.f32.mxu0 0.0
      %1716 = vmatmul.mubr.f32.gmra.mrb[0].mxu0 %v1610
      %v1717 = vpop.f32.mrb[0].mxu0
      %v1718 = vadd.f32 %v1581, %v1717
      %v1719 = vpop.f32.mrb[0].mxu0
      %v1720 = vadd.f32 %v1583, %v1719
      %1721 = vmatprep.mubr.f32.mxu0 0.0
      %1722 = vmatmul.mubr.f32.gmra.mrb[0].mxu0 %v1613
      %v1723 = vpop.f32.mrb[0].mxu0
      %v1724 = vadd.f32 %v1587, %v1723
      %v1725 = vpop.f32.mrb[0].mxu0
      %v1726 = vadd.f32 %v1589, %v1725
      %1727 = vdwg.mxu0
      %vm1728 = vcmp.le.s32.totalorder %v1021, 14
      %vm1729 = vcmp.le.s32.totalorder %v1022, 14
      %v1730 = vadd.s32 %v997, 4294967281
      %v1731 = vadd.s32 %v998, 4294967281
      %1732 = vrot.lane.b32.xlu0 %v980, 15
      %v1733 = vpop.permute.xlu0 %1732
      %1734 = vrot.lane.b32.xlu0 %v982, 15
      %v1735 = vpop.permute.xlu0 %1734
      %1736 = vrot.lane.b32.xlu0 %v984, 15
      %v1737 = vpop.permute.xlu0 %1736
      %1738 = vrot.lane.b32.xlu0 %v986, 15
      %v1739 = vpop.permute.xlu0 %1738
      %1740 = vrot.lane.b32.xlu0 %v988, 15
      %v1741 = vpop.permute.xlu0 %1740
      %1742 = vrot.lane.b32.xlu0 %v990, 15
      %v1743 = vpop.permute.xlu0 %1742
      %1744 = vrot.lane.b32.xlu0 %v992, 15
      %v1745 = vpop.permute.xlu0 %1744
      %1746 = vrot.lane.b32.xlu0 %v994, 15
      %v1747 = vpop.permute.xlu0 %1746
      %1748 = vrot.lane.b32.xlu0 %v981, 15
      %v1749 = vpop.permute.xlu0 %1748
      %1750 = vrot.lane.b32.xlu0 %v983, 15
      %v1751 = vpop.permute.xlu0 %1750
      %1752 = vrot.lane.b32.xlu0 %v985, 15
      %v1753 = vpop.permute.xlu0 %1752
      %1754 = vrot.lane.b32.xlu0 %v987, 15
      %v1755 = vpop.permute.xlu0 %1754
      %1756 = vrot.lane.b32.xlu0 %v989, 15
      %v1757 = vpop.permute.xlu0 %1756
      %1758 = vrot.lane.b32.xlu0 %v991, 15
      %v1759 = vpop.permute.xlu0 %1758
      %1760 = vrot.lane.b32.xlu0 %v993, 15
      %v1761 = vpop.permute.xlu0 %1760
      %1762 = vrot.lane.b32.xlu0 %v995, 15
      %v1763 = vpop.permute.xlu0 %1762
      %vm1764 = vcmp.lt.s32.totalorder %v997, 15
      %v1765 = vsel %vm1764, %v1733, %v1749
      %v1766 = vsel %vm1764, %v1735, %v1751
      %v1767 = vsel %vm1764, %v1737, %v1753
      %v1768 = vsel %vm1764, %v1739, %v1755
      %v1769 = vsel %vm1764, %v1741, %v1757
      %v1770 = vsel %vm1764, %v1743, %v1759
      %v1771 = vsel %vm1764, %v1745, %v1761
      %v1772 = vsel %vm1764, %v1747, %v1763
      %v1773 = vsel %vm1764, %v1749, %v1733
      %v1774 = vsel %vm1764, %v1751, %v1735
      %v1775 = vsel %vm1764, %v1753, %v1737
      %v1776 = vsel %vm1764, %v1755, %v1739
      %v1777 = vsel %vm1764, %v1757, %v1741
      %v1778 = vsel %vm1764, %v1759, %v1743
      %v1779 = vsel %vm1764, %v1761, %v1745
      %v1780 = vsel %vm1764, %v1763, %v1747
      %1781 = vrot.lane.b32.xlu0 %v997, 15
      %v1782 = vpop.permute.xlu0 %1781
      %1783 = vrot.lane.b32.xlu0 %v998, 15
      %v1784 = vpop.permute.xlu0 %1783
      %v1785 = vsel %vm1764, %v1782, %v1784
      %v1786 = vsel %vm1764, %v1784, %v1782
      %vm1787 = vcmp.eq.s32.totalorder %v1786, %v1730
      %vm1788 = vcmp.eq.s32.totalorder %v1785, %v1731
      %vm1789 = vmand %vm1787, %vm1728
      %vm1790 = vmand %vm1788, %vm1729
      %v1791 = vsel %vm1789, 1, 0
      %v1792 = vsel %vm1790, 1, 0
      %v1793 = vlaneseq
      %v1794 = vshrl.u32 %v1793, 7
      %v1795 = vsub.s32 0, %v1794
      %v1796 = vrot.slane %v1791, %v1795
      %v1797 = vlaneseq
      %v1798 = vshrl.u32 %v1797, 7
      %v1799 = vsub.s32 0, %v1798
      %v1800 = vrot.slane %v1792, %v1799
      %vm1801 = vcmp.eq.s32.totalorder %v1796, 1
      %vm1802 = vcmp.eq.s32.totalorder %v1800, 1
      %v1803 = vsel %vm1801, %v1773, 0.0
      %v1804 = vsel %vm1802, %v1765, 0.0
      %v1805 = vsel %vm1801, %v1774, 0.0
      %v1806 = vsel %vm1802, %v1766, 0.0
      %v1807 = vsel %vm1801, %v1775, 0.0
      %v1808 = vsel %vm1802, %v1767, 0.0
      %v1809 = vsel %vm1801, %v1776, 0.0
      %v1810 = vsel %vm1802, %v1768, 0.0
      %v1811 = vsel %vm1801, %v1777, 0.0
      %v1812 = vsel %vm1802, %v1769, 0.0
      %v1813 = vsel %vm1801, %v1778, 0.0
      %v1814 = vsel %vm1802, %v1770, 0.0
      %v1815 = vsel %vm1801, %v1779, 0.0
      %v1816 = vsel %vm1802, %v1771, 0.0
      %v1817 = vsel %vm1801, %v1780, 0.0
      %v1818 = vsel %vm1802, %v1772, 0.0
      %v1819 = vadd.f32 %v1803, 0.0
      %v1820 = vadd.f32 %v1804, 0.0
      %v1821 = vadd.f32 %v1805, 0.0
      %v1822 = vadd.f32 %v1806, 0.0
      %v1823 = vadd.f32 %v1807, 0.0
      %v1824 = vadd.f32 %v1808, 0.0
      %v1825 = vadd.f32 %v1809, 0.0
      %v1826 = vadd.f32 %v1810, 0.0
      %v1827 = vadd.f32 %v1811, 0.0
      %v1828 = vadd.f32 %v1812, 0.0
      %v1829 = vadd.f32 %v1813, 0.0
      %v1830 = vadd.f32 %v1814, 0.0
      %v1831 = vadd.f32 %v1815, 0.0
      %v1832 = vadd.f32 %v1816, 0.0
      %v1833 = vadd.f32 %v1817, 0.0
      %v1834 = vadd.f32 %v1818, 0.0
      %1835 = vrot.lane.b32.xlu0 %v980, 113
      %v1836 = vpop.permute.xlu0 %1835
      %1837 = vrot.lane.b32.xlu0 %v982, 113
      %v1838 = vpop.permute.xlu0 %1837
      %1839 = vrot.lane.b32.xlu0 %v984, 113
      %v1840 = vpop.permute.xlu0 %1839
      %1841 = vrot.lane.b32.xlu0 %v986, 113
      %v1842 = vpop.permute.xlu0 %1841
      %1843 = vrot.lane.b32.xlu0 %v988, 113
      %v1844 = vpop.permute.xlu0 %1843
      %1845 = vrot.lane.b32.xlu0 %v990, 113
      %v1846 = vpop.permute.xlu0 %1845
      %1847 = vrot.lane.b32.xlu0 %v992, 113
      %v1848 = vpop.permute.xlu0 %1847
      %1849 = vrot.lane.b32.xlu0 %v994, 113
      %v1850 = vpop.permute.xlu0 %1849
      %1851 = vrot.lane.b32.xlu0 %v981, 113
      %v1852 = vpop.permute.xlu0 %1851
      %1853 = vrot.lane.b32.xlu0 %v983, 113
      %v1854 = vpop.permute.xlu0 %1853
      %1855 = vrot.lane.b32.xlu0 %v985, 113
      %v1856 = vpop.permute.xlu0 %1855
      %1857 = vrot.lane.b32.xlu0 %v987, 113
      %v1858 = vpop.permute.xlu0 %1857
      %1859 = vrot.lane.b32.xlu0 %v989, 113
      %v1860 = vpop.permute.xlu0 %1859
      %1861 = vrot.lane.b32.xlu0 %v991, 113
      %v1862 = vpop.permute.xlu0 %1861
      %1863 = vrot.lane.b32.xlu0 %v993, 113
      %v1864 = vpop.permute.xlu0 %1863
      %1865 = vrot.lane.b32.xlu0 %v995, 113
      %v1866 = vpop.permute.xlu0 %1865
      %vm1867 = vcmp.lt.s32.totalorder %v997, 113
      %v1868 = vsel %vm1867, %v1836, %v1852
      %v1869 = vsel %vm1867, %v1838, %v1854
      %v1870 = vsel %vm1867, %v1840, %v1856
      %v1871 = vsel %vm1867, %v1842, %v1858
      %v1872 = vsel %vm1867, %v1844, %v1860
      %v1873 = vsel %vm1867, %v1846, %v1862
      %v1874 = vsel %vm1867, %v1848, %v1864
      %v1875 = vsel %vm1867, %v1850, %v1866
      %v1876 = vsel %vm1867, %v1852, %v1836
      %v1877 = vsel %vm1867, %v1854, %v1838
      %v1878 = vsel %vm1867, %v1856, %v1840
      %v1879 = vsel %vm1867, %v1858, %v1842
      %v1880 = vsel %vm1867, %v1860, %v1844
      %v1881 = vsel %vm1867, %v1862, %v1846
      %v1882 = vsel %vm1867, %v1864, %v1848
      %v1883 = vsel %vm1867, %v1866, %v1850
      %1884 = vrot.lane.b32.xlu0 %v997, 113
      %v1885 = vpop.permute.xlu0 %1884
      %1886 = vrot.lane.b32.xlu0 %v998, 113
      %v1887 = vpop.permute.xlu0 %1886
      %v1888 = vsel %vm1867, %v1885, %v1887
      %v1889 = vsel %vm1867, %v1887, %v1885
      %vm1890 = vcmp.eq.s32.totalorder %v1888, %v1730
      %vm1891 = vcmp.eq.s32.totalorder %v1889, %v1731
      %vm1892 = vmand %vm1890, %vm1728
      %vm1893 = vmand %vm1891, %vm1729
      %v1894 = vsel %vm1892, 1, 0
      %v1895 = vsel %vm1893, 1, 0
      %v1896 = vlaneseq
      %v1897 = vshrl.u32 %v1896, 7
      %v1898 = vsub.s32 0, %v1897
      %v1899 = vrot.slane %v1894, %v1898
      %v1900 = vlaneseq
      %v1901 = vshrl.u32 %v1900, 7
      %v1902 = vsub.s32 0, %v1901
      %v1903 = vrot.slane %v1895, %v1902
      %vm1904 = vcmp.eq.s32.totalorder %v1899, 1
      %vm1905 = vcmp.eq.s32.totalorder %v1903, 1
      %v1906 = vsel %vm1904, %v1868, 0.0
      %v1907 = vsel %vm1905, %v1876, 0.0
      %v1908 = vsel %vm1904, %v1869, 0.0
      %v1909 = vsel %vm1905, %v1877, 0.0
      %v1910 = vsel %vm1904, %v1870, 0.0
      %v1911 = vsel %vm1905, %v1878, 0.0
      %v1912 = vsel %vm1904, %v1871, 0.0
      %v1913 = vsel %vm1905, %v1879, 0.0
      %v1914 = vsel %vm1904, %v1872, 0.0
      %v1915 = vsel %vm1905, %v1880, 0.0
      %v1916 = vsel %vm1904, %v1873, 0.0
      %v1917 = vsel %vm1905, %v1881, 0.0
      %v1918 = vsel %vm1904, %v1874, 0.0
      %v1919 = vsel %vm1905, %v1882, 0.0
      %v1920 = vsel %vm1904, %v1875, 0.0
      %v1921 = vsel %vm1905, %v1883, 0.0
      %v1922 = vadd.f32 %v1819, %v1906
      %v1923 = vadd.f32 %v1820, %v1907
      %v1924 = vadd.f32 %v1821, %v1908
      %v1925 = vadd.f32 %v1822, %v1909
      %v1926 = vadd.f32 %v1823, %v1910
      %v1927 = vadd.f32 %v1824, %v1911
      %v1928 = vadd.f32 %v1825, %v1912
      %v1929 = vadd.f32 %v1826, %v1913
      %v1930 = vadd.f32 %v1827, %v1914
      %v1931 = vadd.f32 %v1828, %v1915
      %v1932 = vadd.f32 %v1829, %v1916
      %v1933 = vadd.f32 %v1830, %v1917
      %v1934 = vadd.f32 %v1831, %v1918
      %v1935 = vadd.f32 %v1832, %v1919
      %v1936 = vadd.f32 %v1833, %v1920
      %v1937 = vadd.f32 %v1834, %v1921
      %s1938 = scalar_lea.vmem %s5, 128
      %v1939 = vld [vmem:[%s1938] sm:$0xff]
      %v1940 = vld [vmem:[%s1938 + $0x8] sm:$0xff]
      %v1941 = vld [vmem:[%s1938 + $0x10] sm:$0xff]
      %v1942 = vld [vmem:[%s1938 + $0x18] sm:$0xff]
      %v1943 = vld [vmem:[%s1938 + $0x20] sm:$0xff]
      %v1944 = vld [vmem:[%s1938 + $0x28] sm:$0xff]
      %v1945 = vld [vmem:[%s1938 + $0x30] sm:$0xff]
      %v1946 = vld [vmem:[%s1938 + $0x38] sm:$0xff]
      %v1948 = vsel %vm377, %v1939, 0
      %v1951 = vsel %vm377, %v1940, 0
      %v1954 = vsel %vm377, %v1941, 0
      %v1957 = vsel %vm377, %v1942, 0
      %v1960 = vsel %vm377, %v1943, 0
      %v1963 = vsel %vm377, %v1944, 0
      %v1966 = vsel %vm377, %v1945, 0
      %v1969 = vsel %vm377, %v1946, 0
      %1971 = vmatprep.subr.mxu0 %v1923
      %1972 = vmatpush1.msra.mxu0 %v1922
      %1973 = vmatprep.subr.mxu0 %v1925
      %1974 = vmatpush1.msra.mxu0 %v1924
      %1975 = vmatprep.subr.mxu0 %v1927
      %1976 = vmatpush1.msra.mxu0 %v1926
      %1977 = vmatprep.subr.mxu0 %v1929
      %1978 = vmatpush1.msra.mxu0 %v1928
      %1979 = vmatprep.subr.mxu0 %v1931
      %1980 = vmatpush1.msra.mxu0 %v1930
      %1981 = vmatprep.subr.mxu0 %v1933
      %1982 = vmatpush1.msra.mxu0 %v1932
      %1983 = vmatprep.subr.mxu0 %v1935
      %1984 = vmatpush1.msra.mxu0 %v1934
      %1985 = vmatprep.subr.mxu0 %v1937
      %1986 = vmatpush1.msra.mxu0 %v1936
      %1987 = vmatprep.subr.mxu0 0.0
      %1988 = vmatpush1.msra.mxu0 0.0
      %1989 = vmatprep.subr.mxu0 0.0
      %1990 = vmatpush1.msra.mxu0 0.0
      %1991 = vmatprep.subr.mxu0 0.0
      %1992 = vmatpush1.msra.mxu0 0.0
      %1993 = vmatprep.subr.mxu0 0.0
      %1994 = vmatpush1.msra.mxu0 0.0
      %1995 = vmatprep.subr.mxu0 0.0
      %1996 = vmatpush1.msra.mxu0 0.0
      %1997 = vmatprep.subr.mxu0 0.0
      %1998 = vmatpush1.msra.mxu0 0.0
      %1999 = vmatprep.subr.mxu0 0.0
      %2000 = vmatpush1.msra.mxu0 0.0
      %2001 = vmatprep.subr.mxu0 0.0
      %2002 = vmatpush1.msra.mxu0 0.0
      %2003 = vmatprep.subr.mxu0 0.0
      %2004 = vmatpush1.msra.mxu0 0.0
      %2005 = vmatprep.subr.mxu0 0.0
      %2006 = vmatpush1.msra.mxu0 0.0
      %2007 = vmatprep.subr.mxu0 0.0
      %2008 = vmatpush1.msra.mxu0 0.0
      %2009 = vmatprep.subr.mxu0 0.0
      %2010 = vmatpush1.msra.mxu0 0.0
      %2011 = vmatprep.subr.mxu0 0.0
      %2012 = vmatpush1.msra.mxu0 0.0
      %2013 = vmatprep.subr.mxu0 0.0
      %2014 = vmatpush1.msra.mxu0 0.0
      %2015 = vmatprep.subr.mxu0 0.0
      %2016 = vmatpush1.msra.mxu0 0.0
      %2017 = vmatprep.subr.mxu0 0.0
      %2018 = vmatpush1.msra.mxu0 0.0
      %2019 = vmatprep.subr.mxu0 0.0
      %2020 = vmatpush1.msra.mxu0 0.0
      %2021 = vmatprep.subr.mxu0 0.0
      %2022 = vmatpush1.msra.mxu0 0.0
      %2023 = vmatprep.subr.mxu0 0.0
      %2024 = vmatpush1.msra.mxu0 0.0
      %2025 = vmatprep.subr.mxu0 0.0
      %2026 = vmatpush1.msra.mxu0 0.0
      %2027 = vmatprep.subr.mxu0 0.0
      %2028 = vmatpush1.msra.mxu0 0.0
      %2029 = vmatprep.subr.mxu0 0.0
      %2030 = vmatpush1.msra.mxu0 0.0
      %2031 = vmatprep.subr.mxu0 0.0
      %2032 = vmatpush1.msra.mxu0 0.0
      %2033 = vmatprep.subr.mxu0 0.0
      %2034 = vmatpush1.msra.mxu0 0.0
      %2035 = vmatprep.mubr.f32.mxu0 0.0
      %2036 = vmatmul.mubr.f32.gmra.mrb[0].mxu0 %v1948
      %v2037 = vpop.f32.mrb[0].mxu0
      %v2038 = vadd.f32 0.0, %v2037
      %v2039 = vpop.f32.mrb[0].mxu0
      %v2040 = vadd.f32 0.0, %v2039
      %2041 = vmatprep.mubr.f32.mxu0 0.0
      %2042 = vmatmul.mubr.f32.gmra.mrb[0].mxu0 %v1951
      %v2043 = vpop.f32.mrb[0].mxu0
      %v2044 = vadd.f32 0.0, %v2043
      %v2045 = vpop.f32.mrb[0].mxu0
      %v2046 = vadd.f32 0.0, %v2045
      %2047 = vmatprep.mubr.f32.mxu0 0.0
      %2048 = vmatmul.mubr.f32.gmra.mrb[0].mxu0 %v1954
      %v2049 = vpop.f32.mrb[0].mxu0
      %v2050 = vadd.f32 0.0, %v2049
      %v2051 = vpop.f32.mrb[0].mxu0
      %v2052 = vadd.f32 0.0, %v2051
      %2053 = vmatprep.mubr.f32.mxu0 0.0
      %2054 = vmatmul.mubr.f32.gmra.mrb[0].mxu0 %v1957
      %v2055 = vpop.f32.mrb[0].mxu0
      %v2056 = vadd.f32 0.0, %v2055
      %v2057 = vpop.f32.mrb[0].mxu0
      %v2058 = vadd.f32 0.0, %v2057
      %2059 = vmatprep.mubr.f32.mxu0 0.0
      %2060 = vmatmul.mubr.f32.gmra.mrb[0].mxu0 %v1960
      %v2061 = vpop.f32.mrb[0].mxu0
      %v2062 = vadd.f32 0.0, %v2061
      %v2063 = vpop.f32.mrb[0].mxu0
      %v2064 = vadd.f32 0.0, %v2063
      %2065 = vmatprep.mubr.f32.mxu0 0.0
      %2066 = vmatmul.mubr.f32.gmra.mrb[0].mxu0 %v1963
      %v2067 = vpop.f32.mrb[0].mxu0
      %v2068 = vadd.f32 0.0, %v2067
      %v2069 = vpop.f32.mrb[0].mxu0
      %v2070 = vadd.f32 0.0, %v2069
      %2071 = vmatprep.mubr.f32.mxu0 0.0
      %2072 = vmatmul.mubr.f32.gmra.mrb[0].mxu0 %v1966
      %v2073 = vpop.f32.mrb[0].mxu0
      %v2074 = vadd.f32 0.0, %v2073
      %v2075 = vpop.f32.mrb[0].mxu0
      %v2076 = vadd.f32 0.0, %v2075
      %2077 = vmatprep.mubr.f32.mxu0 0.0
      %2078 = vmatmul.mubr.f32.gmra.mrb[0].mxu0 %v1969
      %v2079 = vpop.f32.mrb[0].mxu0
      %v2080 = vadd.f32 0.0, %v2079
      %v2081 = vpop.f32.mrb[0].mxu0
      %v2082 = vadd.f32 0.0, %v2081
      %2083 = vdwg.mxu0
      %v2084 = vadd.f32 %v1682, %v2038
      %v2085 = vadd.f32 %v1684, %v2040
      %v2086 = vadd.f32 %v1688, %v2044
      %v2087 = vadd.f32 %v1690, %v2046
      %v2088 = vadd.f32 %v1694, %v2050
      %v2089 = vadd.f32 %v1696, %v2052
      %v2090 = vadd.f32 %v1700, %v2056
      %v2091 = vadd.f32 %v1702, %v2058
      %v2092 = vadd.f32 %v1706, %v2062
      %v2093 = vadd.f32 %v1708, %v2064
      %v2094 = vadd.f32 %v1712, %v2068
      %v2095 = vadd.f32 %v1714, %v2070
      %v2096 = vadd.f32 %v1718, %v2074
      %v2097 = vadd.f32 %v1720, %v2076
      %v2098 = vadd.f32 %v1724, %v2080
      %v2099 = vadd.f32 %v1726, %v2082
      %v2100 = vadd.s32 %v997, 4294967295
      %v2101 = vadd.s32 %v998, 4294967295
      %2102 = vrot.lane.b32.xlu0 %v980, 1
      %v2103 = vpop.permute.xlu0 %2102
      %2104 = vrot.lane.b32.xlu0 %v982, 1
      %v2105 = vpop.permute.xlu0 %2104
      %2106 = vrot.lane.b32.xlu0 %v984, 1
      %v2107 = vpop.permute.xlu0 %2106
      %2108 = vrot.lane.b32.xlu0 %v986, 1
      %v2109 = vpop.permute.xlu0 %2108
      %2110 = vrot.lane.b32.xlu0 %v988, 1
      %v2111 = vpop.permute.xlu0 %2110
      %2112 = vrot.lane.b32.xlu0 %v990, 1
      %v2113 = vpop.permute.xlu0 %2112
      %2114 = vrot.lane.b32.xlu0 %v992, 1
      %v2115 = vpop.permute.xlu0 %2114
      %2116 = vrot.lane.b32.xlu0 %v994, 1
      %v2117 = vpop.permute.xlu0 %2116
      %2118 = vrot.lane.b32.xlu0 %v981, 1
      %v2119 = vpop.permute.xlu0 %2118
      %2120 = vrot.lane.b32.xlu0 %v983, 1
      %v2121 = vpop.permute.xlu0 %2120
      %2122 = vrot.lane.b32.xlu0 %v985, 1
      %v2123 = vpop.permute.xlu0 %2122
      %2124 = vrot.lane.b32.xlu0 %v987, 1
      %v2125 = vpop.permute.xlu0 %2124
      %2126 = vrot.lane.b32.xlu0 %v989, 1
      %v2127 = vpop.permute.xlu0 %2126
      %2128 = vrot.lane.b32.xlu0 %v991, 1
      %v2129 = vpop.permute.xlu0 %2128
      %2130 = vrot.lane.b32.xlu0 %v993, 1
      %v2131 = vpop.permute.xlu0 %2130
      %2132 = vrot.lane.b32.xlu0 %v995, 1
      %v2133 = vpop.permute.xlu0 %2132
      %vm2134 = vcmp.lt.s32.totalorder %v997, 1
      %v2135 = vsel %vm2134, %v2103, %v2119
      %v2136 = vsel %vm2134, %v2105, %v2121
      %v2137 = vsel %vm2134, %v2107, %v2123
      %v2138 = vsel %vm2134, %v2109, %v2125
      %v2139 = vsel %vm2134, %v2111, %v2127
      %v2140 = vsel %vm2134, %v2113, %v2129
      %v2141 = vsel %vm2134, %v2115, %v2131
      %v2142 = vsel %vm2134, %v2117, %v2133
      %v2143 = vsel %vm2134, %v2119, %v2103
      %v2144 = vsel %vm2134, %v2121, %v2105
      %v2145 = vsel %vm2134, %v2123, %v2107
      %v2146 = vsel %vm2134, %v2125, %v2109
      %v2147 = vsel %vm2134, %v2127, %v2111
      %v2148 = vsel %vm2134, %v2129, %v2113
      %v2149 = vsel %vm2134, %v2131, %v2115
      %v2150 = vsel %vm2134, %v2133, %v2117
      %2151 = vrot.lane.b32.xlu0 %v997, 1
      %v2152 = vpop.permute.xlu0 %2151
      %2153 = vrot.lane.b32.xlu0 %v998, 1
      %v2154 = vpop.permute.xlu0 %2153
      %v2155 = vsel %vm2134, %v2152, %v2154
      %v2156 = vsel %vm2134, %v2154, %v2152
      %vm2157 = vcmp.eq.s32.totalorder %v2156, %v2100
      %vm2158 = vcmp.eq.s32.totalorder %v2155, %v2101
      %vm2159 = vmand %vm2157, %vm1023
      %vm2160 = vmand %vm2158, %vm1024
      %v2161 = vsel %vm2159, 1, 0
      %v2162 = vsel %vm2160, 1, 0
      %v2163 = vlaneseq
      %v2164 = vshrl.u32 %v2163, 7
      %v2165 = vsub.s32 0, %v2164
      %v2166 = vrot.slane %v2161, %v2165
      %v2167 = vlaneseq
      %v2168 = vshrl.u32 %v2167, 7
      %v2169 = vsub.s32 0, %v2168
      %v2170 = vrot.slane %v2162, %v2169
      %vm2171 = vcmp.eq.s32.totalorder %v2166, 1
      %vm2172 = vcmp.eq.s32.totalorder %v2170, 1
      %v2173 = vsel %vm2171, %v2143, 0.0
      %v2174 = vsel %vm2172, %v2135, 0.0
      %v2175 = vsel %vm2171, %v2144, 0.0
      %v2176 = vsel %vm2172, %v2136, 0.0
      %v2177 = vsel %vm2171, %v2145, 0.0
      %v2178 = vsel %vm2172, %v2137, 0.0
      %v2179 = vsel %vm2171, %v2146, 0.0
      %v2180 = vsel %vm2172, %v2138, 0.0
      %v2181 = vsel %vm2171, %v2147, 0.0
      %v2182 = vsel %vm2172, %v2139, 0.0
      %v2183 = vsel %vm2171, %v2148, 0.0
      %v2184 = vsel %vm2172, %v2140, 0.0
      %v2185 = vsel %vm2171, %v2149, 0.0
      %v2186 = vsel %vm2172, %v2141, 0.0
      %v2187 = vsel %vm2171, %v2150, 0.0
      %v2188 = vsel %vm2172, %v2142, 0.0
      %v2189 = vadd.f32 %v2173, 0.0
      %v2190 = vadd.f32 %v2174, 0.0
      %v2191 = vadd.f32 %v2175, 0.0
      %v2192 = vadd.f32 %v2176, 0.0
      %v2193 = vadd.f32 %v2177, 0.0
      %v2194 = vadd.f32 %v2178, 0.0
      %v2195 = vadd.f32 %v2179, 0.0
      %v2196 = vadd.f32 %v2180, 0.0
      %v2197 = vadd.f32 %v2181, 0.0
      %v2198 = vadd.f32 %v2182, 0.0
      %v2199 = vadd.f32 %v2183, 0.0
      %v2200 = vadd.f32 %v2184, 0.0
      %v2201 = vadd.f32 %v2185, 0.0
      %v2202 = vadd.f32 %v2186, 0.0
      %v2203 = vadd.f32 %v2187, 0.0
      %v2204 = vadd.f32 %v2188, 0.0
      %2205 = vrot.lane.b32.xlu0 %v980, 127
      %v2206 = vpop.permute.xlu0 %2205
      %2207 = vrot.lane.b32.xlu0 %v982, 127
      %v2208 = vpop.permute.xlu0 %2207
      %2209 = vrot.lane.b32.xlu0 %v984, 127
      %v2210 = vpop.permute.xlu0 %2209
      %2211 = vrot.lane.b32.xlu0 %v986, 127
      %v2212 = vpop.permute.xlu0 %2211
      %2213 = vrot.lane.b32.xlu0 %v988, 127
      %v2214 = vpop.permute.xlu0 %2213
      %2215 = vrot.lane.b32.xlu0 %v990, 127
      %v2216 = vpop.permute.xlu0 %2215
      %2217 = vrot.lane.b32.xlu0 %v992, 127
      %v2218 = vpop.permute.xlu0 %2217
      %2219 = vrot.lane.b32.xlu0 %v994, 127
      %v2220 = vpop.permute.xlu0 %2219
      %2221 = vrot.lane.b32.xlu0 %v981, 127
      %v2222 = vpop.permute.xlu0 %2221
      %2223 = vrot.lane.b32.xlu0 %v983, 127
      %v2224 = vpop.permute.xlu0 %2223
      %2225 = vrot.lane.b32.xlu0 %v985, 127
      %v2226 = vpop.permute.xlu0 %2225
      %2227 = vrot.lane.b32.xlu0 %v987, 127
      %v2228 = vpop.permute.xlu0 %2227
      %2229 = vrot.lane.b32.xlu0 %v989, 127
      %v2230 = vpop.permute.xlu0 %2229
      %2231 = vrot.lane.b32.xlu0 %v991, 127
      %v2232 = vpop.permute.xlu0 %2231
      %2233 = vrot.lane.b32.xlu0 %v993, 127
      %v2234 = vpop.permute.xlu0 %2233
      %2235 = vrot.lane.b32.xlu0 %v995, 127
      %v2236 = vpop.permute.xlu0 %2235
      %vm2237 = vcmp.lt.s32.totalorder %v997, 127
      %v2238 = vsel %vm2237, %v2206, %v2222
      %v2239 = vsel %vm2237, %v2208, %v2224
      %v2240 = vsel %vm2237, %v2210, %v2226
      %v2241 = vsel %vm2237, %v2212, %v2228
      %v2242 = vsel %vm2237, %v2214, %v2230
      %v2243 = vsel %vm2237, %v2216, %v2232
      %v2244 = vsel %vm2237, %v2218, %v2234
      %v2245 = vsel %vm2237, %v2220, %v2236
      %v2246 = vsel %vm2237, %v2222, %v2206
      %v2247 = vsel %vm2237, %v2224, %v2208
      %v2248 = vsel %vm2237, %v2226, %v2210
      %v2249 = vsel %vm2237, %v2228, %v2212
      %v2250 = vsel %vm2237, %v2230, %v2214
      %v2251 = vsel %vm2237, %v2232, %v2216
      %v2252 = vsel %vm2237, %v2234, %v2218
      %v2253 = vsel %vm2237, %v2236, %v2220
      %2254 = vrot.lane.b32.xlu0 %v997, 127
      %v2255 = vpop.permute.xlu0 %2254
      %2256 = vrot.lane.b32.xlu0 %v998, 127
      %v2257 = vpop.permute.xlu0 %2256
      %v2258 = vsel %vm2237, %v2255, %v2257
      %v2259 = vsel %vm2237, %v2257, %v2255
      %vm2260 = vcmp.eq.s32.totalorder %v2258, %v2100
      %vm2261 = vcmp.eq.s32.totalorder %v2259, %v2101
      %vm2262 = vmand %vm2260, %vm1023
      %vm2263 = vmand %vm2261, %vm1024
      %v2264 = vsel %vm2262, 1, 0
      %v2265 = vsel %vm2263, 1, 0
      %v2266 = vlaneseq
      %v2267 = vshrl.u32 %v2266, 7
      %v2268 = vsub.s32 0, %v2267
      %v2269 = vrot.slane %v2264, %v2268
      %v2270 = vlaneseq
      %v2271 = vshrl.u32 %v2270, 7
      %v2272 = vsub.s32 0, %v2271
      %v2273 = vrot.slane %v2265, %v2272
      %vm2274 = vcmp.eq.s32.totalorder %v2269, 1
      %vm2275 = vcmp.eq.s32.totalorder %v2273, 1
      %v2276 = vsel %vm2274, %v2238, 0.0
      %v2277 = vsel %vm2275, %v2246, 0.0
      %v2278 = vsel %vm2274, %v2239, 0.0
      %v2279 = vsel %vm2275, %v2247, 0.0
      %v2280 = vsel %vm2274, %v2240, 0.0
      %v2281 = vsel %vm2275, %v2248, 0.0
      %v2282 = vsel %vm2274, %v2241, 0.0
      %v2283 = vsel %vm2275, %v2249, 0.0
      %v2284 = vsel %vm2274, %v2242, 0.0
      %v2285 = vsel %vm2275, %v2250, 0.0
      %v2286 = vsel %vm2274, %v2243, 0.0
      %v2287 = vsel %vm2275, %v2251, 0.0
      %v2288 = vsel %vm2274, %v2244, 0.0
      %v2289 = vsel %vm2275, %v2252, 0.0
      %v2290 = vsel %vm2274, %v2245, 0.0
      %v2291 = vsel %vm2275, %v2253, 0.0
      %v2292 = vadd.f32 %v2189, %v2276
      %v2293 = vadd.f32 %v2190, %v2277
      %v2294 = vadd.f32 %v2191, %v2278
      %v2295 = vadd.f32 %v2192, %v2279
      %v2296 = vadd.f32 %v2193, %v2280
      %v2297 = vadd.f32 %v2194, %v2281
      %v2298 = vadd.f32 %v2195, %v2282
      %v2299 = vadd.f32 %v2196, %v2283
      %v2300 = vadd.f32 %v2197, %v2284
      %v2301 = vadd.f32 %v2198, %v2285
      %v2302 = vadd.f32 %v2199, %v2286
      %v2303 = vadd.f32 %v2200, %v2287
      %v2304 = vadd.f32 %v2201, %v2288
      %v2305 = vadd.f32 %v2202, %v2289
      %v2306 = vadd.f32 %v2203, %v2290
      %v2307 = vadd.f32 %v2204, %v2291
      %s2308 = scalar_lea.vmem %s5, 192
      %v2309 = vld [vmem:[%s2308] sm:$0xff]
      %v2310 = vld [vmem:[%s2308 + $0x8] sm:$0xff]
      %v2311 = vld [vmem:[%s2308 + $0x10] sm:$0xff]
      %v2312 = vld [vmem:[%s2308 + $0x18] sm:$0xff]
      %v2313 = vld [vmem:[%s2308 + $0x20] sm:$0xff]
      %v2314 = vld [vmem:[%s2308 + $0x28] sm:$0xff]
      %v2315 = vld [vmem:[%s2308 + $0x30] sm:$0xff]
      %v2316 = vld [vmem:[%s2308 + $0x38] sm:$0xff]
      %v2318 = vsel %vm377, %v2309, 0
      %v2321 = vsel %vm377, %v2310, 0
      %v2324 = vsel %vm377, %v2311, 0
      %v2327 = vsel %vm377, %v2312, 0
      %v2330 = vsel %vm377, %v2313, 0
      %v2333 = vsel %vm377, %v2314, 0
      %v2336 = vsel %vm377, %v2315, 0
      %v2339 = vsel %vm377, %v2316, 0
      %2341 = vmatprep.subr.mxu0 %v2293
      %2342 = vmatpush1.msra.mxu0 %v2292
      %2343 = vmatprep.subr.mxu0 %v2295
      %2344 = vmatpush1.msra.mxu0 %v2294
      %2345 = vmatprep.subr.mxu0 %v2297
      %2346 = vmatpush1.msra.mxu0 %v2296
      %2347 = vmatprep.subr.mxu0 %v2299
      %2348 = vmatpush1.msra.mxu0 %v2298
      %2349 = vmatprep.subr.mxu0 %v2301
      %2350 = vmatpush1.msra.mxu0 %v2300
      %2351 = vmatprep.subr.mxu0 %v2303
      %2352 = vmatpush1.msra.mxu0 %v2302
      %2353 = vmatprep.subr.mxu0 %v2305
      %2354 = vmatpush1.msra.mxu0 %v2304
      %2355 = vmatprep.subr.mxu0 %v2307
      %2356 = vmatpush1.msra.mxu0 %v2306
      %2357 = vmatprep.subr.mxu0 0.0
      %2358 = vmatpush1.msra.mxu0 0.0
      %2359 = vmatprep.subr.mxu0 0.0
      %2360 = vmatpush1.msra.mxu0 0.0
      %2361 = vmatprep.subr.mxu0 0.0
      %2362 = vmatpush1.msra.mxu0 0.0
      %2363 = vmatprep.subr.mxu0 0.0
      %2364 = vmatpush1.msra.mxu0 0.0
      %2365 = vmatprep.subr.mxu0 0.0
      %2366 = vmatpush1.msra.mxu0 0.0
      %2367 = vmatprep.subr.mxu0 0.0
      %2368 = vmatpush1.msra.mxu0 0.0
      %2369 = vmatprep.subr.mxu0 0.0
      %2370 = vmatpush1.msra.mxu0 0.0
      %2371 = vmatprep.subr.mxu0 0.0
      %2372 = vmatpush1.msra.mxu0 0.0
      %2373 = vmatprep.subr.mxu0 0.0
      %2374 = vmatpush1.msra.mxu0 0.0
      %2375 = vmatprep.subr.mxu0 0.0
      %2376 = vmatpush1.msra.mxu0 0.0
      %2377 = vmatprep.subr.mxu0 0.0
      %2378 = vmatpush1.msra.mxu0 0.0
      %2379 = vmatprep.subr.mxu0 0.0
      %2380 = vmatpush1.msra.mxu0 0.0
      %2381 = vmatprep.subr.mxu0 0.0
      %2382 = vmatpush1.msra.mxu0 0.0
      %2383 = vmatprep.subr.mxu0 0.0
      %2384 = vmatpush1.msra.mxu0 0.0
      %2385 = vmatprep.subr.mxu0 0.0
      %2386 = vmatpush1.msra.mxu0 0.0
      %2387 = vmatprep.subr.mxu0 0.0
      %2388 = vmatpush1.msra.mxu0 0.0
      %2389 = vmatprep.subr.mxu0 0.0
      %2390 = vmatpush1.msra.mxu0 0.0
      %2391 = vmatprep.subr.mxu0 0.0
      %2392 = vmatpush1.msra.mxu0 0.0
      %2393 = vmatprep.subr.mxu0 0.0
      %2394 = vmatpush1.msra.mxu0 0.0
      %2395 = vmatprep.subr.mxu0 0.0
      %2396 = vmatpush1.msra.mxu0 0.0
      %2397 = vmatprep.subr.mxu0 0.0
      %2398 = vmatpush1.msra.mxu0 0.0
      %2399 = vmatprep.subr.mxu0 0.0
      %2400 = vmatpush1.msra.mxu0 0.0
      %2401 = vmatprep.subr.mxu0 0.0
      %2402 = vmatpush1.msra.mxu0 0.0
      %2403 = vmatprep.subr.mxu0 0.0
      %2404 = vmatpush1.msra.mxu0 0.0
      %2405 = vmatprep.mubr.f32.mxu0 0.0
      %2406 = vmatmul.mubr.f32.gmra.mrb[0].mxu0 %v2318
      %v2407 = vpop.f32.mrb[0].mxu0
      %v2408 = vadd.f32 0.0, %v2407
      %v2409 = vpop.f32.mrb[0].mxu0
      %v2410 = vadd.f32 0.0, %v2409
      %2411 = vmatprep.mubr.f32.mxu0 0.0
      %2412 = vmatmul.mubr.f32.gmra.mrb[0].mxu0 %v2321
      %v2413 = vpop.f32.mrb[0].mxu0
      %v2414 = vadd.f32 0.0, %v2413
      %v2415 = vpop.f32.mrb[0].mxu0
      %v2416 = vadd.f32 0.0, %v2415
      %2417 = vmatprep.mubr.f32.mxu0 0.0
      %2418 = vmatmul.mubr.f32.gmra.mrb[0].mxu0 %v2324
      %v2419 = vpop.f32.mrb[0].mxu0
      %v2420 = vadd.f32 0.0, %v2419
      %v2421 = vpop.f32.mrb[0].mxu0
      %v2422 = vadd.f32 0.0, %v2421
      %2423 = vmatprep.mubr.f32.mxu0 0.0
      %2424 = vmatmul.mubr.f32.gmra.mrb[0].mxu0 %v2327
      %v2425 = vpop.f32.mrb[0].mxu0
      %v2426 = vadd.f32 0.0, %v2425
      %v2427 = vpop.f32.mrb[0].mxu0
      %v2428 = vadd.f32 0.0, %v2427
      %2429 = vmatprep.mubr.f32.mxu0 0.0
      %2430 = vmatmul.mubr.f32.gmra.mrb[0].mxu0 %v2330
      %v2431 = vpop.f32.mrb[0].mxu0
      %v2432 = vadd.f32 0.0, %v2431
      %v2433 = vpop.f32.mrb[0].mxu0
      %v2434 = vadd.f32 0.0, %v2433
      %2435 = vmatprep.mubr.f32.mxu0 0.0
      %2436 = vmatmul.mubr.f32.gmra.mrb[0].mxu0 %v2333
      %v2437 = vpop.f32.mrb[0].mxu0
      %v2438 = vadd.f32 0.0, %v2437
      %v2439 = vpop.f32.mrb[0].mxu0
      %v2440 = vadd.f32 0.0, %v2439
      %2441 = vmatprep.mubr.f32.mxu0 0.0
      %2442 = vmatmul.mubr.f32.gmra.mrb[0].mxu0 %v2336
      %v2443 = vpop.f32.mrb[0].mxu0
      %v2444 = vadd.f32 0.0, %v2443
      %v2445 = vpop.f32.mrb[0].mxu0
      %v2446 = vadd.f32 0.0, %v2445
      %2447 = vmatprep.mubr.f32.mxu0 0.0
      %2448 = vmatmul.mubr.f32.gmra.mrb[0].mxu0 %v2339
      %v2449 = vpop.f32.mrb[0].mxu0
      %v2450 = vadd.f32 0.0, %v2449
      %v2451 = vpop.f32.mrb[0].mxu0
      %v2452 = vadd.f32 0.0, %v2451
      %2453 = vdwg.mxu0
      %v2454 = vadd.f32 %v2084, %v2408
      %v2455 = vadd.f32 %v2085, %v2410
      %v2456 = vadd.f32 %v2086, %v2414
      %v2457 = vadd.f32 %v2087, %v2416
      %v2458 = vadd.f32 %v2088, %v2420
      %v2459 = vadd.f32 %v2089, %v2422
      %v2460 = vadd.f32 %v2090, %v2426
      %v2461 = vadd.f32 %v2091, %v2428
      %v2462 = vadd.f32 %v2092, %v2432
      %v2463 = vadd.f32 %v2093, %v2434
      %v2464 = vadd.f32 %v2094, %v2438
      %v2465 = vadd.f32 %v2095, %v2440
      %v2466 = vadd.f32 %v2096, %v2444
      %v2467 = vadd.f32 %v2097, %v2446
      %v2468 = vadd.f32 %v2098, %v2450
      %v2469 = vadd.f32 %v2099, %v2452
      %s2470 = scalar_lea.vmem %s5, 256
      %v2471 = vld [vmem:[%s2470] sm:$0xff]
      %v2472 = vld [vmem:[%s2470 + $0x8] sm:$0xff]
      %v2473 = vld [vmem:[%s2470 + $0x10] sm:$0xff]
      %v2474 = vld [vmem:[%s2470 + $0x18] sm:$0xff]
      %v2475 = vld [vmem:[%s2470 + $0x20] sm:$0xff]
      %v2476 = vld [vmem:[%s2470 + $0x28] sm:$0xff]
      %v2477 = vld [vmem:[%s2470 + $0x30] sm:$0xff]
      %v2478 = vld [vmem:[%s2470 + $0x38] sm:$0xff]
      %v2480 = vsel %vm377, %v2471, 0
      %v2483 = vsel %vm377, %v2472, 0
      %v2486 = vsel %vm377, %v2473, 0
      %v2489 = vsel %vm377, %v2474, 0
      %v2492 = vsel %vm377, %v2475, 0
      %v2495 = vsel %vm377, %v2476, 0
      %v2498 = vsel %vm377, %v2477, 0
      %v2501 = vsel %vm377, %v2478, 0
      %2503 = vmatprep.subr.mxu0 %v981
      %2504 = vmatpush1.msra.mxu0 %v980
      %2505 = vmatprep.subr.mxu0 %v983
      %2506 = vmatpush1.msra.mxu0 %v982
      %2507 = vmatprep.subr.mxu0 %v985
      %2508 = vmatpush1.msra.mxu0 %v984
      %2509 = vmatprep.subr.mxu0 %v987
      %2510 = vmatpush1.msra.mxu0 %v986
      %2511 = vmatprep.subr.mxu0 %v989
      %2512 = vmatpush1.msra.mxu0 %v988
      %2513 = vmatprep.subr.mxu0 %v991
      %2514 = vmatpush1.msra.mxu0 %v990
      %2515 = vmatprep.subr.mxu0 %v993
      %2516 = vmatpush1.msra.mxu0 %v992
      %2517 = vmatprep.subr.mxu0 %v995
      %2518 = vmatpush1.msra.mxu0 %v994
      %2519 = vmatprep.subr.mxu0 0.0
      %2520 = vmatpush1.msra.mxu0 0.0
      %2521 = vmatprep.subr.mxu0 0.0
      %2522 = vmatpush1.msra.mxu0 0.0
      %2523 = vmatprep.subr.mxu0 0.0
      %2524 = vmatpush1.msra.mxu0 0.0
      %2525 = vmatprep.subr.mxu0 0.0
      %2526 = vmatpush1.msra.mxu0 0.0
      %2527 = vmatprep.subr.mxu0 0.0
      %2528 = vmatpush1.msra.mxu0 0.0
      %2529 = vmatprep.subr.mxu0 0.0
      %2530 = vmatpush1.msra.mxu0 0.0
      %2531 = vmatprep.subr.mxu0 0.0
      %2532 = vmatpush1.msra.mxu0 0.0
      %2533 = vmatprep.subr.mxu0 0.0
      %2534 = vmatpush1.msra.mxu0 0.0
      %2535 = vmatprep.subr.mxu0 0.0
      %2536 = vmatpush1.msra.mxu0 0.0
      %2537 = vmatprep.subr.mxu0 0.0
      %2538 = vmatpush1.msra.mxu0 0.0
      %2539 = vmatprep.subr.mxu0 0.0
      %2540 = vmatpush1.msra.mxu0 0.0
      %2541 = vmatprep.subr.mxu0 0.0
      %2542 = vmatpush1.msra.mxu0 0.0
      %2543 = vmatprep.subr.mxu0 0.0
      %2544 = vmatpush1.msra.mxu0 0.0
      %2545 = vmatprep.subr.mxu0 0.0
      %2546 = vmatpush1.msra.mxu0 0.0
      %2547 = vmatprep.subr.mxu0 0.0
      %2548 = vmatpush1.msra.mxu0 0.0
      %2549 = vmatprep.subr.mxu0 0.0
      %2550 = vmatpush1.msra.mxu0 0.0
      %2551 = vmatprep.subr.mxu0 0.0
      %2552 = vmatpush1.msra.mxu0 0.0
      %2553 = vmatprep.subr.mxu0 0.0
      %2554 = vmatpush1.msra.mxu0 0.0
      %2555 = vmatprep.subr.mxu0 0.0
      %2556 = vmatpush1.msra.mxu0 0.0
      %2557 = vmatprep.subr.mxu0 0.0
      %2558 = vmatpush1.msra.mxu0 0.0
      %2559 = vmatprep.subr.mxu0 0.0
      %2560 = vmatpush1.msra.mxu0 0.0
      %2561 = vmatprep.subr.mxu0 0.0
      %2562 = vmatpush1.msra.mxu0 0.0
      %2563 = vmatprep.subr.mxu0 0.0
      %2564 = vmatpush1.msra.mxu0 0.0
      %2565 = vmatprep.subr.mxu0 0.0
      %2566 = vmatpush1.msra.mxu0 0.0
      %2567 = vmatprep.mubr.f32.mxu0 0.0
      %2568 = vmatmul.mubr.f32.gmra.mrb[0].mxu0 %v2480
      %v2569 = vpop.f32.mrb[0].mxu0
      %v2570 = vadd.f32 0.0, %v2569
      %v2571 = vpop.f32.mrb[0].mxu0
      %v2572 = vadd.f32 0.0, %v2571
      %2573 = vmatprep.mubr.f32.mxu0 0.0
      %2574 = vmatmul.mubr.f32.gmra.mrb[0].mxu0 %v2483
      %v2575 = vpop.f32.mrb[0].mxu0
      %v2576 = vadd.f32 0.0, %v2575
      %v2577 = vpop.f32.mrb[0].mxu0
      %v2578 = vadd.f32 0.0, %v2577
      %2579 = vmatprep.mubr.f32.mxu0 0.0
      %2580 = vmatmul.mubr.f32.gmra.mrb[0].mxu0 %v2486
      %v2581 = vpop.f32.mrb[0].mxu0
      %v2582 = vadd.f32 0.0, %v2581
      %v2583 = vpop.f32.mrb[0].mxu0
      %v2584 = vadd.f32 0.0, %v2583
      %2585 = vmatprep.mubr.f32.mxu0 0.0
      %2586 = vmatmul.mubr.f32.gmra.mrb[0].mxu0 %v2489
      %v2587 = vpop.f32.mrb[0].mxu0
      %v2588 = vadd.f32 0.0, %v2587
      %v2589 = vpop.f32.mrb[0].mxu0
      %v2590 = vadd.f32 0.0, %v2589
      %2591 = vmatprep.mubr.f32.mxu0 0.0
      %2592 = vmatmul.mubr.f32.gmra.mrb[0].mxu0 %v2492
      %v2593 = vpop.f32.mrb[0].mxu0
      %v2594 = vadd.f32 0.0, %v2593
      %v2595 = vpop.f32.mrb[0].mxu0
      %v2596 = vadd.f32 0.0, %v2595
      %2597 = vmatprep.mubr.f32.mxu0 0.0
      %2598 = vmatmul.mubr.f32.gmra.mrb[0].mxu0 %v2495
      %v2599 = vpop.f32.mrb[0].mxu0
      %v2600 = vadd.f32 0.0, %v2599
      %v2601 = vpop.f32.mrb[0].mxu0
      %v2602 = vadd.f32 0.0, %v2601
      %2603 = vmatprep.mubr.f32.mxu0 0.0
      %2604 = vmatmul.mubr.f32.gmra.mrb[0].mxu0 %v2498
      %v2605 = vpop.f32.mrb[0].mxu0
      %v2606 = vadd.f32 0.0, %v2605
      %v2607 = vpop.f32.mrb[0].mxu0
      %v2608 = vadd.f32 0.0, %v2607
      %2609 = vmatprep.mubr.f32.mxu0 0.0
      %2610 = vmatmul.mubr.f32.gmra.mrb[0].mxu0 %v2501
      %v2611 = vpop.f32.mrb[0].mxu0
      %v2612 = vadd.f32 0.0, %v2611
      %v2613 = vpop.f32.mrb[0].mxu0
      %v2614 = vadd.f32 0.0, %v2613
      %2615 = vdwg.mxu0
      %v2616 = vadd.f32 %v2454, %v2570
      %v2617 = vadd.f32 %v2455, %v2572
      %v2618 = vadd.f32 %v2456, %v2576
      %v2619 = vadd.f32 %v2457, %v2578
      %v2620 = vadd.f32 %v2458, %v2582
      %v2621 = vadd.f32 %v2459, %v2584
      %v2622 = vadd.f32 %v2460, %v2588
      %v2623 = vadd.f32 %v2461, %v2590
      %v2624 = vadd.f32 %v2462, %v2594
      %v2625 = vadd.f32 %v2463, %v2596
      %v2626 = vadd.f32 %v2464, %v2600
      %v2627 = vadd.f32 %v2465, %v2602
      %v2628 = vadd.f32 %v2466, %v2606
      %v2629 = vadd.f32 %v2467, %v2608
      %v2630 = vadd.f32 %v2468, %v2612
      %v2631 = vadd.f32 %v2469, %v2614
      %v2632 = vadd.s32 %v997, 1
      %v2633 = vadd.s32 %v998, 1
      %vm2634 = vcmp.eq.s32.totalorder %v2258, %v2632
      %vm2635 = vcmp.eq.s32.totalorder %v2259, %v2633
      %vm2636 = vmand %vm2634, %vm1728
      %vm2637 = vmand %vm2635, %vm1729
      %v2638 = vsel %vm2636, 1, 0
      %v2639 = vsel %vm2637, 1, 0
      %v2640 = vlaneseq
      %v2641 = vshrl.u32 %v2640, 7
      %v2642 = vsub.s32 0, %v2641
      %v2643 = vrot.slane %v2638, %v2642
      %v2644 = vlaneseq
      %v2645 = vshrl.u32 %v2644, 7
      %v2646 = vsub.s32 0, %v2645
      %v2647 = vrot.slane %v2639, %v2646
      %vm2648 = vcmp.eq.s32.totalorder %v2643, 1
      %vm2649 = vcmp.eq.s32.totalorder %v2647, 1
      %v2650 = vsel %vm2648, %v2238, 0.0
      %v2651 = vsel %vm2649, %v2246, 0.0
      %v2652 = vsel %vm2648, %v2239, 0.0
      %v2653 = vsel %vm2649, %v2247, 0.0
      %v2654 = vsel %vm2648, %v2240, 0.0
      %v2655 = vsel %vm2649, %v2248, 0.0
      %v2656 = vsel %vm2648, %v2241, 0.0
      %v2657 = vsel %vm2649, %v2249, 0.0
      %v2658 = vsel %vm2648, %v2242, 0.0
      %v2659 = vsel %vm2649, %v2250, 0.0
      %v2660 = vsel %vm2648, %v2243, 0.0
      %v2661 = vsel %vm2649, %v2251, 0.0
      %v2662 = vsel %vm2648, %v2244, 0.0
      %v2663 = vsel %vm2649, %v2252, 0.0
      %v2664 = vsel %vm2648, %v2245, 0.0
      %v2665 = vsel %vm2649, %v2253, 0.0
      %v2666 = vadd.f32 %v2650, 0.0
      %v2667 = vadd.f32 %v2651, 0.0
      %v2668 = vadd.f32 %v2652, 0.0
      %v2669 = vadd.f32 %v2653, 0.0
      %v2670 = vadd.f32 %v2654, 0.0
      %v2671 = vadd.f32 %v2655, 0.0
      %v2672 = vadd.f32 %v2656, 0.0
      %v2673 = vadd.f32 %v2657, 0.0
      %v2674 = vadd.f32 %v2658, 0.0
      %v2675 = vadd.f32 %v2659, 0.0
      %v2676 = vadd.f32 %v2660, 0.0
      %v2677 = vadd.f32 %v2661, 0.0
      %v2678 = vadd.f32 %v2662, 0.0
      %v2679 = vadd.f32 %v2663, 0.0
      %v2680 = vadd.f32 %v2664, 0.0
      %v2681 = vadd.f32 %v2665, 0.0
      %vm2682 = vcmp.eq.s32.totalorder %v2156, %v2632
      %vm2683 = vcmp.eq.s32.totalorder %v2155, %v2633
      %vm2684 = vmand %vm2682, %vm1728
      %vm2685 = vmand %vm2683, %vm1729
      %v2686 = vsel %vm2684, 1, 0
      %v2687 = vsel %vm2685, 1, 0
      %v2688 = vlaneseq
      %v2689 = vshrl.u32 %v2688, 7
      %v2690 = vsub.s32 0, %v2689
      %v2691 = vrot.slane %v2686, %v2690
      %v2692 = vlaneseq
      %v2693 = vshrl.u32 %v2692, 7
      %v2694 = vsub.s32 0, %v2693
      %v2695 = vrot.slane %v2687, %v2694
      %vm2696 = vcmp.eq.s32.totalorder %v2691, 1
      %vm2697 = vcmp.eq.s32.totalorder %v2695, 1
      %v2698 = vsel %vm2696, %v2143, 0.0
      %v2699 = vsel %vm2697, %v2135, 0.0
      %v2700 = vsel %vm2696, %v2144, 0.0
      %v2701 = vsel %vm2697, %v2136, 0.0
      %v2702 = vsel %vm2696, %v2145, 0.0
      %v2703 = vsel %vm2697, %v2137, 0.0
      %v2704 = vsel %vm2696, %v2146, 0.0
      %v2705 = vsel %vm2697, %v2138, 0.0
      %v2706 = vsel %vm2696, %v2147, 0.0
      %v2707 = vsel %vm2697, %v2139, 0.0
      %v2708 = vsel %vm2696, %v2148, 0.0
      %v2709 = vsel %vm2697, %v2140, 0.0
      %v2710 = vsel %vm2696, %v2149, 0.0
      %v2711 = vsel %vm2697, %v2141, 0.0
      %v2712 = vsel %vm2696, %v2150, 0.0
      %v2713 = vsel %vm2697, %v2142, 0.0
      %v2714 = vadd.f32 %v2666, %v2698
      %v2715 = vadd.f32 %v2667, %v2699
      %v2716 = vadd.f32 %v2668, %v2700
      %v2717 = vadd.f32 %v2669, %v2701
      %v2718 = vadd.f32 %v2670, %v2702
      %v2719 = vadd.f32 %v2671, %v2703
      %v2720 = vadd.f32 %v2672, %v2704
      %v2721 = vadd.f32 %v2673, %v2705
      %v2722 = vadd.f32 %v2674, %v2706
      %v2723 = vadd.f32 %v2675, %v2707
      %v2724 = vadd.f32 %v2676, %v2708
      %v2725 = vadd.f32 %v2677, %v2709
      %v2726 = vadd.f32 %v2678, %v2710
      %v2727 = vadd.f32 %v2679, %v2711
      %v2728 = vadd.f32 %v2680, %v2712
      %v2729 = vadd.f32 %v2681, %v2713
      %s2730 = scalar_lea.vmem %s5, 320
      %v2731 = vld [vmem:[%s2730] sm:$0xff]
      %v2732 = vld [vmem:[%s2730 + $0x8] sm:$0xff]
      %v2733 = vld [vmem:[%s2730 + $0x10] sm:$0xff]
      %v2734 = vld [vmem:[%s2730 + $0x18] sm:$0xff]
      %v2735 = vld [vmem:[%s2730 + $0x20] sm:$0xff]
      %v2736 = vld [vmem:[%s2730 + $0x28] sm:$0xff]
      %v2737 = vld [vmem:[%s2730 + $0x30] sm:$0xff]
      %v2738 = vld [vmem:[%s2730 + $0x38] sm:$0xff]
      %v2740 = vsel %vm377, %v2731, 0
      %v2743 = vsel %vm377, %v2732, 0
      %v2746 = vsel %vm377, %v2733, 0
      %v2749 = vsel %vm377, %v2734, 0
      %v2752 = vsel %vm377, %v2735, 0
      %v2755 = vsel %vm377, %v2736, 0
      %v2758 = vsel %vm377, %v2737, 0
      %v2761 = vsel %vm377, %v2738, 0
      %2763 = vmatprep.subr.mxu0 %v2715
      %2764 = vmatpush1.msra.mxu0 %v2714
      %2765 = vmatprep.subr.mxu0 %v2717
      %2766 = vmatpush1.msra.mxu0 %v2716
      %2767 = vmatprep.subr.mxu0 %v2719
      %2768 = vmatpush1.msra.mxu0 %v2718
      %2769 = vmatprep.subr.mxu0 %v2721
      %2770 = vmatpush1.msra.mxu0 %v2720
      %2771 = vmatprep.subr.mxu0 %v2723
      %2772 = vmatpush1.msra.mxu0 %v2722
      %2773 = vmatprep.subr.mxu0 %v2725
      %2774 = vmatpush1.msra.mxu0 %v2724
      %2775 = vmatprep.subr.mxu0 %v2727
      %2776 = vmatpush1.msra.mxu0 %v2726
      %2777 = vmatprep.subr.mxu0 %v2729
      %2778 = vmatpush1.msra.mxu0 %v2728
      %2779 = vmatprep.subr.mxu0 0.0
      %2780 = vmatpush1.msra.mxu0 0.0
      %2781 = vmatprep.subr.mxu0 0.0
      %2782 = vmatpush1.msra.mxu0 0.0
      %2783 = vmatprep.subr.mxu0 0.0
      %2784 = vmatpush1.msra.mxu0 0.0
      %2785 = vmatprep.subr.mxu0 0.0
      %2786 = vmatpush1.msra.mxu0 0.0
      %2787 = vmatprep.subr.mxu0 0.0
      %2788 = vmatpush1.msra.mxu0 0.0
      %2789 = vmatprep.subr.mxu0 0.0
      %2790 = vmatpush1.msra.mxu0 0.0
      %2791 = vmatprep.subr.mxu0 0.0
      %2792 = vmatpush1.msra.mxu0 0.0
      %2793 = vmatprep.subr.mxu0 0.0
      %2794 = vmatpush1.msra.mxu0 0.0
      %2795 = vmatprep.subr.mxu0 0.0
      %2796 = vmatpush1.msra.mxu0 0.0
      %2797 = vmatprep.subr.mxu0 0.0
      %2798 = vmatpush1.msra.mxu0 0.0
      %2799 = vmatprep.subr.mxu0 0.0
      %2800 = vmatpush1.msra.mxu0 0.0
      %2801 = vmatprep.subr.mxu0 0.0
      %2802 = vmatpush1.msra.mxu0 0.0
      %2803 = vmatprep.subr.mxu0 0.0
      %2804 = vmatpush1.msra.mxu0 0.0
      %2805 = vmatprep.subr.mxu0 0.0
      %2806 = vmatpush1.msra.mxu0 0.0
      %2807 = vmatprep.subr.mxu0 0.0
      %2808 = vmatpush1.msra.mxu0 0.0
      %2809 = vmatprep.subr.mxu0 0.0
      %2810 = vmatpush1.msra.mxu0 0.0
      %2811 = vmatprep.subr.mxu0 0.0
      %2812 = vmatpush1.msra.mxu0 0.0
      %2813 = vmatprep.subr.mxu0 0.0
      %2814 = vmatpush1.msra.mxu0 0.0
      %2815 = vmatprep.subr.mxu0 0.0
      %2816 = vmatpush1.msra.mxu0 0.0
      %2817 = vmatprep.subr.mxu0 0.0
      %2818 = vmatpush1.msra.mxu0 0.0
      %2819 = vmatprep.subr.mxu0 0.0
      %2820 = vmatpush1.msra.mxu0 0.0
      %2821 = vmatprep.subr.mxu0 0.0
      %2822 = vmatpush1.msra.mxu0 0.0
      %2823 = vmatprep.subr.mxu0 0.0
      %2824 = vmatpush1.msra.mxu0 0.0
      %2825 = vmatprep.subr.mxu0 0.0
      %2826 = vmatpush1.msra.mxu0 0.0
      %2827 = vmatprep.mubr.f32.mxu0 0.0
      %2828 = vmatmul.mubr.f32.gmra.mrb[0].mxu0 %v2740
      %v2829 = vpop.f32.mrb[0].mxu0
      %v2830 = vadd.f32 0.0, %v2829
      %v2831 = vpop.f32.mrb[0].mxu0
      %v2832 = vadd.f32 0.0, %v2831
      %2833 = vmatprep.mubr.f32.mxu0 0.0
      %2834 = vmatmul.mubr.f32.gmra.mrb[0].mxu0 %v2743
      %v2835 = vpop.f32.mrb[0].mxu0
      %v2836 = vadd.f32 0.0, %v2835
      %v2837 = vpop.f32.mrb[0].mxu0
      %v2838 = vadd.f32 0.0, %v2837
      %2839 = vmatprep.mubr.f32.mxu0 0.0
      %2840 = vmatmul.mubr.f32.gmra.mrb[0].mxu0 %v2746
      %v2841 = vpop.f32.mrb[0].mxu0
      %v2842 = vadd.f32 0.0, %v2841
      %v2843 = vpop.f32.mrb[0].mxu0
      %v2844 = vadd.f32 0.0, %v2843
      %2845 = vmatprep.mubr.f32.mxu0 0.0
      %2846 = vmatmul.mubr.f32.gmra.mrb[0].mxu0 %v2749
      %v2847 = vpop.f32.mrb[0].mxu0
      %v2848 = vadd.f32 0.0, %v2847
      %v2849 = vpop.f32.mrb[0].mxu0
      %v2850 = vadd.f32 0.0, %v2849
      %2851 = vmatprep.mubr.f32.mxu0 0.0
      %2852 = vmatmul.mubr.f32.gmra.mrb[0].mxu0 %v2752
      %v2853 = vpop.f32.mrb[0].mxu0
      %v2854 = vadd.f32 0.0, %v2853
      %v2855 = vpop.f32.mrb[0].mxu0
      %v2856 = vadd.f32 0.0, %v2855
      %2857 = vmatprep.mubr.f32.mxu0 0.0
      %2858 = vmatmul.mubr.f32.gmra.mrb[0].mxu0 %v2755
      %v2859 = vpop.f32.mrb[0].mxu0
      %v2860 = vadd.f32 0.0, %v2859
      %v2861 = vpop.f32.mrb[0].mxu0
      %v2862 = vadd.f32 0.0, %v2861
      %2863 = vmatprep.mubr.f32.mxu0 0.0
      %2864 = vmatmul.mubr.f32.gmra.mrb[0].mxu0 %v2758
      %v2865 = vpop.f32.mrb[0].mxu0
      %v2866 = vadd.f32 0.0, %v2865
      %v2867 = vpop.f32.mrb[0].mxu0
      %v2868 = vadd.f32 0.0, %v2867
      %2869 = vmatprep.mubr.f32.mxu0 0.0
      %2870 = vmatmul.mubr.f32.gmra.mrb[0].mxu0 %v2761
      %v2871 = vpop.f32.mrb[0].mxu0
      %v2872 = vadd.f32 0.0, %v2871
      %v2873 = vpop.f32.mrb[0].mxu0
      %v2874 = vadd.f32 0.0, %v2873
      %2875 = vdwg.mxu0
      %v2876 = vadd.f32 %v2616, %v2830
      %v2877 = vadd.f32 %v2617, %v2832
      %v2878 = vadd.f32 %v2618, %v2836
      %v2879 = vadd.f32 %v2619, %v2838
      %v2880 = vadd.f32 %v2620, %v2842
      %v2881 = vadd.f32 %v2621, %v2844
      %v2882 = vadd.f32 %v2622, %v2848
      %v2883 = vadd.f32 %v2623, %v2850
      %v2884 = vadd.f32 %v2624, %v2854
      %v2885 = vadd.f32 %v2625, %v2856
      %v2886 = vadd.f32 %v2626, %v2860
      %v2887 = vadd.f32 %v2627, %v2862
      %v2888 = vadd.f32 %v2628, %v2866
      %v2889 = vadd.f32 %v2629, %v2868
      %v2890 = vadd.f32 %v2630, %v2872
      %v2891 = vadd.f32 %v2631, %v2874
      %v2892 = vadd.s32 %v997, 15
      %v2893 = vadd.s32 %v998, 15
      %vm2894 = vcmp.eq.s32.totalorder %v1888, %v2892
      %vm2895 = vcmp.eq.s32.totalorder %v1889, %v2893
      %vm2896 = vmand %vm2894, %vm1023
      %vm2897 = vmand %vm2895, %vm1024
      %v2898 = vsel %vm2896, 1, 0
      %v2899 = vsel %vm2897, 1, 0
      %v2900 = vlaneseq
      %v2901 = vshrl.u32 %v2900, 7
      %v2902 = vsub.s32 0, %v2901
      %v2903 = vrot.slane %v2898, %v2902
      %v2904 = vlaneseq
      %v2905 = vshrl.u32 %v2904, 7
      %v2906 = vsub.s32 0, %v2905
      %v2907 = vrot.slane %v2899, %v2906
      %vm2908 = vcmp.eq.s32.totalorder %v2903, 1
      %vm2909 = vcmp.eq.s32.totalorder %v2907, 1
      %v2910 = vsel %vm2908, %v1868, 0.0
      %v2911 = vsel %vm2909, %v1876, 0.0
      %v2912 = vsel %vm2908, %v1869, 0.0
      %v2913 = vsel %vm2909, %v1877, 0.0
      %v2914 = vsel %vm2908, %v1870, 0.0
      %v2915 = vsel %vm2909, %v1878, 0.0
      %v2916 = vsel %vm2908, %v1871, 0.0
      %v2917 = vsel %vm2909, %v1879, 0.0
      %v2918 = vsel %vm2908, %v1872, 0.0
      %v2919 = vsel %vm2909, %v1880, 0.0
      %v2920 = vsel %vm2908, %v1873, 0.0
      %v2921 = vsel %vm2909, %v1881, 0.0
      %v2922 = vsel %vm2908, %v1874, 0.0
      %v2923 = vsel %vm2909, %v1882, 0.0
      %v2924 = vsel %vm2908, %v1875, 0.0
      %v2925 = vsel %vm2909, %v1883, 0.0
      %v2926 = vadd.f32 %v2910, 0.0
      %v2927 = vadd.f32 %v2911, 0.0
      %v2928 = vadd.f32 %v2912, 0.0
      %v2929 = vadd.f32 %v2913, 0.0
      %v2930 = vadd.f32 %v2914, 0.0
      %v2931 = vadd.f32 %v2915, 0.0
      %v2932 = vadd.f32 %v2916, 0.0
      %v2933 = vadd.f32 %v2917, 0.0
      %v2934 = vadd.f32 %v2918, 0.0
      %v2935 = vadd.f32 %v2919, 0.0
      %v2936 = vadd.f32 %v2920, 0.0
      %v2937 = vadd.f32 %v2921, 0.0
      %v2938 = vadd.f32 %v2922, 0.0
      %v2939 = vadd.f32 %v2923, 0.0
      %v2940 = vadd.f32 %v2924, 0.0
      %v2941 = vadd.f32 %v2925, 0.0
      %vm2942 = vcmp.eq.s32.totalorder %v1786, %v2892
      %vm2943 = vcmp.eq.s32.totalorder %v1785, %v2893
      %vm2944 = vmand %vm2942, %vm1023
      %vm2945 = vmand %vm2943, %vm1024
      %v2946 = vsel %vm2944, 1, 0
      %v2947 = vsel %vm2945, 1, 0
      %v2948 = vlaneseq
      %v2949 = vshrl.u32 %v2948, 7
      %v2950 = vsub.s32 0, %v2949
      %v2951 = vrot.slane %v2946, %v2950
      %v2952 = vlaneseq
      %v2953 = vshrl.u32 %v2952, 7
      %v2954 = vsub.s32 0, %v2953
      %v2955 = vrot.slane %v2947, %v2954
      %vm2956 = vcmp.eq.s32.totalorder %v2951, 1
      %vm2957 = vcmp.eq.s32.totalorder %v2955, 1
      %v2958 = vsel %vm2956, %v1773, 0.0
      %v2959 = vsel %vm2957, %v1765, 0.0
      %v2960 = vsel %vm2956, %v1774, 0.0
      %v2961 = vsel %vm2957, %v1766, 0.0
      %v2962 = vsel %vm2956, %v1775, 0.0
      %v2963 = vsel %vm2957, %v1767, 0.0
      %v2964 = vsel %vm2956, %v1776, 0.0
      %v2965 = vsel %vm2957, %v1768, 0.0
      %v2966 = vsel %vm2956, %v1777, 0.0
      %v2967 = vsel %vm2957, %v1769, 0.0
      %v2968 = vsel %vm2956, %v1778, 0.0
      %v2969 = vsel %vm2957, %v1770, 0.0
      %v2970 = vsel %vm2956, %v1779, 0.0
      %v2971 = vsel %vm2957, %v1771, 0.0
      %v2972 = vsel %vm2956, %v1780, 0.0
      %v2973 = vsel %vm2957, %v1772, 0.0
      %v2974 = vadd.f32 %v2926, %v2958
      %v2975 = vadd.f32 %v2927, %v2959
      %v2976 = vadd.f32 %v2928, %v2960
      %v2977 = vadd.f32 %v2929, %v2961
      %v2978 = vadd.f32 %v2930, %v2962
      %v2979 = vadd.f32 %v2931, %v2963
      %v2980 = vadd.f32 %v2932, %v2964
      %v2981 = vadd.f32 %v2933, %v2965
      %v2982 = vadd.f32 %v2934, %v2966
      %v2983 = vadd.f32 %v2935, %v2967
      %v2984 = vadd.f32 %v2936, %v2968
      %v2985 = vadd.f32 %v2937, %v2969
      %v2986 = vadd.f32 %v2938, %v2970
      %v2987 = vadd.f32 %v2939, %v2971
      %v2988 = vadd.f32 %v2940, %v2972
      %v2989 = vadd.f32 %v2941, %v2973
      %s2990 = scalar_lea.vmem %s5, 384
      %v2991 = vld [vmem:[%s2990] sm:$0xff]
      %v2992 = vld [vmem:[%s2990 + $0x8] sm:$0xff]
      %v2993 = vld [vmem:[%s2990 + $0x10] sm:$0xff]
      %v2994 = vld [vmem:[%s2990 + $0x18] sm:$0xff]
      %v2995 = vld [vmem:[%s2990 + $0x20] sm:$0xff]
      %v2996 = vld [vmem:[%s2990 + $0x28] sm:$0xff]
      %v2997 = vld [vmem:[%s2990 + $0x30] sm:$0xff]
      %v2998 = vld [vmem:[%s2990 + $0x38] sm:$0xff]
      %v3000 = vsel %vm377, %v2991, 0
      %v3003 = vsel %vm377, %v2992, 0
      %v3006 = vsel %vm377, %v2993, 0
      %v3009 = vsel %vm377, %v2994, 0
      %v3012 = vsel %vm377, %v2995, 0
      %v3015 = vsel %vm377, %v2996, 0
      %v3018 = vsel %vm377, %v2997, 0
      %v3021 = vsel %vm377, %v2998, 0
      %3023 = vmatprep.subr.mxu0 %v2975
      %3024 = vmatpush1.msra.mxu0 %v2974
      %3025 = vmatprep.subr.mxu0 %v2977
      %3026 = vmatpush1.msra.mxu0 %v2976
      %3027 = vmatprep.subr.mxu0 %v2979
      %3028 = vmatpush1.msra.mxu0 %v2978
      %3029 = vmatprep.subr.mxu0 %v2981
      %3030 = vmatpush1.msra.mxu0 %v2980
      %3031 = vmatprep.subr.mxu0 %v2983
      %3032 = vmatpush1.msra.mxu0 %v2982
      %3033 = vmatprep.subr.mxu0 %v2985
      %3034 = vmatpush1.msra.mxu0 %v2984
      %3035 = vmatprep.subr.mxu0 %v2987
      %3036 = vmatpush1.msra.mxu0 %v2986
      %3037 = vmatprep.subr.mxu0 %v2989
      %3038 = vmatpush1.msra.mxu0 %v2988
      %3039 = vmatprep.subr.mxu0 0.0
      %3040 = vmatpush1.msra.mxu0 0.0
      %3041 = vmatprep.subr.mxu0 0.0
      %3042 = vmatpush1.msra.mxu0 0.0
      %3043 = vmatprep.subr.mxu0 0.0
      %3044 = vmatpush1.msra.mxu0 0.0
      %3045 = vmatprep.subr.mxu0 0.0
      %3046 = vmatpush1.msra.mxu0 0.0
      %3047 = vmatprep.subr.mxu0 0.0
      %3048 = vmatpush1.msra.mxu0 0.0
      %3049 = vmatprep.subr.mxu0 0.0
      %3050 = vmatpush1.msra.mxu0 0.0
      %3051 = vmatprep.subr.mxu0 0.0
      %3052 = vmatpush1.msra.mxu0 0.0
      %3053 = vmatprep.subr.mxu0 0.0
      %3054 = vmatpush1.msra.mxu0 0.0
      %3055 = vmatprep.subr.mxu0 0.0
      %3056 = vmatpush1.msra.mxu0 0.0
      %3057 = vmatprep.subr.mxu0 0.0
      %3058 = vmatpush1.msra.mxu0 0.0
      %3059 = vmatprep.subr.mxu0 0.0
      %3060 = vmatpush1.msra.mxu0 0.0
      %3061 = vmatprep.subr.mxu0 0.0
      %3062 = vmatpush1.msra.mxu0 0.0
      %3063 = vmatprep.subr.mxu0 0.0
      %3064 = vmatpush1.msra.mxu0 0.0
      %3065 = vmatprep.subr.mxu0 0.0
      %3066 = vmatpush1.msra.mxu0 0.0
      %3067 = vmatprep.subr.mxu0 0.0
      %3068 = vmatpush1.msra.mxu0 0.0
      %3069 = vmatprep.subr.mxu0 0.0
      %3070 = vmatpush1.msra.mxu0 0.0
      %3071 = vmatprep.subr.mxu0 0.0
      %3072 = vmatpush1.msra.mxu0 0.0
      %3073 = vmatprep.subr.mxu0 0.0
      %3074 = vmatpush1.msra.mxu0 0.0
      %3075 = vmatprep.subr.mxu0 0.0
      %3076 = vmatpush1.msra.mxu0 0.0
      %3077 = vmatprep.subr.mxu0 0.0
      %3078 = vmatpush1.msra.mxu0 0.0
      %3079 = vmatprep.subr.mxu0 0.0
      %3080 = vmatpush1.msra.mxu0 0.0
      %3081 = vmatprep.subr.mxu0 0.0
      %3082 = vmatpush1.msra.mxu0 0.0
      %3083 = vmatprep.subr.mxu0 0.0
      %3084 = vmatpush1.msra.mxu0 0.0
      %3085 = vmatprep.subr.mxu0 0.0
      %3086 = vmatpush1.msra.mxu0 0.0
      %3087 = vmatprep.mubr.f32.mxu0 0.0
      %3088 = vmatmul.mubr.f32.gmra.mrb[0].mxu0 %v3000
      %v3089 = vpop.f32.mrb[0].mxu0
      %v3090 = vadd.f32 0.0, %v3089
      %v3091 = vpop.f32.mrb[0].mxu0
      %v3092 = vadd.f32 0.0, %v3091
      %3093 = vmatprep.mubr.f32.mxu0 0.0
      %3094 = vmatmul.mubr.f32.gmra.mrb[0].mxu0 %v3003
      %v3095 = vpop.f32.mrb[0].mxu0
      %v3096 = vadd.f32 0.0, %v3095
      %v3097 = vpop.f32.mrb[0].mxu0
      %v3098 = vadd.f32 0.0, %v3097
      %3099 = vmatprep.mubr.f32.mxu0 0.0
      %3100 = vmatmul.mubr.f32.gmra.mrb[0].mxu0 %v3006
      %v3101 = vpop.f32.mrb[0].mxu0
      %v3102 = vadd.f32 0.0, %v3101
      %v3103 = vpop.f32.mrb[0].mxu0
      %v3104 = vadd.f32 0.0, %v3103
      %3105 = vmatprep.mubr.f32.mxu0 0.0
      %3106 = vmatmul.mubr.f32.gmra.mrb[0].mxu0 %v3009
      %v3107 = vpop.f32.mrb[0].mxu0
      %v3108 = vadd.f32 0.0, %v3107
      %v3109 = vpop.f32.mrb[0].mxu0
      %v3110 = vadd.f32 0.0, %v3109
      %3111 = vmatprep.mubr.f32.mxu0 0.0
      %3112 = vmatmul.mubr.f32.gmra.mrb[0].mxu0 %v3012
      %v3113 = vpop.f32.mrb[0].mxu0
      %v3114 = vadd.f32 0.0, %v3113
      %v3115 = vpop.f32.mrb[0].mxu0
      %v3116 = vadd.f32 0.0, %v3115
      %3117 = vmatprep.mubr.f32.mxu0 0.0
      %3118 = vmatmul.mubr.f32.gmra.mrb[0].mxu0 %v3015
      %v3119 = vpop.f32.mrb[0].mxu0
      %v3120 = vadd.f32 0.0, %v3119
      %v3121 = vpop.f32.mrb[0].mxu0
      %v3122 = vadd.f32 0.0, %v3121
      %3123 = vmatprep.mubr.f32.mxu0 0.0
      %3124 = vmatmul.mubr.f32.gmra.mrb[0].mxu0 %v3018
      %v3125 = vpop.f32.mrb[0].mxu0
      %v3126 = vadd.f32 0.0, %v3125
      %v3127 = vpop.f32.mrb[0].mxu0
      %v3128 = vadd.f32 0.0, %v3127
      %3129 = vmatprep.mubr.f32.mxu0 0.0
      %3130 = vmatmul.mubr.f32.gmra.mrb[0].mxu0 %v3021
      %v3131 = vpop.f32.mrb[0].mxu0
      %v3132 = vadd.f32 0.0, %v3131
      %v3133 = vpop.f32.mrb[0].mxu0
      %v3134 = vadd.f32 0.0, %v3133
      %3135 = vdwg.mxu0
      %v3136 = vadd.f32 %v2876, %v3090
      %v3137 = vadd.f32 %v2877, %v3092
      %v3138 = vadd.f32 %v2878, %v3096
      %v3139 = vadd.f32 %v2879, %v3098
      %v3140 = vadd.f32 %v2880, %v3102
      %v3141 = vadd.f32 %v2881, %v3104
      %v3142 = vadd.f32 %v2882, %v3108
      %v3143 = vadd.f32 %v2883, %v3110
      %v3144 = vadd.f32 %v2884, %v3114
      %v3145 = vadd.f32 %v2885, %v3116
      %v3146 = vadd.f32 %v2886, %v3120
      %v3147 = vadd.f32 %v2887, %v3122
      %v3148 = vadd.f32 %v2888, %v3126
      %v3149 = vadd.f32 %v2889, %v3128
      %v3150 = vadd.f32 %v2890, %v3132
      %v3151 = vadd.f32 %v2891, %v3134
      %v3152 = vadd.s32 %v997, 16
      %v3153 = vadd.s32 %v998, 16
      %vm3154 = vcmp.eq.s32.totalorder %v1397, %v3152
      %vm3155 = vcmp.eq.s32.totalorder %v1398, %v3153
      %v3156 = vsel %vm3154, 1, 0
      %v3157 = vsel %vm3155, 1, 0
      %v3158 = vlaneseq
      %v3159 = vshrl.u32 %v3158, 7
      %v3160 = vsub.s32 0, %v3159
      %v3161 = vrot.slane %v3156, %v3160
      %v3162 = vlaneseq
      %v3163 = vshrl.u32 %v3162, 7
      %v3164 = vsub.s32 0, %v3163
      %v3165 = vrot.slane %v3157, %v3164
      %vm3166 = vcmp.eq.s32.totalorder %v3161, 1
      %vm3167 = vcmp.eq.s32.totalorder %v3165, 1
      %v3168 = vsel %vm3166, %v1377, 0.0
      %v3169 = vsel %vm3167, %v1385, 0.0
      %v3170 = vsel %vm3166, %v1378, 0.0
      %v3171 = vsel %vm3167, %v1386, 0.0
      %v3172 = vsel %vm3166, %v1379, 0.0
      %v3173 = vsel %vm3167, %v1387, 0.0
      %v3174 = vsel %vm3166, %v1380, 0.0
      %v3175 = vsel %vm3167, %v1388, 0.0
      %v3176 = vsel %vm3166, %v1381, 0.0
      %v3177 = vsel %vm3167, %v1389, 0.0
      %v3178 = vsel %vm3166, %v1382, 0.0
      %v3179 = vsel %vm3167, %v1390, 0.0
      %v3180 = vsel %vm3166, %v1383, 0.0
      %v3181 = vsel %vm3167, %v1391, 0.0
      %v3182 = vsel %vm3166, %v1384, 0.0
      %v3183 = vsel %vm3167, %v1392, 0.0
      %v3184 = vadd.f32 %v3168, 0.0
      %v3185 = vadd.f32 %v3169, 0.0
      %v3186 = vadd.f32 %v3170, 0.0
      %v3187 = vadd.f32 %v3171, 0.0
      %v3188 = vadd.f32 %v3172, 0.0
      %v3189 = vadd.f32 %v3173, 0.0
      %v3190 = vadd.f32 %v3174, 0.0
      %v3191 = vadd.f32 %v3175, 0.0
      %v3192 = vadd.f32 %v3176, 0.0
      %v3193 = vadd.f32 %v3177, 0.0
      %v3194 = vadd.f32 %v3178, 0.0
      %v3195 = vadd.f32 %v3179, 0.0
      %v3196 = vadd.f32 %v3180, 0.0
      %v3197 = vadd.f32 %v3181, 0.0
      %v3198 = vadd.f32 %v3182, 0.0
      %v3199 = vadd.f32 %v3183, 0.0
      %vm3200 = vcmp.eq.s32.totalorder %v1297, %v3152
      %vm3201 = vcmp.eq.s32.totalorder %v1296, %v3153
      %v3202 = vsel %vm3200, 1, 0
      %v3203 = vsel %vm3201, 1, 0
      %v3204 = vlaneseq
      %v3205 = vshrl.u32 %v3204, 7
      %v3206 = vsub.s32 0, %v3205
      %v3207 = vrot.slane %v3202, %v3206
      %v3208 = vlaneseq
      %v3209 = vshrl.u32 %v3208, 7
      %v3210 = vsub.s32 0, %v3209
      %v3211 = vrot.slane %v3203, %v3210
      %vm3212 = vcmp.eq.s32.totalorder %v3207, 1
      %vm3213 = vcmp.eq.s32.totalorder %v3211, 1
      %v3214 = vsel %vm3212, %v1284, 0.0
      %v3215 = vsel %vm3213, %v1276, 0.0
      %v3216 = vsel %vm3212, %v1285, 0.0
      %v3217 = vsel %vm3213, %v1277, 0.0
      %v3218 = vsel %vm3212, %v1286, 0.0
      %v3219 = vsel %vm3213, %v1278, 0.0
      %v3220 = vsel %vm3212, %v1287, 0.0
      %v3221 = vsel %vm3213, %v1279, 0.0
      %v3222 = vsel %vm3212, %v1288, 0.0
      %v3223 = vsel %vm3213, %v1280, 0.0
      %v3224 = vsel %vm3212, %v1289, 0.0
      %v3225 = vsel %vm3213, %v1281, 0.0
      %v3226 = vsel %vm3212, %v1290, 0.0
      %v3227 = vsel %vm3213, %v1282, 0.0
      %v3228 = vsel %vm3212, %v1291, 0.0
      %v3229 = vsel %vm3213, %v1283, 0.0
      %v3230 = vadd.f32 %v3184, %v3214
      %v3231 = vadd.f32 %v3185, %v3215
      %v3232 = vadd.f32 %v3186, %v3216
      %v3233 = vadd.f32 %v3187, %v3217
      %v3234 = vadd.f32 %v3188, %v3218
      %v3235 = vadd.f32 %v3189, %v3219
      %v3236 = vadd.f32 %v3190, %v3220
      %v3237 = vadd.f32 %v3191, %v3221
      %v3238 = vadd.f32 %v3192, %v3222
      %v3239 = vadd.f32 %v3193, %v3223
      %v3240 = vadd.f32 %v3194, %v3224
      %v3241 = vadd.f32 %v3195, %v3225
      %v3242 = vadd.f32 %v3196, %v3226
      %v3243 = vadd.f32 %v3197, %v3227
      %v3244 = vadd.f32 %v3198, %v3228
      %v3245 = vadd.f32 %v3199, %v3229
      %s3246 = scalar_lea.vmem %s5, 448
      %v3247 = vld [vmem:[%s3246] sm:$0xff]
      %v3248 = vld [vmem:[%s3246 + $0x8] sm:$0xff]
      %v3249 = vld [vmem:[%s3246 + $0x10] sm:$0xff]
      %v3250 = vld [vmem:[%s3246 + $0x18] sm:$0xff]
      %v3251 = vld [vmem:[%s3246 + $0x20] sm:$0xff]
      %v3252 = vld [vmem:[%s3246 + $0x28] sm:$0xff]
      %v3253 = vld [vmem:[%s3246 + $0x30] sm:$0xff]
      %v3254 = vld [vmem:[%s3246 + $0x38] sm:$0xff]
      %v3256 = vsel %vm377, %v3247, 0
      %v3259 = vsel %vm377, %v3248, 0
      %v3262 = vsel %vm377, %v3249, 0
      %v3265 = vsel %vm377, %v3250, 0
      %v3268 = vsel %vm377, %v3251, 0
      %v3271 = vsel %vm377, %v3252, 0
      %v3274 = vsel %vm377, %v3253, 0
      %v3277 = vsel %vm377, %v3254, 0
      %3279 = vmatprep.subr.mxu0 %v3231
      %3280 = vmatpush1.msra.mxu0 %v3230
      %3281 = vmatprep.subr.mxu0 %v3233
      %3282 = vmatpush1.msra.mxu0 %v3232
      %3283 = vmatprep.subr.mxu0 %v3235
      %3284 = vmatpush1.msra.mxu0 %v3234
      %3285 = vmatprep.subr.mxu0 %v3237
      %3286 = vmatpush1.msra.mxu0 %v3236
      %3287 = vmatprep.subr.mxu0 %v3239
      %3288 = vmatpush1.msra.mxu0 %v3238
      %3289 = vmatprep.subr.mxu0 %v3241
      %3290 = vmatpush1.msra.mxu0 %v3240
      %3291 = vmatprep.subr.mxu0 %v3243
      %3292 = vmatpush1.msra.mxu0 %v3242
      %3293 = vmatprep.subr.mxu0 %v3245
      %3294 = vmatpush1.msra.mxu0 %v3244
      %3295 = vmatprep.subr.mxu0 0.0
      %3296 = vmatpush1.msra.mxu0 0.0
      %3297 = vmatprep.subr.mxu0 0.0
      %3298 = vmatpush1.msra.mxu0 0.0
      %3299 = vmatprep.subr.mxu0 0.0
      %3300 = vmatpush1.msra.mxu0 0.0
      %3301 = vmatprep.subr.mxu0 0.0
      %3302 = vmatpush1.msra.mxu0 0.0
      %3303 = vmatprep.subr.mxu0 0.0
      %3304 = vmatpush1.msra.mxu0 0.0
      %3305 = vmatprep.subr.mxu0 0.0
      %3306 = vmatpush1.msra.mxu0 0.0
      %3307 = vmatprep.subr.mxu0 0.0
      %3308 = vmatpush1.msra.mxu0 0.0
      %3309 = vmatprep.subr.mxu0 0.0
      %3310 = vmatpush1.msra.mxu0 0.0
      %3311 = vmatprep.subr.mxu0 0.0
      %3312 = vmatpush1.msra.mxu0 0.0
      %3313 = vmatprep.subr.mxu0 0.0
      %3314 = vmatpush1.msra.mxu0 0.0
      %3315 = vmatprep.subr.mxu0 0.0
      %3316 = vmatpush1.msra.mxu0 0.0
      %3317 = vmatprep.subr.mxu0 0.0
      %3318 = vmatpush1.msra.mxu0 0.0
      %3319 = vmatprep.subr.mxu0 0.0
      %3320 = vmatpush1.msra.mxu0 0.0
      %3321 = vmatprep.subr.mxu0 0.0
      %3322 = vmatpush1.msra.mxu0 0.0
      %3323 = vmatprep.subr.mxu0 0.0
      %3324 = vmatpush1.msra.mxu0 0.0
      %3325 = vmatprep.subr.mxu0 0.0
      %3326 = vmatpush1.msra.mxu0 0.0
      %3327 = vmatprep.subr.mxu0 0.0
      %3328 = vmatpush1.msra.mxu0 0.0
      %3329 = vmatprep.subr.mxu0 0.0
      %3330 = vmatpush1.msra.mxu0 0.0
      %3331 = vmatprep.subr.mxu0 0.0
      %3332 = vmatpush1.msra.mxu0 0.0
      %3333 = vmatprep.subr.mxu0 0.0
      %3334 = vmatpush1.msra.mxu0 0.0
      %3335 = vmatprep.subr.mxu0 0.0
      %3336 = vmatpush1.msra.mxu0 0.0
      %3337 = vmatprep.subr.mxu0 0.0
      %3338 = vmatpush1.msra.mxu0 0.0
      %3339 = vmatprep.subr.mxu0 0.0
      %3340 = vmatpush1.msra.mxu0 0.0
      %3341 = vmatprep.subr.mxu0 0.0
      %3342 = vmatpush1.msra.mxu0 0.0
      %3343 = vmatprep.mubr.f32.mxu0 0.0
      %3344 = vmatmul.mubr.f32.gmra.mrb[0].mxu0 %v3256
      %v3345 = vpop.f32.mrb[0].mxu0
      %v3346 = vadd.f32 0.0, %v3345
      %v3347 = vpop.f32.mrb[0].mxu0
      %v3348 = vadd.f32 0.0, %v3347
      %3349 = vmatprep.mubr.f32.mxu0 0.0
      %3350 = vmatmul.mubr.f32.gmra.mrb[0].mxu0 %v3259
      %v3351 = vpop.f32.mrb[0].mxu0
      %v3352 = vadd.f32 0.0, %v3351
      %v3353 = vpop.f32.mrb[0].mxu0
      %v3354 = vadd.f32 0.0, %v3353
      %3355 = vmatprep.mubr.f32.mxu0 0.0
      %3356 = vmatmul.mubr.f32.gmra.mrb[0].mxu0 %v3262
      %v3357 = vpop.f32.mrb[0].mxu0
      %v3358 = vadd.f32 0.0, %v3357
      %v3359 = vpop.f32.mrb[0].mxu0
      %v3360 = vadd.f32 0.0, %v3359
      %3361 = vmatprep.mubr.f32.mxu0 0.0
      %3362 = vmatmul.mubr.f32.gmra.mrb[0].mxu0 %v3265
      %v3363 = vpop.f32.mrb[0].mxu0
      %v3364 = vadd.f32 0.0, %v3363
      %v3365 = vpop.f32.mrb[0].mxu0
      %v3366 = vadd.f32 0.0, %v3365
      %3367 = vmatprep.mubr.f32.mxu0 0.0
      %3368 = vmatmul.mubr.f32.gmra.mrb[0].mxu0 %v3268
      %v3369 = vpop.f32.mrb[0].mxu0
      %v3370 = vadd.f32 0.0, %v3369
      %v3371 = vpop.f32.mrb[0].mxu0
      %v3372 = vadd.f32 0.0, %v3371
      %3373 = vmatprep.mubr.f32.mxu0 0.0
      %3374 = vmatmul.mubr.f32.gmra.mrb[0].mxu0 %v3271
      %v3375 = vpop.f32.mrb[0].mxu0
      %v3376 = vadd.f32 0.0, %v3375
      %v3377 = vpop.f32.mrb[0].mxu0
      %v3378 = vadd.f32 0.0, %v3377
      %3379 = vmatprep.mubr.f32.mxu0 0.0
      %3380 = vmatmul.mubr.f32.gmra.mrb[0].mxu0 %v3274
      %v3381 = vpop.f32.mrb[0].mxu0
      %v3382 = vadd.f32 0.0, %v3381
      %v3383 = vpop.f32.mrb[0].mxu0
      %v3384 = vadd.f32 0.0, %v3383
      %3385 = vmatprep.mubr.f32.mxu0 0.0
      %3386 = vmatmul.mubr.f32.gmra.mrb[0].mxu0 %v3277
      %v3387 = vpop.f32.mrb[0].mxu0
      %v3388 = vadd.f32 0.0, %v3387
      %v3389 = vpop.f32.mrb[0].mxu0
      %v3390 = vadd.f32 0.0, %v3389
      %3391 = vdwg.mxu0
      %v3392 = vadd.f32 %v3136, %v3346
      %v3393 = vadd.f32 %v3137, %v3348
      %v3394 = vadd.f32 %v3138, %v3352
      %v3395 = vadd.f32 %v3139, %v3354
      %v3396 = vadd.f32 %v3140, %v3358
      %v3397 = vadd.f32 %v3141, %v3360
      %v3398 = vadd.f32 %v3142, %v3364
      %v3399 = vadd.f32 %v3143, %v3366
      %v3400 = vadd.f32 %v3144, %v3370
      %v3401 = vadd.f32 %v3145, %v3372
      %v3402 = vadd.f32 %v3146, %v3376
      %v3403 = vadd.f32 %v3147, %v3378
      %v3404 = vadd.f32 %v3148, %v3382
      %v3405 = vadd.f32 %v3149, %v3384
      %v3406 = vadd.f32 %v3150, %v3388
      %v3407 = vadd.f32 %v3151, %v3390
      %v3408 = vadd.s32 %v997, 17
      %v3409 = vadd.s32 %v998, 17
      %vm3410 = vcmp.eq.s32.totalorder %v1183, %v3408
      %vm3411 = vcmp.eq.s32.totalorder %v1184, %v3409
      %vm3412 = vmand %vm3410, %vm1728
      %vm3413 = vmand %vm3411, %vm1729
      %v3414 = vsel %vm3412, 1, 0
      %v3415 = vsel %vm3413, 1, 0
      %v3416 = vlaneseq
      %v3417 = vshrl.u32 %v3416, 7
      %v3418 = vsub.s32 0, %v3417
      %v3419 = vrot.slane %v3414, %v3418
      %v3420 = vlaneseq
      %v3421 = vshrl.u32 %v3420, 7
      %v3422 = vsub.s32 0, %v3421
      %v3423 = vrot.slane %v3415, %v3422
      %vm3424 = vcmp.eq.s32.totalorder %v3419, 1
      %vm3425 = vcmp.eq.s32.totalorder %v3423, 1
      %v3426 = vsel %vm3424, %v1163, 0.0
      %v3427 = vsel %vm3425, %v1171, 0.0
      %v3428 = vsel %vm3424, %v1164, 0.0
      %v3429 = vsel %vm3425, %v1172, 0.0
      %v3430 = vsel %vm3424, %v1165, 0.0
      %v3431 = vsel %vm3425, %v1173, 0.0
      %v3432 = vsel %vm3424, %v1166, 0.0
      %v3433 = vsel %vm3425, %v1174, 0.0
      %v3434 = vsel %vm3424, %v1167, 0.0
      %v3435 = vsel %vm3425, %v1175, 0.0
      %v3436 = vsel %vm3424, %v1168, 0.0
      %v3437 = vsel %vm3425, %v1176, 0.0
      %v3438 = vsel %vm3424, %v1169, 0.0
      %v3439 = vsel %vm3425, %v1177, 0.0
      %v3440 = vsel %vm3424, %v1170, 0.0
      %v3441 = vsel %vm3425, %v1178, 0.0
      %v3442 = vadd.f32 %v3426, 0.0
      %v3443 = vadd.f32 %v3427, 0.0
      %v3444 = vadd.f32 %v3428, 0.0
      %v3445 = vadd.f32 %v3429, 0.0
      %v3446 = vadd.f32 %v3430, 0.0
      %v3447 = vadd.f32 %v3431, 0.0
      %v3448 = vadd.f32 %v3432, 0.0
      %v3449 = vadd.f32 %v3433, 0.0
      %v3450 = vadd.f32 %v3434, 0.0
      %v3451 = vadd.f32 %v3435, 0.0
      %v3452 = vadd.f32 %v3436, 0.0
      %v3453 = vadd.f32 %v3437, 0.0
      %v3454 = vadd.f32 %v3438, 0.0
      %v3455 = vadd.f32 %v3439, 0.0
      %v3456 = vadd.f32 %v3440, 0.0
      %v3457 = vadd.f32 %v3441, 0.0
      %vm3458 = vcmp.eq.s32.totalorder %v1081, %v3408
      %vm3459 = vcmp.eq.s32.totalorder %v1080, %v3409
      %vm3460 = vmand %vm3458, %vm1728
      %vm3461 = vmand %vm3459, %vm1729
      %v3462 = vsel %vm3460, 1, 0
      %v3463 = vsel %vm3461, 1, 0
      %v3464 = vlaneseq
      %v3465 = vshrl.u32 %v3464, 7
      %v3466 = vsub.s32 0, %v3465
      %v3467 = vrot.slane %v3462, %v3466
      %v3468 = vlaneseq
      %v3469 = vshrl.u32 %v3468, 7
      %v3470 = vsub.s32 0, %v3469
      %v3471 = vrot.slane %v3463, %v3470
      %vm3472 = vcmp.eq.s32.totalorder %v3467, 1
      %vm3473 = vcmp.eq.s32.totalorder %v3471, 1
      %v3474 = vsel %vm3472, %v1068, 0.0
      %v3475 = vsel %vm3473, %v1060, 0.0
      %v3476 = vsel %vm3472, %v1069, 0.0
      %v3477 = vsel %vm3473, %v1061, 0.0
      %v3478 = vsel %vm3472, %v1070, 0.0
      %v3479 = vsel %vm3473, %v1062, 0.0
      %v3480 = vsel %vm3472, %v1071, 0.0
      %v3481 = vsel %vm3473, %v1063, 0.0
      %v3482 = vsel %vm3472, %v1072, 0.0
      %v3483 = vsel %vm3473, %v1064, 0.0
      %v3484 = vsel %vm3472, %v1073, 0.0
      %v3485 = vsel %vm3473, %v1065, 0.0
      %v3486 = vsel %vm3472, %v1074, 0.0
      %v3487 = vsel %vm3473, %v1066, 0.0
      %v3488 = vsel %vm3472, %v1075, 0.0
      %v3489 = vsel %vm3473, %v1067, 0.0
      %v3490 = vadd.f32 %v3442, %v3474
      %v3491 = vadd.f32 %v3443, %v3475
      %v3492 = vadd.f32 %v3444, %v3476
      %v3493 = vadd.f32 %v3445, %v3477
      %v3494 = vadd.f32 %v3446, %v3478
      %v3495 = vadd.f32 %v3447, %v3479
      %v3496 = vadd.f32 %v3448, %v3480
      %v3497 = vadd.f32 %v3449, %v3481
      %v3498 = vadd.f32 %v3450, %v3482
      %v3499 = vadd.f32 %v3451, %v3483
      %v3500 = vadd.f32 %v3452, %v3484
      %v3501 = vadd.f32 %v3453, %v3485
      %v3502 = vadd.f32 %v3454, %v3486
      %v3503 = vadd.f32 %v3455, %v3487
      %v3504 = vadd.f32 %v3456, %v3488
      %v3505 = vadd.f32 %v3457, %v3489
      %s3506 = scalar_lea.vmem %s5, 512
      %v3507 = vld [vmem:[%s3506] sm:$0xff]
      %v3508 = vld [vmem:[%s3506 + $0x8] sm:$0xff]
      %v3509 = vld [vmem:[%s3506 + $0x10] sm:$0xff]
      %v3510 = vld [vmem:[%s3506 + $0x18] sm:$0xff]
      %v3511 = vld [vmem:[%s3506 + $0x20] sm:$0xff]
      %v3512 = vld [vmem:[%s3506 + $0x28] sm:$0xff]
      %v3513 = vld [vmem:[%s3506 + $0x30] sm:$0xff]
      %v3514 = vld [vmem:[%s3506 + $0x38] sm:$0xff]
      %v3516 = vsel %vm377, %v3507, 0
      %v3519 = vsel %vm377, %v3508, 0
      %v3522 = vsel %vm377, %v3509, 0
      %v3525 = vsel %vm377, %v3510, 0
      %v3528 = vsel %vm377, %v3511, 0
      %v3531 = vsel %vm377, %v3512, 0
      %v3534 = vsel %vm377, %v3513, 0
      %v3537 = vsel %vm377, %v3514, 0
      %3539 = vmatprep.subr.mxu0 %v3491
      %3540 = vmatpush1.msra.mxu0 %v3490
      %3541 = vmatprep.subr.mxu0 %v3493
      %3542 = vmatpush1.msra.mxu0 %v3492
      %3543 = vmatprep.subr.mxu0 %v3495
      %3544 = vmatpush1.msra.mxu0 %v3494
      %3545 = vmatprep.subr.mxu0 %v3497
      %3546 = vmatpush1.msra.mxu0 %v3496
      %3547 = vmatprep.subr.mxu0 %v3499
      %3548 = vmatpush1.msra.mxu0 %v3498
      %3549 = vmatprep.subr.mxu0 %v3501
      %3550 = vmatpush1.msra.mxu0 %v3500
      %3551 = vmatprep.subr.mxu0 %v3503
      %3552 = vmatpush1.msra.mxu0 %v3502
      %3553 = vmatprep.subr.mxu0 %v3505
      %3554 = vmatpush1.msra.mxu0 %v3504
      %3555 = vmatprep.subr.mxu0 0.0
      %3556 = vmatpush1.msra.mxu0 0.0
      %3557 = vmatprep.subr.mxu0 0.0
      %3558 = vmatpush1.msra.mxu0 0.0
      %3559 = vmatprep.subr.mxu0 0.0
      %3560 = vmatpush1.msra.mxu0 0.0
      %3561 = vmatprep.subr.mxu0 0.0
      %3562 = vmatpush1.msra.mxu0 0.0
      %3563 = vmatprep.subr.mxu0 0.0
      %3564 = vmatpush1.msra.mxu0 0.0
      %3565 = vmatprep.subr.mxu0 0.0
      %3566 = vmatpush1.msra.mxu0 0.0
      %3567 = vmatprep.subr.mxu0 0.0
      %3568 = vmatpush1.msra.mxu0 0.0
      %3569 = vmatprep.subr.mxu0 0.0
      %3570 = vmatpush1.msra.mxu0 0.0
      %3571 = vmatprep.subr.mxu0 0.0
      %3572 = vmatpush1.msra.mxu0 0.0
      %3573 = vmatprep.subr.mxu0 0.0
      %3574 = vmatpush1.msra.mxu0 0.0
      %3575 = vmatprep.subr.mxu0 0.0
      %3576 = vmatpush1.msra.mxu0 0.0
      %3577 = vmatprep.subr.mxu0 0.0
      %3578 = vmatpush1.msra.mxu0 0.0
      %3579 = vmatprep.subr.mxu0 0.0
      %3580 = vmatpush1.msra.mxu0 0.0
      %3581 = vmatprep.subr.mxu0 0.0
      %3582 = vmatpush1.msra.mxu0 0.0
      %3583 = vmatprep.subr.mxu0 0.0
      %3584 = vmatpush1.msra.mxu0 0.0
      %3585 = vmatprep.subr.mxu0 0.0
      %3586 = vmatpush1.msra.mxu0 0.0
      %3587 = vmatprep.subr.mxu0 0.0
      %3588 = vmatpush1.msra.mxu0 0.0
      %3589 = vmatprep.subr.mxu0 0.0
      %3590 = vmatpush1.msra.mxu0 0.0
      %3591 = vmatprep.subr.mxu0 0.0
      %3592 = vmatpush1.msra.mxu0 0.0
      %3593 = vmatprep.subr.mxu0 0.0
      %3594 = vmatpush1.msra.mxu0 0.0
      %3595 = vmatprep.subr.mxu0 0.0
      %3596 = vmatpush1.msra.mxu0 0.0
      %3597 = vmatprep.subr.mxu0 0.0
      %3598 = vmatpush1.msra.mxu0 0.0
      %3599 = vmatprep.subr.mxu0 0.0
      %3600 = vmatpush1.msra.mxu0 0.0
      %3601 = vmatprep.subr.mxu0 0.0
      %3602 = vmatpush1.msra.mxu0 0.0
      %3603 = vmatprep.mubr.f32.mxu0 0.0
      %3604 = vmatmul.mubr.f32.gmra.mrb[0].mxu0 %v3516
      %v3605 = vpop.f32.mrb[0].mxu0
      %v3606 = vadd.f32 0.0, %v3605
      %v3607 = vpop.f32.mrb[0].mxu0
      %v3608 = vadd.f32 0.0, %v3607
      %3609 = vmatprep.mubr.f32.mxu0 0.0
      %3610 = vmatmul.mubr.f32.gmra.mrb[0].mxu0 %v3519
      %v3611 = vpop.f32.mrb[0].mxu0
      %v3612 = vadd.f32 0.0, %v3611
      %v3613 = vpop.f32.mrb[0].mxu0
      %v3614 = vadd.f32 0.0, %v3613
      %3615 = vmatprep.mubr.f32.mxu0 0.0
      %3616 = vmatmul.mubr.f32.gmra.mrb[0].mxu0 %v3522
      %v3617 = vpop.f32.mrb[0].mxu0
      %v3618 = vadd.f32 0.0, %v3617
      %v3619 = vpop.f32.mrb[0].mxu0
      %v3620 = vadd.f32 0.0, %v3619
      %3621 = vmatprep.mubr.f32.mxu0 0.0
      %3622 = vmatmul.mubr.f32.gmra.mrb[0].mxu0 %v3525
      %v3623 = vpop.f32.mrb[0].mxu0
      %v3624 = vadd.f32 0.0, %v3623
      %v3625 = vpop.f32.mrb[0].mxu0
      %v3626 = vadd.f32 0.0, %v3625
      %3627 = vmatprep.mubr.f32.mxu0 0.0
      %3628 = vmatmul.mubr.f32.gmra.mrb[0].mxu0 %v3528
      %v3629 = vpop.f32.mrb[0].mxu0
      %v3630 = vadd.f32 0.0, %v3629
      %v3631 = vpop.f32.mrb[0].mxu0
      %v3632 = vadd.f32 0.0, %v3631
      %3633 = vmatprep.mubr.f32.mxu0 0.0
      %3634 = vmatmul.mubr.f32.gmra.mrb[0].mxu0 %v3531
      %v3635 = vpop.f32.mrb[0].mxu0
      %v3636 = vadd.f32 0.0, %v3635
      %v3637 = vpop.f32.mrb[0].mxu0
      %v3638 = vadd.f32 0.0, %v3637
      %3639 = vmatprep.mubr.f32.mxu0 0.0
      %3640 = vmatmul.mubr.f32.gmra.mrb[0].mxu0 %v3534
      %v3641 = vpop.f32.mrb[0].mxu0
      %v3642 = vadd.f32 0.0, %v3641
      %v3643 = vpop.f32.mrb[0].mxu0
      %v3644 = vadd.f32 0.0, %v3643
      %3645 = vmatprep.mubr.f32.mxu0 0.0
      %3646 = vmatmul.mubr.f32.gmra.mrb[0].mxu0 %v3537
      %v3647 = vpop.f32.mrb[0].mxu0
      %v3648 = vadd.f32 0.0, %v3647
      %v3649 = vpop.f32.mrb[0].mxu0
      %v3650 = vadd.f32 0.0, %v3649
      %3651 = vdwg.mxu0
      %v3652 = vadd.f32 %v3392, %v3606
      %v3653 = vadd.f32 %v3393, %v3608
      %v3654 = vadd.f32 %v3394, %v3612
      %v3655 = vadd.f32 %v3395, %v3614
      %v3656 = vadd.f32 %v3396, %v3618
      %v3657 = vadd.f32 %v3397, %v3620
      %v3658 = vadd.f32 %v3398, %v3624
      %v3659 = vadd.f32 %v3399, %v3626
      %v3660 = vadd.f32 %v3400, %v3630
      %v3661 = vadd.f32 %v3401, %v3632
      %v3662 = vadd.f32 %v3402, %v3636
      %v3663 = vadd.f32 %v3403, %v3638
      %v3664 = vadd.f32 %v3404, %v3642
      %v3665 = vadd.f32 %v3405, %v3644
      %v3666 = vadd.f32 %v3406, %v3648
      %v3667 = vadd.f32 %v3407, %v3650
      %v3668 = vld [vmem:[%s6] sm:$0xff]
      %v3669 = vld [vmem:[%s6 + $0x8] sm:$0xff]
      %v3670 = vld [vmem:[%s6 + $0x10] sm:$0xff]
      %v3671 = vld [vmem:[%s6 + $0x18] sm:$0xff]
      %v3672 = vld [vmem:[%s6 + $0x20] sm:$0xff]
      %v3673 = vld [vmem:[%s6 + $0x28] sm:$0xff]
      %v3674 = vld [vmem:[%s6 + $0x30] sm:$0xff]
      %v3675 = vld [vmem:[%s6 + $0x38] sm:$0xff]
      %3677 = vset.pattern.permute.xlu0 0
      %3678 = vperm.xlu0 %3677, %v3668
      %v3679 = vpop.permute.xlu0 %3678
      %3682 = vset.pattern.permute.xlu0 0
      %3683 = vperm.xlu0 %3682, %v3669
      %v3684 = vpop.permute.xlu0 %3683
      %3687 = vset.pattern.permute.xlu0 0
      %3688 = vperm.xlu0 %3687, %v3670
      %v3689 = vpop.permute.xlu0 %3688
      %3692 = vset.pattern.permute.xlu0 0
      %3693 = vperm.xlu0 %3692, %v3671
      %v3694 = vpop.permute.xlu0 %3693
      %3697 = vset.pattern.permute.xlu0 0
      %3698 = vperm.xlu0 %3697, %v3672
      %v3699 = vpop.permute.xlu0 %3698
      %3702 = vset.pattern.permute.xlu0 0
      %3703 = vperm.xlu0 %3702, %v3673
      %v3704 = vpop.permute.xlu0 %3703
      %3707 = vset.pattern.permute.xlu0 0
      %3708 = vperm.xlu0 %3707, %v3674
      %v3709 = vpop.permute.xlu0 %3708
      %3712 = vset.pattern.permute.xlu0 0
      %3713 = vperm.xlu0 %3712, %v3675
      %v3714 = vpop.permute.xlu0 %3713
      %v3716 = vadd.f32 %v3652, %v3679
      %v3717 = vadd.f32 %v3653, %v3679
      %v3718 = vadd.f32 %v3654, %v3684
      %v3719 = vadd.f32 %v3655, %v3684
      %v3720 = vadd.f32 %v3656, %v3689
      %v3721 = vadd.f32 %v3657, %v3689
      %v3722 = vadd.f32 %v3658, %v3694
      %v3723 = vadd.f32 %v3659, %v3694
      %v3724 = vadd.f32 %v3660, %v3699
      %v3725 = vadd.f32 %v3661, %v3699
      %v3726 = vadd.f32 %v3662, %v3704
      %v3727 = vadd.f32 %v3663, %v3704
      %v3728 = vadd.f32 %v3664, %v3709
      %v3729 = vadd.f32 %v3665, %v3709
      %v3730 = vadd.f32 %v3666, %v3714
      %v3731 = vadd.f32 %v3667, %v3714
      %v3732 = vld [vmem:[%s7] sm:$0xff]
      %v3733 = vld [vmem:[%s7 + $0x8] sm:$0xff]
      %v3734 = vld [vmem:[%s7 + $0x10] sm:$0xff]
      %v3735 = vld [vmem:[%s7 + $0x18] sm:$0xff]
      %v3736 = vld [vmem:[%s7 + $0x20] sm:$0xff]
      %v3737 = vld [vmem:[%s7 + $0x28] sm:$0xff]
      %v3738 = vld [vmem:[%s7 + $0x30] sm:$0xff]
      %v3739 = vld [vmem:[%s7 + $0x38] sm:$0xff]
      %v3740 = vld [vmem:[%s347] sm:$0xff]
      %v3741 = vld [vmem:[%s347 + $0x8] sm:$0xff]
      %v3742 = vld [vmem:[%s347 + $0x10] sm:$0xff]
      %v3743 = vld [vmem:[%s347 + $0x18] sm:$0xff]
      %v3744 = vld [vmem:[%s347 + $0x20] sm:$0xff]
      %v3745 = vld [vmem:[%s347 + $0x28] sm:$0xff]
      %v3746 = vld [vmem:[%s347 + $0x30] sm:$0xff]
      %v3747 = vld [vmem:[%s347 + $0x38] sm:$0xff]
      %v3748 = vld [vmem:[%s8] sm:$0xff]
      %v3749 = vld [vmem:[%s8 + $0x8] sm:$0xff]
      %v3750 = vld [vmem:[%s8 + $0x10] sm:$0xff]
      %v3751 = vld [vmem:[%s8 + $0x18] sm:$0xff]
      %v3752 = vld [vmem:[%s8 + $0x20] sm:$0xff]
      %v3753 = vld [vmem:[%s8 + $0x28] sm:$0xff]
      %v3754 = vld [vmem:[%s8 + $0x30] sm:$0xff]
      %v3755 = vld [vmem:[%s8 + $0x38] sm:$0xff]
      %3757 = vset.pattern.permute.xlu0 0
      %3758 = vperm.xlu0 %3757, %v3748
      %v3759 = vpop.permute.xlu0 %3758
      %3762 = vset.pattern.permute.xlu0 0
      %3763 = vperm.xlu0 %3762, %v3749
      %v3764 = vpop.permute.xlu0 %3763
      %3767 = vset.pattern.permute.xlu0 0
      %3768 = vperm.xlu0 %3767, %v3750
      %v3769 = vpop.permute.xlu0 %3768
      %3772 = vset.pattern.permute.xlu0 0
      %3773 = vperm.xlu0 %3772, %v3751
      %v3774 = vpop.permute.xlu0 %3773
      %3777 = vset.pattern.permute.xlu0 0
      %3778 = vperm.xlu0 %3777, %v3752
      %v3779 = vpop.permute.xlu0 %3778
      %3782 = vset.pattern.permute.xlu0 0
      %3783 = vperm.xlu0 %3782, %v3753
      %v3784 = vpop.permute.xlu0 %3783
      %3787 = vset.pattern.permute.xlu0 0
      %3788 = vperm.xlu0 %3787, %v3754
      %v3789 = vpop.permute.xlu0 %3788
      %3792 = vset.pattern.permute.xlu0 0
      %3793 = vperm.xlu0 %3792, %v3755
      %v3794 = vpop.permute.xlu0 %3793
      %vm3796 = vcmask 261120
      %v3798 = vsel %vm3796, %v3732, 0
      %v3801 = vsel %vm3796, %v3733, 0
      %v3804 = vsel %vm3796, %v3734, 0
      %v3807 = vsel %vm3796, %v3735, 0
      %v3810 = vsel %vm3796, %v3736, 0
      %v3813 = vsel %vm3796, %v3737, 0
      %v3816 = vsel %vm3796, %v3738, 0
      %v3819 = vsel %vm3796, %v3739, 0
      %3821 = vmatprep.subr.mxu0 %v3741
      %3822 = vmatpush1.msra.mxu0 %v3740
      %3823 = vmatprep.subr.mxu0 %v3743
      %3824 = vmatpush1.msra.mxu0 %v3742
      %3825 = vmatprep.subr.mxu0 %v3745
      %3826 = vmatpush1.msra.mxu0 %v3744
      %3827 = vmatprep.subr.mxu0 %v3747
      %3828 = vmatpush1.msra.mxu0 %v3746
      %3829 = vmatprep.subr.mxu0 0.0
      %3830 = vmatpush1.msra.mxu0 0.0
      %3831 = vmatprep.subr.mxu0 0.0
      %3832 = vmatpush1.msra.mxu0 0.0
      %3833 = vmatprep.subr.mxu0 0.0
      %3834 = vmatpush1.msra.mxu0 0.0
      %3835 = vmatprep.subr.mxu0 0.0
      %3836 = vmatpush1.msra.mxu0 0.0
      %3837 = vmatprep.subr.mxu0 0.0
      %3838 = vmatpush1.msra.mxu0 0.0
      %3839 = vmatprep.subr.mxu0 0.0
      %3840 = vmatpush1.msra.mxu0 0.0
      %3841 = vmatprep.subr.mxu0 0.0
      %3842 = vmatpush1.msra.mxu0 0.0
      %3843 = vmatprep.subr.mxu0 0.0
      %3844 = vmatpush1.msra.mxu0 0.0
      %3845 = vmatprep.subr.mxu0 0.0
      %3846 = vmatpush1.msra.mxu0 0.0
      %3847 = vmatprep.subr.mxu0 0.0
      %3848 = vmatpush1.msra.mxu0 0.0
      %3849 = vmatprep.subr.mxu0 0.0
      %3850 = vmatpush1.msra.mxu0 0.0
      %3851 = vmatprep.subr.mxu0 0.0
      %3852 = vmatpush1.msra.mxu0 0.0
      %3853 = vmatprep.subr.mxu0 0.0
      %3854 = vmatpush1.msra.mxu0 0.0
      %3855 = vmatprep.subr.mxu0 0.0
      %3856 = vmatpush1.msra.mxu0 0.0
      %3857 = vmatprep.subr.mxu0 0.0
      %3858 = vmatpush1.msra.mxu0 0.0
      %3859 = vmatprep.subr.mxu0 0.0
      %3860 = vmatpush1.msra.mxu0 0.0
      %3861 = vmatprep.subr.mxu0 0.0
      %3862 = vmatpush1.msra.mxu0 0.0
      %3863 = vmatprep.subr.mxu0 0.0
      %3864 = vmatpush1.msra.mxu0 0.0
      %3865 = vmatprep.subr.mxu0 0.0
      %3866 = vmatpush1.msra.mxu0 0.0
      %3867 = vmatprep.subr.mxu0 0.0
      %3868 = vmatpush1.msra.mxu0 0.0
      %3869 = vmatprep.subr.mxu0 0.0
      %3870 = vmatpush1.msra.mxu0 0.0
      %3871 = vmatprep.subr.mxu0 0.0
      %3872 = vmatpush1.msra.mxu0 0.0
      %3873 = vmatprep.subr.mxu0 0.0
      %3874 = vmatpush1.msra.mxu0 0.0
      %3875 = vmatprep.subr.mxu0 0.0
      %3876 = vmatpush1.msra.mxu0 0.0
      %3877 = vmatprep.subr.mxu0 0.0
      %3878 = vmatpush1.msra.mxu0 0.0
      %3879 = vmatprep.subr.mxu0 0.0
      %3880 = vmatpush1.msra.mxu0 0.0
      %3881 = vmatprep.subr.mxu0 0.0
      %3882 = vmatpush1.msra.mxu0 0.0
      %3883 = vmatprep.subr.mxu0 0.0
      %3884 = vmatpush1.msra.mxu0 0.0
      %3885 = vmatprep.mubr.f32.mxu0 0.0
      %3886 = vmatmul.mubr.f32.gmra.mrb[0].mxu0 %v3798
      %v3887 = vpop.f32.mrb[0].mxu0
      %v3888 = vadd.f32 %v3759, %v3887
      %v3889 = vpop.f32.mrb[0].mxu0
      %v3890 = vadd.f32 %v3759, %v3889
      %3891 = vmatprep.mubr.f32.mxu0 0.0
      %3892 = vmatmul.mubr.f32.gmra.mrb[0].mxu0 %v3801
      %v3893 = vpop.f32.mrb[0].mxu0
      %v3894 = vadd.f32 %v3764, %v3893
      %v3895 = vpop.f32.mrb[0].mxu0
      %v3896 = vadd.f32 %v3764, %v3895
      %3897 = vmatprep.mubr.f32.mxu0 0.0
      %3898 = vmatmul.mubr.f32.gmra.mrb[0].mxu0 %v3804
      %v3899 = vpop.f32.mrb[0].mxu0
      %v3900 = vadd.f32 %v3769, %v3899
      %v3901 = vpop.f32.mrb[0].mxu0
      %v3902 = vadd.f32 %v3769, %v3901
      %3903 = vmatprep.mubr.f32.mxu0 0.0
      %3904 = vmatmul.mubr.f32.gmra.mrb[0].mxu0 %v3807
      %v3905 = vpop.f32.mrb[0].mxu0
      %v3906 = vadd.f32 %v3774, %v3905
      %v3907 = vpop.f32.mrb[0].mxu0
      %v3908 = vadd.f32 %v3774, %v3907
      %3909 = vmatprep.mubr.f32.mxu0 0.0
      %3910 = vmatmul.mubr.f32.gmra.mrb[0].mxu0 %v3810
      %v3911 = vpop.f32.mrb[0].mxu0
      %v3912 = vadd.f32 %v3779, %v3911
      %v3913 = vpop.f32.mrb[0].mxu0
      %v3914 = vadd.f32 %v3779, %v3913
      %3915 = vmatprep.mubr.f32.mxu0 0.0
      %3916 = vmatmul.mubr.f32.gmra.mrb[0].mxu0 %v3813
      %v3917 = vpop.f32.mrb[0].mxu0
      %v3918 = vadd.f32 %v3784, %v3917
      %v3919 = vpop.f32.mrb[0].mxu0
      %v3920 = vadd.f32 %v3784, %v3919
      %3921 = vmatprep.mubr.f32.mxu0 0.0
      %3922 = vmatmul.mubr.f32.gmra.mrb[0].mxu0 %v3816
      %v3923 = vpop.f32.mrb[0].mxu0
      %v3924 = vadd.f32 %v3789, %v3923
      %v3925 = vpop.f32.mrb[0].mxu0
      %v3926 = vadd.f32 %v3789, %v3925
      %3927 = vmatprep.mubr.f32.mxu0 0.0
      %3928 = vmatmul.mubr.f32.gmra.mrb[0].mxu0 %v3819
      %v3929 = vpop.f32.mrb[0].mxu0
      %v3930 = vadd.f32 %v3794, %v3929
      %v3931 = vpop.f32.mrb[0].mxu0
      %v3932 = vadd.f32 %v3794, %v3931
      %3933 = vdwg.mxu0
      %v3934 = vadd.f32 %v3716, %v3888
      %v3935 = vadd.f32 %v3717, %v3890
      %v3936 = vadd.f32 %v3718, %v3894
      %v3937 = vadd.f32 %v3719, %v3896
      %v3938 = vadd.f32 %v3720, %v3900
      %v3939 = vadd.f32 %v3721, %v3902
      %v3940 = vadd.f32 %v3722, %v3906
      %v3941 = vadd.f32 %v3723, %v3908
      %v3942 = vadd.f32 %v3724, %v3912
      %v3943 = vadd.f32 %v3725, %v3914
      %v3944 = vadd.f32 %v3726, %v3918
      %v3945 = vadd.f32 %v3727, %v3920
      %v3946 = vadd.f32 %v3728, %v3924
      %v3947 = vadd.f32 %v3729, %v3926
      %v3948 = vadd.f32 %v3730, %v3930
      %v3949 = vadd.f32 %v3731, %v3932
      %3950 = vst [vmem:[%s352] sm:$0xff] %v3934
      %3951 = vst [vmem:[%s352 + $0x8] sm:$0xff] %v3935
      %3952 = vst [vmem:[%s352 + $0x10] sm:$0xff] %v3936
      %3953 = vst [vmem:[%s352 + $0x18] sm:$0xff] %v3937
      %3954 = vst [vmem:[%s352 + $0x20] sm:$0xff] %v3938
      %3955 = vst [vmem:[%s352 + $0x28] sm:$0xff] %v3939
      %3956 = vst [vmem:[%s352 + $0x30] sm:$0xff] %v3940
      %3957 = vst [vmem:[%s352 + $0x38] sm:$0xff] %v3941
      %3958 = vst [vmem:[%s352 + $0x40] sm:$0xff] %v3942
      %3959 = vst [vmem:[%s352 + $0x48] sm:$0xff] %v3943
      %3960 = vst [vmem:[%s352 + $0x50] sm:$0xff] %v3944
      %3961 = vst [vmem:[%s352 + $0x58] sm:$0xff] %v3945
      %3962 = vst [vmem:[%s352 + $0x60] sm:$0xff] %v3946
      %3963 = vst [vmem:[%s352 + $0x68] sm:$0xff] %v3947
      %3964 = vst [vmem:[%s352 + $0x70] sm:$0xff] %v3948
      %3965 = vst [vmem:[%s352 + $0x78] sm:$0xff] %v3949
      %p3966 = scmp.lt.s32.totalorder %s20, 1
      %s3967 = scalar_select %p3966, %s20, 1
      %s3968 = smul.addr %s3967, 16
      %s3969 = smul.addr %s3968, 8
      %s3970 = scalar_lea.vmem %s9, %s3969
      // Predicated region
      $region57: #{resnet_block_forward.5} parent=55 // pred_check
        %p3971 = pneg %p237
      $region58: #{resnet_block_forward.5} parent=55 // pred_check_branch
        %3973 = sbr.rel (%p3971) target = $region60
      $region59: #{resnet_block_forward.5} parent=55 // pred_region
        _
      $region60: #{resnet_block_forward.5} parent=55 // pred_fallthru
        _
    $region56: #{resnet_block_forward.5} parent=5 // pred_fallthru
      _
    %p3974 = scmp.le.s32.totalorder 2, %s15
    // Predicated region
    $region61: #{resnet_block_forward.5} parent=5 // pred_check
      %p3975 = pneg %p3974
    $region62: #{resnet_block_forward.5} parent=5 // pred_check_branch
      %3977 = sbr.rel (%p3975) target = $region64
    $region63: #{resnet_block_forward.5} parent=5 // pred_region
      %s3978 = ssub.s32 %s15, 2
      // Predicated region
      $region65: #{resnet_block_forward.5} parent=63 // pred_check
        %p3979 = pneg %p243
      $region66: #{resnet_block_forward.5} parent=63 // pred_check_branch
        %3981 = sbr.rel (%p3979) target = $region68
      $region67: #{resnet_block_forward.5} parent=63 // pred_region
        %p3982 = scmp.lt.s32.totalorder %s21, 1
        %s3983 = scalar_select %p3982, %s21, 1
        %s3984 = smul.addr %s3983, 16
        %s3985 = smul.addr %s3984, 8
        %s3986 = scalar_lea.vmem %s9, %s3985
      $region68: #{resnet_block_forward.5} parent=63 // pred_fallthru
        _
    $region64: #{resnet_block_forward.5} parent=5 // pred_fallthru
      _
  $region6: #{resnet_block_forward.5} parent=0 // loop_footer
    %s19 = sadd.s32 1, %s15
  $region7: #{resnet_block_forward.5} parent=0 // loop_footer_branch
    %14 = sbr.rel target = $region3
  $region8: #{resnet_block_forward.5} parent=0 // loop_exit
    _

</llo_original>
